<compile_context>
chip_gen: v7x
topology: tpu7x:2x2x1
jax: 0.10.0
libtpu: 0.0.40
codegen_flags: <defaults>
</compile_context>

<pallas_src>
import numpy as np
import jax
import jax.numpy as jnp
from jax.experimental import pallas as pl
from jax.experimental.pallas import tpu as pltpu


# --------------------------- kernel 1: ZPool maps ---------------------------

def pool_kernel(x_ref,
                mx_hw_ref, mn_hw_ref,   # reduce over C  (hw gate, no permute)
                mx_cw_ref, mn_cw_ref,   # reduce over D  (cw gate, permute 0,2,1,3,4)
                mx_hc_ref, mn_hc_ref,   # reduce over H  (hc gate, permute 0,3,2,1,4)
                mx_w_ref,  mn_w_ref):   # reduce over W  (hc gate, permute 0,4,2,3,1)
    x = x_ref[...]                                        # (C, D, H, W) f32
    mx_hw_ref[...] = jnp.max(x, axis=0, keepdims=True)
    mn_hw_ref[...] = jnp.mean(x, axis=0, keepdims=True)
    mx_cw_ref[...] = jnp.max(x, axis=1, keepdims=True)
    mn_cw_ref[...] = jnp.mean(x, axis=1, keepdims=True)
    mx_hc_ref[...] = jnp.max(x, axis=2, keepdims=True)    # sublane reduce
    mn_hc_ref[...] = jnp.mean(x, axis=2, keepdims=True)
    mx_w_ref[...]  = jnp.max(x, axis=3, keepdims=True)    # lane reduce
    mn_w_ref[...]  = jnp.mean(x, axis=3, keepdims=True)


def zpool_all(x):
    B, C, D, H, W = x.shape
    f32 = jnp.float32
    out_shapes = (
        jax.ShapeDtypeStruct((B, 1, D, H, W), f32), jax.ShapeDtypeStruct((B, 1, D, H, W), f32),
        jax.ShapeDtypeStruct((B, C, 1, H, W), f32), jax.ShapeDtypeStruct((B, C, 1, H, W), f32),
        jax.ShapeDtypeStruct((B, C, D, 1, W), f32), jax.ShapeDtypeStruct((B, C, D, 1, W), f32),
        jax.ShapeDtypeStruct((B, C, D, H, 1), f32), jax.ShapeDtypeStruct((B, C, D, H, 1), f32),
    )

    def spec(shape):
        # squeeze the batch dim; trailing block dims equal full array dims
        return pl.BlockSpec((None,) + tuple(shape[1:]), lambda b: (b, 0, 0, 0, 0))

    return pl.pallas_call(
        pool_kernel,
        out_shape=out_shapes,
        grid=(B,),
        in_specs=[spec(x.shape)],
        out_specs=tuple(spec(s.shape) for s in out_shapes),
        compiler_params=pltpu.CompilerParams(dimension_semantics=("parallel",)),
    )(x)


# ------------- kernel 2: conv-as-matmul + BatchNorm + sigmoid (4 gates) ------

def gates_kernel(zx_hw_ref, zm_hw_ref, zx_cw_ref, zm_cw_ref,
                 zx_hc_ref, zm_hc_ref, zx_w_ref,  zm_w_ref,
                 cm_hw_ref, cm_cw_ref, cm_hc_ref, cm_w_ref,
                 bn_ref,
                 s_hw_ref, s_cw_ref, s_hc_ref, s_w_ref):
    def gate(zmax_ref, zmean_ref, cm_ref, idx, out_ref):
        # Fold max/mean along the contraction axis: (B, 2S) @ (2S, S), bf16 on MXU.
        z = jnp.concatenate([zmax_ref[...], zmean_ref[...]], axis=-1)
        conv = jnp.dot(z.astype(jnp.bfloat16), cm_ref[...],
                       preferred_element_type=jnp.float32)            # (B, S) f32
        # BatchNorm3d(1), training mode: stats over all B*S elements of 1 channel.
        mu = jnp.mean(conv)
        var = jnp.mean(jnp.square(conv - mu))
        y = (conv - mu) * jax.lax.rsqrt(var + 1e-5) * bn_ref[idx, 0] + bn_ref[idx, 1]
        out_ref[...] = 1.0 / (1.0 + jnp.exp(-y))                       # sigmoid, f32

    gate(zx_hw_ref, zm_hw_ref, cm_hw_ref, 0, s_hw_ref)
    gate(zx_cw_ref, zm_cw_ref, cm_cw_ref, 1, s_cw_ref)
    gate(zx_hc_ref, zm_hc_ref, cm_hc_ref, 2, s_hc_ref)
    gate(zx_w_ref,  zm_w_ref,  cm_w_ref,  3, s_w_ref)


def gate_scales(pools_flat, cms, bn):
    """pools_flat: 8 arrays [(B,S)x2 per gate]; cms: 4 bf16 (2S,S); bn: (4,2) f32."""
    B = pools_flat[0].shape[0]
    out_shapes = tuple(jax.ShapeDtypeStruct((B, p.shape[1]), jnp.float32)
                       for p in pools_flat[::2])

    def full2d(shape):
        return pl.BlockSpec(tuple(shape), lambda i: (0, 0))

    in_specs = ([full2d(p.shape) for p in pools_flat]
                + [full2d(c.shape) for c in cms]
                + [pl.BlockSpec(memory_space=pltpu.MemorySpace.SMEM)])
    out_specs = tuple(full2d(s.shape) for s in out_shapes)

    return pl.pallas_call(
        gates_kernel,
        out_shape=out_shapes,
        grid=(1,),
        in_specs=in_specs,
        out_specs=out_specs,
        compiler_params=pltpu.CompilerParams(dimension_semantics=("arbitrary",)),
    )(*pools_flat, *cms, bn)


# ---------------- kernel 3: fused scale-apply + 1/4 average ------------------

def apply_kernel(x_ref, s_hw_ref, s_cw_ref, s_hc_ref, s_w_ref, o_ref):
    x = x_ref[...]                                   # (C, D, H, W)
    gate = (s_hw_ref[...] +                          # (1, D, H, W)  bcast over C
            s_cw_ref[...] +                          # (C, 1, H, W)  bcast over D
            s_hc_ref[...] +                          # (C, D, 1, W)  bcast over H
            s_w_ref[...])                            # (C, D, H, 1)  bcast over W
    o_ref[...] = x * (0.25 * gate)


def apply_scales(x, s_hw, s_cw, s_hc, s_w):
    B = x.shape[0]

    def spec(shape):
        return pl.BlockSpec((None,) + tuple(shape[1:]), lambda b: (b, 0, 0, 0, 0))

    return pl.pallas_call(
        apply_kernel,
        out_shape=jax.ShapeDtypeStruct(x.shape, jnp.float32),
        grid=(B,),
        in_specs=[spec(x.shape), spec(s_hw.shape), spec(s_cw.shape),
                  spec(s_hc.shape), spec(s_w.shape)],
        out_specs=spec(x.shape),
        compiler_params=pltpu.CompilerParams(dimension_semantics=("parallel",)),
    )(x, s_hw, s_cw, s_hc, s_w)


# ------------------------------ full forward ---------------------------------

def triplet_attention_pallas(x, cms, bn):
    B, C, D, H, W = x.shape
    (mx_hw, mn_hw, mx_cw, mn_cw, mx_hc, mn_hc, mx_w, mn_w) = zpool_all(x)

    # Flatten the pooled maps to (B, S) — free reshapes of contiguous HBM arrays.
    pools_flat = [
        mx_hw.reshape(B, D * H * W), mn_hw.reshape(B, D * H * W),
        mx_cw.reshape(B, C * H * W), mn_cw.reshape(B, C * H * W),
        mx_hc.reshape(B, C * D * W), mn_hc.reshape(B, C * D * W),
        mx_w.reshape(B, C * D * H),  mn_w.reshape(B, C * D * H),
    ]
    s_hw, s_cw, s_hc, s_w = gate_scales(
        pools_flat, [cms["hw"], cms["cw"], cms["hc2"], cms["hc3"]], bn)

    # Back to broadcast-ready (kept-dim) shapes — again free reshapes.
    s_hw = s_hw.reshape(B, 1, D, H, W)
    s_cw = s_cw.reshape(B, C, 1, H, W)
    s_hc = s_hc.reshape(B, C, D, 1, W)
    s_w  = s_w.reshape(B, C, D, H, 1)
    return apply_scales(x, s_hw, s_cw, s_hc, s_w)


# ------------------------ parameter setup (host glue) ------------------------

def conv3d_to_matrix(w, spatial):
    """Dense Toeplitz matrix for a 2->1 channel, 7x7x7, stride 1, padding 3 Conv3d.

    w: np.ndarray (2, 7, 7, 7) — conv weight with its spatial (tap) axes already
       permuted into the NATURAL (transpose-free) ordering of the pooled tensor.
    spatial: (S1, S2, S3) of the pooled tensor in that natural ordering.
    Returns CM of shape (2*S, S) with
       conv_out[b, flat_o] = concat([zmax_flat, zmean_flat], -1)[b] @ CM
    NOTE: O(S^2) memory/FLOPs — fine at demo scale, see TODO(synk) at file top.
    """
    S1, S2, S3 = spatial
    S = S1 * S2 * S3
    cm = np.zeros((2, S1, S2, S3, S1, S2, S3), dtype=np.float32)
    o1, o2, o3 = np.arange(S1), np.arange(S2), np.arange(S3)
    for c in range(2):
        for k1 in range(7):
            i1 = o1 + k1 - 3
            m1 = (i1 >= 0) & (i1 < S1)
            if not m1.any():
                continue
            a1, b1 = i1[m1], o1[m1]
            for k2 in range(7):
                i2 = o2 + k2 - 3
                m2 = (i2 >= 0) & (i2 < S2)
                if not m2.any():
                    continue
                a2, b2 = i2[m2], o2[m2]
                for k3 in range(7):
                    i3 = o3 + k3 - 3
                    m3 = (i3 >= 0) & (i3 < S3)
                    if not m3.any():
                        continue
                    a3, b3 = i3[m3], o3[m3]
                    cm[c,
                       a1[:, None, None], a2[None, :, None], a3[None, None, :],
                       b1[:, None, None], b2[None, :, None], b3[None, None, :]] = w[c, k1, k2, k3]
    return cm.reshape(2 * S, S)


# ----------------------------- pure-JAX reference ----------------------------

def ref_attention_gate(xp, w, gamma, beta):
    zmax = jnp.max(xp, axis=1, keepdims=True)
    zmean = jnp.mean(xp, axis=1, keepdims=True)
    z = jnp.concatenate([zmax, zmean], axis=1)
    conv = jax.lax.conv_general_dilated(
        z, w, window_strides=(1, 1, 1), padding=[(3, 3), (3, 3), (3, 3)],
        dimension_numbers=("NCDHW", "OIDHW", "NCDHW"))
    mu = jnp.mean(conv)
    var = jnp.mean(jnp.square(conv - mu))
    y = (conv - mu) * jax.lax.rsqrt(var + 1e-5) * gamma + beta
    return xp * (1.0 / (1.0 + jnp.exp(-y)))


def ref_triplet_attention(x, w_cw, w_hc, w_hw, bn_cw, bn_hc, bn_hw):
    xp1 = jnp.transpose(x, (0, 2, 1, 3, 4))
    o11 = jnp.transpose(ref_attention_gate(xp1, w_cw, bn_cw[0], bn_cw[1]), (0, 2, 1, 3, 4))
    xp2 = jnp.transpose(x, (0, 3, 2, 1, 4))
    o21 = jnp.transpose(ref_attention_gate(xp2, w_hc, bn_hc[0], bn_hc[1]), (0, 3, 2, 1, 4))
    xp3 = jnp.transpose(x, (0, 4, 2, 3, 1))
    o31 = jnp.transpose(ref_attention_gate(xp3, w_hc, bn_hc[0], bn_hc[1]), (0, 4, 2, 3, 1))
    o0 = ref_attention_gate(x, w_hw, bn_hw[0], bn_hw[1])
    return 0.25 * (o0 + o11 + o21 + o31)


# ----------------------------------- main ------------------------------------

if __name__ == "__main__":
    B, C, D, H, W = 2, 4, 8, 8, 8
    key = jax.random.PRNGKey(0)
    k_x, k1, k2, k3 = jax.random.split(key, 4)

    x = jax.random.normal(k_x, (B, C, D, H, W), jnp.float32)

    # Conv3d(2, 1, 7, padding=3, bias=False) weights per gate (deterministic).
    w_cw = jax.random.uniform(k1, (1, 2, 7, 7, 7), jnp.float32, -0.04, 0.04)
    w_hc = jax.random.uniform(k2, (1, 2, 7, 7, 7), jnp.float32, -0.04, 0.04)
    w_hw = jax.random.uniform(k3, (1, 2, 7, 7, 7), jnp.float32, -0.04, 0.04)

    # BatchNorm3d(1) affine [gamma, beta]; rows ordered (hw, cw, hc, hc-again).
    bn_hw = jnp.array([1.05, 0.02], jnp.float32)
    bn_cw = jnp.array([0.90, 0.10], jnp.float32)
    bn_hc = jnp.array([1.10, -0.05], jnp.float32)
    bn = jnp.stack([bn_hw, bn_cw, bn_hc, bn_hc])          # (4, 2) -> SMEM

    # Dense conv matrices in the NATURAL (transpose-free) layout of each branch;
    # the kernel taps are permuted to account for the PyTorch permutes:
    #   hw : pool over C, conv order (D, H, W)  -> taps unchanged
    #   cw : pool over D, conv order (C, H, W)  -> taps unchanged
    #   hc2: pool over H, permuted conv order (D, C, W), natural (C, D, W) -> taps (0,2,1,3)
    #   hc3: pool over W, permuted conv order (D, H, C), natural (C, D, H) -> taps (0,3,1,2)
    np_cw, np_hc, np_hw = np.asarray(w_cw[0]), np.asarray(w_hc[0]), np.asarray(w_hw[0])
    cms = {
        "hw":  jnp.asarray(conv3d_to_matrix(np_hw, (D, H, W))).astype(jnp.bfloat16),
        "cw":  jnp.asarray(conv3d_to_matrix(np_cw, (C, H, W))).astype(jnp.bfloat16),
        "hc2": jnp.asarray(conv3d_to_matrix(np.transpose(np_hc, (0, 2, 1, 3)),
                                            (C, D, W))).astype(jnp.bfloat16),
        "hc3": jnp.asarray(conv3d_to_matrix(np.transpose(np_hc, (0, 3, 1, 2)),
                                            (C, D, H))).astype(jnp.bfloat16),
    }

    out = jax.jit(triplet_attention_pallas)(x, cms, bn)
    out = jax.block_until_ready(out)
    assert out.shape == x.shape and out.dtype == jnp.float32

    ref = jax.block_until_ready(
        ref_triplet_attention(x, w_cw, w_hc, w_hw, bn_cw, bn_hc, bn_hw))
    # Tolerance accepts bf16 MXU inputs for the conv matmul (per perf review).
    np.testing.assert_allclose(np.asarray(out), np.asarray(ref), rtol=1e-2, atol=1e-2)

    print("KERNEL_OK")
</pallas_src>

<mosaic_0001>
module attributes {stable_mosaic.version = 11 : i64} {
  func.func @pool_kernel(%arg0: i32, %arg1: memref<1x4x8x8x8xf32, #tpu.memory_space<vmem>>, %arg2: memref<1x1x8x8x8xf32, #tpu.memory_space<vmem>>, %arg3: memref<1x1x8x8x8xf32, #tpu.memory_space<vmem>>, %arg4: memref<1x4x1x8x8xf32, #tpu.memory_space<vmem>>, %arg5: memref<1x4x1x8x8xf32, #tpu.memory_space<vmem>>, %arg6: memref<1x4x8x1x8xf32, #tpu.memory_space<vmem>>, %arg7: memref<1x4x8x1x8xf32, #tpu.memory_space<vmem>>, %arg8: memref<1x4x8x8x1xf32, #tpu.memory_space<vmem>>, %arg9: memref<1x4x8x8x1xf32, #tpu.memory_space<vmem>>) attributes {dimension_semantics = [#tpu.dimension_semantics<parallel>], iteration_bounds = array<i64: 2>, scalar_prefetch = 0 : i64, scratch_operands = 0 : i64, tpu.core_type = #tpu.core_type<tc>, window_params = [{transform_indices = @transform_0, window_bounds = array<i64: 1, 4, 8, 8, 8>}, {transform_indices = @transform_1, window_bounds = array<i64: 1, 1, 8, 8, 8>}, {transform_indices = @transform_2, window_bounds = array<i64: 1, 1, 8, 8, 8>}, {transform_indices = @transform_3, window_bounds = array<i64: 1, 4, 1, 8, 8>}, {transform_indices = @transform_4, window_bounds = array<i64: 1, 4, 1, 8, 8>}, {transform_indices = @transform_5, window_bounds = array<i64: 1, 4, 8, 1, 8>}, {transform_indices = @transform_6, window_bounds = array<i64: 1, 4, 8, 1, 8>}, {transform_indices = @transform_7, window_bounds = array<i64: 1, 4, 8, 8, 1>}, {transform_indices = @transform_8, window_bounds = array<i64: 1, 4, 8, 8, 1>}]} {
    %c0 = arith.constant 0 : index
    %c0_0 = arith.constant 0 : index
    %c0_1 = arith.constant 0 : index
    %c0_2 = arith.constant 0 : index
    %c0_3 = arith.constant 0 : index
    %0 = vector.load %arg1[%c0, %c0_0, %c0_1, %c0_2, %c0_3] : memref<1x4x8x8x8xf32, #tpu.memory_space<vmem>>, vector<1x4x8x8x8xf32>
    %1 = vector.shape_cast %0 : vector<1x4x8x8x8xf32> to vector<4x8x8x8xf32>
    %cst = arith.constant dense<0xFF800000> : vector<8x8x8xf32>
    %2 = vector.multi_reduction <maximumf>, %1, %cst [0] : vector<4x8x8x8xf32> to vector<8x8x8xf32>
    %3 = vector.shape_cast %2 : vector<8x8x8xf32> to vector<1x8x8x8xf32>
    %c0_4 = arith.constant 0 : index
    %c0_5 = arith.constant 0 : index
    %c0_6 = arith.constant 0 : index
    %c0_7 = arith.constant 0 : index
    %c0_8 = arith.constant 0 : index
    %4 = vector.load %arg2[%c0_4, %c0_5, %c0_6, %c0_7, %c0_8] : memref<1x1x8x8x8xf32, #tpu.memory_space<vmem>>, vector<1x1x8x8x8xf32>
    %5 = vector.shape_cast %4 : vector<1x1x8x8x8xf32> to vector<1x8x8x8xf32>
    %6 = vector.shape_cast %3 : vector<1x8x8x8xf32> to vector<1x1x8x8x8xf32>
    tpu.vector_store %arg2[%c0_4, %c0_5, %c0_6, %c0_7, %c0_8], %6 {strides = array<i32>} : memref<1x1x8x8x8xf32, #tpu.memory_space<vmem>>, vector<1x1x8x8x8xf32>,
    %cst_9 = arith.constant dense<0.000000e+00> : vector<8x8x8xf32>
    %7 = vector.multi_reduction <add>, %1, %cst_9 [0] : vector<4x8x8x8xf32> to vector<8x8x8xf32>
    %8 = vector.shape_cast %7 : vector<8x8x8xf32> to vector<1x8x8x8xf32>
    %cst_10 = arith.constant 4.000000e+00 : f32
    %9 = vector.broadcast %cst_10 : f32 to vector<1x8x8x8xf32>
    %10 = arith.divf %8, %9 : vector<1x8x8x8xf32>
    %c0_11 = arith.constant 0 : index
    %c0_12 = arith.constant 0 : index
    %c0_13 = arith.constant 0 : index
    %c0_14 = arith.constant 0 : index
    %c0_15 = arith.constant 0 : index
    %11 = vector.load %arg3[%c0_11, %c0_12, %c0_13, %c0_14, %c0_15] : memref<1x1x8x8x8xf32, #tpu.memory_space<vmem>>, vector<1x1x8x8x8xf32>
    %12 = vector.shape_cast %11 : vector<1x1x8x8x8xf32> to vector<1x8x8x8xf32>
    %13 = vector.shape_cast %10 : vector<1x8x8x8xf32> to vector<1x1x8x8x8xf32>
    tpu.vector_store %arg3[%c0_11, %c0_12, %c0_13, %c0_14, %c0_15], %13 {strides = array<i32>} : memref<1x1x8x8x8xf32, #tpu.memory_space<vmem>>, vector<1x1x8x8x8xf32>,
    %cst_16 = arith.constant dense<0xFF800000> : vector<4x8x8xf32>
    %14 = vector.multi_reduction <maximumf>, %1, %cst_16 [1] : vector<4x8x8x8xf32> to vector<4x8x8xf32>
    %15 = vector.shape_cast %14 : vector<4x8x8xf32> to vector<4x1x8x8xf32>
    %c0_17 = arith.constant 0 : index
    %c0_18 = arith.constant 0 : index
    %c0_19 = arith.constant 0 : index
    %c0_20 = arith.constant 0 : index
    %c0_21 = arith.constant 0 : index
    %16 = vector.load %arg4[%c0_17, %c0_18, %c0_19, %c0_20, %c0_21] : memref<1x4x1x8x8xf32, #tpu.memory_space<vmem>>, vector<1x4x1x8x8xf32>
    %17 = vector.shape_cast %16 : vector<1x4x1x8x8xf32> to vector<4x1x8x8xf32>
    %18 = vector.shape_cast %15 : vector<4x1x8x8xf32> to vector<1x4x1x8x8xf32>
    tpu.vector_store %arg4[%c0_17, %c0_18, %c0_19, %c0_20, %c0_21], %18 {strides = array<i32>} : memref<1x4x1x8x8xf32, #tpu.memory_space<vmem>>, vector<1x4x1x8x8xf32>,
    %cst_22 = arith.constant dense<0.000000e+00> : vector<4x8x8xf32>
    %19 = vector.multi_reduction <add>, %1, %cst_22 [1] : vector<4x8x8x8xf32> to vector<4x8x8xf32>
    %20 = vector.shape_cast %19 : vector<4x8x8xf32> to vector<4x1x8x8xf32>
    %cst_23 = arith.constant 8.000000e+00 : f32
    %21 = vector.broadcast %cst_23 : f32 to vector<4x1x8x8xf32>
    %22 = arith.divf %20, %21 : vector<4x1x8x8xf32>
    %c0_24 = arith.constant 0 : index
    %c0_25 = arith.constant 0 : index
    %c0_26 = arith.constant 0 : index
    %c0_27 = arith.constant 0 : index
    %c0_28 = arith.constant 0 : index
    %23 = vector.load %arg5[%c0_24, %c0_25, %c0_26, %c0_27, %c0_28] : memref<1x4x1x8x8xf32, #tpu.memory_space<vmem>>, vector<1x4x1x8x8xf32>
    %24 = vector.shape_cast %23 : vector<1x4x1x8x8xf32> to vector<4x1x8x8xf32>
    %25 = vector.shape_cast %22 : vector<4x1x8x8xf32> to vector<1x4x1x8x8xf32>
    tpu.vector_store %arg5[%c0_24, %c0_25, %c0_26, %c0_27, %c0_28], %25 {strides = array<i32>} : memref<1x4x1x8x8xf32, #tpu.memory_space<vmem>>, vector<1x4x1x8x8xf32>,
    %cst_29 = arith.constant dense<0xFF800000> : vector<4x8x8xf32>
    %26 = vector.multi_reduction <maximumf>, %1, %cst_29 [2] : vector<4x8x8x8xf32> to vector<4x8x8xf32>
    %27 = vector.shape_cast %26 : vector<4x8x8xf32> to vector<4x8x1x8xf32>
    %c0_30 = arith.constant 0 : index
    %c0_31 = arith.constant 0 : index
    %c0_32 = arith.constant 0 : index
    %c0_33 = arith.constant 0 : index
    %c0_34 = arith.constant 0 : index
    %28 = vector.load %arg6[%c0_30, %c0_31, %c0_32, %c0_33, %c0_34] : memref<1x4x8x1x8xf32, #tpu.memory_space<vmem>>, vector<1x4x8x1x8xf32>
    %29 = vector.shape_cast %28 : vector<1x4x8x1x8xf32> to vector<4x8x1x8xf32>
    %30 = vector.shape_cast %27 : vector<4x8x1x8xf32> to vector<1x4x8x1x8xf32>
    tpu.vector_store %arg6[%c0_30, %c0_31, %c0_32, %c0_33, %c0_34], %30 {strides = array<i32>} : memref<1x4x8x1x8xf32, #tpu.memory_space<vmem>>, vector<1x4x8x1x8xf32>,
    %cst_35 = arith.constant dense<0.000000e+00> : vector<4x8x8xf32>
    %31 = vector.multi_reduction <add>, %1, %cst_35 [2] : vector<4x8x8x8xf32> to vector<4x8x8xf32>
    %32 = vector.shape_cast %31 : vector<4x8x8xf32> to vector<4x8x1x8xf32>
    %cst_36 = arith.constant 8.000000e+00 : f32
    %33 = vector.broadcast %cst_36 : f32 to vector<4x8x1x8xf32>
    %34 = arith.divf %32, %33 : vector<4x8x1x8xf32>
    %c0_37 = arith.constant 0 : index
    %c0_38 = arith.constant 0 : index
    %c0_39 = arith.constant 0 : index
    %c0_40 = arith.constant 0 : index
    %c0_41 = arith.constant 0 : index
    %35 = vector.load %arg7[%c0_37, %c0_38, %c0_39, %c0_40, %c0_41] : memref<1x4x8x1x8xf32, #tpu.memory_space<vmem>>, vector<1x4x8x1x8xf32>
    %36 = vector.shape_cast %35 : vector<1x4x8x1x8xf32> to vector<4x8x1x8xf32>
    %37 = vector.shape_cast %34 : vector<4x8x1x8xf32> to vector<1x4x8x1x8xf32>
    tpu.vector_store %arg7[%c0_37, %c0_38, %c0_39, %c0_40, %c0_41], %37 {strides = array<i32>} : memref<1x4x8x1x8xf32, #tpu.memory_space<vmem>>, vector<1x4x8x1x8xf32>,
    %cst_42 = arith.constant dense<0xFF800000> : vector<4x8x8xf32>
    %38 = vector.multi_reduction <maximumf>, %1, %cst_42 [3] : vector<4x8x8x8xf32> to vector<4x8x8xf32>
    %39 = vector.shape_cast %38 : vector<4x8x8xf32> to vector<4x8x8x1xf32>
    %c0_43 = arith.constant 0 : index
    %c0_44 = arith.constant 0 : index
    %c0_45 = arith.constant 0 : index
    %c0_46 = arith.constant 0 : index
    %c0_47 = arith.constant 0 : index
    %40 = vector.load %arg8[%c0_43, %c0_44, %c0_45, %c0_46, %c0_47] : memref<1x4x8x8x1xf32, #tpu.memory_space<vmem>>, vector<1x4x8x8x1xf32>
    %41 = vector.shape_cast %40 : vector<1x4x8x8x1xf32> to vector<4x8x8x1xf32>
    %42 = vector.shape_cast %39 : vector<4x8x8x1xf32> to vector<1x4x8x8x1xf32>
    tpu.vector_store %arg8[%c0_43, %c0_44, %c0_45, %c0_46, %c0_47], %42 {strides = array<i32>} : memref<1x4x8x8x1xf32, #tpu.memory_space<vmem>>, vector<1x4x8x8x1xf32>,
    %cst_48 = arith.constant dense<0.000000e+00> : vector<4x8x8xf32>
    %43 = vector.multi_reduction <add>, %1, %cst_48 [3] : vector<4x8x8x8xf32> to vector<4x8x8xf32>
    %44 = vector.shape_cast %43 : vector<4x8x8xf32> to vector<4x8x8x1xf32>
    %cst_49 = arith.constant 8.000000e+00 : f32
    %45 = vector.broadcast %cst_49 : f32 to vector<4x8x8x1xf32>
    %46 = arith.divf %44, %45 : vector<4x8x8x1xf32>
    %c0_50 = arith.constant 0 : index
    %c0_51 = arith.constant 0 : index
    %c0_52 = arith.constant 0 : index
    %c0_53 = arith.constant 0 : index
    %c0_54 = arith.constant 0 : index
    %47 = vector.load %arg9[%c0_50, %c0_51, %c0_52, %c0_53, %c0_54] : memref<1x4x8x8x1xf32, #tpu.memory_space<vmem>>, vector<1x4x8x8x1xf32>
    %48 = vector.shape_cast %47 : vector<1x4x8x8x1xf32> to vector<4x8x8x1xf32>
    %49 = vector.shape_cast %46 : vector<4x8x8x1xf32> to vector<1x4x8x8x1xf32>
    tpu.vector_store %arg9[%c0_50, %c0_51, %c0_52, %c0_53, %c0_54], %49 {strides = array<i32>} : memref<1x4x8x8x1xf32, #tpu.memory_space<vmem>>, vector<1x4x8x8x1xf32>,
    return
  }
  func.func @transform_0(%arg0: i32) -> (i32, i32, i32, i32, i32) {
    %c0_i32 = arith.constant 0 : i32
    %c0_i32_0 = arith.constant 0 : i32
    %c0_i32_1 = arith.constant 0 : i32
    %c0_i32_2 = arith.constant 0 : i32
    %c0_i32_3 = arith.constant 0 : i32
    return %arg0, %c0_i32, %c0_i32_0, %c0_i32_1, %c0_i32_2 : i32, i32, i32, i32, i32
  }
  func.func @transform_1(%arg0: i32) -> (i32, i32, i32, i32, i32) {
    %c0_i32 = arith.constant 0 : i32
    %c0_i32_0 = arith.constant 0 : i32
    %c0_i32_1 = arith.constant 0 : i32
    %c0_i32_2 = arith.constant 0 : i32
    %c0_i32_3 = arith.constant 0 : i32
    return %arg0, %c0_i32, %c0_i32_0, %c0_i32_1, %c0_i32_2 : i32, i32, i32, i32, i32
  }
  func.func @transform_2(%arg0: i32) -> (i32, i32, i32, i32, i32) {
    %c0_i32 = arith.constant 0 : i32
    %c0_i32_0 = arith.constant 0 : i32
    %c0_i32_1 = arith.constant 0 : i32
    %c0_i32_2 = arith.constant 0 : i32
    %c0_i32_3 = arith.constant 0 : i32
    return %arg0, %c0_i32, %c0_i32_0, %c0_i32_1, %c0_i32_2 : i32, i32, i32, i32, i32
  }
  func.func @transform_3(%arg0: i32) -> (i32, i32, i32, i32, i32) {
    %c0_i32 = arith.constant 0 : i32
    %c0_i32_0 = arith.constant 0 : i32
    %c0_i32_1 = arith.constant 0 : i32
    %c0_i32_2 = arith.constant 0 : i32
    %c0_i32_3 = arith.constant 0 : i32
    return %arg0, %c0_i32, %c0_i32_0, %c0_i32_1, %c0_i32_2 : i32, i32, i32, i32, i32
  }
  func.func @transform_4(%arg0: i32) -> (i32, i32, i32, i32, i32) {
    %c0_i32 = arith.constant 0 : i32
    %c0_i32_0 = arith.constant 0 : i32
    %c0_i32_1 = arith.constant 0 : i32
    %c0_i32_2 = arith.constant 0 : i32
    %c0_i32_3 = arith.constant 0 : i32
    return %arg0, %c0_i32, %c0_i32_0, %c0_i32_1, %c0_i32_2 : i32, i32, i32, i32, i32
  }
  func.func @transform_5(%arg0: i32) -> (i32, i32, i32, i32, i32) {
    %c0_i32 = arith.constant 0 : i32
    %c0_i32_0 = arith.constant 0 : i32
    %c0_i32_1 = arith.constant 0 : i32
    %c0_i32_2 = arith.constant 0 : i32
    %c0_i32_3 = arith.constant 0 : i32
    return %arg0, %c0_i32, %c0_i32_0, %c0_i32_1, %c0_i32_2 : i32, i32, i32, i32, i32
  }
  func.func @transform_6(%arg0: i32) -> (i32, i32, i32, i32, i32) {
    %c0_i32 = arith.constant 0 : i32
    %c0_i32_0 = arith.constant 0 : i32
    %c0_i32_1 = arith.constant 0 : i32
    %c0_i32_2 = arith.constant 0 : i32
    %c0_i32_3 = arith.constant 0 : i32
    return %arg0, %c0_i32, %c0_i32_0, %c0_i32_1, %c0_i32_2 : i32, i32, i32, i32, i32
  }
  func.func @transform_7(%arg0: i32) -> (i32, i32, i32, i32, i32) {
    %c0_i32 = arith.constant 0 : i32
    %c0_i32_0 = arith.constant 0 : i32
    %c0_i32_1 = arith.constant 0 : i32
    %c0_i32_2 = arith.constant 0 : i32
    %c0_i32_3 = arith.constant 0 : i32
    return %arg0, %c0_i32, %c0_i32_0, %c0_i32_1, %c0_i32_2 : i32, i32, i32, i32, i32
  }
  func.func @transform_8(%arg0: i32) -> (i32, i32, i32, i32, i32) {
    %c0_i32 = arith.constant 0 : i32
    %c0_i32_0 = arith.constant 0 : i32
    %c0_i32_1 = arith.constant 0 : i32
    %c0_i32_2 = arith.constant 0 : i32
    %c0_i32_3 = arith.constant 0 : i32
    return %arg0, %c0_i32, %c0_i32_0, %c0_i32_1, %c0_i32_2 : i32, i32, i32, i32, i32
  }
}

module attributes {stable_mosaic.version = 11 : i64} {
  func.func @gates_kernel(%arg0: i32, %arg1: memref<2x512xf32, #tpu.memory_space<vmem>>, %arg2: memref<2x512xf32, #tpu.memory_space<vmem>>, %arg3: memref<2x256xf32, #tpu.memory_space<vmem>>, %arg4: memref<2x256xf32, #tpu.memory_space<vmem>>, %arg5: memref<2x256xf32, #tpu.memory_space<vmem>>, %arg6: memref<2x256xf32, #tpu.memory_space<vmem>>, %arg7: memref<2x256xf32, #tpu.memory_space<vmem>>, %arg8: memref<2x256xf32, #tpu.memory_space<vmem>>, %arg9: memref<1024x512xbf16, #tpu.memory_space<vmem>>, %arg10: memref<512x256xbf16, #tpu.memory_space<vmem>>, %arg11: memref<512x256xbf16, #tpu.memory_space<vmem>>, %arg12: memref<512x256xbf16, #tpu.memory_space<vmem>>, %arg13: memref<4x2xf32, #tpu.memory_space<smem>>, %arg14: memref<2x512xf32, #tpu.memory_space<vmem>>, %arg15: memref<2x256xf32, #tpu.memory_space<vmem>>, %arg16: memref<2x256xf32, #tpu.memory_space<vmem>>, %arg17: memref<2x256xf32, #tpu.memory_space<vmem>>) attributes {dimension_semantics = [#tpu.dimension_semantics<arbitrary>], iteration_bounds = array<i64: 1>, scalar_prefetch = 0 : i64, scratch_operands = 0 : i64, tpu.core_type = #tpu.core_type<tc>, window_params = [{pipeline_mode = #tpu.pipeline_mode<synchronous>, transform_indices = @transform_0, window_bounds = array<i64: 2, 512>}, {pipeline_mode = #tpu.pipeline_mode<synchronous>, transform_indices = @transform_1, window_bounds = array<i64: 2, 512>}, {pipeline_mode = #tpu.pipeline_mode<synchronous>, transform_indices = @transform_2, window_bounds = array<i64: 2, 256>}, {pipeline_mode = #tpu.pipeline_mode<synchronous>, transform_indices = @transform_3, window_bounds = array<i64: 2, 256>}, {pipeline_mode = #tpu.pipeline_mode<synchronous>, transform_indices = @transform_4, window_bounds = array<i64: 2, 256>}, {pipeline_mode = #tpu.pipeline_mode<synchronous>, transform_indices = @transform_5, window_bounds = array<i64: 2, 256>}, {pipeline_mode = #tpu.pipeline_mode<synchronous>, transform_indices = @transform_6, window_bounds = array<i64: 2, 256>}, {pipeline_mode = #tpu.pipeline_mode<synchronous>, transform_indices = @transform_7, window_bounds = array<i64: 2, 256>}, {pipeline_mode = #tpu.pipeline_mode<synchronous>, transform_indices = @transform_8, window_bounds = array<i64: 1024, 512>}, {pipeline_mode = #tpu.pipeline_mode<synchronous>, transform_indices = @transform_9, window_bounds = array<i64: 512, 256>}, {pipeline_mode = #tpu.pipeline_mode<synchronous>, transform_indices = @transform_10, window_bounds = array<i64: 512, 256>}, {pipeline_mode = #tpu.pipeline_mode<synchronous>, transform_indices = @transform_11, window_bounds = array<i64: 512, 256>}, {transform_indices = @transform_12, window_bounds = array<i64: 4, 2>}, {pipeline_mode = #tpu.pipeline_mode<synchronous>, transform_indices = @transform_13, window_bounds = array<i64: 2, 512>}, {pipeline_mode = #tpu.pipeline_mode<synchronous>, transform_indices = @transform_14, window_bounds = array<i64: 2, 256>}, {pipeline_mode = #tpu.pipeline_mode<synchronous>, transform_indices = @transform_15, window_bounds = array<i64: 2, 256>}, {pipeline_mode = #tpu.pipeline_mode<synchronous>, transform_indices = @transform_16, window_bounds = array<i64: 2, 256>}]} {
    %c0 = arith.constant 0 : index
    %c0_0 = arith.constant 0 : index
    %0 = vector.load %arg1[%c0, %c0_0] : memref<2x512xf32, #tpu.memory_space<vmem>>, vector<2x512xf32>
    %c0_1 = arith.constant 0 : index
    %c0_2 = arith.constant 0 : index
    %1 = vector.load %arg2[%c0_1, %c0_2] : memref<2x512xf32, #tpu.memory_space<vmem>>, vector<2x512xf32>
    %2 = tpu.concatenate %0, %1 in 1 : vector<2x512xf32>, vector<2x512xf32> -> vector<2x1024xf32>
    %3 = arith.truncf %2 : vector<2x1024xf32> to vector<2x1024xbf16>
    %c0_3 = arith.constant 0 : index
    %c0_4 = arith.constant 0 : index
    %4 = vector.load %arg9[%c0_3, %c0_4] : memref<1024x512xbf16, #tpu.memory_space<vmem>>, vector<1024x512xbf16>
    %cst = arith.constant dense<0.000000e+00> : vector<2x512xf32>
    %5 = tpu.matmul %3, %4, %cst {dimension_numbers = #tpu.dot_dimension_numbers<[1], [0], [0], [1], [0, 0, 1, 1], [], []>} : vector<2x1024xbf16>, vector<1024x512xbf16>, vector<2x512xf32> -> vector<2x512xf32>
    %6 = vector.shape_cast %5 : vector<2x512xf32> to vector<1x2x512xf32>
    %cst_5 = arith.constant dense<0.000000e+00> : vector<1xf32>
    %7 = vector.multi_reduction <add>, %6, %cst_5 [1, 2] : vector<1x2x512xf32> to vector<1xf32>
    %8 = vector.shape_cast %7 : vector<1xf32> to vector<1x1x1xf32>
    %9 = vector.extract %8[0, 0, 0] : f32 from vector<1x1x1xf32>
    %cst_6 = arith.constant 1.024000e+03 : f32
    %10 = arith.divf %9, %cst_6 : f32
    %11 = vector.broadcast %10 : f32 to vector<2x512xf32>
    %12 = arith.subf %5, %11 : vector<2x512xf32>
    %13 = arith.mulf %12, %12 : vector<2x512xf32>
    %14 = vector.shape_cast %13 : vector<2x512xf32> to vector<1x2x512xf32>
    %cst_7 = arith.constant dense<0.000000e+00> : vector<1xf32>
    %15 = vector.multi_reduction <add>, %14, %cst_7 [1, 2] : vector<1x2x512xf32> to vector<1xf32>
    %16 = vector.shape_cast %15 : vector<1xf32> to vector<1x1x1xf32>
    %17 = vector.extract %16[0, 0, 0] : f32 from vector<1x1x1xf32>
    %cst_8 = arith.constant 1.024000e+03 : f32
    %18 = arith.divf %17, %cst_8 : f32
    %19 = vector.broadcast %10 : f32 to vector<2x512xf32>
    %20 = arith.subf %5, %19 : vector<2x512xf32>
    %cst_9 = arith.constant 9.99999974E-6 : f32
    %21 = arith.addf %18, %cst_9 : f32
    %22 = math.rsqrt %21 : f32
    %23 = vector.broadcast %22 : f32 to vector<2x512xf32>
    %24 = arith.mulf %20, %23 : vector<2x512xf32>
    %c0_10 = arith.constant 0 : index
    %c0_11 = arith.constant 0 : index
    %25 = memref.load %arg13[%c0_10, %c0_11] : memref<4x2xf32, #tpu.memory_space<smem>>
    %26 = vector.broadcast %25 : f32 to vector<2x512xf32>
    %27 = arith.mulf %24, %26 : vector<2x512xf32>
    %c0_12 = arith.constant 0 : index
    %c1 = arith.constant 1 : index
    %28 = memref.load %arg13[%c0_12, %c1] : memref<4x2xf32, #tpu.memory_space<smem>>
    %29 = vector.broadcast %28 : f32 to vector<2x512xf32>
    %30 = arith.addf %27, %29 : vector<2x512xf32>
    %cst_13 = arith.constant 0.000000e+00 : f32
    %31 = vector.broadcast %cst_13 : f32 to vector<2x512xf32>
    %32 = arith.subf %31, %30 : vector<2x512xf32>
    %33 = math.exp %32 : vector<2x512xf32>
    %cst_14 = arith.constant 1.000000e+00 : f32
    %34 = vector.broadcast %cst_14 : f32 to vector<2x512xf32>
    %35 = arith.addf %34, %33 : vector<2x512xf32>
    %cst_15 = arith.constant 1.000000e+00 : f32
    %36 = vector.broadcast %cst_15 : f32 to vector<2x512xf32>
    %37 = arith.divf %36, %35 : vector<2x512xf32>
    %c0_16 = arith.constant 0 : index
    %c0_17 = arith.constant 0 : index
    %38 = vector.load %arg14[%c0_16, %c0_17] : memref<2x512xf32, #tpu.memory_space<vmem>>, vector<2x512xf32>
    tpu.vector_store %arg14[%c0_16, %c0_17], %37 {strides = array<i32>} : memref<2x512xf32, #tpu.memory_space<vmem>>, vector<2x512xf32>,
    %c0_18 = arith.constant 0 : index
    %c0_19 = arith.constant 0 : index
    %39 = vector.load %arg3[%c0_18, %c0_19] : memref<2x256xf32, #tpu.memory_space<vmem>>, vector<2x256xf32>
    %c0_20 = arith.constant 0 : index
    %c0_21 = arith.constant 0 : index
    %40 = vector.load %arg4[%c0_20, %c0_21] : memref<2x256xf32, #tpu.memory_space<vmem>>, vector<2x256xf32>
    %41 = tpu.concatenate %39, %40 in 1 : vector<2x256xf32>, vector<2x256xf32> -> vector<2x512xf32>
    %42 = arith.truncf %41 : vector<2x512xf32> to vector<2x512xbf16>
    %c0_22 = arith.constant 0 : index
    %c0_23 = arith.constant 0 : index
    %43 = vector.load %arg10[%c0_22, %c0_23] : memref<512x256xbf16, #tpu.memory_space<vmem>>, vector<512x256xbf16>
    %cst_24 = arith.constant dense<0.000000e+00> : vector<2x256xf32>
    %44 = tpu.matmul %42, %43, %cst_24 {dimension_numbers = #tpu.dot_dimension_numbers<[1], [0], [0], [1], [0, 0, 1, 1], [], []>} : vector<2x512xbf16>, vector<512x256xbf16>, vector<2x256xf32> -> vector<2x256xf32>
    %45 = vector.shape_cast %44 : vector<2x256xf32> to vector<1x2x256xf32>
    %cst_25 = arith.constant dense<0.000000e+00> : vector<1xf32>
    %46 = vector.multi_reduction <add>, %45, %cst_25 [1, 2] : vector<1x2x256xf32> to vector<1xf32>
    %47 = vector.shape_cast %46 : vector<1xf32> to vector<1x1x1xf32>
    %48 = vector.extract %47[0, 0, 0] : f32 from vector<1x1x1xf32>
    %cst_26 = arith.constant 5.120000e+02 : f32
    %49 = arith.divf %48, %cst_26 : f32
    %50 = vector.broadcast %49 : f32 to vector<2x256xf32>
    %51 = arith.subf %44, %50 : vector<2x256xf32>
    %52 = arith.mulf %51, %51 : vector<2x256xf32>
    %53 = vector.shape_cast %52 : vector<2x256xf32> to vector<1x2x256xf32>
    %cst_27 = arith.constant dense<0.000000e+00> : vector<1xf32>
    %54 = vector.multi_reduction <add>, %53, %cst_27 [1, 2] : vector<1x2x256xf32> to vector<1xf32>
    %55 = vector.shape_cast %54 : vector<1xf32> to vector<1x1x1xf32>
    %56 = vector.extract %55[0, 0, 0] : f32 from vector<1x1x1xf32>
    %cst_28 = arith.constant 5.120000e+02 : f32
    %57 = arith.divf %56, %cst_28 : f32
    %58 = vector.broadcast %49 : f32 to vector<2x256xf32>
    %59 = arith.subf %44, %58 : vector<2x256xf32>
    %cst_29 = arith.constant 9.99999974E-6 : f32
    %60 = arith.addf %57, %cst_29 : f32
    %61 = math.rsqrt %60 : f32
    %62 = vector.broadcast %61 : f32 to vector<2x256xf32>
    %63 = arith.mulf %59, %62 : vector<2x256xf32>
    %c1_30 = arith.constant 1 : index
    %c0_31 = arith.constant 0 : index
    %64 = memref.load %arg13[%c1_30, %c0_31] : memref<4x2xf32, #tpu.memory_space<smem>>
    %65 = vector.broadcast %64 : f32 to vector<2x256xf32>
    %66 = arith.mulf %63, %65 : vector<2x256xf32>
    %c1_32 = arith.constant 1 : index
    %c1_33 = arith.constant 1 : index
    %67 = memref.load %arg13[%c1_32, %c1_33] : memref<4x2xf32, #tpu.memory_space<smem>>
    %68 = vector.broadcast %67 : f32 to vector<2x256xf32>
    %69 = arith.addf %66, %68 : vector<2x256xf32>
    %cst_34 = arith.constant 0.000000e+00 : f32
    %70 = vector.broadcast %cst_34 : f32 to vector<2x256xf32>
    %71 = arith.subf %70, %69 : vector<2x256xf32>
    %72 = math.exp %71 : vector<2x256xf32>
    %cst_35 = arith.constant 1.000000e+00 : f32
    %73 = vector.broadcast %cst_35 : f32 to vector<2x256xf32>
    %74 = arith.addf %73, %72 : vector<2x256xf32>
    %cst_36 = arith.constant 1.000000e+00 : f32
    %75 = vector.broadcast %cst_36 : f32 to vector<2x256xf32>
    %76 = arith.divf %75, %74 : vector<2x256xf32>
    %c0_37 = arith.constant 0 : index
    %c0_38 = arith.constant 0 : index
    %77 = vector.load %arg15[%c0_37, %c0_38] : memref<2x256xf32, #tpu.memory_space<vmem>>, vector<2x256xf32>
    tpu.vector_store %arg15[%c0_37, %c0_38], %76 {strides = array<i32>} : memref<2x256xf32, #tpu.memory_space<vmem>>, vector<2x256xf32>,
    %c0_39 = arith.constant 0 : index
    %c0_40 = arith.constant 0 : index
    %78 = vector.load %arg5[%c0_39, %c0_40] : memref<2x256xf32, #tpu.memory_space<vmem>>, vector<2x256xf32>
    %c0_41 = arith.constant 0 : index
    %c0_42 = arith.constant 0 : index
    %79 = vector.load %arg6[%c0_41, %c0_42] : memref<2x256xf32, #tpu.memory_space<vmem>>, vector<2x256xf32>
    %80 = tpu.concatenate %78, %79 in 1 : vector<2x256xf32>, vector<2x256xf32> -> vector<2x512xf32>
    %81 = arith.truncf %80 : vector<2x512xf32> to vector<2x512xbf16>
    %c0_43 = arith.constant 0 : index
    %c0_44 = arith.constant 0 : index
    %82 = vector.load %arg11[%c0_43, %c0_44] : memref<512x256xbf16, #tpu.memory_space<vmem>>, vector<512x256xbf16>
    %cst_45 = arith.constant dense<0.000000e+00> : vector<2x256xf32>
    %83 = tpu.matmul %81, %82, %cst_45 {dimension_numbers = #tpu.dot_dimension_numbers<[1], [0], [0], [1], [0, 0, 1, 1], [], []>} : vector<2x512xbf16>, vector<512x256xbf16>, vector<2x256xf32> -> vector<2x256xf32>
    %84 = vector.shape_cast %83 : vector<2x256xf32> to vector<1x2x256xf32>
    %cst_46 = arith.constant dense<0.000000e+00> : vector<1xf32>
    %85 = vector.multi_reduction <add>, %84, %cst_46 [1, 2] : vector<1x2x256xf32> to vector<1xf32>
    %86 = vector.shape_cast %85 : vector<1xf32> to vector<1x1x1xf32>
    %87 = vector.extract %86[0, 0, 0] : f32 from vector<1x1x1xf32>
    %cst_47 = arith.constant 5.120000e+02 : f32
    %88 = arith.divf %87, %cst_47 : f32
    %89 = vector.broadcast %88 : f32 to vector<2x256xf32>
    %90 = arith.subf %83, %89 : vector<2x256xf32>
    %91 = arith.mulf %90, %90 : vector<2x256xf32>
    %92 = vector.shape_cast %91 : vector<2x256xf32> to vector<1x2x256xf32>
    %cst_48 = arith.constant dense<0.000000e+00> : vector<1xf32>
    %93 = vector.multi_reduction <add>, %92, %cst_48 [1, 2] : vector<1x2x256xf32> to vector<1xf32>
    %94 = vector.shape_cast %93 : vector<1xf32> to vector<1x1x1xf32>
    %95 = vector.extract %94[0, 0, 0] : f32 from vector<1x1x1xf32>
    %cst_49 = arith.constant 5.120000e+02 : f32
    %96 = arith.divf %95, %cst_49 : f32
    %97 = vector.broadcast %88 : f32 to vector<2x256xf32>
    %98 = arith.subf %83, %97 : vector<2x256xf32>
    %cst_50 = arith.constant 9.99999974E-6 : f32
    %99 = arith.addf %96, %cst_50 : f32
    %100 = math.rsqrt %99 : f32
    %101 = vector.broadcast %100 : f32 to vector<2x256xf32>
    %102 = arith.mulf %98, %101 : vector<2x256xf32>
    %c2 = arith.constant 2 : index
    %c0_51 = arith.constant 0 : index
    %103 = memref.load %arg13[%c2, %c0_51] : memref<4x2xf32, #tpu.memory_space<smem>>
    %104 = vector.broadcast %103 : f32 to vector<2x256xf32>
    %105 = arith.mulf %102, %104 : vector<2x256xf32>
    %c2_52 = arith.constant 2 : index
    %c1_53 = arith.constant 1 : index
    %106 = memref.load %arg13[%c2_52, %c1_53] : memref<4x2xf32, #tpu.memory_space<smem>>
    %107 = vector.broadcast %106 : f32 to vector<2x256xf32>
    %108 = arith.addf %105, %107 : vector<2x256xf32>
    %cst_54 = arith.constant 0.000000e+00 : f32
    %109 = vector.broadcast %cst_54 : f32 to vector<2x256xf32>
    %110 = arith.subf %109, %108 : vector<2x256xf32>
    %111 = math.exp %110 : vector<2x256xf32>
    %cst_55 = arith.constant 1.000000e+00 : f32
    %112 = vector.broadcast %cst_55 : f32 to vector<2x256xf32>
    %113 = arith.addf %112, %111 : vector<2x256xf32>
    %cst_56 = arith.constant 1.000000e+00 : f32
    %114 = vector.broadcast %cst_56 : f32 to vector<2x256xf32>
    %115 = arith.divf %114, %113 : vector<2x256xf32>
    %c0_57 = arith.constant 0 : index
    %c0_58 = arith.constant 0 : index
    %116 = vector.load %arg16[%c0_57, %c0_58] : memref<2x256xf32, #tpu.memory_space<vmem>>, vector<2x256xf32>
    tpu.vector_store %arg16[%c0_57, %c0_58], %115 {strides = array<i32>} : memref<2x256xf32, #tpu.memory_space<vmem>>, vector<2x256xf32>,
    %c0_59 = arith.constant 0 : index
    %c0_60 = arith.constant 0 : index
    %117 = vector.load %arg7[%c0_59, %c0_60] : memref<2x256xf32, #tpu.memory_space<vmem>>, vector<2x256xf32>
    %c0_61 = arith.constant 0 : index
    %c0_62 = arith.constant 0 : index
    %118 = vector.load %arg8[%c0_61, %c0_62] : memref<2x256xf32, #tpu.memory_space<vmem>>, vector<2x256xf32>
    %119 = tpu.concatenate %117, %118 in 1 : vector<2x256xf32>, vector<2x256xf32> -> vector<2x512xf32>
    %120 = arith.truncf %119 : vector<2x512xf32> to vector<2x512xbf16>
    %c0_63 = arith.constant 0 : index
    %c0_64 = arith.constant 0 : index
    %121 = vector.load %arg12[%c0_63, %c0_64] : memref<512x256xbf16, #tpu.memory_space<vmem>>, vector<512x256xbf16>
    %cst_65 = arith.constant dense<0.000000e+00> : vector<2x256xf32>
    %122 = tpu.matmul %120, %121, %cst_65 {dimension_numbers = #tpu.dot_dimension_numbers<[1], [0], [0], [1], [0, 0, 1, 1], [], []>} : vector<2x512xbf16>, vector<512x256xbf16>, vector<2x256xf32> -> vector<2x256xf32>
    %123 = vector.shape_cast %122 : vector<2x256xf32> to vector<1x2x256xf32>
    %cst_66 = arith.constant dense<0.000000e+00> : vector<1xf32>
    %124 = vector.multi_reduction <add>, %123, %cst_66 [1, 2] : vector<1x2x256xf32> to vector<1xf32>
    %125 = vector.shape_cast %124 : vector<1xf32> to vector<1x1x1xf32>
    %126 = vector.extract %125[0, 0, 0] : f32 from vector<1x1x1xf32>
    %cst_67 = arith.constant 5.120000e+02 : f32
    %127 = arith.divf %126, %cst_67 : f32
    %128 = vector.broadcast %127 : f32 to vector<2x256xf32>
    %129 = arith.subf %122, %128 : vector<2x256xf32>
    %130 = arith.mulf %129, %129 : vector<2x256xf32>
    %131 = vector.shape_cast %130 : vector<2x256xf32> to vector<1x2x256xf32>
    %cst_68 = arith.constant dense<0.000000e+00> : vector<1xf32>
    %132 = vector.multi_reduction <add>, %131, %cst_68 [1, 2] : vector<1x2x256xf32> to vector<1xf32>
    %133 = vector.shape_cast %132 : vector<1xf32> to vector<1x1x1xf32>
    %134 = vector.extract %133[0, 0, 0] : f32 from vector<1x1x1xf32>
    %cst_69 = arith.constant 5.120000e+02 : f32
    %135 = arith.divf %134, %cst_69 : f32
    %136 = vector.broadcast %127 : f32 to vector<2x256xf32>
    %137 = arith.subf %122, %136 : vector<2x256xf32>
    %cst_70 = arith.constant 9.99999974E-6 : f32
    %138 = arith.addf %135, %cst_70 : f32
    %139 = math.rsqrt %138 : f32
    %140 = vector.broadcast %139 : f32 to vector<2x256xf32>
    %141 = arith.mulf %137, %140 : vector<2x256xf32>
    %c3 = arith.constant 3 : index
    %c0_71 = arith.constant 0 : index
    %142 = memref.load %arg13[%c3, %c0_71] : memref<4x2xf32, #tpu.memory_space<smem>>
    %143 = vector.broadcast %142 : f32 to vector<2x256xf32>
    %144 = arith.mulf %141, %143 : vector<2x256xf32>
    %c3_72 = arith.constant 3 : index
    %c1_73 = arith.constant 1 : index
    %145 = memref.load %arg13[%c3_72, %c1_73] : memref<4x2xf32, #tpu.memory_space<smem>>
    %146 = vector.broadcast %145 : f32 to vector<2x256xf32>
    %147 = arith.addf %144, %146 : vector<2x256xf32>
    %cst_74 = arith.constant 0.000000e+00 : f32
    %148 = vector.broadcast %cst_74 : f32 to vector<2x256xf32>
    %149 = arith.subf %148, %147 : vector<2x256xf32>
    %150 = math.exp %149 : vector<2x256xf32>
    %cst_75 = arith.constant 1.000000e+00 : f32
    %151 = vector.broadcast %cst_75 : f32 to vector<2x256xf32>
    %152 = arith.addf %151, %150 : vector<2x256xf32>
    %cst_76 = arith.constant 1.000000e+00 : f32
    %153 = vector.broadcast %cst_76 : f32 to vector<2x256xf32>
    %154 = arith.divf %153, %152 : vector<2x256xf32>
    %c0_77 = arith.constant 0 : index
    %c0_78 = arith.constant 0 : index
    %155 = vector.load %arg17[%c0_77, %c0_78] : memref<2x256xf32, #tpu.memory_space<vmem>>, vector<2x256xf32>
    tpu.vector_store %arg17[%c0_77, %c0_78], %154 {strides = array<i32>} : memref<2x256xf32, #tpu.memory_space<vmem>>, vector<2x256xf32>,
    return
  }
  func.func @transform_0(%arg0: i32) -> (i32, i32) {
    %c0_i32 = arith.constant 0 : i32
    %c0_i32_0 = arith.constant 0 : i32
    %c0_i32_1 = arith.constant 0 : i32
    return %c0_i32, %c0_i32_0 : i32, i32
  }
  func.func @transform_1(%arg0: i32) -> (i32, i32) {
    %c0_i32 = arith.constant 0 : i32
    %c0_i32_0 = arith.constant 0 : i32
    %c0_i32_1 = arith.constant 0 : i32
    return %c0_i32, %c0_i32_0 : i32, i32
  }
  func.func @transform_2(%arg0: i32) -> (i32, i32) {
    %c0_i32 = arith.constant 0 : i32
    %c0_i32_0 = arith.constant 0 : i32
    %c0_i32_1 = arith.constant 0 : i32
    return %c0_i32, %c0_i32_0 : i32, i32
  }
  func.func @transform_3(%arg0: i32) -> (i32, i32) {
    %c0_i32 = arith.constant 0 : i32
    %c0_i32_0 = arith.constant 0 : i32
    %c0_i32_1 = arith.constant 0 : i32
    return %c0_i32, %c0_i32_0 : i32, i32
  }
  func.func @transform_4(%arg0: i32) -> (i32, i32) {
    %c0_i32 = arith.constant 0 : i32
    %c0_i32_0 = arith.constant 0 : i32
    %c0_i32_1 = arith.constant 0 : i32
    return %c0_i32, %c0_i32_0 : i32, i32
  }
  func.func @transform_5(%arg0: i32) -> (i32, i32) {
    %c0_i32 = arith.constant 0 : i32
    %c0_i32_0 = arith.constant 0 : i32
    %c0_i32_1 = arith.constant 0 : i32
    return %c0_i32, %c0_i32_0 : i32, i32
  }
  func.func @transform_6(%arg0: i32) -> (i32, i32) {
    %c0_i32 = arith.constant 0 : i32
    %c0_i32_0 = arith.constant 0 : i32
    %c0_i32_1 = arith.constant 0 : i32
    return %c0_i32, %c0_i32_0 : i32, i32
  }
  func.func @transform_7(%arg0: i32) -> (i32, i32) {
    %c0_i32 = arith.constant 0 : i32
    %c0_i32_0 = arith.constant 0 : i32
    %c0_i32_1 = arith.constant 0 : i32
    return %c0_i32, %c0_i32_0 : i32, i32
  }
  func.func @transform_8(%arg0: i32) -> (i32, i32) {
    %c0_i32 = arith.constant 0 : i32
    %c0_i32_0 = arith.constant 0 : i32
    %c0_i32_1 = arith.constant 0 : i32
    return %c0_i32, %c0_i32_0 : i32, i32
  }
  func.func @transform_9(%arg0: i32) -> (i32, i32) {
    %c0_i32 = arith.constant 0 : i32
    %c0_i32_0 = arith.constant 0 : i32
    %c0_i32_1 = arith.constant 0 : i32
    return %c0_i32, %c0_i32_0 : i32, i32
  }
  func.func @transform_10(%arg0: i32) -> (i32, i32) {
    %c0_i32 = arith.constant 0 : i32
    %c0_i32_0 = arith.constant 0 : i32
    %c0_i32_1 = arith.constant 0 : i32
    return %c0_i32, %c0_i32_0 : i32, i32
  }
  func.func @transform_11(%arg0: i32) -> (i32, i32) {
    %c0_i32 = arith.constant 0 : i32
    %c0_i32_0 = arith.constant 0 : i32
    %c0_i32_1 = arith.constant 0 : i32
    return %c0_i32, %c0_i32_0 : i32, i32
  }
  func.func @transform_12(%arg0: i32) -> (i32, i32) {
    %c0_i32 = arith.constant 0 : i32
    %c0_i32_0 = arith.constant 0 : i32
    %c0_i32_1 = arith.constant 0 : i32
    return %c0_i32, %c0_i32_0 : i32, i32
  }
  func.func @transform_13(%arg0: i32) -> (i32, i32) {
    %c0_i32 = arith.constant 0 : i32
    %c0_i32_0 = arith.constant 0 : i32
    %c0_i32_1 = arith.constant 0 : i32
    return %c0_i32, %c0_i32_0 : i32, i32
  }
  func.func @transform_14(%arg0: i32) -> (i32, i32) {
    %c0_i32 = arith.constant 0 : i32
    %c0_i32_0 = arith.constant 0 : i32
    %c0_i32_1 = arith.constant 0 : i32
    return %c0_i32, %c0_i32_0 : i32, i32
  }
  func.func @transform_15(%arg0: i32) -> (i32, i32) {
    %c0_i32 = arith.constant 0 : i32
    %c0_i32_0 = arith.constant 0 : i32
    %c0_i32_1 = arith.constant 0 : i32
    return %c0_i32, %c0_i32_0 : i32, i32
  }
  func.func @transform_16(%arg0: i32) -> (i32, i32) {
    %c0_i32 = arith.constant 0 : i32
    %c0_i32_0 = arith.constant 0 : i32
    %c0_i32_1 = arith.constant 0 : i32
    return %c0_i32, %c0_i32_0 : i32, i32
  }
}

module attributes {stable_mosaic.version = 11 : i64} {
  func.func @apply_kernel(%arg0: i32, %arg1: memref<1x4x8x8x8xf32, #tpu.memory_space<vmem>>, %arg2: memref<1x1x8x8x8xf32, #tpu.memory_space<vmem>>, %arg3: memref<1x4x1x8x8xf32, #tpu.memory_space<vmem>>, %arg4: memref<1x4x8x1x8xf32, #tpu.memory_space<vmem>>, %arg5: memref<1x4x8x8x1xf32, #tpu.memory_space<vmem>>, %arg6: memref<1x4x8x8x8xf32, #tpu.memory_space<vmem>>) attributes {dimension_semantics = [#tpu.dimension_semantics<parallel>], iteration_bounds = array<i64: 2>, scalar_prefetch = 0 : i64, scratch_operands = 0 : i64, tpu.core_type = #tpu.core_type<tc>, window_params = [{transform_indices = @transform_0, window_bounds = array<i64: 1, 4, 8, 8, 8>}, {transform_indices = @transform_1, window_bounds = array<i64: 1, 1, 8, 8, 8>}, {transform_indices = @transform_2, window_bounds = array<i64: 1, 4, 1, 8, 8>}, {transform_indices = @transform_3, window_bounds = array<i64: 1, 4, 8, 1, 8>}, {transform_indices = @transform_4, window_bounds = array<i64: 1, 4, 8, 8, 1>}, {transform_indices = @transform_5, window_bounds = array<i64: 1, 4, 8, 8, 8>}]} {
    %c0 = arith.constant 0 : index
    %c0_0 = arith.constant 0 : index
    %c0_1 = arith.constant 0 : index
    %c0_2 = arith.constant 0 : index
    %c0_3 = arith.constant 0 : index
    %0 = vector.load %arg1[%c0, %c0_0, %c0_1, %c0_2, %c0_3] : memref<1x4x8x8x8xf32, #tpu.memory_space<vmem>>, vector<1x4x8x8x8xf32>
    %1 = vector.shape_cast %0 : vector<1x4x8x8x8xf32> to vector<4x8x8x8xf32>
    %c0_4 = arith.constant 0 : index
    %c0_5 = arith.constant 0 : index
    %c0_6 = arith.constant 0 : index
    %c0_7 = arith.constant 0 : index
    %c0_8 = arith.constant 0 : index
    %2 = vector.load %arg2[%c0_4, %c0_5, %c0_6, %c0_7, %c0_8] : memref<1x1x8x8x8xf32, #tpu.memory_space<vmem>>, vector<1x1x8x8x8xf32>
    %3 = vector.shape_cast %2 : vector<1x1x8x8x8xf32> to vector<1x8x8x8xf32>
    %c0_9 = arith.constant 0 : index
    %c0_10 = arith.constant 0 : index
    %c0_11 = arith.constant 0 : index
    %c0_12 = arith.constant 0 : index
    %c0_13 = arith.constant 0 : index
    %4 = vector.load %arg3[%c0_9, %c0_10, %c0_11, %c0_12, %c0_13] : memref<1x4x1x8x8xf32, #tpu.memory_space<vmem>>, vector<1x4x1x8x8xf32>
    %5 = vector.shape_cast %4 : vector<1x4x1x8x8xf32> to vector<4x1x8x8xf32>
    %6 = vector.broadcast %3 : vector<1x8x8x8xf32> to vector<4x8x8x8xf32>
    %7 = vector.broadcast %5 : vector<4x1x8x8xf32> to vector<4x8x8x8xf32>
    %8 = arith.addf %6, %7 : vector<4x8x8x8xf32>
    %c0_14 = arith.constant 0 : index
    %c0_15 = arith.constant 0 : index
    %c0_16 = arith.constant 0 : index
    %c0_17 = arith.constant 0 : index
    %c0_18 = arith.constant 0 : index
    %9 = vector.load %arg4[%c0_14, %c0_15, %c0_16, %c0_17, %c0_18] : memref<1x4x8x1x8xf32, #tpu.memory_space<vmem>>, vector<1x4x8x1x8xf32>
    %10 = vector.shape_cast %9 : vector<1x4x8x1x8xf32> to vector<4x8x1x8xf32>
    %11 = vector.broadcast %10 : vector<4x8x1x8xf32> to vector<4x8x8x8xf32>
    %12 = arith.addf %8, %11 : vector<4x8x8x8xf32>
    %c0_19 = arith.constant 0 : index
    %c0_20 = arith.constant 0 : index
    %c0_21 = arith.constant 0 : index
    %c0_22 = arith.constant 0 : index
    %c0_23 = arith.constant 0 : index
    %13 = vector.load %arg5[%c0_19, %c0_20, %c0_21, %c0_22, %c0_23] : memref<1x4x8x8x1xf32, #tpu.memory_space<vmem>>, vector<1x4x8x8x1xf32>
    %14 = vector.shape_cast %13 : vector<1x4x8x8x1xf32> to vector<4x8x8x1xf32>
    %15 = vector.broadcast %14 : vector<4x8x8x1xf32> to vector<4x8x8x8xf32>
    %16 = arith.addf %12, %15 : vector<4x8x8x8xf32>
    %cst = arith.constant 2.500000e-01 : f32
    %17 = vector.broadcast %cst : f32 to vector<4x8x8x8xf32>
    %18 = arith.mulf %17, %16 : vector<4x8x8x8xf32>
    %19 = arith.mulf %1, %18 : vector<4x8x8x8xf32>
    %c0_24 = arith.constant 0 : index
    %c0_25 = arith.constant 0 : index
    %c0_26 = arith.constant 0 : index
    %c0_27 = arith.constant 0 : index
    %c0_28 = arith.constant 0 : index
    %20 = vector.load %arg6[%c0_24, %c0_25, %c0_26, %c0_27, %c0_28] : memref<1x4x8x8x8xf32, #tpu.memory_space<vmem>>, vector<1x4x8x8x8xf32>
    %21 = vector.shape_cast %20 : vector<1x4x8x8x8xf32> to vector<4x8x8x8xf32>
    %22 = vector.shape_cast %19 : vector<4x8x8x8xf32> to vector<1x4x8x8x8xf32>
    tpu.vector_store %arg6[%c0_24, %c0_25, %c0_26, %c0_27, %c0_28], %22 {strides = array<i32>} : memref<1x4x8x8x8xf32, #tpu.memory_space<vmem>>, vector<1x4x8x8x8xf32>,
    return
  }
  func.func @transform_0(%arg0: i32) -> (i32, i32, i32, i32, i32) {
    %c0_i32 = arith.constant 0 : i32
    %c0_i32_0 = arith.constant 0 : i32
    %c0_i32_1 = arith.constant 0 : i32
    %c0_i32_2 = arith.constant 0 : i32
    %c0_i32_3 = arith.constant 0 : i32
    return %arg0, %c0_i32, %c0_i32_0, %c0_i32_1, %c0_i32_2 : i32, i32, i32, i32, i32
  }
  func.func @transform_1(%arg0: i32) -> (i32, i32, i32, i32, i32) {
    %c0_i32 = arith.constant 0 : i32
    %c0_i32_0 = arith.constant 0 : i32
    %c0_i32_1 = arith.constant 0 : i32
    %c0_i32_2 = arith.constant 0 : i32
    %c0_i32_3 = arith.constant 0 : i32
    return %arg0, %c0_i32, %c0_i32_0, %c0_i32_1, %c0_i32_2 : i32, i32, i32, i32, i32
  }
  func.func @transform_2(%arg0: i32) -> (i32, i32, i32, i32, i32) {
    %c0_i32 = arith.constant 0 : i32
    %c0_i32_0 = arith.constant 0 : i32
    %c0_i32_1 = arith.constant 0 : i32
    %c0_i32_2 = arith.constant 0 : i32
    %c0_i32_3 = arith.constant 0 : i32
    return %arg0, %c0_i32, %c0_i32_0, %c0_i32_1, %c0_i32_2 : i32, i32, i32, i32, i32
  }
  func.func @transform_3(%arg0: i32) -> (i32, i32, i32, i32, i32) {
    %c0_i32 = arith.constant 0 : i32
    %c0_i32_0 = arith.constant 0 : i32
    %c0_i32_1 = arith.constant 0 : i32
    %c0_i32_2 = arith.constant 0 : i32
    %c0_i32_3 = arith.constant 0 : i32
    return %arg0, %c0_i32, %c0_i32_0, %c0_i32_1, %c0_i32_2 : i32, i32, i32, i32, i32
  }
  func.func @transform_4(%arg0: i32) -> (i32, i32, i32, i32, i32) {
    %c0_i32 = arith.constant 0 : i32
    %c0_i32_0 = arith.constant 0 : i32
    %c0_i32_1 = arith.constant 0 : i32
    %c0_i32_2 = arith.constant 0 : i32
    %c0_i32_3 = arith.constant 0 : i32
    return %arg0, %c0_i32, %c0_i32_0, %c0_i32_1, %c0_i32_2 : i32, i32, i32, i32, i32
  }
  func.func @transform_5(%arg0: i32) -> (i32, i32, i32, i32, i32) {
    %c0_i32 = arith.constant 0 : i32
    %c0_i32_0 = arith.constant 0 : i32
    %c0_i32_1 = arith.constant 0 : i32
    %c0_i32_2 = arith.constant 0 : i32
    %c0_i32_3 = arith.constant 0 : i32
    return %arg0, %c0_i32, %c0_i32_0, %c0_i32_1, %c0_i32_2 : i32, i32, i32, i32, i32
  }
}

</mosaic_0001>

<llo_original>
// kernel: triplet_attention_pallas.3
$region0: #{triplet_attention_pallas.3}
  #allocation0 [shape = 'u32[]', space=smem, size = 0x4, offset = 0x4, fixed_abs, tag = 'smem constant byte address 0x4 - core index']
  #allocation1 [shape = 'u32[144,128]{1,0:T(1,128)}', space=vmem, size = 0x12000, scoped, tag = 'internal scratch']
  %s0 = inlined_call_operand.hbm [shape: f32[2,4,8,8,8], index: 0, kind: input, shape index: {}]
  %s1 = inlined_call_operand.vmem [shape: f32[2,1,8,8,8], index: 1, kind: output, shape index: {0}]
  %s2 = inlined_call_operand.vmem [shape: f32[2,1,8,8,8], index: 2, kind: output, shape index: {1}]
  %s3 = inlined_call_operand.vmem [shape: f32[2,4,1,8,8], index: 3, kind: output, shape index: {2}]
  %s4 = inlined_call_operand.vmem [shape: f32[2,4,1,8,8], index: 4, kind: output, shape index: {3}]
  %s5 = inlined_call_operand.vmem [shape: f32[2,4,8,1,8], index: 5, kind: output, shape index: {4}]
  %s6 = inlined_call_operand.vmem [shape: f32[2,4,8,1,8], index: 6, kind: output, shape index: {5}]
  %s7 = inlined_call_operand.vmem [shape: f32[2,4,8,8,1], index: 7, kind: output, shape index: {6}]
  %s8 = inlined_call_operand.vmem [shape: f32[2,4,8,8,1], index: 8, kind: output, shape index: {7}]
  %9 = xla_tuple %s1, %s2, %s3, %s4, %s5, %s6, %s7, %s8
  %s10 = sld [smem:[#allocation0]]
  $region97: #{triplet_attention_pallas.3} parent=0
    _
  %s12 = ssub.s32 1, %s10
  %s13 = scalar_select 0, %s12, %s10
  $region1: #{triplet_attention_pallas.3} parent=0
    #allocation2 [shape = 'u8[262144]{0}', space=vmem, size = 0x40000, scoped, tag = 'input window, operand 0']
    #allocation3 [shape = 's32[2]{0}', space=sflag, size = 0x8, scoped, tag = 'scoped memory for triplet_attention_pallas.3']
    %14 = vsyncpa [#allocation3], 0
    %s15 = scalar_lea.sflag [#allocation3], 1
    %16 = vsyncpa %s15, 0
    loop: start=0, step=1, limit=4
    $region2: #{triplet_attention_pallas.3} parent=1 // loop_pre_header
      _
    $region3: #{triplet_attention_pallas.3} parent=1 // loop_header
      %s18 = sphi 0, %s22
      %p19 = scmp.ge.s32.totalorder %s18, 4
      %s28 = sphi 0, %s30
      %s31 = sphi 0, %s28
      %s32 = sphi 0, %s31
      %s48 = sphi 0, %s32
      %s54 = sphi 0, %s56
      %s57 = sphi 0, %s54
      %s58 = sphi 0, %s57
      %s74 = sphi 0, %s58
      %s80 = sphi 0, %s82
      %s83 = sphi 0, %s80
      %s84 = sphi 0, %s83
      %s100 = sphi 0, %s84
      %s106 = sphi 0, %s108
      %s109 = sphi 0, %s106
      %s110 = sphi 0, %s109
      %s126 = sphi 0, %s110
      %s132 = sphi 0, %s134
      %s135 = sphi 0, %s132
      %s136 = sphi 0, %s135
      %s152 = sphi 0, %s136
      %s158 = sphi 0, %s160
      %s161 = sphi 0, %s158
      %s162 = sphi 0, %s161
      %s178 = sphi 0, %s162
      %s184 = sphi 0, %s186
      %s187 = sphi 0, %s184
      %s188 = sphi 0, %s187
      %s204 = sphi 0, %s188
      %s210 = sphi 0, %s212
      %s213 = sphi 0, %s210
      %s214 = sphi 0, %s213
      %s230 = sphi 0, %s214
      %s236 = sphi 0, %s238
      %s239 = sphi 0, %s236
      %s240 = sphi 0, %s239
      %s256 = sphi 0, %s240
    $region4: #{triplet_attention_pallas.3} parent=1 // loop_header_branch
      %21 = sbr.rel (%p19) target = $region8
    $region5: #{triplet_attention_pallas.3} parent=1 // loop_body
      %s23 = ssub.s32 %s18, 1
      %s24 = ssub.s32 %s18, 2
      %s25 = sadd.s32 %s18, 1
      %s26 = ssub.s32 %s18, %s25
      %p27 = scmp.eq.s32.totalorder %s26, 0
      %s29 = sadd.s32 %s28, 1
      %s30 = scalar_select %p27, %s28, %s29
      %p33 = pneg %p27
      %p34 = scmp.eq.s32.totalorder %s18, 1
      %p35 = por %p33, %p34
      %p36 = scmp.ne.s32.totalorder %s28, %s31
      %p37 = scmp.eq.s32.totalorder %s18, 0
      %p38 = por %p36, %p37
      %p39 = scmp.ne.s32.totalorder %s28, %s31
      %p40 = scmp.eq.s32.totalorder %s23, 1
      %p41 = por %p39, %p40
      %p42 = scmp.ne.s32.totalorder %s31, %s32
      %p43 = scmp.eq.s32.totalorder %s23, 0
      %p44 = por %p42, %p43
      %p45 = scmp.ne.s32.totalorder %s31, %s32
      %p46 = scmp.eq.s32.totalorder %s24, 1
      %p47 = por %p45, %p46
      %p49 = scmp.ne.s32.totalorder %s32, %s48
      %p50 = scmp.eq.s32.totalorder %s24, 0
      %p51 = por %p49, %p50
      %s52 = ssub.s32 %s18, %s25
      %p53 = scmp.eq.s32.totalorder %s52, 0
      %s55 = sadd.s32 %s54, 1
      %s56 = scalar_select %p53, %s54, %s55
      %p59 = pneg %p53
      %p60 = scmp.eq.s32.totalorder %s18, 1
      %p61 = por %p59, %p60
      %p62 = scmp.ne.s32.totalorder %s54, %s57
      %p63 = scmp.eq.s32.totalorder %s18, 0
      %p64 = por %p62, %p63
      %p65 = scmp.ne.s32.totalorder %s54, %s57
      %p66 = scmp.eq.s32.totalorder %s23, 1
      %p67 = por %p65, %p66
      %p68 = scmp.ne.s32.totalorder %s57, %s58
      %p69 = scmp.eq.s32.totalorder %s23, 0
      %p70 = por %p68, %p69
      %p71 = scmp.ne.s32.totalorder %s57, %s58
      %p72 = scmp.eq.s32.totalorder %s24, 1
      %p73 = por %p71, %p72
      %p75 = scmp.ne.s32.totalorder %s58, %s74
      %p76 = scmp.eq.s32.totalorder %s24, 0
      %p77 = por %p75, %p76
      %s78 = ssub.s32 %s18, %s25
      %p79 = scmp.eq.s32.totalorder %s78, 0
      %s81 = sadd.s32 %s80, 1
      %s82 = scalar_select %p79, %s80, %s81
      %p85 = pneg %p79
      %p86 = scmp.eq.s32.totalorder %s18, 1
      %p87 = por %p85, %p86
      %p88 = scmp.ne.s32.totalorder %s80, %s83
      %p89 = scmp.eq.s32.totalorder %s18, 0
      %p90 = por %p88, %p89
      %p91 = scmp.ne.s32.totalorder %s80, %s83
      %p92 = scmp.eq.s32.totalorder %s23, 1
      %p93 = por %p91, %p92
      %p94 = scmp.ne.s32.totalorder %s83, %s84
      %p95 = scmp.eq.s32.totalorder %s23, 0
      %p96 = por %p94, %p95
      %p97 = scmp.ne.s32.totalorder %s83, %s84
      %p98 = scmp.eq.s32.totalorder %s24, 1
      %p99 = por %p97, %p98
      %p101 = scmp.ne.s32.totalorder %s84, %s100
      %p102 = scmp.eq.s32.totalorder %s24, 0
      %p103 = por %p101, %p102
      %s104 = ssub.s32 %s18, %s25
      %p105 = scmp.eq.s32.totalorder %s104, 0
      %s107 = sadd.s32 %s106, 1
      %s108 = scalar_select %p105, %s106, %s107
      %p111 = pneg %p105
      %p112 = scmp.eq.s32.totalorder %s18, 1
      %p113 = por %p111, %p112
      %p114 = scmp.ne.s32.totalorder %s106, %s109
      %p115 = scmp.eq.s32.totalorder %s18, 0
      %p116 = por %p114, %p115
      %p117 = scmp.ne.s32.totalorder %s106, %s109
      %p118 = scmp.eq.s32.totalorder %s23, 1
      %p119 = por %p117, %p118
      %p120 = scmp.ne.s32.totalorder %s109, %s110
      %p121 = scmp.eq.s32.totalorder %s23, 0
      %p122 = por %p120, %p121
      %p123 = scmp.ne.s32.totalorder %s109, %s110
      %p124 = scmp.eq.s32.totalorder %s24, 1
      %p125 = por %p123, %p124
      %p127 = scmp.ne.s32.totalorder %s110, %s126
      %p128 = scmp.eq.s32.totalorder %s24, 0
      %p129 = por %p127, %p128
      %s130 = ssub.s32 %s18, %s25
      %p131 = scmp.eq.s32.totalorder %s130, 0
      %s133 = sadd.s32 %s132, 1
      %s134 = scalar_select %p131, %s132, %s133
      %p137 = pneg %p131
      %p138 = scmp.eq.s32.totalorder %s18, 1
      %p139 = por %p137, %p138
      %p140 = scmp.ne.s32.totalorder %s132, %s135
      %p141 = scmp.eq.s32.totalorder %s18, 0
      %p142 = por %p140, %p141
      %p143 = scmp.ne.s32.totalorder %s132, %s135
      %p144 = scmp.eq.s32.totalorder %s23, 1
      %p145 = por %p143, %p144
      %p146 = scmp.ne.s32.totalorder %s135, %s136
      %p147 = scmp.eq.s32.totalorder %s23, 0
      %p148 = por %p146, %p147
      %p149 = scmp.ne.s32.totalorder %s135, %s136
      %p150 = scmp.eq.s32.totalorder %s24, 1
      %p151 = por %p149, %p150
      %p153 = scmp.ne.s32.totalorder %s136, %s152
      %p154 = scmp.eq.s32.totalorder %s24, 0
      %p155 = por %p153, %p154
      %s156 = ssub.s32 %s18, %s25
      %p157 = scmp.eq.s32.totalorder %s156, 0
      %s159 = sadd.s32 %s158, 1
      %s160 = scalar_select %p157, %s158, %s159
      %p163 = pneg %p157
      %p164 = scmp.eq.s32.totalorder %s18, 1
      %p165 = por %p163, %p164
      %p166 = scmp.ne.s32.totalorder %s158, %s161
      %p167 = scmp.eq.s32.totalorder %s18, 0
      %p168 = por %p166, %p167
      %p169 = scmp.ne.s32.totalorder %s158, %s161
      %p170 = scmp.eq.s32.totalorder %s23, 1
      %p171 = por %p169, %p170
      %p172 = scmp.ne.s32.totalorder %s161, %s162
      %p173 = scmp.eq.s32.totalorder %s23, 0
      %p174 = por %p172, %p173
      %p175 = scmp.ne.s32.totalorder %s161, %s162
      %p176 = scmp.eq.s32.totalorder %s24, 1
      %p177 = por %p175, %p176
      %p179 = scmp.ne.s32.totalorder %s162, %s178
      %p180 = scmp.eq.s32.totalorder %s24, 0
      %p181 = por %p179, %p180
      %s182 = ssub.s32 %s18, %s25
      %p183 = scmp.eq.s32.totalorder %s182, 0
      %s185 = sadd.s32 %s184, 1
      %s186 = scalar_select %p183, %s184, %s185
      %p189 = pneg %p183
      %p190 = scmp.eq.s32.totalorder %s18, 1
      %p191 = por %p189, %p190
      %p192 = scmp.ne.s32.totalorder %s184, %s187
      %p193 = scmp.eq.s32.totalorder %s18, 0
      %p194 = por %p192, %p193
      %p195 = scmp.ne.s32.totalorder %s184, %s187
      %p196 = scmp.eq.s32.totalorder %s23, 1
      %p197 = por %p195, %p196
      %p198 = scmp.ne.s32.totalorder %s187, %s188
      %p199 = scmp.eq.s32.totalorder %s23, 0
      %p200 = por %p198, %p199
      %p201 = scmp.ne.s32.totalorder %s187, %s188
      %p202 = scmp.eq.s32.totalorder %s24, 1
      %p203 = por %p201, %p202
      %p205 = scmp.ne.s32.totalorder %s188, %s204
      %p206 = scmp.eq.s32.totalorder %s24, 0
      %p207 = por %p205, %p206
      %s208 = ssub.s32 %s18, %s25
      %p209 = scmp.eq.s32.totalorder %s208, 0
      %s211 = sadd.s32 %s210, 1
      %s212 = scalar_select %p209, %s210, %s211
      %p215 = pneg %p209
      %p216 = scmp.eq.s32.totalorder %s18, 1
      %p217 = por %p215, %p216
      %p218 = scmp.ne.s32.totalorder %s210, %s213
      %p219 = scmp.eq.s32.totalorder %s18, 0
      %p220 = por %p218, %p219
      %p221 = scmp.ne.s32.totalorder %s210, %s213
      %p222 = scmp.eq.s32.totalorder %s23, 1
      %p223 = por %p221, %p222
      %p224 = scmp.ne.s32.totalorder %s213, %s214
      %p225 = scmp.eq.s32.totalorder %s23, 0
      %p226 = por %p224, %p225
      %p227 = scmp.ne.s32.totalorder %s213, %s214
      %p228 = scmp.eq.s32.totalorder %s24, 1
      %p229 = por %p227, %p228
      %p231 = scmp.ne.s32.totalorder %s214, %s230
      %p232 = scmp.eq.s32.totalorder %s24, 0
      %p233 = por %p231, %p232
      %s234 = ssub.s32 %s18, %s25
      %p235 = scmp.eq.s32.totalorder %s234, 0
      %s237 = sadd.s32 %s236, 1
      %s238 = scalar_select %p235, %s236, %s237
      %p241 = pneg %p235
      %p242 = scmp.eq.s32.totalorder %s18, 1
      %p243 = por %p241, %p242
      %p244 = scmp.ne.s32.totalorder %s236, %s239
      %p245 = scmp.eq.s32.totalorder %s18, 0
      %p246 = por %p244, %p245
      %p247 = scmp.ne.s32.totalorder %s236, %s239
      %p248 = scmp.eq.s32.totalorder %s23, 1
      %p249 = por %p247, %p248
      %p250 = scmp.ne.s32.totalorder %s239, %s240
      %p251 = scmp.eq.s32.totalorder %s23, 0
      %p252 = por %p250, %p251
      %p253 = scmp.ne.s32.totalorder %s239, %s240
      %p254 = scmp.eq.s32.totalorder %s24, 1
      %p255 = por %p253, %p254
      %p257 = scmp.ne.s32.totalorder %s240, %s256
      %p258 = scmp.eq.s32.totalorder %s24, 0
      %p259 = por %p257, %p258
      %p260 = scmp.le.s32.totalorder 1, %s18
      %p261 = scmp.lt.s32.totalorder %s18, 3
      %p262 = pnand %p260, %p261
      %p263 = pneg %p262
      // Predicated region
      $region9: #{triplet_attention_pallas.3} parent=5 // pred_check
        _
      $region10: #{triplet_attention_pallas.3} parent=5 // pred_check_branch
        %265 = sbr.rel (%p262) target = $region12
      $region11: #{triplet_attention_pallas.3} parent=5 // pred_region
        %s266 = ssub.s32 %s18, 1
      $region12: #{triplet_attention_pallas.3} parent=5 // pred_fallthru
        _
      %p267 = scmp.lt.s32.totalorder %s18, 2
      // Predicated region
      $region13: #{triplet_attention_pallas.3} parent=5 // pred_check
        %p268 = pneg %p267
      $region14: #{triplet_attention_pallas.3} parent=5 // pred_check_branch
        %270 = sbr.rel (%p268) target = $region16
      $region15: #{triplet_attention_pallas.3} parent=5 // pred_region
        // Predicated region
        $region17: #{triplet_attention_pallas.3} parent=15 // pred_check
          %p271 = pneg %p38
        $region18: #{triplet_attention_pallas.3} parent=15 // pred_check_branch
          %273 = sbr.rel (%p271) target = $region20
        $region19: #{triplet_attention_pallas.3} parent=15 // pred_region
          %s274 = sand.u32 %s28, 1
          %s275 = scalar_lea.sflag [#allocation3], %s274
          %s276 = sand.u32 %s28, 1
          %s277 = smul.addr %s276, 256
          %s278 = scalar_lea.vmem [#allocation2], %s277
          %s280 = ssub.s32 4096, 4096
          %281 = vsyncadd %s275, %s280
          %s282 = smul.addr %s18, 32
          %s283 = smul.addr %s282, 128
          %s284 = scalar_lea.hbm %s0, %s283
          %s285 = sshll.u32 %s278, 4
          %s286 = int_to_ptr.vmem [resolvable:$true] %s285
          %291 = dma.hbm_to_vmem [thread:$0]  %s284, 4096, %s286, %s275, 128, 128, 8
        $region20: #{triplet_attention_pallas.3} parent=15 // pred_fallthru
          _
      $region16: #{triplet_attention_pallas.3} parent=5 // pred_fallthru
        _
      %p292 = scmp.le.s32.totalorder 1, %s18
      %p293 = scmp.lt.s32.totalorder %s18, 3
      %p294 = pnand %p292, %p293
      %p295 = pneg %p294
      // Predicated region
      $region21: #{triplet_attention_pallas.3} parent=5 // pred_check
        _
      $region22: #{triplet_attention_pallas.3} parent=5 // pred_check_branch
        %297 = sbr.rel (%p294) target = $region24
      $region23: #{triplet_attention_pallas.3} parent=5 // pred_region
        %s298 = ssub.s32 %s18, 1
        %s299 = sand.u32 %s31, 1
        %s300 = scalar_lea.sflag [#allocation3], %s299
        %s301 = sand.u32 %s31, 1
        %s302 = smul.addr %s301, 256
        %s303 = scalar_lea.vmem [#allocation2], %s302
        // Predicated region
        $region25: #{triplet_attention_pallas.3} parent=23 // pred_check
          %p304 = pneg %p44
        $region26: #{triplet_attention_pallas.3} parent=23 // pred_check_branch
          %306 = sbr.rel (%p304) target = $region28
        $region27: #{triplet_attention_pallas.3} parent=23 // pred_region
          %307 = dma.done %s300, 4096
        $region28: #{triplet_attention_pallas.3} parent=23 // pred_fallthru
          _
        %s308 = sand.u32 %s31, 1
        %s309 = scalar_lea.sflag [#allocation3], %s308
        %s310 = sand.u32 %s31, 1
        %s311 = smul.addr %s310, 256
        %s312 = scalar_lea.vmem [#allocation2], %s311
        %p313 = pneg %p44
        %p314 = pneg %p41
        %p315 = pneg %p70
        %p316 = pneg %p67
        %p317 = scmp.lt.s32.totalorder %s23, 1
        %s318 = scalar_select %p317, %s23, 1
        %s319 = smul.addr %s318, 8
        %s320 = smul.addr %s319, 8
        %s321 = scalar_lea.vmem %s1, %s320
        %p322 = pneg %p96
        %p323 = pneg %p93
        %p324 = scmp.lt.s32.totalorder %s23, 1
        %s325 = scalar_select %p324, %s23, 1
        %s326 = smul.addr %s325, 8
        %s327 = smul.addr %s326, 8
        %s328 = scalar_lea.vmem %s2, %s327
        %p329 = pneg %p122
        %p330 = pneg %p119
        %p331 = scmp.lt.s32.totalorder %s23, 1
        %s332 = scalar_select %p331, %s23, 1
        %s333 = smul.addr %s332, 4
        %s334 = smul.addr %s333, 8
        %s335 = scalar_lea.vmem %s3, %s334
        %p336 = pneg %p148
        %p337 = pneg %p145
        %p338 = scmp.lt.s32.totalorder %s23, 1
        %s339 = scalar_select %p338, %s23, 1
        %s340 = smul.addr %s339, 4
        %s341 = smul.addr %s340, 8
        %s342 = scalar_lea.vmem %s4, %s341
        %p343 = pneg %p174
        %p344 = pneg %p171
        %p345 = scmp.lt.s32.totalorder %s23, 1
        %s346 = scalar_select %p345, %s23, 1
        %s347 = smul.addr %s346, 32
        %s348 = scalar_lea.vmem %s5, %s347
        %p349 = pneg %p200
        %p350 = pneg %p197
        %p351 = scmp.lt.s32.totalorder %s23, 1
        %s352 = scalar_select %p351, %s23, 1
        %s353 = smul.addr %s352, 32
        %s354 = scalar_lea.vmem %s6, %s353
        %p355 = pneg %p226
        %p356 = pneg %p223
        %p357 = scmp.lt.s32.totalorder %s23, 1
        %s358 = scalar_select %p357, %s23, 1
        %s359 = smul.addr %s358, 32
        %s360 = smul.addr %s359, 8
        %s361 = scalar_lea.vmem %s7, %s360
        %p362 = pneg %p252
        %p363 = pneg %p249
        %p364 = scmp.lt.s32.totalorder %s23, 1
        %s365 = scalar_select %p364, %s23, 1
        %s366 = smul.addr %s365, 32
        %s367 = smul.addr %s366, 8
        %s368 = scalar_lea.vmem %s8, %s367
        %p369 = scmp.lt.s32.totalorder %s23, 1
        %s370 = scalar_select %p369, %s23, 1
        %s371 = smul.addr %s370, 8
        %s372 = smul.addr %s371, 8
        %s373 = scalar_lea.vmem %s1, %s372
        %p374 = scmp.lt.s32.totalorder %s23, 1
        %s375 = scalar_select %p374, %s23, 1
        %s376 = smul.addr %s375, 8
        %s377 = smul.addr %s376, 8
        %s378 = scalar_lea.vmem %s2, %s377
        %p379 = scmp.lt.s32.totalorder %s23, 1
        %s380 = scalar_select %p379, %s23, 1
        %s381 = smul.addr %s380, 4
        %s382 = smul.addr %s381, 8
        %s383 = scalar_lea.vmem %s3, %s382
        %p384 = scmp.lt.s32.totalorder %s23, 1
        %s385 = scalar_select %p384, %s23, 1
        %s386 = smul.addr %s385, 4
        %s387 = smul.addr %s386, 8
        %s388 = scalar_lea.vmem %s4, %s387
        %p389 = scmp.lt.s32.totalorder %s23, 1
        %s390 = scalar_select %p389, %s23, 1
        %s391 = smul.addr %s390, 32
        %s392 = scalar_lea.vmem %s5, %s391
        %p393 = scmp.lt.s32.totalorder %s23, 1
        %s394 = scalar_select %p393, %s23, 1
        %s395 = smul.addr %s394, 32
        %s396 = scalar_lea.vmem %s6, %s395
        %p397 = scmp.lt.s32.totalorder %s23, 1
        %s398 = scalar_select %p397, %s23, 1
        %s399 = smul.addr %s398, 32
        %s400 = smul.addr %s399, 8
        %s401 = scalar_lea.vmem %s7, %s400
        %p402 = scmp.lt.s32.totalorder %s23, 1
        %s403 = scalar_select %p402, %s23, 1
        %s404 = smul.addr %s403, 32
        %s405 = smul.addr %s404, 8
        %s406 = scalar_lea.vmem %s8, %s405
        %v407 = vld [vmem:[%s303] sm:$0xff]
        %v408 = vld [vmem:[%s303 + $0x8] sm:$0xff]
        %v409 = vld [vmem:[%s303 + $0x10] sm:$0xff]
        %v410 = vld [vmem:[%s303 + $0x18] sm:$0xff]
        %v411 = vld [vmem:[%s303 + $0x20] sm:$0xff]
        %v412 = vld [vmem:[%s303 + $0x28] sm:$0xff]
        %v413 = vld [vmem:[%s303 + $0x30] sm:$0xff]
        %v414 = vld [vmem:[%s303 + $0x38] sm:$0xff]
        %v415 = vld [vmem:[%s303 + $0x40] sm:$0xff]
        %v416 = vld [vmem:[%s303 + $0x48] sm:$0xff]
        %v417 = vld [vmem:[%s303 + $0x50] sm:$0xff]
        %v418 = vld [vmem:[%s303 + $0x58] sm:$0xff]
        %v419 = vld [vmem:[%s303 + $0x60] sm:$0xff]
        %v420 = vld [vmem:[%s303 + $0x68] sm:$0xff]
        %v421 = vld [vmem:[%s303 + $0x70] sm:$0xff]
        %v422 = vld [vmem:[%s303 + $0x78] sm:$0xff]
        %v423 = vld [vmem:[%s303 + $0x80] sm:$0xff]
        %v424 = vld [vmem:[%s303 + $0x88] sm:$0xff]
        %v425 = vld [vmem:[%s303 + $0x90] sm:$0xff]
        %v426 = vld [vmem:[%s303 + $0x98] sm:$0xff]
        %v427 = vld [vmem:[%s303 + $0xa0] sm:$0xff]
        %v428 = vld [vmem:[%s303 + $0xa8] sm:$0xff]
        %v429 = vld [vmem:[%s303 + $0xb0] sm:$0xff]
        %v430 = vld [vmem:[%s303 + $0xb8] sm:$0xff]
        %v431 = vld [vmem:[%s303 + $0xc0] sm:$0xff]
        %v432 = vld [vmem:[%s303 + $0xc8] sm:$0xff]
        %v433 = vld [vmem:[%s303 + $0xd0] sm:$0xff]
        %v434 = vld [vmem:[%s303 + $0xd8] sm:$0xff]
        %v435 = vld [vmem:[%s303 + $0xe0] sm:$0xff]
        %v436 = vld [vmem:[%s303 + $0xe8] sm:$0xff]
        %v437 = vld [vmem:[%s303 + $0xf0] sm:$0xff]
        %v438 = vld [vmem:[%s303 + $0xf8] sm:$0xff]
        %vm439 = vcmask 64512
        %v440 = vsel %vm439, %v407, -inf
        %v441 = vsel %vm439, %v415, -inf
        %v442 = vmax.f32 %v440, %v441
        %v443 = vsel %vm439, %v423, -inf
        %v444 = vmax.f32 %v442, %v443
        %v445 = vsel %vm439, %v431, -inf
        %v446 = vmax.f32 %v444, %v445
        %v447 = vsel %vm439, %v408, -inf
        %v448 = vsel %vm439, %v416, -inf
        %v449 = vmax.f32 %v447, %v448
        %v450 = vsel %vm439, %v424, -inf
        %v451 = vmax.f32 %v449, %v450
        %v452 = vsel %vm439, %v432, -inf
        %v453 = vmax.f32 %v451, %v452
        %v454 = vsel %vm439, %v409, -inf
        %v455 = vsel %vm439, %v417, -inf
        %v456 = vmax.f32 %v454, %v455
        %v457 = vsel %vm439, %v425, -inf
        %v458 = vmax.f32 %v456, %v457
        %v459 = vsel %vm439, %v433, -inf
        %v460 = vmax.f32 %v458, %v459
        %v461 = vsel %vm439, %v410, -inf
        %v462 = vsel %vm439, %v418, -inf
        %v463 = vmax.f32 %v461, %v462
        %v464 = vsel %vm439, %v426, -inf
        %v465 = vmax.f32 %v463, %v464
        %v466 = vsel %vm439, %v434, -inf
        %v467 = vmax.f32 %v465, %v466
        %v468 = vsel %vm439, %v411, -inf
        %v469 = vsel %vm439, %v419, -inf
        %v470 = vmax.f32 %v468, %v469
        %v471 = vsel %vm439, %v427, -inf
        %v472 = vmax.f32 %v470, %v471
        %v473 = vsel %vm439, %v435, -inf
        %v474 = vmax.f32 %v472, %v473
        %v475 = vsel %vm439, %v412, -inf
        %v476 = vsel %vm439, %v420, -inf
        %v477 = vmax.f32 %v475, %v476
        %v478 = vsel %vm439, %v428, -inf
        %v479 = vmax.f32 %v477, %v478
        %v480 = vsel %vm439, %v436, -inf
        %v481 = vmax.f32 %v479, %v480
        %v482 = vsel %vm439, %v413, -inf
        %v483 = vsel %vm439, %v421, -inf
        %v484 = vmax.f32 %v482, %v483
        %v485 = vsel %vm439, %v429, -inf
        %v486 = vmax.f32 %v484, %v485
        %v487 = vsel %vm439, %v437, -inf
        %v488 = vmax.f32 %v486, %v487
        %v489 = vsel %vm439, %v414, -inf
        %v490 = vsel %vm439, %v422, -inf
        %v491 = vmax.f32 %v489, %v490
        %v492 = vsel %vm439, %v430, -inf
        %v493 = vmax.f32 %v491, %v492
        %v494 = vsel %vm439, %v438, -inf
        %v495 = vmax.f32 %v493, %v494
        %496 = vst.msk [vmem:[%s373] sm:$0xff] %vm439, %v446
        %497 = vst.msk [vmem:[%s373 + $0x8] sm:$0xff] %vm439, %v453
        %498 = vst.msk [vmem:[%s373 + $0x10] sm:$0xff] %vm439, %v460
        %499 = vst.msk [vmem:[%s373 + $0x18] sm:$0xff] %vm439, %v467
        %500 = vst.msk [vmem:[%s373 + $0x20] sm:$0xff] %vm439, %v474
        %501 = vst.msk [vmem:[%s373 + $0x28] sm:$0xff] %vm439, %v481
        %502 = vst.msk [vmem:[%s373 + $0x30] sm:$0xff] %vm439, %v488
        %503 = vst.msk [vmem:[%s373 + $0x38] sm:$0xff] %vm439, %v495
        %v504 = vsel %vm439, %v407, 0.0
        %v505 = vsel %vm439, %v415, 0.0
        %v506 = vadd.f32 %v504, %v505
        %v507 = vsel %vm439, %v423, 0.0
        %v508 = vadd.f32 %v506, %v507
        %v509 = vsel %vm439, %v431, 0.0
        %v510 = vadd.f32 %v508, %v509
        %v511 = vsel %vm439, %v408, 0.0
        %v512 = vsel %vm439, %v416, 0.0
        %v513 = vadd.f32 %v511, %v512
        %v514 = vsel %vm439, %v424, 0.0
        %v515 = vadd.f32 %v513, %v514
        %v516 = vsel %vm439, %v432, 0.0
        %v517 = vadd.f32 %v515, %v516
        %v518 = vsel %vm439, %v409, 0.0
        %v519 = vsel %vm439, %v417, 0.0
        %v520 = vadd.f32 %v518, %v519
        %v521 = vsel %vm439, %v425, 0.0
        %v522 = vadd.f32 %v520, %v521
        %v523 = vsel %vm439, %v433, 0.0
        %v524 = vadd.f32 %v522, %v523
        %v525 = vsel %vm439, %v410, 0.0
        %v526 = vsel %vm439, %v418, 0.0
        %v527 = vadd.f32 %v525, %v526
        %v528 = vsel %vm439, %v426, 0.0
        %v529 = vadd.f32 %v527, %v528
        %v530 = vsel %vm439, %v434, 0.0
        %v531 = vadd.f32 %v529, %v530
        %v532 = vsel %vm439, %v411, 0.0
        %v533 = vsel %vm439, %v419, 0.0
        %v534 = vadd.f32 %v532, %v533
        %v535 = vsel %vm439, %v427, 0.0
        %v536 = vadd.f32 %v534, %v535
        %v537 = vsel %vm439, %v435, 0.0
        %v538 = vadd.f32 %v536, %v537
        %v539 = vsel %vm439, %v412, 0.0
        %v540 = vsel %vm439, %v420, 0.0
        %v541 = vadd.f32 %v539, %v540
        %v542 = vsel %vm439, %v428, 0.0
        %v543 = vadd.f32 %v541, %v542
        %v544 = vsel %vm439, %v436, 0.0
        %v545 = vadd.f32 %v543, %v544
        %v546 = vsel %vm439, %v413, 0.0
        %v547 = vsel %vm439, %v421, 0.0
        %v548 = vadd.f32 %v546, %v547
        %v549 = vsel %vm439, %v429, 0.0
        %v550 = vadd.f32 %v548, %v549
        %v551 = vsel %vm439, %v437, 0.0
        %v552 = vadd.f32 %v550, %v551
        %v553 = vsel %vm439, %v414, 0.0
        %v554 = vsel %vm439, %v422, 0.0
        %v555 = vadd.f32 %v553, %v554
        %v556 = vsel %vm439, %v430, 0.0
        %v557 = vadd.f32 %v555, %v556
        %v558 = vsel %vm439, %v438, 0.0
        %v559 = vadd.f32 %v557, %v558
        %v560 = vrcp.pop 4.0
        %v561 = vmul.f32 %v510, %v560
        %v562 = vmul.f32 %v517, %v560
        %v563 = vmul.f32 %v524, %v560
        %v564 = vmul.f32 %v531, %v560
        %v565 = vmul.f32 %v538, %v560
        %v566 = vmul.f32 %v545, %v560
        %v567 = vmul.f32 %v552, %v560
        %v568 = vmul.f32 %v559, %v560
        %569 = vst.msk [vmem:[%s378] sm:$0xff] %vm439, %v561
        %570 = vst.msk [vmem:[%s378 + $0x8] sm:$0xff] %vm439, %v562
        %571 = vst.msk [vmem:[%s378 + $0x10] sm:$0xff] %vm439, %v563
        %572 = vst.msk [vmem:[%s378 + $0x18] sm:$0xff] %vm439, %v564
        %573 = vst.msk [vmem:[%s378 + $0x20] sm:$0xff] %vm439, %v565
        %574 = vst.msk [vmem:[%s378 + $0x28] sm:$0xff] %vm439, %v566
        %575 = vst.msk [vmem:[%s378 + $0x30] sm:$0xff] %vm439, %v567
        %576 = vst.msk [vmem:[%s378 + $0x38] sm:$0xff] %vm439, %v568
        %v577 = vmax.f32 %v440, %v447
        %v578 = vmax.f32 %v577, %v454
        %v579 = vmax.f32 %v578, %v461
        %v580 = vmax.f32 %v579, %v468
        %v581 = vmax.f32 %v580, %v475
        %v582 = vmax.f32 %v581, %v482
        %v583 = vmax.f32 %v582, %v489
        %v584 = vmax.f32 %v441, %v448
        %v585 = vmax.f32 %v584, %v455
        %v586 = vmax.f32 %v585, %v462
        %v587 = vmax.f32 %v586, %v469
        %v588 = vmax.f32 %v587, %v476
        %v589 = vmax.f32 %v588, %v483
        %v590 = vmax.f32 %v589, %v490
        %v591 = vmax.f32 %v443, %v450
        %v592 = vmax.f32 %v591, %v457
        %v593 = vmax.f32 %v592, %v464
        %v594 = vmax.f32 %v593, %v471
        %v595 = vmax.f32 %v594, %v478
        %v596 = vmax.f32 %v595, %v485
        %v597 = vmax.f32 %v596, %v492
        %v598 = vmax.f32 %v445, %v452
        %v599 = vmax.f32 %v598, %v459
        %v600 = vmax.f32 %v599, %v466
        %v601 = vmax.f32 %v600, %v473
        %v602 = vmax.f32 %v601, %v480
        %v603 = vmax.f32 %v602, %v487
        %v604 = vmax.f32 %v603, %v494
        %605 = vst.msk [vmem:[%s383] sm:$0xff] %vm439, %v583
        %606 = vst.msk [vmem:[%s383 + $0x8] sm:$0xff] %vm439, %v590
        %607 = vst.msk [vmem:[%s383 + $0x10] sm:$0xff] %vm439, %v597
        %608 = vst.msk [vmem:[%s383 + $0x18] sm:$0xff] %vm439, %v604
        %v609 = vadd.f32 %v504, %v511
        %v610 = vadd.f32 %v609, %v518
        %v611 = vadd.f32 %v610, %v525
        %v612 = vadd.f32 %v611, %v532
        %v613 = vadd.f32 %v612, %v539
        %v614 = vadd.f32 %v613, %v546
        %v615 = vadd.f32 %v614, %v553
        %v616 = vadd.f32 %v505, %v512
        %v617 = vadd.f32 %v616, %v519
        %v618 = vadd.f32 %v617, %v526
        %v619 = vadd.f32 %v618, %v533
        %v620 = vadd.f32 %v619, %v540
        %v621 = vadd.f32 %v620, %v547
        %v622 = vadd.f32 %v621, %v554
        %v623 = vadd.f32 %v507, %v514
        %v624 = vadd.f32 %v623, %v521
        %v625 = vadd.f32 %v624, %v528
        %v626 = vadd.f32 %v625, %v535
        %v627 = vadd.f32 %v626, %v542
        %v628 = vadd.f32 %v627, %v549
        %v629 = vadd.f32 %v628, %v556
        %v630 = vadd.f32 %v509, %v516
        %v631 = vadd.f32 %v630, %v523
        %v632 = vadd.f32 %v631, %v530
        %v633 = vadd.f32 %v632, %v537
        %v634 = vadd.f32 %v633, %v544
        %v635 = vadd.f32 %v634, %v551
        %v636 = vadd.f32 %v635, %v558
        %v637 = vrcp.pop 8.0
        %v638 = vmul.f32 %v615, %v637
        %v639 = vmul.f32 %v622, %v637
        %v640 = vmul.f32 %v629, %v637
        %v641 = vmul.f32 %v636, %v637
        %642 = vst.msk [vmem:[%s388] sm:$0xff] %vm439, %v638
        %643 = vst.msk [vmem:[%s388 + $0x8] sm:$0xff] %vm439, %v639
        %644 = vst.msk [vmem:[%s388 + $0x10] sm:$0xff] %vm439, %v640
        %645 = vst.msk [vmem:[%s388 + $0x18] sm:$0xff] %vm439, %v641
        %v646 = vrot.slane %v440, 4
        %v647 = vmax.f32 %v440, %v646
        %v648 = vrot.slane %v647, 2
        %v649 = vmax.f32 %v647, %v648
        %v650 = vrot.slane %v649, 1
        %v651 = vmax.f32 %v649, %v650
        %v652 = vrot.slane %v447, 4
        %v653 = vmax.f32 %v447, %v652
        %v654 = vrot.slane %v653, 2
        %v655 = vmax.f32 %v653, %v654
        %v656 = vrot.slane %v655, 1
        %v657 = vmax.f32 %v655, %v656
        %v658 = vrot.slane %v454, 4
        %v659 = vmax.f32 %v454, %v658
        %v660 = vrot.slane %v659, 2
        %v661 = vmax.f32 %v659, %v660
        %v662 = vrot.slane %v661, 1
        %v663 = vmax.f32 %v661, %v662
        %v664 = vrot.slane %v461, 4
        %v665 = vmax.f32 %v461, %v664
        %v666 = vrot.slane %v665, 2
        %v667 = vmax.f32 %v665, %v666
        %v668 = vrot.slane %v667, 1
        %v669 = vmax.f32 %v667, %v668
        %v670 = vrot.slane %v468, 4
        %v671 = vmax.f32 %v468, %v670
        %v672 = vrot.slane %v671, 2
        %v673 = vmax.f32 %v671, %v672
        %v674 = vrot.slane %v673, 1
        %v675 = vmax.f32 %v673, %v674
        %v676 = vrot.slane %v475, 4
        %v677 = vmax.f32 %v475, %v676
        %v678 = vrot.slane %v677, 2
        %v679 = vmax.f32 %v677, %v678
        %v680 = vrot.slane %v679, 1
        %v681 = vmax.f32 %v679, %v680
        %v682 = vrot.slane %v482, 4
        %v683 = vmax.f32 %v482, %v682
        %v684 = vrot.slane %v683, 2
        %v685 = vmax.f32 %v683, %v684
        %v686 = vrot.slane %v685, 1
        %v687 = vmax.f32 %v685, %v686
        %v688 = vrot.slane %v489, 4
        %v689 = vmax.f32 %v489, %v688
        %v690 = vrot.slane %v689, 2
        %v691 = vmax.f32 %v689, %v690
        %v692 = vrot.slane %v691, 1
        %v693 = vmax.f32 %v691, %v692
        %v694 = vrot.slane %v441, 4
        %v695 = vmax.f32 %v441, %v694
        %v696 = vrot.slane %v695, 2
        %v697 = vmax.f32 %v695, %v696
        %v698 = vrot.slane %v697, 1
        %v699 = vmax.f32 %v697, %v698
        %v700 = vrot.slane %v448, 4
        %v701 = vmax.f32 %v448, %v700
        %v702 = vrot.slane %v701, 2
        %v703 = vmax.f32 %v701, %v702
        %v704 = vrot.slane %v703, 1
        %v705 = vmax.f32 %v703, %v704
        %v706 = vrot.slane %v455, 4
        %v707 = vmax.f32 %v455, %v706
        %v708 = vrot.slane %v707, 2
        %v709 = vmax.f32 %v707, %v708
        %v710 = vrot.slane %v709, 1
        %v711 = vmax.f32 %v709, %v710
        %v712 = vrot.slane %v462, 4
        %v713 = vmax.f32 %v462, %v712
        %v714 = vrot.slane %v713, 2
        %v715 = vmax.f32 %v713, %v714
        %v716 = vrot.slane %v715, 1
        %v717 = vmax.f32 %v715, %v716
        %v718 = vrot.slane %v469, 4
        %v719 = vmax.f32 %v469, %v718
        %v720 = vrot.slane %v719, 2
        %v721 = vmax.f32 %v719, %v720
        %v722 = vrot.slane %v721, 1
        %v723 = vmax.f32 %v721, %v722
        %v724 = vrot.slane %v476, 4
        %v725 = vmax.f32 %v476, %v724
        %v726 = vrot.slane %v725, 2
        %v727 = vmax.f32 %v725, %v726
        %v728 = vrot.slane %v727, 1
        %v729 = vmax.f32 %v727, %v728
        %v730 = vrot.slane %v483, 4
        %v731 = vmax.f32 %v483, %v730
        %v732 = vrot.slane %v731, 2
        %v733 = vmax.f32 %v731, %v732
        %v734 = vrot.slane %v733, 1
        %v735 = vmax.f32 %v733, %v734
        %v736 = vrot.slane %v490, 4
        %v737 = vmax.f32 %v490, %v736
        %v738 = vrot.slane %v737, 2
        %v739 = vmax.f32 %v737, %v738
        %v740 = vrot.slane %v739, 1
        %v741 = vmax.f32 %v739, %v740
        %v742 = vrot.slane %v443, 4
        %v743 = vmax.f32 %v443, %v742
        %v744 = vrot.slane %v743, 2
        %v745 = vmax.f32 %v743, %v744
        %v746 = vrot.slane %v745, 1
        %v747 = vmax.f32 %v745, %v746
        %v748 = vrot.slane %v450, 4
        %v749 = vmax.f32 %v450, %v748
        %v750 = vrot.slane %v749, 2
        %v751 = vmax.f32 %v749, %v750
        %v752 = vrot.slane %v751, 1
        %v753 = vmax.f32 %v751, %v752
        %v754 = vrot.slane %v457, 4
        %v755 = vmax.f32 %v457, %v754
        %v756 = vrot.slane %v755, 2
        %v757 = vmax.f32 %v755, %v756
        %v758 = vrot.slane %v757, 1
        %v759 = vmax.f32 %v757, %v758
        %v760 = vrot.slane %v464, 4
        %v761 = vmax.f32 %v464, %v760
        %v762 = vrot.slane %v761, 2
        %v763 = vmax.f32 %v761, %v762
        %v764 = vrot.slane %v763, 1
        %v765 = vmax.f32 %v763, %v764
        %v766 = vrot.slane %v471, 4
        %v767 = vmax.f32 %v471, %v766
        %v768 = vrot.slane %v767, 2
        %v769 = vmax.f32 %v767, %v768
        %v770 = vrot.slane %v769, 1
        %v771 = vmax.f32 %v769, %v770
        %v772 = vrot.slane %v478, 4
        %v773 = vmax.f32 %v478, %v772
        %v774 = vrot.slane %v773, 2
        %v775 = vmax.f32 %v773, %v774
        %v776 = vrot.slane %v775, 1
        %v777 = vmax.f32 %v775, %v776
        %v778 = vrot.slane %v485, 4
        %v779 = vmax.f32 %v485, %v778
        %v780 = vrot.slane %v779, 2
        %v781 = vmax.f32 %v779, %v780
        %v782 = vrot.slane %v781, 1
        %v783 = vmax.f32 %v781, %v782
        %v784 = vrot.slane %v492, 4
        %v785 = vmax.f32 %v492, %v784
        %v786 = vrot.slane %v785, 2
        %v787 = vmax.f32 %v785, %v786
        %v788 = vrot.slane %v787, 1
        %v789 = vmax.f32 %v787, %v788
        %v790 = vrot.slane %v445, 4
        %v791 = vmax.f32 %v445, %v790
        %v792 = vrot.slane %v791, 2
        %v793 = vmax.f32 %v791, %v792
        %v794 = vrot.slane %v793, 1
        %v795 = vmax.f32 %v793, %v794
        %v796 = vrot.slane %v452, 4
        %v797 = vmax.f32 %v452, %v796
        %v798 = vrot.slane %v797, 2
        %v799 = vmax.f32 %v797, %v798
        %v800 = vrot.slane %v799, 1
        %v801 = vmax.f32 %v799, %v800
        %v802 = vrot.slane %v459, 4
        %v803 = vmax.f32 %v459, %v802
        %v804 = vrot.slane %v803, 2
        %v805 = vmax.f32 %v803, %v804
        %v806 = vrot.slane %v805, 1
        %v807 = vmax.f32 %v805, %v806
        %v808 = vrot.slane %v466, 4
        %v809 = vmax.f32 %v466, %v808
        %v810 = vrot.slane %v809, 2
        %v811 = vmax.f32 %v809, %v810
        %v812 = vrot.slane %v811, 1
        %v813 = vmax.f32 %v811, %v812
        %v814 = vrot.slane %v473, 4
        %v815 = vmax.f32 %v473, %v814
        %v816 = vrot.slane %v815, 2
        %v817 = vmax.f32 %v815, %v816
        %v818 = vrot.slane %v817, 1
        %v819 = vmax.f32 %v817, %v818
        %v820 = vrot.slane %v480, 4
        %v821 = vmax.f32 %v480, %v820
        %v822 = vrot.slane %v821, 2
        %v823 = vmax.f32 %v821, %v822
        %v824 = vrot.slane %v823, 1
        %v825 = vmax.f32 %v823, %v824
        %v826 = vrot.slane %v487, 4
        %v827 = vmax.f32 %v487, %v826
        %v828 = vrot.slane %v827, 2
        %v829 = vmax.f32 %v827, %v828
        %v830 = vrot.slane %v829, 1
        %v831 = vmax.f32 %v829, %v830
        %v832 = vrot.slane %v494, 4
        %v833 = vmax.f32 %v494, %v832
        %v834 = vrot.slane %v833, 2
        %v835 = vmax.f32 %v833, %v834
        %v836 = vrot.slane %v835, 1
        %v837 = vmax.f32 %v835, %v836
        %vm838 = vcmask 57344
        %839 = vst.msk [vmem:[%s392] sm:$0x1] %vm838, %v651
        %840 = vst.msk [vmem:[%s392 + $0x1] sm:$0x1] %vm838, %v657
        %841 = vst.msk [vmem:[%s392 + $0x2] sm:$0x1] %vm838, %v663
        %842 = vst.msk [vmem:[%s392 + $0x3] sm:$0x1] %vm838, %v669
        %843 = vst.msk [vmem:[%s392 + $0x4] sm:$0x1] %vm838, %v675
        %844 = vst.msk [vmem:[%s392 + $0x5] sm:$0x1] %vm838, %v681
        %845 = vst.msk [vmem:[%s392 + $0x6] sm:$0x1] %vm838, %v687
        %846 = vst.msk [vmem:[%s392 + $0x7] sm:$0x1] %vm838, %v693
        %847 = vst.msk [vmem:[%s392 + $0x8] sm:$0x1] %vm838, %v699
        %848 = vst.msk [vmem:[%s392 + $0x9] sm:$0x1] %vm838, %v705
        %849 = vst.msk [vmem:[%s392 + $0xa] sm:$0x1] %vm838, %v711
        %850 = vst.msk [vmem:[%s392 + $0xb] sm:$0x1] %vm838, %v717
        %851 = vst.msk [vmem:[%s392 + $0xc] sm:$0x1] %vm838, %v723
        %852 = vst.msk [vmem:[%s392 + $0xd] sm:$0x1] %vm838, %v729
        %853 = vst.msk [vmem:[%s392 + $0xe] sm:$0x1] %vm838, %v735
        %854 = vst.msk [vmem:[%s392 + $0xf] sm:$0x1] %vm838, %v741
        %855 = vst.msk [vmem:[%s392 + $0x10] sm:$0x1] %vm838, %v747
        %856 = vst.msk [vmem:[%s392 + $0x11] sm:$0x1] %vm838, %v753
        %857 = vst.msk [vmem:[%s392 + $0x12] sm:$0x1] %vm838, %v759
        %858 = vst.msk [vmem:[%s392 + $0x13] sm:$0x1] %vm838, %v765
        %859 = vst.msk [vmem:[%s392 + $0x14] sm:$0x1] %vm838, %v771
        %860 = vst.msk [vmem:[%s392 + $0x15] sm:$0x1] %vm838, %v777
        %861 = vst.msk [vmem:[%s392 + $0x16] sm:$0x1] %vm838, %v783
        %862 = vst.msk [vmem:[%s392 + $0x17] sm:$0x1] %vm838, %v789
        %863 = vst.msk [vmem:[%s392 + $0x18] sm:$0x1] %vm838, %v795
        %864 = vst.msk [vmem:[%s392 + $0x19] sm:$0x1] %vm838, %v801
        %865 = vst.msk [vmem:[%s392 + $0x1a] sm:$0x1] %vm838, %v807
        %866 = vst.msk [vmem:[%s392 + $0x1b] sm:$0x1] %vm838, %v813
        %867 = vst.msk [vmem:[%s392 + $0x1c] sm:$0x1] %vm838, %v819
        %868 = vst.msk [vmem:[%s392 + $0x1d] sm:$0x1] %vm838, %v825
        %869 = vst.msk [vmem:[%s392 + $0x1e] sm:$0x1] %vm838, %v831
        %870 = vst.msk [vmem:[%s392 + $0x1f] sm:$0x1] %vm838, %v837
        %v871 = vrot.slane %v504, 4
        %v872 = vadd.f32 %v504, %v871
        %v873 = vrot.slane %v872, 2
        %v874 = vadd.f32 %v872, %v873
        %v875 = vrot.slane %v874, 1
        %v876 = vadd.f32 %v874, %v875
        %v877 = vrot.slane %v511, 4
        %v878 = vadd.f32 %v511, %v877
        %v879 = vrot.slane %v878, 2
        %v880 = vadd.f32 %v878, %v879
        %v881 = vrot.slane %v880, 1
        %v882 = vadd.f32 %v880, %v881
        %v883 = vrot.slane %v518, 4
        %v884 = vadd.f32 %v518, %v883
        %v885 = vrot.slane %v884, 2
        %v886 = vadd.f32 %v884, %v885
        %v887 = vrot.slane %v886, 1
        %v888 = vadd.f32 %v886, %v887
        %v889 = vrot.slane %v525, 4
        %v890 = vadd.f32 %v525, %v889
        %v891 = vrot.slane %v890, 2
        %v892 = vadd.f32 %v890, %v891
        %v893 = vrot.slane %v892, 1
        %v894 = vadd.f32 %v892, %v893
        %v895 = vrot.slane %v532, 4
        %v896 = vadd.f32 %v532, %v895
        %v897 = vrot.slane %v896, 2
        %v898 = vadd.f32 %v896, %v897
        %v899 = vrot.slane %v898, 1
        %v900 = vadd.f32 %v898, %v899
        %v901 = vrot.slane %v539, 4
        %v902 = vadd.f32 %v539, %v901
        %v903 = vrot.slane %v902, 2
        %v904 = vadd.f32 %v902, %v903
        %v905 = vrot.slane %v904, 1
        %v906 = vadd.f32 %v904, %v905
        %v907 = vrot.slane %v546, 4
        %v908 = vadd.f32 %v546, %v907
        %v909 = vrot.slane %v908, 2
        %v910 = vadd.f32 %v908, %v909
        %v911 = vrot.slane %v910, 1
        %v912 = vadd.f32 %v910, %v911
        %v913 = vrot.slane %v553, 4
        %v914 = vadd.f32 %v553, %v913
        %v915 = vrot.slane %v914, 2
        %v916 = vadd.f32 %v914, %v915
        %v917 = vrot.slane %v916, 1
        %v918 = vadd.f32 %v916, %v917
        %v919 = vrot.slane %v505, 4
        %v920 = vadd.f32 %v505, %v919
        %v921 = vrot.slane %v920, 2
        %v922 = vadd.f32 %v920, %v921
        %v923 = vrot.slane %v922, 1
        %v924 = vadd.f32 %v922, %v923
        %v925 = vrot.slane %v512, 4
        %v926 = vadd.f32 %v512, %v925
        %v927 = vrot.slane %v926, 2
        %v928 = vadd.f32 %v926, %v927
        %v929 = vrot.slane %v928, 1
        %v930 = vadd.f32 %v928, %v929
        %v931 = vrot.slane %v519, 4
        %v932 = vadd.f32 %v519, %v931
        %v933 = vrot.slane %v932, 2
        %v934 = vadd.f32 %v932, %v933
        %v935 = vrot.slane %v934, 1
        %v936 = vadd.f32 %v934, %v935
        %v937 = vrot.slane %v526, 4
        %v938 = vadd.f32 %v526, %v937
        %v939 = vrot.slane %v938, 2
        %v940 = vadd.f32 %v938, %v939
        %v941 = vrot.slane %v940, 1
        %v942 = vadd.f32 %v940, %v941
        %v943 = vrot.slane %v533, 4
        %v944 = vadd.f32 %v533, %v943
        %v945 = vrot.slane %v944, 2
        %v946 = vadd.f32 %v944, %v945
        %v947 = vrot.slane %v946, 1
        %v948 = vadd.f32 %v946, %v947
        %v949 = vrot.slane %v540, 4
        %v950 = vadd.f32 %v540, %v949
        %v951 = vrot.slane %v950, 2
        %v952 = vadd.f32 %v950, %v951
        %v953 = vrot.slane %v952, 1
        %v954 = vadd.f32 %v952, %v953
        %v955 = vrot.slane %v547, 4
        %v956 = vadd.f32 %v547, %v955
        %v957 = vrot.slane %v956, 2
        %v958 = vadd.f32 %v956, %v957
        %v959 = vrot.slane %v958, 1
        %v960 = vadd.f32 %v958, %v959
        %v961 = vrot.slane %v554, 4
        %v962 = vadd.f32 %v554, %v961
        %v963 = vrot.slane %v962, 2
        %v964 = vadd.f32 %v962, %v963
        %v965 = vrot.slane %v964, 1
        %v966 = vadd.f32 %v964, %v965
        %v967 = vrot.slane %v507, 4
        %v968 = vadd.f32 %v507, %v967
        %v969 = vrot.slane %v968, 2
        %v970 = vadd.f32 %v968, %v969
        %v971 = vrot.slane %v970, 1
        %v972 = vadd.f32 %v970, %v971
        %v973 = vrot.slane %v514, 4
        %v974 = vadd.f32 %v514, %v973
        %v975 = vrot.slane %v974, 2
        %v976 = vadd.f32 %v974, %v975
        %v977 = vrot.slane %v976, 1
        %v978 = vadd.f32 %v976, %v977
        %v979 = vrot.slane %v521, 4
        %v980 = vadd.f32 %v521, %v979
        %v981 = vrot.slane %v980, 2
        %v982 = vadd.f32 %v980, %v981
        %v983 = vrot.slane %v982, 1
        %v984 = vadd.f32 %v982, %v983
        %v985 = vrot.slane %v528, 4
        %v986 = vadd.f32 %v528, %v985
        %v987 = vrot.slane %v986, 2
        %v988 = vadd.f32 %v986, %v987
        %v989 = vrot.slane %v988, 1
        %v990 = vadd.f32 %v988, %v989
        %v991 = vrot.slane %v535, 4
        %v992 = vadd.f32 %v535, %v991
        %v993 = vrot.slane %v992, 2
        %v994 = vadd.f32 %v992, %v993
        %v995 = vrot.slane %v994, 1
        %v996 = vadd.f32 %v994, %v995
        %v997 = vrot.slane %v542, 4
        %v998 = vadd.f32 %v542, %v997
        %v999 = vrot.slane %v998, 2
        %v1000 = vadd.f32 %v998, %v999
        %v1001 = vrot.slane %v1000, 1
        %v1002 = vadd.f32 %v1000, %v1001
        %v1003 = vrot.slane %v549, 4
        %v1004 = vadd.f32 %v549, %v1003
        %v1005 = vrot.slane %v1004, 2
        %v1006 = vadd.f32 %v1004, %v1005
        %v1007 = vrot.slane %v1006, 1
        %v1008 = vadd.f32 %v1006, %v1007
        %v1009 = vrot.slane %v556, 4
        %v1010 = vadd.f32 %v556, %v1009
        %v1011 = vrot.slane %v1010, 2
        %v1012 = vadd.f32 %v1010, %v1011
        %v1013 = vrot.slane %v1012, 1
        %v1014 = vadd.f32 %v1012, %v1013
        %v1015 = vrot.slane %v509, 4
        %v1016 = vadd.f32 %v509, %v1015
        %v1017 = vrot.slane %v1016, 2
        %v1018 = vadd.f32 %v1016, %v1017
        %v1019 = vrot.slane %v1018, 1
        %v1020 = vadd.f32 %v1018, %v1019
        %v1021 = vrot.slane %v516, 4
        %v1022 = vadd.f32 %v516, %v1021
        %v1023 = vrot.slane %v1022, 2
        %v1024 = vadd.f32 %v1022, %v1023
        %v1025 = vrot.slane %v1024, 1
        %v1026 = vadd.f32 %v1024, %v1025
        %v1027 = vrot.slane %v523, 4
        %v1028 = vadd.f32 %v523, %v1027
        %v1029 = vrot.slane %v1028, 2
        %v1030 = vadd.f32 %v1028, %v1029
        %v1031 = vrot.slane %v1030, 1
        %v1032 = vadd.f32 %v1030, %v1031
        %v1033 = vrot.slane %v530, 4
        %v1034 = vadd.f32 %v530, %v1033
        %v1035 = vrot.slane %v1034, 2
        %v1036 = vadd.f32 %v1034, %v1035
        %v1037 = vrot.slane %v1036, 1
        %v1038 = vadd.f32 %v1036, %v1037
        %v1039 = vrot.slane %v537, 4
        %v1040 = vadd.f32 %v537, %v1039
        %v1041 = vrot.slane %v1040, 2
        %v1042 = vadd.f32 %v1040, %v1041
        %v1043 = vrot.slane %v1042, 1
        %v1044 = vadd.f32 %v1042, %v1043
        %v1045 = vrot.slane %v544, 4
        %v1046 = vadd.f32 %v544, %v1045
        %v1047 = vrot.slane %v1046, 2
        %v1048 = vadd.f32 %v1046, %v1047
        %v1049 = vrot.slane %v1048, 1
        %v1050 = vadd.f32 %v1048, %v1049
        %v1051 = vrot.slane %v551, 4
        %v1052 = vadd.f32 %v551, %v1051
        %v1053 = vrot.slane %v1052, 2
        %v1054 = vadd.f32 %v1052, %v1053
        %v1055 = vrot.slane %v1054, 1
        %v1056 = vadd.f32 %v1054, %v1055
        %v1057 = vrot.slane %v558, 4
        %v1058 = vadd.f32 %v558, %v1057
        %v1059 = vrot.slane %v1058, 2
        %v1060 = vadd.f32 %v1058, %v1059
        %v1061 = vrot.slane %v1060, 1
        %v1062 = vadd.f32 %v1060, %v1061
        %v1063 = vmul.f32 %v876, %v637
        %v1064 = vmul.f32 %v882, %v637
        %v1065 = vmul.f32 %v888, %v637
        %v1066 = vmul.f32 %v894, %v637
        %v1067 = vmul.f32 %v900, %v637
        %v1068 = vmul.f32 %v906, %v637
        %v1069 = vmul.f32 %v912, %v637
        %v1070 = vmul.f32 %v918, %v637
        %v1071 = vmul.f32 %v924, %v637
        %v1072 = vmul.f32 %v930, %v637
        %v1073 = vmul.f32 %v936, %v637
        %v1074 = vmul.f32 %v942, %v637
        %v1075 = vmul.f32 %v948, %v637
        %v1076 = vmul.f32 %v954, %v637
        %v1077 = vmul.f32 %v960, %v637
        %v1078 = vmul.f32 %v966, %v637
        %v1079 = vmul.f32 %v972, %v637
        %v1080 = vmul.f32 %v978, %v637
        %v1081 = vmul.f32 %v984, %v637
        %v1082 = vmul.f32 %v990, %v637
        %v1083 = vmul.f32 %v996, %v637
        %v1084 = vmul.f32 %v1002, %v637
        %v1085 = vmul.f32 %v1008, %v637
        %v1086 = vmul.f32 %v1014, %v637
        %v1087 = vmul.f32 %v1020, %v637
        %v1088 = vmul.f32 %v1026, %v637
        %v1089 = vmul.f32 %v1032, %v637
        %v1090 = vmul.f32 %v1038, %v637
        %v1091 = vmul.f32 %v1044, %v637
        %v1092 = vmul.f32 %v1050, %v637
        %v1093 = vmul.f32 %v1056, %v637
        %v1094 = vmul.f32 %v1062, %v637
        %1095 = vst.msk [vmem:[%s396] sm:$0x1] %vm838, %v1063
        %1096 = vst.msk [vmem:[%s396 + $0x1] sm:$0x1] %vm838, %v1064
        %1097 = vst.msk [vmem:[%s396 + $0x2] sm:$0x1] %vm838, %v1065
        %1098 = vst.msk [vmem:[%s396 + $0x3] sm:$0x1] %vm838, %v1066
        %1099 = vst.msk [vmem:[%s396 + $0x4] sm:$0x1] %vm838, %v1067
        %1100 = vst.msk [vmem:[%s396 + $0x5] sm:$0x1] %vm838, %v1068
        %1101 = vst.msk [vmem:[%s396 + $0x6] sm:$0x1] %vm838, %v1069
        %1102 = vst.msk [vmem:[%s396 + $0x7] sm:$0x1] %vm838, %v1070
        %1103 = vst.msk [vmem:[%s396 + $0x8] sm:$0x1] %vm838, %v1071
        %1104 = vst.msk [vmem:[%s396 + $0x9] sm:$0x1] %vm838, %v1072
        %1105 = vst.msk [vmem:[%s396 + $0xa] sm:$0x1] %vm838, %v1073
        %1106 = vst.msk [vmem:[%s396 + $0xb] sm:$0x1] %vm838, %v1074
        %1107 = vst.msk [vmem:[%s396 + $0xc] sm:$0x1] %vm838, %v1075
        %1108 = vst.msk [vmem:[%s396 + $0xd] sm:$0x1] %vm838, %v1076
        %1109 = vst.msk [vmem:[%s396 + $0xe] sm:$0x1] %vm838, %v1077
        %1110 = vst.msk [vmem:[%s396 + $0xf] sm:$0x1] %vm838, %v1078
        %1111 = vst.msk [vmem:[%s396 + $0x10] sm:$0x1] %vm838, %v1079
        %1112 = vst.msk [vmem:[%s396 + $0x11] sm:$0x1] %vm838, %v1080
        %1113 = vst.msk [vmem:[%s396 + $0x12] sm:$0x1] %vm838, %v1081
        %1114 = vst.msk [vmem:[%s396 + $0x13] sm:$0x1] %vm838, %v1082
        %1115 = vst.msk [vmem:[%s396 + $0x14] sm:$0x1] %vm838, %v1083
        %1116 = vst.msk [vmem:[%s396 + $0x15] sm:$0x1] %vm838, %v1084
        %1117 = vst.msk [vmem:[%s396 + $0x16] sm:$0x1] %vm838, %v1085
        %1118 = vst.msk [vmem:[%s396 + $0x17] sm:$0x1] %vm838, %v1086
        %1119 = vst.msk [vmem:[%s396 + $0x18] sm:$0x1] %vm838, %v1087
        %1120 = vst.msk [vmem:[%s396 + $0x19] sm:$0x1] %vm838, %v1088
        %1121 = vst.msk [vmem:[%s396 + $0x1a] sm:$0x1] %vm838, %v1089
        %1122 = vst.msk [vmem:[%s396 + $0x1b] sm:$0x1] %vm838, %v1090
        %1123 = vst.msk [vmem:[%s396 + $0x1c] sm:$0x1] %vm838, %v1091
        %1124 = vst.msk [vmem:[%s396 + $0x1d] sm:$0x1] %vm838, %v1092
        %1125 = vst.msk [vmem:[%s396 + $0x1e] sm:$0x1] %vm838, %v1093
        %1126 = vst.msk [vmem:[%s396 + $0x1f] sm:$0x1] %vm838, %v1094
        %1127 = vmax.xlane.f32.xlu0 %v440
        %v1128 = vpop.xlane.xlu0 %1127
        %1129 = vmax.xlane.f32.xlu0 %v447
        %v1130 = vpop.xlane.xlu0 %1129
        %1131 = vmax.xlane.f32.xlu0 %v454
        %v1132 = vpop.xlane.xlu0 %1131
        %1133 = vmax.xlane.f32.xlu0 %v461
        %v1134 = vpop.xlane.xlu0 %1133
        %1135 = vmax.xlane.f32.xlu0 %v468
        %v1136 = vpop.xlane.xlu0 %1135
        %1137 = vmax.xlane.f32.xlu0 %v475
        %v1138 = vpop.xlane.xlu0 %1137
        %1139 = vmax.xlane.f32.xlu0 %v482
        %v1140 = vpop.xlane.xlu0 %1139
        %1141 = vmax.xlane.f32.xlu0 %v489
        %v1142 = vpop.xlane.xlu0 %1141
        %1143 = vmax.xlane.f32.xlu0 %v441
        %v1144 = vpop.xlane.xlu0 %1143
        %1145 = vmax.xlane.f32.xlu0 %v448
        %v1146 = vpop.xlane.xlu0 %1145
        %1147 = vmax.xlane.f32.xlu0 %v455
        %v1148 = vpop.xlane.xlu0 %1147
        %1149 = vmax.xlane.f32.xlu0 %v462
        %v1150 = vpop.xlane.xlu0 %1149
        %1151 = vmax.xlane.f32.xlu0 %v469
        %v1152 = vpop.xlane.xlu0 %1151
        %1153 = vmax.xlane.f32.xlu0 %v476
        %v1154 = vpop.xlane.xlu0 %1153
        %1155 = vmax.xlane.f32.xlu0 %v483
        %v1156 = vpop.xlane.xlu0 %1155
        %1157 = vmax.xlane.f32.xlu0 %v490
        %v1158 = vpop.xlane.xlu0 %1157
        %1159 = vmax.xlane.f32.xlu0 %v443
        %v1160 = vpop.xlane.xlu0 %1159
        %1161 = vmax.xlane.f32.xlu0 %v450
        %v1162 = vpop.xlane.xlu0 %1161
        %1163 = vmax.xlane.f32.xlu0 %v457
        %v1164 = vpop.xlane.xlu0 %1163
        %1165 = vmax.xlane.f32.xlu0 %v464
        %v1166 = vpop.xlane.xlu0 %1165
        %1167 = vmax.xlane.f32.xlu0 %v471
        %v1168 = vpop.xlane.xlu0 %1167
        %1169 = vmax.xlane.f32.xlu0 %v478
        %v1170 = vpop.xlane.xlu0 %1169
        %1171 = vmax.xlane.f32.xlu0 %v485
        %v1172 = vpop.xlane.xlu0 %1171
        %1173 = vmax.xlane.f32.xlu0 %v492
        %v1174 = vpop.xlane.xlu0 %1173
        %1175 = vmax.xlane.f32.xlu0 %v445
        %v1176 = vpop.xlane.xlu0 %1175
        %1177 = vmax.xlane.f32.xlu0 %v452
        %v1178 = vpop.xlane.xlu0 %1177
        %1179 = vmax.xlane.f32.xlu0 %v459
        %v1180 = vpop.xlane.xlu0 %1179
        %1181 = vmax.xlane.f32.xlu0 %v466
        %v1182 = vpop.xlane.xlu0 %1181
        %1183 = vmax.xlane.f32.xlu0 %v473
        %v1184 = vpop.xlane.xlu0 %1183
        %1185 = vmax.xlane.f32.xlu0 %v480
        %v1186 = vpop.xlane.xlu0 %1185
        %1187 = vmax.xlane.f32.xlu0 %v487
        %v1188 = vpop.xlane.xlu0 %1187
        %1189 = vmax.xlane.f32.xlu0 %v494
        %v1190 = vpop.xlane.xlu0 %1189
        %vm1191 = vcmask 7168
        %1192 = vst.msk [vmem:[%s401] sm:$0xff] %vm1191, %v1128
        %1193 = vst.msk [vmem:[%s401 + $0x8] sm:$0xff] %vm1191, %v1130
        %1194 = vst.msk [vmem:[%s401 + $0x10] sm:$0xff] %vm1191, %v1132
        %1195 = vst.msk [vmem:[%s401 + $0x18] sm:$0xff] %vm1191, %v1134
        %1196 = vst.msk [vmem:[%s401 + $0x20] sm:$0xff] %vm1191, %v1136
        %1197 = vst.msk [vmem:[%s401 + $0x28] sm:$0xff] %vm1191, %v1138
        %1198 = vst.msk [vmem:[%s401 + $0x30] sm:$0xff] %vm1191, %v1140
        %1199 = vst.msk [vmem:[%s401 + $0x38] sm:$0xff] %vm1191, %v1142
        %1200 = vst.msk [vmem:[%s401 + $0x40] sm:$0xff] %vm1191, %v1144
        %1201 = vst.msk [vmem:[%s401 + $0x48] sm:$0xff] %vm1191, %v1146
        %1202 = vst.msk [vmem:[%s401 + $0x50] sm:$0xff] %vm1191, %v1148
        %1203 = vst.msk [vmem:[%s401 + $0x58] sm:$0xff] %vm1191, %v1150
        %1204 = vst.msk [vmem:[%s401 + $0x60] sm:$0xff] %vm1191, %v1152
        %1205 = vst.msk [vmem:[%s401 + $0x68] sm:$0xff] %vm1191, %v1154
        %1206 = vst.msk [vmem:[%s401 + $0x70] sm:$0xff] %vm1191, %v1156
        %1207 = vst.msk [vmem:[%s401 + $0x78] sm:$0xff] %vm1191, %v1158
        %1208 = vst.msk [vmem:[%s401 + $0x80] sm:$0xff] %vm1191, %v1160
        %1209 = vst.msk [vmem:[%s401 + $0x88] sm:$0xff] %vm1191, %v1162
        %1210 = vst.msk [vmem:[%s401 + $0x90] sm:$0xff] %vm1191, %v1164
        %1211 = vst.msk [vmem:[%s401 + $0x98] sm:$0xff] %vm1191, %v1166
        %1212 = vst.msk [vmem:[%s401 + $0xa0] sm:$0xff] %vm1191, %v1168
        %1213 = vst.msk [vmem:[%s401 + $0xa8] sm:$0xff] %vm1191, %v1170
        %1214 = vst.msk [vmem:[%s401 + $0xb0] sm:$0xff] %vm1191, %v1172
        %1215 = vst.msk [vmem:[%s401 + $0xb8] sm:$0xff] %vm1191, %v1174
        %1216 = vst.msk [vmem:[%s401 + $0xc0] sm:$0xff] %vm1191, %v1176
        %1217 = vst.msk [vmem:[%s401 + $0xc8] sm:$0xff] %vm1191, %v1178
        %1218 = vst.msk [vmem:[%s401 + $0xd0] sm:$0xff] %vm1191, %v1180
        %1219 = vst.msk [vmem:[%s401 + $0xd8] sm:$0xff] %vm1191, %v1182
        %1220 = vst.msk [vmem:[%s401 + $0xe0] sm:$0xff] %vm1191, %v1184
        %1221 = vst.msk [vmem:[%s401 + $0xe8] sm:$0xff] %vm1191, %v1186
        %1222 = vst.msk [vmem:[%s401 + $0xf0] sm:$0xff] %vm1191, %v1188
        %1223 = vst.msk [vmem:[%s401 + $0xf8] sm:$0xff] %vm1191, %v1190
        %1224 = vadd.xlane.f32.xlu0 %v504
        %v1225 = vpop.xlane.xlu0 %1224
        %1226 = vadd.xlane.f32.xlu0 %v511
        %v1227 = vpop.xlane.xlu0 %1226
        %1228 = vadd.xlane.f32.xlu0 %v518
        %v1229 = vpop.xlane.xlu0 %1228
        %1230 = vadd.xlane.f32.xlu0 %v525
        %v1231 = vpop.xlane.xlu0 %1230
        %1232 = vadd.xlane.f32.xlu0 %v532
        %v1233 = vpop.xlane.xlu0 %1232
        %1234 = vadd.xlane.f32.xlu0 %v539
        %v1235 = vpop.xlane.xlu0 %1234
        %1236 = vadd.xlane.f32.xlu0 %v546
        %v1237 = vpop.xlane.xlu0 %1236
        %1238 = vadd.xlane.f32.xlu0 %v553
        %v1239 = vpop.xlane.xlu0 %1238
        %1240 = vadd.xlane.f32.xlu0 %v505
        %v1241 = vpop.xlane.xlu0 %1240
        %1242 = vadd.xlane.f32.xlu0 %v512
        %v1243 = vpop.xlane.xlu0 %1242
        %1244 = vadd.xlane.f32.xlu0 %v519
        %v1245 = vpop.xlane.xlu0 %1244
        %1246 = vadd.xlane.f32.xlu0 %v526
        %v1247 = vpop.xlane.xlu0 %1246
        %1248 = vadd.xlane.f32.xlu0 %v533
        %v1249 = vpop.xlane.xlu0 %1248
        %1250 = vadd.xlane.f32.xlu0 %v540
        %v1251 = vpop.xlane.xlu0 %1250
        %1252 = vadd.xlane.f32.xlu0 %v547
        %v1253 = vpop.xlane.xlu0 %1252
        %1254 = vadd.xlane.f32.xlu0 %v554
        %v1255 = vpop.xlane.xlu0 %1254
        %1256 = vadd.xlane.f32.xlu0 %v507
        %v1257 = vpop.xlane.xlu0 %1256
        %1258 = vadd.xlane.f32.xlu0 %v514
        %v1259 = vpop.xlane.xlu0 %1258
        %1260 = vadd.xlane.f32.xlu0 %v521
        %v1261 = vpop.xlane.xlu0 %1260
        %1262 = vadd.xlane.f32.xlu0 %v528
        %v1263 = vpop.xlane.xlu0 %1262
        %1264 = vadd.xlane.f32.xlu0 %v535
        %v1265 = vpop.xlane.xlu0 %1264
        %1266 = vadd.xlane.f32.xlu0 %v542
        %v1267 = vpop.xlane.xlu0 %1266
        %1268 = vadd.xlane.f32.xlu0 %v549
        %v1269 = vpop.xlane.xlu0 %1268
        %1270 = vadd.xlane.f32.xlu0 %v556
        %v1271 = vpop.xlane.xlu0 %1270
        %1272 = vadd.xlane.f32.xlu0 %v509
        %v1273 = vpop.xlane.xlu0 %1272
        %1274 = vadd.xlane.f32.xlu0 %v516
        %v1275 = vpop.xlane.xlu0 %1274
        %1276 = vadd.xlane.f32.xlu0 %v523
        %v1277 = vpop.xlane.xlu0 %1276
        %1278 = vadd.xlane.f32.xlu0 %v530
        %v1279 = vpop.xlane.xlu0 %1278
        %1280 = vadd.xlane.f32.xlu0 %v537
        %v1281 = vpop.xlane.xlu0 %1280
        %1282 = vadd.xlane.f32.xlu0 %v544
        %v1283 = vpop.xlane.xlu0 %1282
        %1284 = vadd.xlane.f32.xlu0 %v551
        %v1285 = vpop.xlane.xlu0 %1284
        %1286 = vadd.xlane.f32.xlu0 %v558
        %v1287 = vpop.xlane.xlu0 %1286
        %v1288 = vmul.f32 %v1225, %v637
        %v1289 = vmul.f32 %v1227, %v637
        %v1290 = vmul.f32 %v1229, %v637
        %v1291 = vmul.f32 %v1231, %v637
        %v1292 = vmul.f32 %v1233, %v637
        %v1293 = vmul.f32 %v1235, %v637
        %v1294 = vmul.f32 %v1237, %v637
        %v1295 = vmul.f32 %v1239, %v637
        %v1296 = vmul.f32 %v1241, %v637
        %v1297 = vmul.f32 %v1243, %v637
        %v1298 = vmul.f32 %v1245, %v637
        %v1299 = vmul.f32 %v1247, %v637
        %v1300 = vmul.f32 %v1249, %v637
        %v1301 = vmul.f32 %v1251, %v637
        %v1302 = vmul.f32 %v1253, %v637
        %v1303 = vmul.f32 %v1255, %v637
        %v1304 = vmul.f32 %v1257, %v637
        %v1305 = vmul.f32 %v1259, %v637
        %v1306 = vmul.f32 %v1261, %v637
        %v1307 = vmul.f32 %v1263, %v637
        %v1308 = vmul.f32 %v1265, %v637
        %v1309 = vmul.f32 %v1267, %v637
        %v1310 = vmul.f32 %v1269, %v637
        %v1311 = vmul.f32 %v1271, %v637
        %v1312 = vmul.f32 %v1273, %v637
        %v1313 = vmul.f32 %v1275, %v637
        %v1314 = vmul.f32 %v1277, %v637
        %v1315 = vmul.f32 %v1279, %v637
        %v1316 = vmul.f32 %v1281, %v637
        %v1317 = vmul.f32 %v1283, %v637
        %v1318 = vmul.f32 %v1285, %v637
        %v1319 = vmul.f32 %v1287, %v637
        %1320 = vst.msk [vmem:[%s406] sm:$0xff] %vm1191, %v1288
        %1321 = vst.msk [vmem:[%s406 + $0x8] sm:$0xff] %vm1191, %v1289
        %1322 = vst.msk [vmem:[%s406 + $0x10] sm:$0xff] %vm1191, %v1290
        %1323 = vst.msk [vmem:[%s406 + $0x18] sm:$0xff] %vm1191, %v1291
        %1324 = vst.msk [vmem:[%s406 + $0x20] sm:$0xff] %vm1191, %v1292
        %1325 = vst.msk [vmem:[%s406 + $0x28] sm:$0xff] %vm1191, %v1293
        %1326 = vst.msk [vmem:[%s406 + $0x30] sm:$0xff] %vm1191, %v1294
        %1327 = vst.msk [vmem:[%s406 + $0x38] sm:$0xff] %vm1191, %v1295
        %1328 = vst.msk [vmem:[%s406 + $0x40] sm:$0xff] %vm1191, %v1296
        %1329 = vst.msk [vmem:[%s406 + $0x48] sm:$0xff] %vm1191, %v1297
        %1330 = vst.msk [vmem:[%s406 + $0x50] sm:$0xff] %vm1191, %v1298
        %1331 = vst.msk [vmem:[%s406 + $0x58] sm:$0xff] %vm1191, %v1299
        %1332 = vst.msk [vmem:[%s406 + $0x60] sm:$0xff] %vm1191, %v1300
        %1333 = vst.msk [vmem:[%s406 + $0x68] sm:$0xff] %vm1191, %v1301
        %1334 = vst.msk [vmem:[%s406 + $0x70] sm:$0xff] %vm1191, %v1302
        %1335 = vst.msk [vmem:[%s406 + $0x78] sm:$0xff] %vm1191, %v1303
        %1336 = vst.msk [vmem:[%s406 + $0x80] sm:$0xff] %vm1191, %v1304
        %1337 = vst.msk [vmem:[%s406 + $0x88] sm:$0xff] %vm1191, %v1305
        %1338 = vst.msk [vmem:[%s406 + $0x90] sm:$0xff] %vm1191, %v1306
        %1339 = vst.msk [vmem:[%s406 + $0x98] sm:$0xff] %vm1191, %v1307
        %1340 = vst.msk [vmem:[%s406 + $0xa0] sm:$0xff] %vm1191, %v1308
        %1341 = vst.msk [vmem:[%s406 + $0xa8] sm:$0xff] %vm1191, %v1309
        %1342 = vst.msk [vmem:[%s406 + $0xb0] sm:$0xff] %vm1191, %v1310
        %1343 = vst.msk [vmem:[%s406 + $0xb8] sm:$0xff] %vm1191, %v1311
        %1344 = vst.msk [vmem:[%s406 + $0xc0] sm:$0xff] %vm1191, %v1312
        %1345 = vst.msk [vmem:[%s406 + $0xc8] sm:$0xff] %vm1191, %v1313
        %1346 = vst.msk [vmem:[%s406 + $0xd0] sm:$0xff] %vm1191, %v1314
        %1347 = vst.msk [vmem:[%s406 + $0xd8] sm:$0xff] %vm1191, %v1315
        %1348 = vst.msk [vmem:[%s406 + $0xe0] sm:$0xff] %vm1191, %v1316
        %1349 = vst.msk [vmem:[%s406 + $0xe8] sm:$0xff] %vm1191, %v1317
        %1350 = vst.msk [vmem:[%s406 + $0xf0] sm:$0xff] %vm1191, %v1318
        %1351 = vst.msk [vmem:[%s406 + $0xf8] sm:$0xff] %vm1191, %v1319
        %p1352 = scmp.lt.s32.totalorder %s23, 1
        %s1353 = scalar_select %p1352, %s23, 1
        %s1354 = smul.addr %s1353, 8
        %s1355 = smul.addr %s1354, 8
        %s1356 = scalar_lea.vmem %s1, %s1355
        %p1357 = scmp.lt.s32.totalorder %s23, 1
        %s1358 = scalar_select %p1357, %s23, 1
        %s1359 = smul.addr %s1358, 8
        %s1360 = smul.addr %s1359, 8
        %s1361 = scalar_lea.vmem %s2, %s1360
        %p1362 = scmp.lt.s32.totalorder %s23, 1
        %s1363 = scalar_select %p1362, %s23, 1
        %s1364 = smul.addr %s1363, 4
        %s1365 = smul.addr %s1364, 8
        %s1366 = scalar_lea.vmem %s3, %s1365
        %p1367 = scmp.lt.s32.totalorder %s23, 1
        %s1368 = scalar_select %p1367, %s23, 1
        %s1369 = smul.addr %s1368, 4
        %s1370 = smul.addr %s1369, 8
        %s1371 = scalar_lea.vmem %s4, %s1370
        %p1372 = scmp.lt.s32.totalorder %s23, 1
        %s1373 = scalar_select %p1372, %s23, 1
        %s1374 = smul.addr %s1373, 32
        %s1375 = scalar_lea.vmem %s5, %s1374
        %p1376 = scmp.lt.s32.totalorder %s23, 1
        %s1377 = scalar_select %p1376, %s23, 1
        %s1378 = smul.addr %s1377, 32
        %s1379 = scalar_lea.vmem %s6, %s1378
        %p1380 = scmp.lt.s32.totalorder %s23, 1
        %s1381 = scalar_select %p1380, %s23, 1
        %s1382 = smul.addr %s1381, 32
        %s1383 = smul.addr %s1382, 8
        %s1384 = scalar_lea.vmem %s7, %s1383
        %p1385 = scmp.lt.s32.totalorder %s23, 1
        %s1386 = scalar_select %p1385, %s23, 1
        %s1387 = smul.addr %s1386, 32
        %s1388 = smul.addr %s1387, 8
        %s1389 = scalar_lea.vmem %s8, %s1388
        // Predicated region
        $region29: #{triplet_attention_pallas.3} parent=23 // pred_check
          %p1390 = pneg %p67
        $region30: #{triplet_attention_pallas.3} parent=23 // pred_check_branch
          %1392 = sbr.rel (%p1390) target = $region32
        $region31: #{triplet_attention_pallas.3} parent=23 // pred_region
          _
        $region32: #{triplet_attention_pallas.3} parent=23 // pred_fallthru
          _
        // Predicated region
        $region33: #{triplet_attention_pallas.3} parent=23 // pred_check
          %p1393 = pneg %p93
        $region34: #{triplet_attention_pallas.3} parent=23 // pred_check_branch
          %1395 = sbr.rel (%p1393) target = $region36
        $region35: #{triplet_attention_pallas.3} parent=23 // pred_region
          _
        $region36: #{triplet_attention_pallas.3} parent=23 // pred_fallthru
          _
        // Predicated region
        $region37: #{triplet_attention_pallas.3} parent=23 // pred_check
          %p1396 = pneg %p119
        $region38: #{triplet_attention_pallas.3} parent=23 // pred_check_branch
          %1398 = sbr.rel (%p1396) target = $region40
        $region39: #{triplet_attention_pallas.3} parent=23 // pred_region
          _
        $region40: #{triplet_attention_pallas.3} parent=23 // pred_fallthru
          _
        // Predicated region
        $region41: #{triplet_attention_pallas.3} parent=23 // pred_check
          %p1399 = pneg %p145
        $region42: #{triplet_attention_pallas.3} parent=23 // pred_check_branch
          %1401 = sbr.rel (%p1399) target = $region44
        $region43: #{triplet_attention_pallas.3} parent=23 // pred_region
          _
        $region44: #{triplet_attention_pallas.3} parent=23 // pred_fallthru
          _
        // Predicated region
        $region45: #{triplet_attention_pallas.3} parent=23 // pred_check
          %p1402 = pneg %p171
        $region46: #{triplet_attention_pallas.3} parent=23 // pred_check_branch
          %1404 = sbr.rel (%p1402) target = $region48
        $region47: #{triplet_attention_pallas.3} parent=23 // pred_region
          _
        $region48: #{triplet_attention_pallas.3} parent=23 // pred_fallthru
          _
        // Predicated region
        $region49: #{triplet_attention_pallas.3} parent=23 // pred_check
          %p1405 = pneg %p197
        $region50: #{triplet_attention_pallas.3} parent=23 // pred_check_branch
          %1407 = sbr.rel (%p1405) target = $region52
        $region51: #{triplet_attention_pallas.3} parent=23 // pred_region
          _
        $region52: #{triplet_attention_pallas.3} parent=23 // pred_fallthru
          _
        // Predicated region
        $region53: #{triplet_attention_pallas.3} parent=23 // pred_check
          %p1408 = pneg %p223
        $region54: #{triplet_attention_pallas.3} parent=23 // pred_check_branch
          %1410 = sbr.rel (%p1408) target = $region56
        $region55: #{triplet_attention_pallas.3} parent=23 // pred_region
          _
        $region56: #{triplet_attention_pallas.3} parent=23 // pred_fallthru
          _
        // Predicated region
        $region57: #{triplet_attention_pallas.3} parent=23 // pred_check
          %p1411 = pneg %p249
        $region58: #{triplet_attention_pallas.3} parent=23 // pred_check_branch
          %1413 = sbr.rel (%p1411) target = $region60
        $region59: #{triplet_attention_pallas.3} parent=23 // pred_region
          _
        $region60: #{triplet_attention_pallas.3} parent=23 // pred_fallthru
          _
      $region24: #{triplet_attention_pallas.3} parent=5 // pred_fallthru
        _
      %p1414 = scmp.le.s32.totalorder 2, %s18
      // Predicated region
      $region61: #{triplet_attention_pallas.3} parent=5 // pred_check
        %p1415 = pneg %p1414
      $region62: #{triplet_attention_pallas.3} parent=5 // pred_check_branch
        %1417 = sbr.rel (%p1415) target = $region64
      $region63: #{triplet_attention_pallas.3} parent=5 // pred_region
        %s1418 = ssub.s32 %s18, 2
        // Predicated region
        $region65: #{triplet_attention_pallas.3} parent=63 // pred_check
          %p1419 = pneg %p73
        $region66: #{triplet_attention_pallas.3} parent=63 // pred_check_branch
          %1421 = sbr.rel (%p1419) target = $region68
        $region67: #{triplet_attention_pallas.3} parent=63 // pred_region
          %p1422 = scmp.lt.s32.totalorder %s24, 1
          %s1423 = scalar_select %p1422, %s24, 1
          %s1424 = smul.addr %s1423, 8
          %s1425 = smul.addr %s1424, 8
          %s1426 = scalar_lea.vmem %s1, %s1425
        $region68: #{triplet_attention_pallas.3} parent=63 // pred_fallthru
          _
        // Predicated region
        $region69: #{triplet_attention_pallas.3} parent=63 // pred_check
          %p1427 = pneg %p99
        $region70: #{triplet_attention_pallas.3} parent=63 // pred_check_branch
          %1429 = sbr.rel (%p1427) target = $region72
        $region71: #{triplet_attention_pallas.3} parent=63 // pred_region
          %p1430 = scmp.lt.s32.totalorder %s24, 1
          %s1431 = scalar_select %p1430, %s24, 1
          %s1432 = smul.addr %s1431, 8
          %s1433 = smul.addr %s1432, 8
          %s1434 = scalar_lea.vmem %s2, %s1433
        $region72: #{triplet_attention_pallas.3} parent=63 // pred_fallthru
          _
        // Predicated region
        $region73: #{triplet_attention_pallas.3} parent=63 // pred_check
          %p1435 = pneg %p125
        $region74: #{triplet_attention_pallas.3} parent=63 // pred_check_branch
          %1437 = sbr.rel (%p1435) target = $region76
        $region75: #{triplet_attention_pallas.3} parent=63 // pred_region
          %p1438 = scmp.lt.s32.totalorder %s24, 1
          %s1439 = scalar_select %p1438, %s24, 1
          %s1440 = smul.addr %s1439, 4
          %s1441 = smul.addr %s1440, 8
          %s1442 = scalar_lea.vmem %s3, %s1441
        $region76: #{triplet_attention_pallas.3} parent=63 // pred_fallthru
          _
        // Predicated region
        $region77: #{triplet_attention_pallas.3} parent=63 // pred_check
          %p1443 = pneg %p151
        $region78: #{triplet_attention_pallas.3} parent=63 // pred_check_branch
          %1445 = sbr.rel (%p1443) target = $region80
        $region79: #{triplet_attention_pallas.3} parent=63 // pred_region
          %p1446 = scmp.lt.s32.totalorder %s24, 1
          %s1447 = scalar_select %p1446, %s24, 1
          %s1448 = smul.addr %s1447, 4
          %s1449 = smul.addr %s1448, 8
          %s1450 = scalar_lea.vmem %s4, %s1449
        $region80: #{triplet_attention_pallas.3} parent=63 // pred_fallthru
          _
        // Predicated region
        $region81: #{triplet_attention_pallas.3} parent=63 // pred_check
          %p1451 = pneg %p177
        $region82: #{triplet_attention_pallas.3} parent=63 // pred_check_branch
          %1453 = sbr.rel (%p1451) target = $region84
        $region83: #{triplet_attention_pallas.3} parent=63 // pred_region
          %p1454 = scmp.lt.s32.totalorder %s24, 1
          %s1455 = scalar_select %p1454, %s24, 1
          %s1456 = smul.addr %s1455, 32
          %s1457 = scalar_lea.vmem %s5, %s1456
        $region84: #{triplet_attention_pallas.3} parent=63 // pred_fallthru
          _
        // Predicated region
        $region85: #{triplet_attention_pallas.3} parent=63 // pred_check
          %p1458 = pneg %p203
        $region86: #{triplet_attention_pallas.3} parent=63 // pred_check_branch
          %1460 = sbr.rel (%p1458) target = $region88
        $region87: #{triplet_attention_pallas.3} parent=63 // pred_region
          %p1461 = scmp.lt.s32.totalorder %s24, 1
          %s1462 = scalar_select %p1461, %s24, 1
          %s1463 = smul.addr %s1462, 32
          %s1464 = scalar_lea.vmem %s6, %s1463
        $region88: #{triplet_attention_pallas.3} parent=63 // pred_fallthru
          _
        // Predicated region
        $region89: #{triplet_attention_pallas.3} parent=63 // pred_check
          %p1465 = pneg %p229
        $region90: #{triplet_attention_pallas.3} parent=63 // pred_check_branch
          %1467 = sbr.rel (%p1465) target = $region92
        $region91: #{triplet_attention_pallas.3} parent=63 // pred_region
          %p1468 = scmp.lt.s32.totalorder %s24, 1
          %s1469 = scalar_select %p1468, %s24, 1
          %s1470 = smul.addr %s1469, 32
          %s1471 = smul.addr %s1470, 8
          %s1472 = scalar_lea.vmem %s7, %s1471
        $region92: #{triplet_attention_pallas.3} parent=63 // pred_fallthru
          _
        // Predicated region
        $region93: #{triplet_attention_pallas.3} parent=63 // pred_check
          %p1473 = pneg %p255
        $region94: #{triplet_attention_pallas.3} parent=63 // pred_check_branch
          %1475 = sbr.rel (%p1473) target = $region96
        $region95: #{triplet_attention_pallas.3} parent=63 // pred_region
          %p1476 = scmp.lt.s32.totalorder %s24, 1
          %s1477 = scalar_select %p1476, %s24, 1
          %s1478 = smul.addr %s1477, 32
          %s1479 = smul.addr %s1478, 8
          %s1480 = scalar_lea.vmem %s8, %s1479
        $region96: #{triplet_attention_pallas.3} parent=63 // pred_fallthru
          _
      $region64: #{triplet_attention_pallas.3} parent=5 // pred_fallthru
        _
    $region6: #{triplet_attention_pallas.3} parent=1 // loop_footer
      %s22 = sadd.s32 1, %s18
    $region7: #{triplet_attention_pallas.3} parent=1 // loop_footer_branch
      %17 = sbr.rel target = $region3
    $region8: #{triplet_attention_pallas.3} parent=1 // loop_exit
      _
    %1481 = vsyncpa [#allocation3], 1
    %s1482 = scalar_lea.sflag [#allocation3], 1
    %1483 = vsyncpa %s1482, 1

// kernel: triplet_attention_pallas.5
$region0: #{triplet_attention_pallas.5}
  #allocation0 [shape = 'u32[]', space=smem, size = 0x4, offset = 0x4, fixed_abs, tag = 'smem constant byte address 0x4 - core index']
  #allocation1 [shape = 'u32[144,128]{1,0:T(1,128)}', space=vmem, size = 0x12000, scoped, tag = 'internal scratch']
  %s0 = inlined_call_operand.vmem [shape: f32[2,4,8,8,8], index: 0, kind: input, shape index: {}]
  %s1 = inlined_call_operand.vmem [shape: f32[2,1,8,8,8], index: 1, kind: input, shape index: {}]
  %s2 = inlined_call_operand.vmem [shape: f32[2,4,1,8,8], index: 2, kind: input, shape index: {}]
  %s3 = inlined_call_operand.vmem [shape: f32[2,4,8,1,8], index: 3, kind: input, shape index: {}]
  %s4 = inlined_call_operand.vmem [shape: f32[2,4,8,8,1], index: 4, kind: input, shape index: {}]
  %s5 = inlined_call_operand.hbm [shape: f32[2,4,8,8,8], index: 5, kind: output, shape index: {}]
  %s6 = sld [smem:[#allocation0]]
  $region53: #{triplet_attention_pallas.5} parent=0
    _
  %s8 = ssub.s32 1, %s6
  %s9 = scalar_select 0, %s8, %s6
  $region1: #{triplet_attention_pallas.5} parent=0
    #allocation2 [shape = 'u8[262144]{0}', space=vmem, size = 0x40000, scoped, tag = 'output window, operand 0']
    #allocation3 [shape = 's32[2]{0}', space=sflag, size = 0x8, scoped, tag = 'scoped memory for triplet_attention_pallas.5']
    %10 = vsyncpa [#allocation3], 0
    %s11 = scalar_lea.sflag [#allocation3], 1
    %12 = vsyncpa %s11, 0
    loop: start=0, step=1, limit=4
    $region2: #{triplet_attention_pallas.5} parent=1 // loop_pre_header
      _
    $region3: #{triplet_attention_pallas.5} parent=1 // loop_header
      %s14 = sphi 0, %s18
      %p15 = scmp.ge.s32.totalorder %s14, 4
      %s24 = sphi 0, %s26
      %s27 = sphi 0, %s24
      %s28 = sphi 0, %s27
      %s44 = sphi 0, %s28
      %s50 = sphi 0, %s52
      %s53 = sphi 0, %s50
      %s54 = sphi 0, %s53
      %s70 = sphi 0, %s54
      %s76 = sphi 0, %s78
      %s79 = sphi 0, %s76
      %s80 = sphi 0, %s79
      %s96 = sphi 0, %s80
      %s102 = sphi 0, %s104
      %s105 = sphi 0, %s102
      %s106 = sphi 0, %s105
      %s122 = sphi 0, %s106
      %s128 = sphi 0, %s130
      %s131 = sphi 0, %s128
      %s132 = sphi 0, %s131
      %s148 = sphi 0, %s132
      %s154 = sphi 0, %s156
      %s157 = sphi 0, %s154
      %s158 = sphi 0, %s157
      %s174 = sphi 0, %s158
    $region4: #{triplet_attention_pallas.5} parent=1 // loop_header_branch
      %17 = sbr.rel (%p15) target = $region8
    $region5: #{triplet_attention_pallas.5} parent=1 // loop_body
      %s19 = ssub.s32 %s14, 1
      %s20 = ssub.s32 %s14, 2
      %s21 = sadd.s32 %s14, 1
      %s22 = ssub.s32 %s14, %s21
      %p23 = scmp.eq.s32.totalorder %s22, 0
      %s25 = sadd.s32 %s24, 1
      %s26 = scalar_select %p23, %s24, %s25
      %p29 = pneg %p23
      %p30 = scmp.eq.s32.totalorder %s14, 1
      %p31 = por %p29, %p30
      %p32 = scmp.ne.s32.totalorder %s24, %s27
      %p33 = scmp.eq.s32.totalorder %s14, 0
      %p34 = por %p32, %p33
      %p35 = scmp.ne.s32.totalorder %s24, %s27
      %p36 = scmp.eq.s32.totalorder %s19, 1
      %p37 = por %p35, %p36
      %p38 = scmp.ne.s32.totalorder %s27, %s28
      %p39 = scmp.eq.s32.totalorder %s19, 0
      %p40 = por %p38, %p39
      %p41 = scmp.ne.s32.totalorder %s27, %s28
      %p42 = scmp.eq.s32.totalorder %s20, 1
      %p43 = por %p41, %p42
      %p45 = scmp.ne.s32.totalorder %s28, %s44
      %p46 = scmp.eq.s32.totalorder %s20, 0
      %p47 = por %p45, %p46
      %s48 = ssub.s32 %s14, %s21
      %p49 = scmp.eq.s32.totalorder %s48, 0
      %s51 = sadd.s32 %s50, 1
      %s52 = scalar_select %p49, %s50, %s51
      %p55 = pneg %p49
      %p56 = scmp.eq.s32.totalorder %s14, 1
      %p57 = por %p55, %p56
      %p58 = scmp.ne.s32.totalorder %s50, %s53
      %p59 = scmp.eq.s32.totalorder %s14, 0
      %p60 = por %p58, %p59
      %p61 = scmp.ne.s32.totalorder %s50, %s53
      %p62 = scmp.eq.s32.totalorder %s19, 1
      %p63 = por %p61, %p62
      %p64 = scmp.ne.s32.totalorder %s53, %s54
      %p65 = scmp.eq.s32.totalorder %s19, 0
      %p66 = por %p64, %p65
      %p67 = scmp.ne.s32.totalorder %s53, %s54
      %p68 = scmp.eq.s32.totalorder %s20, 1
      %p69 = por %p67, %p68
      %p71 = scmp.ne.s32.totalorder %s54, %s70
      %p72 = scmp.eq.s32.totalorder %s20, 0
      %p73 = por %p71, %p72
      %s74 = ssub.s32 %s14, %s21
      %p75 = scmp.eq.s32.totalorder %s74, 0
      %s77 = sadd.s32 %s76, 1
      %s78 = scalar_select %p75, %s76, %s77
      %p81 = pneg %p75
      %p82 = scmp.eq.s32.totalorder %s14, 1
      %p83 = por %p81, %p82
      %p84 = scmp.ne.s32.totalorder %s76, %s79
      %p85 = scmp.eq.s32.totalorder %s14, 0
      %p86 = por %p84, %p85
      %p87 = scmp.ne.s32.totalorder %s76, %s79
      %p88 = scmp.eq.s32.totalorder %s19, 1
      %p89 = por %p87, %p88
      %p90 = scmp.ne.s32.totalorder %s79, %s80
      %p91 = scmp.eq.s32.totalorder %s19, 0
      %p92 = por %p90, %p91
      %p93 = scmp.ne.s32.totalorder %s79, %s80
      %p94 = scmp.eq.s32.totalorder %s20, 1
      %p95 = por %p93, %p94
      %p97 = scmp.ne.s32.totalorder %s80, %s96
      %p98 = scmp.eq.s32.totalorder %s20, 0
      %p99 = por %p97, %p98
      %s100 = ssub.s32 %s14, %s21
      %p101 = scmp.eq.s32.totalorder %s100, 0
      %s103 = sadd.s32 %s102, 1
      %s104 = scalar_select %p101, %s102, %s103
      %p107 = pneg %p101
      %p108 = scmp.eq.s32.totalorder %s14, 1
      %p109 = por %p107, %p108
      %p110 = scmp.ne.s32.totalorder %s102, %s105
      %p111 = scmp.eq.s32.totalorder %s14, 0
      %p112 = por %p110, %p111
      %p113 = scmp.ne.s32.totalorder %s102, %s105
      %p114 = scmp.eq.s32.totalorder %s19, 1
      %p115 = por %p113, %p114
      %p116 = scmp.ne.s32.totalorder %s105, %s106
      %p117 = scmp.eq.s32.totalorder %s19, 0
      %p118 = por %p116, %p117
      %p119 = scmp.ne.s32.totalorder %s105, %s106
      %p120 = scmp.eq.s32.totalorder %s20, 1
      %p121 = por %p119, %p120
      %p123 = scmp.ne.s32.totalorder %s106, %s122
      %p124 = scmp.eq.s32.totalorder %s20, 0
      %p125 = por %p123, %p124
      %s126 = ssub.s32 %s14, %s21
      %p127 = scmp.eq.s32.totalorder %s126, 0
      %s129 = sadd.s32 %s128, 1
      %s130 = scalar_select %p127, %s128, %s129
      %p133 = pneg %p127
      %p134 = scmp.eq.s32.totalorder %s14, 1
      %p135 = por %p133, %p134
      %p136 = scmp.ne.s32.totalorder %s128, %s131
      %p137 = scmp.eq.s32.totalorder %s14, 0
      %p138 = por %p136, %p137
      %p139 = scmp.ne.s32.totalorder %s128, %s131
      %p140 = scmp.eq.s32.totalorder %s19, 1
      %p141 = por %p139, %p140
      %p142 = scmp.ne.s32.totalorder %s131, %s132
      %p143 = scmp.eq.s32.totalorder %s19, 0
      %p144 = por %p142, %p143
      %p145 = scmp.ne.s32.totalorder %s131, %s132
      %p146 = scmp.eq.s32.totalorder %s20, 1
      %p147 = por %p145, %p146
      %p149 = scmp.ne.s32.totalorder %s132, %s148
      %p150 = scmp.eq.s32.totalorder %s20, 0
      %p151 = por %p149, %p150
      %s152 = ssub.s32 %s14, %s21
      %p153 = scmp.eq.s32.totalorder %s152, 0
      %s155 = sadd.s32 %s154, 1
      %s156 = scalar_select %p153, %s154, %s155
      %p159 = pneg %p153
      %p160 = scmp.eq.s32.totalorder %s14, 1
      %p161 = por %p159, %p160
      %p162 = scmp.ne.s32.totalorder %s154, %s157
      %p163 = scmp.eq.s32.totalorder %s14, 0
      %p164 = por %p162, %p163
      %p165 = scmp.ne.s32.totalorder %s154, %s157
      %p166 = scmp.eq.s32.totalorder %s19, 1
      %p167 = por %p165, %p166
      %p168 = scmp.ne.s32.totalorder %s157, %s158
      %p169 = scmp.eq.s32.totalorder %s19, 0
      %p170 = por %p168, %p169
      %p171 = scmp.ne.s32.totalorder %s157, %s158
      %p172 = scmp.eq.s32.totalorder %s20, 1
      %p173 = por %p171, %p172
      %p175 = scmp.ne.s32.totalorder %s158, %s174
      %p176 = scmp.eq.s32.totalorder %s20, 0
      %p177 = por %p175, %p176
      %p178 = scmp.le.s32.totalorder 1, %s14
      %p179 = scmp.lt.s32.totalorder %s14, 3
      %p180 = pnand %p178, %p179
      %p181 = pneg %p180
      // Predicated region
      $region9: #{triplet_attention_pallas.5} parent=5 // pred_check
        _
      $region10: #{triplet_attention_pallas.5} parent=5 // pred_check_branch
        %183 = sbr.rel (%p180) target = $region12
      $region11: #{triplet_attention_pallas.5} parent=5 // pred_region
        %s184 = ssub.s32 %s14, 1
      $region12: #{triplet_attention_pallas.5} parent=5 // pred_fallthru
        _
      %p185 = scmp.lt.s32.totalorder %s14, 2
      // Predicated region
      $region13: #{triplet_attention_pallas.5} parent=5 // pred_check
        %p186 = pneg %p185
      $region14: #{triplet_attention_pallas.5} parent=5 // pred_check_branch
        %188 = sbr.rel (%p186) target = $region16
      $region15: #{triplet_attention_pallas.5} parent=5 // pred_region
        // Predicated region
        $region17: #{triplet_attention_pallas.5} parent=15 // pred_check
          %p189 = pneg %p34
        $region18: #{triplet_attention_pallas.5} parent=15 // pred_check_branch
          %191 = sbr.rel (%p189) target = $region20
        $region19: #{triplet_attention_pallas.5} parent=15 // pred_region
          %p192 = scmp.lt.s32.totalorder %s14, 1
          %s193 = scalar_select %p192, %s14, 1
          %s194 = smul.addr %s193, 32
          %s195 = smul.addr %s194, 8
          %s196 = scalar_lea.vmem %s0, %s195
        $region20: #{triplet_attention_pallas.5} parent=15 // pred_fallthru
          _
        // Predicated region
        $region21: #{triplet_attention_pallas.5} parent=15 // pred_check
          %p197 = pneg %p60
        $region22: #{triplet_attention_pallas.5} parent=15 // pred_check_branch
          %199 = sbr.rel (%p197) target = $region24
        $region23: #{triplet_attention_pallas.5} parent=15 // pred_region
          %p200 = scmp.lt.s32.totalorder %s14, 1
          %s201 = scalar_select %p200, %s14, 1
          %s202 = smul.addr %s201, 8
          %s203 = smul.addr %s202, 8
          %s204 = scalar_lea.vmem %s1, %s203
        $region24: #{triplet_attention_pallas.5} parent=15 // pred_fallthru
          _
        // Predicated region
        $region25: #{triplet_attention_pallas.5} parent=15 // pred_check
          %p205 = pneg %p86
        $region26: #{triplet_attention_pallas.5} parent=15 // pred_check_branch
          %207 = sbr.rel (%p205) target = $region28
        $region27: #{triplet_attention_pallas.5} parent=15 // pred_region
          %p208 = scmp.lt.s32.totalorder %s14, 1
          %s209 = scalar_select %p208, %s14, 1
          %s210 = smul.addr %s209, 4
          %s211 = smul.addr %s210, 8
          %s212 = scalar_lea.vmem %s2, %s211
        $region28: #{triplet_attention_pallas.5} parent=15 // pred_fallthru
          _
        // Predicated region
        $region29: #{triplet_attention_pallas.5} parent=15 // pred_check
          %p213 = pneg %p112
        $region30: #{triplet_attention_pallas.5} parent=15 // pred_check_branch
          %215 = sbr.rel (%p213) target = $region32
        $region31: #{triplet_attention_pallas.5} parent=15 // pred_region
          %p216 = scmp.lt.s32.totalorder %s14, 1
          %s217 = scalar_select %p216, %s14, 1
          %s218 = smul.addr %s217, 32
          %s219 = scalar_lea.vmem %s3, %s218
        $region32: #{triplet_attention_pallas.5} parent=15 // pred_fallthru
          _
        // Predicated region
        $region33: #{triplet_attention_pallas.5} parent=15 // pred_check
          %p220 = pneg %p138
        $region34: #{triplet_attention_pallas.5} parent=15 // pred_check_branch
          %222 = sbr.rel (%p220) target = $region36
        $region35: #{triplet_attention_pallas.5} parent=15 // pred_region
          %p223 = scmp.lt.s32.totalorder %s14, 1
          %s224 = scalar_select %p223, %s14, 1
          %s225 = smul.addr %s224, 32
          %s226 = smul.addr %s225, 8
          %s227 = scalar_lea.vmem %s4, %s226
        $region36: #{triplet_attention_pallas.5} parent=15 // pred_fallthru
          _
      $region16: #{triplet_attention_pallas.5} parent=5 // pred_fallthru
        _
      %p228 = scmp.le.s32.totalorder 1, %s14
      %p229 = scmp.lt.s32.totalorder %s14, 3
      %p230 = pnand %p228, %p229
      %p231 = pneg %p230
      // Predicated region
      $region37: #{triplet_attention_pallas.5} parent=5 // pred_check
        _
      $region38: #{triplet_attention_pallas.5} parent=5 // pred_check_branch
        %233 = sbr.rel (%p230) target = $region40
      $region39: #{triplet_attention_pallas.5} parent=5 // pred_region
        %s234 = ssub.s32 %s14, 1
        %p235 = scmp.lt.s32.totalorder %s19, 1
        %s236 = scalar_select %p235, %s19, 1
        %s237 = smul.addr %s236, 32
        %s238 = smul.addr %s237, 8
        %s239 = scalar_lea.vmem %s0, %s238
        %p240 = pneg %p40
        %p241 = pneg %p37
        %p242 = scmp.lt.s32.totalorder %s19, 1
        %s243 = scalar_select %p242, %s19, 1
        %s244 = smul.addr %s243, 8
        %s245 = smul.addr %s244, 8
        %s246 = scalar_lea.vmem %s1, %s245
        %p247 = pneg %p66
        %p248 = pneg %p63
        %p249 = scmp.lt.s32.totalorder %s19, 1
        %s250 = scalar_select %p249, %s19, 1
        %s251 = smul.addr %s250, 4
        %s252 = smul.addr %s251, 8
        %s253 = scalar_lea.vmem %s2, %s252
        %p254 = pneg %p92
        %p255 = pneg %p89
        %p256 = scmp.lt.s32.totalorder %s19, 1
        %s257 = scalar_select %p256, %s19, 1
        %s258 = smul.addr %s257, 32
        %s259 = scalar_lea.vmem %s3, %s258
        %p260 = pneg %p118
        %p261 = pneg %p115
        %p262 = scmp.lt.s32.totalorder %s19, 1
        %s263 = scalar_select %p262, %s19, 1
        %s264 = smul.addr %s263, 32
        %s265 = smul.addr %s264, 8
        %s266 = scalar_lea.vmem %s4, %s265
        %p267 = pneg %p144
        %p268 = pneg %p141
        %p269 = pneg %p170
        %p270 = pneg %p167
        %s271 = sand.u32 %s157, 1
        %s272 = scalar_lea.sflag [#allocation3], %s271
        %s273 = sand.u32 %s157, 1
        %s274 = smul.addr %s273, 256
        %s275 = scalar_lea.vmem [#allocation2], %s274
        %p276 = scmp.lt.s32.totalorder %s19, 1
        %s277 = scalar_select %p276, %s19, 1
        %s278 = smul.addr %s277, 32
        %s279 = smul.addr %s278, 8
        %s280 = scalar_lea.vmem %s0, %s279
        %p281 = scmp.lt.s32.totalorder %s19, 1
        %s282 = scalar_select %p281, %s19, 1
        %s283 = smul.addr %s282, 8
        %s284 = smul.addr %s283, 8
        %s285 = scalar_lea.vmem %s1, %s284
        %p286 = scmp.lt.s32.totalorder %s19, 1
        %s287 = scalar_select %p286, %s19, 1
        %s288 = smul.addr %s287, 4
        %s289 = smul.addr %s288, 8
        %s290 = scalar_lea.vmem %s2, %s289
        %p291 = scmp.lt.s32.totalorder %s19, 1
        %s292 = scalar_select %p291, %s19, 1
        %s293 = smul.addr %s292, 32
        %s294 = scalar_lea.vmem %s3, %s293
        %p295 = scmp.lt.s32.totalorder %s19, 1
        %s296 = scalar_select %p295, %s19, 1
        %s297 = smul.addr %s296, 32
        %s298 = smul.addr %s297, 8
        %s299 = scalar_lea.vmem %s4, %s298
        %v300 = vld [vmem:[%s280] sm:$0xff]
        %v301 = vld [vmem:[%s280 + $0x8] sm:$0xff]
        %v302 = vld [vmem:[%s280 + $0x10] sm:$0xff]
        %v303 = vld [vmem:[%s280 + $0x18] sm:$0xff]
        %v304 = vld [vmem:[%s280 + $0x20] sm:$0xff]
        %v305 = vld [vmem:[%s280 + $0x28] sm:$0xff]
        %v306 = vld [vmem:[%s280 + $0x30] sm:$0xff]
        %v307 = vld [vmem:[%s280 + $0x38] sm:$0xff]
        %v308 = vld [vmem:[%s280 + $0x40] sm:$0xff]
        %v309 = vld [vmem:[%s280 + $0x48] sm:$0xff]
        %v310 = vld [vmem:[%s280 + $0x50] sm:$0xff]
        %v311 = vld [vmem:[%s280 + $0x58] sm:$0xff]
        %v312 = vld [vmem:[%s280 + $0x60] sm:$0xff]
        %v313 = vld [vmem:[%s280 + $0x68] sm:$0xff]
        %v314 = vld [vmem:[%s280 + $0x70] sm:$0xff]
        %v315 = vld [vmem:[%s280 + $0x78] sm:$0xff]
        %v316 = vld [vmem:[%s280 + $0x80] sm:$0xff]
        %v317 = vld [vmem:[%s280 + $0x88] sm:$0xff]
        %v318 = vld [vmem:[%s280 + $0x90] sm:$0xff]
        %v319 = vld [vmem:[%s280 + $0x98] sm:$0xff]
        %v320 = vld [vmem:[%s280 + $0xa0] sm:$0xff]
        %v321 = vld [vmem:[%s280 + $0xa8] sm:$0xff]
        %v322 = vld [vmem:[%s280 + $0xb0] sm:$0xff]
        %v323 = vld [vmem:[%s280 + $0xb8] sm:$0xff]
        %v324 = vld [vmem:[%s280 + $0xc0] sm:$0xff]
        %v325 = vld [vmem:[%s280 + $0xc8] sm:$0xff]
        %v326 = vld [vmem:[%s280 + $0xd0] sm:$0xff]
        %v327 = vld [vmem:[%s280 + $0xd8] sm:$0xff]
        %v328 = vld [vmem:[%s280 + $0xe0] sm:$0xff]
        %v329 = vld [vmem:[%s280 + $0xe8] sm:$0xff]
        %v330 = vld [vmem:[%s280 + $0xf0] sm:$0xff]
        %v331 = vld [vmem:[%s280 + $0xf8] sm:$0xff]
        %v332 = vld [vmem:[%s285] sm:$0xff]
        %v333 = vld [vmem:[%s285 + $0x8] sm:$0xff]
        %v334 = vld [vmem:[%s285 + $0x10] sm:$0xff]
        %v335 = vld [vmem:[%s285 + $0x18] sm:$0xff]
        %v336 = vld [vmem:[%s285 + $0x20] sm:$0xff]
        %v337 = vld [vmem:[%s285 + $0x28] sm:$0xff]
        %v338 = vld [vmem:[%s285 + $0x30] sm:$0xff]
        %v339 = vld [vmem:[%s285 + $0x38] sm:$0xff]
        %v340 = vld [vmem:[%s290] sm:$0xff]
        %v341 = vld [vmem:[%s290 + $0x8] sm:$0xff]
        %v342 = vld [vmem:[%s290 + $0x10] sm:$0xff]
        %v343 = vld [vmem:[%s290 + $0x18] sm:$0xff]
        %v344 = vadd.f32 %v332, %v340
        %v345 = vadd.f32 %v333, %v340
        %v346 = vadd.f32 %v334, %v340
        %v347 = vadd.f32 %v335, %v340
        %v348 = vadd.f32 %v336, %v340
        %v349 = vadd.f32 %v337, %v340
        %v350 = vadd.f32 %v338, %v340
        %v351 = vadd.f32 %v339, %v340
        %v352 = vadd.f32 %v332, %v341
        %v353 = vadd.f32 %v333, %v341
        %v354 = vadd.f32 %v334, %v341
        %v355 = vadd.f32 %v335, %v341
        %v356 = vadd.f32 %v336, %v341
        %v357 = vadd.f32 %v337, %v341
        %v358 = vadd.f32 %v338, %v341
        %v359 = vadd.f32 %v339, %v341
        %v360 = vadd.f32 %v332, %v342
        %v361 = vadd.f32 %v333, %v342
        %v362 = vadd.f32 %v334, %v342
        %v363 = vadd.f32 %v335, %v342
        %v364 = vadd.f32 %v336, %v342
        %v365 = vadd.f32 %v337, %v342
        %v366 = vadd.f32 %v338, %v342
        %v367 = vadd.f32 %v339, %v342
        %v368 = vadd.f32 %v332, %v343
        %v369 = vadd.f32 %v333, %v343
        %v370 = vadd.f32 %v334, %v343
        %v371 = vadd.f32 %v335, %v343
        %v372 = vadd.f32 %v336, %v343
        %v373 = vadd.f32 %v337, %v343
        %v374 = vadd.f32 %v338, %v343
        %v375 = vadd.f32 %v339, %v343
        %v376 = vld [vmem:[%s294] sm:$0x1]
        %v377 = vld [vmem:[%s294 + $0x1] sm:$0x1]
        %v378 = vld [vmem:[%s294 + $0x2] sm:$0x1]
        %v379 = vld [vmem:[%s294 + $0x3] sm:$0x1]
        %v380 = vld [vmem:[%s294 + $0x4] sm:$0x1]
        %v381 = vld [vmem:[%s294 + $0x5] sm:$0x1]
        %v382 = vld [vmem:[%s294 + $0x6] sm:$0x1]
        %v383 = vld [vmem:[%s294 + $0x7] sm:$0x1]
        %v384 = vld [vmem:[%s294 + $0x8] sm:$0x1]
        %v385 = vld [vmem:[%s294 + $0x9] sm:$0x1]
        %v386 = vld [vmem:[%s294 + $0xa] sm:$0x1]
        %v387 = vld [vmem:[%s294 + $0xb] sm:$0x1]
        %v388 = vld [vmem:[%s294 + $0xc] sm:$0x1]
        %v389 = vld [vmem:[%s294 + $0xd] sm:$0x1]
        %v390 = vld [vmem:[%s294 + $0xe] sm:$0x1]
        %v391 = vld [vmem:[%s294 + $0xf] sm:$0x1]
        %v392 = vld [vmem:[%s294 + $0x10] sm:$0x1]
        %v393 = vld [vmem:[%s294 + $0x11] sm:$0x1]
        %v394 = vld [vmem:[%s294 + $0x12] sm:$0x1]
        %v395 = vld [vmem:[%s294 + $0x13] sm:$0x1]
        %v396 = vld [vmem:[%s294 + $0x14] sm:$0x1]
        %v397 = vld [vmem:[%s294 + $0x15] sm:$0x1]
        %v398 = vld [vmem:[%s294 + $0x16] sm:$0x1]
        %v399 = vld [vmem:[%s294 + $0x17] sm:$0x1]
        %v400 = vld [vmem:[%s294 + $0x18] sm:$0x1]
        %v401 = vld [vmem:[%s294 + $0x19] sm:$0x1]
        %v402 = vld [vmem:[%s294 + $0x1a] sm:$0x1]
        %v403 = vld [vmem:[%s294 + $0x1b] sm:$0x1]
        %v404 = vld [vmem:[%s294 + $0x1c] sm:$0x1]
        %v405 = vld [vmem:[%s294 + $0x1d] sm:$0x1]
        %v406 = vld [vmem:[%s294 + $0x1e] sm:$0x1]
        %v407 = vld [vmem:[%s294 + $0x1f] sm:$0x1]
        %v440 = vlaneseq
        %v441 = vshrl.u32 %v440, 7
        %v442 = vsub.s32 0, %v441
        %v443 = vrot.slane %v376, %v442
        %v444 = vlaneseq
        %v445 = vshrl.u32 %v444, 7
        %v446 = vsub.s32 0, %v445
        %v447 = vrot.slane %v377, %v446
        %v448 = vlaneseq
        %v449 = vshrl.u32 %v448, 7
        %v450 = vsub.s32 0, %v449
        %v451 = vrot.slane %v378, %v450
        %v452 = vlaneseq
        %v453 = vshrl.u32 %v452, 7
        %v454 = vsub.s32 0, %v453
        %v455 = vrot.slane %v379, %v454
        %v456 = vlaneseq
        %v457 = vshrl.u32 %v456, 7
        %v458 = vsub.s32 0, %v457
        %v459 = vrot.slane %v380, %v458
        %v460 = vlaneseq
        %v461 = vshrl.u32 %v460, 7
        %v462 = vsub.s32 0, %v461
        %v463 = vrot.slane %v381, %v462
        %v464 = vlaneseq
        %v465 = vshrl.u32 %v464, 7
        %v466 = vsub.s32 0, %v465
        %v467 = vrot.slane %v382, %v466
        %v468 = vlaneseq
        %v469 = vshrl.u32 %v468, 7
        %v470 = vsub.s32 0, %v469
        %v471 = vrot.slane %v383, %v470
        %v472 = vlaneseq
        %v473 = vshrl.u32 %v472, 7
        %v474 = vsub.s32 0, %v473
        %v475 = vrot.slane %v384, %v474
        %v476 = vlaneseq
        %v477 = vshrl.u32 %v476, 7
        %v478 = vsub.s32 0, %v477
        %v479 = vrot.slane %v385, %v478
        %v480 = vlaneseq
        %v481 = vshrl.u32 %v480, 7
        %v482 = vsub.s32 0, %v481
        %v483 = vrot.slane %v386, %v482
        %v484 = vlaneseq
        %v485 = vshrl.u32 %v484, 7
        %v486 = vsub.s32 0, %v485
        %v487 = vrot.slane %v387, %v486
        %v488 = vlaneseq
        %v489 = vshrl.u32 %v488, 7
        %v490 = vsub.s32 0, %v489
        %v491 = vrot.slane %v388, %v490
        %v492 = vlaneseq
        %v493 = vshrl.u32 %v492, 7
        %v494 = vsub.s32 0, %v493
        %v495 = vrot.slane %v389, %v494
        %v496 = vlaneseq
        %v497 = vshrl.u32 %v496, 7
        %v498 = vsub.s32 0, %v497
        %v499 = vrot.slane %v390, %v498
        %v500 = vlaneseq
        %v501 = vshrl.u32 %v500, 7
        %v502 = vsub.s32 0, %v501
        %v503 = vrot.slane %v391, %v502
        %v504 = vlaneseq
        %v505 = vshrl.u32 %v504, 7
        %v506 = vsub.s32 0, %v505
        %v507 = vrot.slane %v392, %v506
        %v508 = vlaneseq
        %v509 = vshrl.u32 %v508, 7
        %v510 = vsub.s32 0, %v509
        %v511 = vrot.slane %v393, %v510
        %v512 = vlaneseq
        %v513 = vshrl.u32 %v512, 7
        %v514 = vsub.s32 0, %v513
        %v515 = vrot.slane %v394, %v514
        %v516 = vlaneseq
        %v517 = vshrl.u32 %v516, 7
        %v518 = vsub.s32 0, %v517
        %v519 = vrot.slane %v395, %v518
        %v520 = vlaneseq
        %v521 = vshrl.u32 %v520, 7
        %v522 = vsub.s32 0, %v521
        %v523 = vrot.slane %v396, %v522
        %v524 = vlaneseq
        %v525 = vshrl.u32 %v524, 7
        %v526 = vsub.s32 0, %v525
        %v527 = vrot.slane %v397, %v526
        %v528 = vlaneseq
        %v529 = vshrl.u32 %v528, 7
        %v530 = vsub.s32 0, %v529
        %v531 = vrot.slane %v398, %v530
        %v532 = vlaneseq
        %v533 = vshrl.u32 %v532, 7
        %v534 = vsub.s32 0, %v533
        %v535 = vrot.slane %v399, %v534
        %v536 = vlaneseq
        %v537 = vshrl.u32 %v536, 7
        %v538 = vsub.s32 0, %v537
        %v539 = vrot.slane %v400, %v538
        %v540 = vlaneseq
        %v541 = vshrl.u32 %v540, 7
        %v542 = vsub.s32 0, %v541
        %v543 = vrot.slane %v401, %v542
        %v544 = vlaneseq
        %v545 = vshrl.u32 %v544, 7
        %v546 = vsub.s32 0, %v545
        %v547 = vrot.slane %v402, %v546
        %v548 = vlaneseq
        %v549 = vshrl.u32 %v548, 7
        %v550 = vsub.s32 0, %v549
        %v551 = vrot.slane %v403, %v550
        %v552 = vlaneseq
        %v553 = vshrl.u32 %v552, 7
        %v554 = vsub.s32 0, %v553
        %v555 = vrot.slane %v404, %v554
        %v556 = vlaneseq
        %v557 = vshrl.u32 %v556, 7
        %v558 = vsub.s32 0, %v557
        %v559 = vrot.slane %v405, %v558
        %v560 = vlaneseq
        %v561 = vshrl.u32 %v560, 7
        %v562 = vsub.s32 0, %v561
        %v563 = vrot.slane %v406, %v562
        %v564 = vlaneseq
        %v565 = vshrl.u32 %v564, 7
        %v566 = vsub.s32 0, %v565
        %v567 = vrot.slane %v407, %v566
        %v600 = vadd.f32 %v344, %v443
        %v601 = vadd.f32 %v345, %v447
        %v602 = vadd.f32 %v346, %v451
        %v603 = vadd.f32 %v347, %v455
        %v604 = vadd.f32 %v348, %v459
        %v605 = vadd.f32 %v349, %v463
        %v606 = vadd.f32 %v350, %v467
        %v607 = vadd.f32 %v351, %v471
        %v608 = vadd.f32 %v352, %v475
        %v609 = vadd.f32 %v353, %v479
        %v610 = vadd.f32 %v354, %v483
        %v611 = vadd.f32 %v355, %v487
        %v612 = vadd.f32 %v356, %v491
        %v613 = vadd.f32 %v357, %v495
        %v614 = vadd.f32 %v358, %v499
        %v615 = vadd.f32 %v359, %v503
        %v616 = vadd.f32 %v360, %v507
        %v617 = vadd.f32 %v361, %v511
        %v618 = vadd.f32 %v362, %v515
        %v619 = vadd.f32 %v363, %v519
        %v620 = vadd.f32 %v364, %v523
        %v621 = vadd.f32 %v365, %v527
        %v622 = vadd.f32 %v366, %v531
        %v623 = vadd.f32 %v367, %v535
        %v624 = vadd.f32 %v368, %v539
        %v625 = vadd.f32 %v369, %v543
        %v626 = vadd.f32 %v370, %v547
        %v627 = vadd.f32 %v371, %v551
        %v628 = vadd.f32 %v372, %v555
        %v629 = vadd.f32 %v373, %v559
        %v630 = vadd.f32 %v374, %v563
        %v631 = vadd.f32 %v375, %v567
        %v632 = vld [vmem:[%s299] sm:$0xff]
        %v633 = vld [vmem:[%s299 + $0x8] sm:$0xff]
        %v634 = vld [vmem:[%s299 + $0x10] sm:$0xff]
        %v635 = vld [vmem:[%s299 + $0x18] sm:$0xff]
        %v636 = vld [vmem:[%s299 + $0x20] sm:$0xff]
        %v637 = vld [vmem:[%s299 + $0x28] sm:$0xff]
        %v638 = vld [vmem:[%s299 + $0x30] sm:$0xff]
        %v639 = vld [vmem:[%s299 + $0x38] sm:$0xff]
        %v640 = vld [vmem:[%s299 + $0x40] sm:$0xff]
        %v641 = vld [vmem:[%s299 + $0x48] sm:$0xff]
        %v642 = vld [vmem:[%s299 + $0x50] sm:$0xff]
        %v643 = vld [vmem:[%s299 + $0x58] sm:$0xff]
        %v644 = vld [vmem:[%s299 + $0x60] sm:$0xff]
        %v645 = vld [vmem:[%s299 + $0x68] sm:$0xff]
        %v646 = vld [vmem:[%s299 + $0x70] sm:$0xff]
        %v647 = vld [vmem:[%s299 + $0x78] sm:$0xff]
        %v648 = vld [vmem:[%s299 + $0x80] sm:$0xff]
        %v649 = vld [vmem:[%s299 + $0x88] sm:$0xff]
        %v650 = vld [vmem:[%s299 + $0x90] sm:$0xff]
        %v651 = vld [vmem:[%s299 + $0x98] sm:$0xff]
        %v652 = vld [vmem:[%s299 + $0xa0] sm:$0xff]
        %v653 = vld [vmem:[%s299 + $0xa8] sm:$0xff]
        %v654 = vld [vmem:[%s299 + $0xb0] sm:$0xff]
        %v655 = vld [vmem:[%s299 + $0xb8] sm:$0xff]
        %v656 = vld [vmem:[%s299 + $0xc0] sm:$0xff]
        %v657 = vld [vmem:[%s299 + $0xc8] sm:$0xff]
        %v658 = vld [vmem:[%s299 + $0xd0] sm:$0xff]
        %v659 = vld [vmem:[%s299 + $0xd8] sm:$0xff]
        %v660 = vld [vmem:[%s299 + $0xe0] sm:$0xff]
        %v661 = vld [vmem:[%s299 + $0xe8] sm:$0xff]
        %v662 = vld [vmem:[%s299 + $0xf0] sm:$0xff]
        %v663 = vld [vmem:[%s299 + $0xf8] sm:$0xff]
        %665 = vset.pattern.permute.xlu0 0
        %666 = vperm.xlu0 %665, %v632
        %v667 = vpop.permute.xlu0 %666
        %670 = vset.pattern.permute.xlu0 0
        %671 = vperm.xlu0 %670, %v633
        %v672 = vpop.permute.xlu0 %671
        %675 = vset.pattern.permute.xlu0 0
        %676 = vperm.xlu0 %675, %v634
        %v677 = vpop.permute.xlu0 %676
        %680 = vset.pattern.permute.xlu0 0
        %681 = vperm.xlu0 %680, %v635
        %v682 = vpop.permute.xlu0 %681
        %685 = vset.pattern.permute.xlu0 0
        %686 = vperm.xlu0 %685, %v636
        %v687 = vpop.permute.xlu0 %686
        %690 = vset.pattern.permute.xlu0 0
        %691 = vperm.xlu0 %690, %v637
        %v692 = vpop.permute.xlu0 %691
        %695 = vset.pattern.permute.xlu0 0
        %696 = vperm.xlu0 %695, %v638
        %v697 = vpop.permute.xlu0 %696
        %700 = vset.pattern.permute.xlu0 0
        %701 = vperm.xlu0 %700, %v639
        %v702 = vpop.permute.xlu0 %701
        %705 = vset.pattern.permute.xlu0 0
        %706 = vperm.xlu0 %705, %v640
        %v707 = vpop.permute.xlu0 %706
        %710 = vset.pattern.permute.xlu0 0
        %711 = vperm.xlu0 %710, %v641
        %v712 = vpop.permute.xlu0 %711
        %715 = vset.pattern.permute.xlu0 0
        %716 = vperm.xlu0 %715, %v642
        %v717 = vpop.permute.xlu0 %716
        %720 = vset.pattern.permute.xlu0 0
        %721 = vperm.xlu0 %720, %v643
        %v722 = vpop.permute.xlu0 %721
        %725 = vset.pattern.permute.xlu0 0
        %726 = vperm.xlu0 %725, %v644
        %v727 = vpop.permute.xlu0 %726
        %730 = vset.pattern.permute.xlu0 0
        %731 = vperm.xlu0 %730, %v645
        %v732 = vpop.permute.xlu0 %731
        %735 = vset.pattern.permute.xlu0 0
        %736 = vperm.xlu0 %735, %v646
        %v737 = vpop.permute.xlu0 %736
        %740 = vset.pattern.permute.xlu0 0
        %741 = vperm.xlu0 %740, %v647
        %v742 = vpop.permute.xlu0 %741
        %745 = vset.pattern.permute.xlu0 0
        %746 = vperm.xlu0 %745, %v648
        %v747 = vpop.permute.xlu0 %746
        %750 = vset.pattern.permute.xlu0 0
        %751 = vperm.xlu0 %750, %v649
        %v752 = vpop.permute.xlu0 %751
        %755 = vset.pattern.permute.xlu0 0
        %756 = vperm.xlu0 %755, %v650
        %v757 = vpop.permute.xlu0 %756
        %760 = vset.pattern.permute.xlu0 0
        %761 = vperm.xlu0 %760, %v651
        %v762 = vpop.permute.xlu0 %761
        %765 = vset.pattern.permute.xlu0 0
        %766 = vperm.xlu0 %765, %v652
        %v767 = vpop.permute.xlu0 %766
        %770 = vset.pattern.permute.xlu0 0
        %771 = vperm.xlu0 %770, %v653
        %v772 = vpop.permute.xlu0 %771
        %775 = vset.pattern.permute.xlu0 0
        %776 = vperm.xlu0 %775, %v654
        %v777 = vpop.permute.xlu0 %776
        %780 = vset.pattern.permute.xlu0 0
        %781 = vperm.xlu0 %780, %v655
        %v782 = vpop.permute.xlu0 %781
        %785 = vset.pattern.permute.xlu0 0
        %786 = vperm.xlu0 %785, %v656
        %v787 = vpop.permute.xlu0 %786
        %790 = vset.pattern.permute.xlu0 0
        %791 = vperm.xlu0 %790, %v657
        %v792 = vpop.permute.xlu0 %791
        %795 = vset.pattern.permute.xlu0 0
        %796 = vperm.xlu0 %795, %v658
        %v797 = vpop.permute.xlu0 %796
        %800 = vset.pattern.permute.xlu0 0
        %801 = vperm.xlu0 %800, %v659
        %v802 = vpop.permute.xlu0 %801
        %805 = vset.pattern.permute.xlu0 0
        %806 = vperm.xlu0 %805, %v660
        %v807 = vpop.permute.xlu0 %806
        %810 = vset.pattern.permute.xlu0 0
        %811 = vperm.xlu0 %810, %v661
        %v812 = vpop.permute.xlu0 %811
        %815 = vset.pattern.permute.xlu0 0
        %816 = vperm.xlu0 %815, %v662
        %v817 = vpop.permute.xlu0 %816
        %820 = vset.pattern.permute.xlu0 0
        %821 = vperm.xlu0 %820, %v663
        %v822 = vpop.permute.xlu0 %821
        %v824 = vadd.f32 %v600, %v667
        %v825 = vadd.f32 %v601, %v672
        %v826 = vadd.f32 %v602, %v677
        %v827 = vadd.f32 %v603, %v682
        %v828 = vadd.f32 %v604, %v687
        %v829 = vadd.f32 %v605, %v692
        %v830 = vadd.f32 %v606, %v697
        %v831 = vadd.f32 %v607, %v702
        %v832 = vadd.f32 %v608, %v707
        %v833 = vadd.f32 %v609, %v712
        %v834 = vadd.f32 %v610, %v717
        %v835 = vadd.f32 %v611, %v722
        %v836 = vadd.f32 %v612, %v727
        %v837 = vadd.f32 %v613, %v732
        %v838 = vadd.f32 %v614, %v737
        %v839 = vadd.f32 %v615, %v742
        %v840 = vadd.f32 %v616, %v747
        %v841 = vadd.f32 %v617, %v752
        %v842 = vadd.f32 %v618, %v757
        %v843 = vadd.f32 %v619, %v762
        %v844 = vadd.f32 %v620, %v767
        %v845 = vadd.f32 %v621, %v772
        %v846 = vadd.f32 %v622, %v777
        %v847 = vadd.f32 %v623, %v782
        %v848 = vadd.f32 %v624, %v787
        %v849 = vadd.f32 %v625, %v792
        %v850 = vadd.f32 %v626, %v797
        %v851 = vadd.f32 %v627, %v802
        %v852 = vadd.f32 %v628, %v807
        %v853 = vadd.f32 %v629, %v812
        %v854 = vadd.f32 %v630, %v817
        %v855 = vadd.f32 %v631, %v822
        %v856 = vmul.f32 %v824, 0.25
        %v857 = vmul.f32 %v825, 0.25
        %v858 = vmul.f32 %v826, 0.25
        %v859 = vmul.f32 %v827, 0.25
        %v860 = vmul.f32 %v828, 0.25
        %v861 = vmul.f32 %v829, 0.25
        %v862 = vmul.f32 %v830, 0.25
        %v863 = vmul.f32 %v831, 0.25
        %v864 = vmul.f32 %v832, 0.25
        %v865 = vmul.f32 %v833, 0.25
        %v866 = vmul.f32 %v834, 0.25
        %v867 = vmul.f32 %v835, 0.25
        %v868 = vmul.f32 %v836, 0.25
        %v869 = vmul.f32 %v837, 0.25
        %v870 = vmul.f32 %v838, 0.25
        %v871 = vmul.f32 %v839, 0.25
        %v872 = vmul.f32 %v840, 0.25
        %v873 = vmul.f32 %v841, 0.25
        %v874 = vmul.f32 %v842, 0.25
        %v875 = vmul.f32 %v843, 0.25
        %v876 = vmul.f32 %v844, 0.25
        %v877 = vmul.f32 %v845, 0.25
        %v878 = vmul.f32 %v846, 0.25
        %v879 = vmul.f32 %v847, 0.25
        %v880 = vmul.f32 %v848, 0.25
        %v881 = vmul.f32 %v849, 0.25
        %v882 = vmul.f32 %v850, 0.25
        %v883 = vmul.f32 %v851, 0.25
        %v884 = vmul.f32 %v852, 0.25
        %v885 = vmul.f32 %v853, 0.25
        %v886 = vmul.f32 %v854, 0.25
        %v887 = vmul.f32 %v855, 0.25
        %v888 = vmul.f32 %v300, %v856
        %v889 = vmul.f32 %v301, %v857
        %v890 = vmul.f32 %v302, %v858
        %v891 = vmul.f32 %v303, %v859
        %v892 = vmul.f32 %v304, %v860
        %v893 = vmul.f32 %v305, %v861
        %v894 = vmul.f32 %v306, %v862
        %v895 = vmul.f32 %v307, %v863
        %v896 = vmul.f32 %v308, %v864
        %v897 = vmul.f32 %v309, %v865
        %v898 = vmul.f32 %v310, %v866
        %v899 = vmul.f32 %v311, %v867
        %v900 = vmul.f32 %v312, %v868
        %v901 = vmul.f32 %v313, %v869
        %v902 = vmul.f32 %v314, %v870
        %v903 = vmul.f32 %v315, %v871
        %v904 = vmul.f32 %v316, %v872
        %v905 = vmul.f32 %v317, %v873
        %v906 = vmul.f32 %v318, %v874
        %v907 = vmul.f32 %v319, %v875
        %v908 = vmul.f32 %v320, %v876
        %v909 = vmul.f32 %v321, %v877
        %v910 = vmul.f32 %v322, %v878
        %v911 = vmul.f32 %v323, %v879
        %v912 = vmul.f32 %v324, %v880
        %v913 = vmul.f32 %v325, %v881
        %v914 = vmul.f32 %v326, %v882
        %v915 = vmul.f32 %v327, %v883
        %v916 = vmul.f32 %v328, %v884
        %v917 = vmul.f32 %v329, %v885
        %v918 = vmul.f32 %v330, %v886
        %v919 = vmul.f32 %v331, %v887
        %vm920 = vcmask 64512
        %921 = vst.msk [vmem:[%s275] sm:$0xff] %vm920, %v888
        %922 = vst.msk [vmem:[%s275 + $0x8] sm:$0xff] %vm920, %v889
        %923 = vst.msk [vmem:[%s275 + $0x10] sm:$0xff] %vm920, %v890
        %924 = vst.msk [vmem:[%s275 + $0x18] sm:$0xff] %vm920, %v891
        %925 = vst.msk [vmem:[%s275 + $0x20] sm:$0xff] %vm920, %v892
        %926 = vst.msk [vmem:[%s275 + $0x28] sm:$0xff] %vm920, %v893
        %927 = vst.msk [vmem:[%s275 + $0x30] sm:$0xff] %vm920, %v894
        %928 = vst.msk [vmem:[%s275 + $0x38] sm:$0xff] %vm920, %v895
        %929 = vst.msk [vmem:[%s275 + $0x40] sm:$0xff] %vm920, %v896
        %930 = vst.msk [vmem:[%s275 + $0x48] sm:$0xff] %vm920, %v897
        %931 = vst.msk [vmem:[%s275 + $0x50] sm:$0xff] %vm920, %v898
        %932 = vst.msk [vmem:[%s275 + $0x58] sm:$0xff] %vm920, %v899
        %933 = vst.msk [vmem:[%s275 + $0x60] sm:$0xff] %vm920, %v900
        %934 = vst.msk [vmem:[%s275 + $0x68] sm:$0xff] %vm920, %v901
        %935 = vst.msk [vmem:[%s275 + $0x70] sm:$0xff] %vm920, %v902
        %936 = vst.msk [vmem:[%s275 + $0x78] sm:$0xff] %vm920, %v903
        %937 = vst.msk [vmem:[%s275 + $0x80] sm:$0xff] %vm920, %v904
        %938 = vst.msk [vmem:[%s275 + $0x88] sm:$0xff] %vm920, %v905
        %939 = vst.msk [vmem:[%s275 + $0x90] sm:$0xff] %vm920, %v906
        %940 = vst.msk [vmem:[%s275 + $0x98] sm:$0xff] %vm920, %v907
        %941 = vst.msk [vmem:[%s275 + $0xa0] sm:$0xff] %vm920, %v908
        %942 = vst.msk [vmem:[%s275 + $0xa8] sm:$0xff] %vm920, %v909
        %943 = vst.msk [vmem:[%s275 + $0xb0] sm:$0xff] %vm920, %v910
        %944 = vst.msk [vmem:[%s275 + $0xb8] sm:$0xff] %vm920, %v911
        %945 = vst.msk [vmem:[%s275 + $0xc0] sm:$0xff] %vm920, %v912
        %946 = vst.msk [vmem:[%s275 + $0xc8] sm:$0xff] %vm920, %v913
        %947 = vst.msk [vmem:[%s275 + $0xd0] sm:$0xff] %vm920, %v914
        %948 = vst.msk [vmem:[%s275 + $0xd8] sm:$0xff] %vm920, %v915
        %949 = vst.msk [vmem:[%s275 + $0xe0] sm:$0xff] %vm920, %v916
        %950 = vst.msk [vmem:[%s275 + $0xe8] sm:$0xff] %vm920, %v917
        %951 = vst.msk [vmem:[%s275 + $0xf0] sm:$0xff] %vm920, %v918
        %952 = vst.msk [vmem:[%s275 + $0xf8] sm:$0xff] %vm920, %v919
        %s953 = sand.u32 %s157, 1
        %s954 = scalar_lea.sflag [#allocation3], %s953
        %s955 = sand.u32 %s157, 1
        %s956 = smul.addr %s955, 256
        %s957 = scalar_lea.vmem [#allocation2], %s956
        // Predicated region
        $region41: #{triplet_attention_pallas.5} parent=39 // pred_check
          %p958 = pneg %p167
        $region42: #{triplet_attention_pallas.5} parent=39 // pred_check_branch
          %960 = sbr.rel (%p958) target = $region44
        $region43: #{triplet_attention_pallas.5} parent=39 // pred_region
          %s962 = ssub.s32 4096, 4096
          %963 = vsyncadd %s954, %s962
          %s964 = smul.addr %s19, 32
          %s965 = smul.addr %s964, 128
          %s966 = scalar_lea.hbm %s5, %s965
          %s967 = sshll.u32 %s957, 4
          %s968 = int_to_ptr.vmem [resolvable:$true] %s967
          %973 = dma.vmem_to_hbm [thread:$0]  %s968, 4096, %s966, %s954, 128, 128, 8
        $region44: #{triplet_attention_pallas.5} parent=39 // pred_fallthru
          _
      $region40: #{triplet_attention_pallas.5} parent=5 // pred_fallthru
        _
      %p974 = scmp.le.s32.totalorder 2, %s14
      // Predicated region
      $region45: #{triplet_attention_pallas.5} parent=5 // pred_check
        %p975 = pneg %p974
      $region46: #{triplet_attention_pallas.5} parent=5 // pred_check_branch
        %977 = sbr.rel (%p975) target = $region48
      $region47: #{triplet_attention_pallas.5} parent=5 // pred_region
        %s978 = ssub.s32 %s14, 2
        // Predicated region
        $region49: #{triplet_attention_pallas.5} parent=47 // pred_check
          %p979 = pneg %p173
        $region50: #{triplet_attention_pallas.5} parent=47 // pred_check_branch
          %981 = sbr.rel (%p979) target = $region52
        $region51: #{triplet_attention_pallas.5} parent=47 // pred_region
          %s982 = sand.u32 %s158, 1
          %s983 = scalar_lea.sflag [#allocation3], %s982
          %s984 = sand.u32 %s158, 1
          %s985 = smul.addr %s984, 256
          %s986 = scalar_lea.vmem [#allocation2], %s985
          %987 = dma.done %s983, 4096
        $region52: #{triplet_attention_pallas.5} parent=47 // pred_fallthru
          _
      $region48: #{triplet_attention_pallas.5} parent=5 // pred_fallthru
        _
    $region6: #{triplet_attention_pallas.5} parent=1 // loop_footer
      %s18 = sadd.s32 1, %s14
    $region7: #{triplet_attention_pallas.5} parent=1 // loop_footer_branch
      %13 = sbr.rel target = $region3
    $region8: #{triplet_attention_pallas.5} parent=1 // loop_exit
      _
    %988 = vsyncpa [#allocation3], 1
    %s989 = scalar_lea.sflag [#allocation3], 1
    %990 = vsyncpa %s989, 1

// kernel: triplet_attention_pallas.4
$region0: #{triplet_attention_pallas.4}
  #allocation0 [shape = 'u32[]', space=smem, size = 0x4, offset = 0x4, fixed_abs, tag = 'smem constant byte address 0x4 - core index']
  #allocation1 [shape = 'u32[144,128]{1,0:T(1,128)}', space=vmem, size = 0x12000, scoped, tag = 'internal scratch']
  %s0 = inlined_call_operand.vmem [shape: f32[2,512], index: 0, kind: input, shape index: {}]
  %s1 = inlined_call_operand.vmem [shape: f32[2,512], index: 1, kind: input, shape index: {}]
  %s2 = inlined_call_operand.vmem [shape: f32[2,256], index: 2, kind: input, shape index: {}]
  %s3 = inlined_call_operand.vmem [shape: f32[2,256], index: 3, kind: input, shape index: {}]
  %s4 = inlined_call_operand.vmem [shape: f32[2,256], index: 4, kind: input, shape index: {}]
  %s5 = inlined_call_operand.vmem [shape: f32[2,256], index: 5, kind: input, shape index: {}]
  %s6 = inlined_call_operand.vmem [shape: f32[2,256], index: 6, kind: input, shape index: {}]
  %s7 = inlined_call_operand.vmem [shape: f32[2,256], index: 7, kind: input, shape index: {}]
  %s8 = inlined_call_operand.vmem [shape: bf16[1024,512], index: 8, kind: input, shape index: {}]
  %s9 = inlined_call_operand.vmem [shape: bf16[512,256], index: 9, kind: input, shape index: {}]
  %s10 = inlined_call_operand.hbm [shape: bf16[512,256], index: 10, kind: input, shape index: {}]
  %s11 = inlined_call_operand.hbm [shape: bf16[512,256], index: 11, kind: input, shape index: {}]
  %s12 = inlined_call_operand.vmem [shape: f32[4,2], index: 12, kind: input, shape index: {}]
  %s13 = inlined_call_operand.vmem [shape: f32[2,512], index: 13, kind: output, shape index: {0}]
  %s14 = inlined_call_operand.vmem [shape: f32[2,256], index: 14, kind: output, shape index: {1}]
  %s15 = inlined_call_operand.vmem [shape: f32[2,256], index: 15, kind: output, shape index: {2}]
  %s16 = inlined_call_operand.vmem [shape: f32[2,256], index: 16, kind: output, shape index: {3}]
  %17 = xla_tuple %s13, %s14, %s15, %s16
  %s18 = sld [smem:[#allocation0]]
  $region98: #{triplet_attention_pallas.4} parent=0
    _
  %s20 = ssub.s32 1, %s18
  %s21 = scalar_select 0, %s20, %s18
  $region1: #{triplet_attention_pallas.4} parent=0
    #allocation2 [shape = 'u8[262144]{0}', space=vmem, size = 0x40000, scoped, tag = 'input window, operand 10, single buffered']
    #allocation3 [shape = 's32[1]{0}', space=sflag, size = 0x4, scoped, tag = 'scoped memory for triplet_attention_pallas.4']
    #allocation4 [shape = 's32[1]{0}', space=sflag, size = 0x4, scoped, tag = 'scoped memory for triplet_attention_pallas.4']
    #allocation5 [shape = 'u8[262144]{0}', space=vmem, size = 0x40000, scoped, tag = 'input window, operand 11, single buffered']
    #allocation6 [shape = 's32[1]{0}', space=sflag, size = 0x4, scoped, tag = 'scoped memory for triplet_attention_pallas.4']
    #allocation7 [shape = 'u8[2048]{0}', space=smem, size = 0x800, scoped, tag = 'input window, operand 12, single buffered']
    %22 = vsyncpa [#allocation3], 0
    %23 = vsyncpa [#allocation6], 0
    %24 = vsyncpa [#allocation4], 0
    // Predicated region
    $region2: #{triplet_attention_pallas.4} parent=1 // pred_check
      _
    $region3: #{triplet_attention_pallas.4} parent=1 // pred_check_branch
      %26 = sbr.rel (0) target = $region5
    $region4: #{triplet_attention_pallas.4} parent=1 // pred_region
      _
    $region5: #{triplet_attention_pallas.4} parent=1 // pred_fallthru
      _
    // Predicated region
    $region6: #{triplet_attention_pallas.4} parent=1 // pred_check
      _
    $region7: #{triplet_attention_pallas.4} parent=1 // pred_check_branch
      %28 = sbr.rel (0) target = $region9
    $region8: #{triplet_attention_pallas.4} parent=1 // pred_region
      _
    $region9: #{triplet_attention_pallas.4} parent=1 // pred_fallthru
      _
    // Predicated region
    $region10: #{triplet_attention_pallas.4} parent=1 // pred_check
      _
    $region11: #{triplet_attention_pallas.4} parent=1 // pred_check_branch
      %30 = sbr.rel (0) target = $region13
    $region12: #{triplet_attention_pallas.4} parent=1 // pred_region
      _
    $region13: #{triplet_attention_pallas.4} parent=1 // pred_fallthru
      _
    // Predicated region
    $region14: #{triplet_attention_pallas.4} parent=1 // pred_check
      _
    $region15: #{triplet_attention_pallas.4} parent=1 // pred_check_branch
      %32 = sbr.rel (0) target = $region17
    $region16: #{triplet_attention_pallas.4} parent=1 // pred_region
      _
    $region17: #{triplet_attention_pallas.4} parent=1 // pred_fallthru
      _
    // Predicated region
    $region18: #{triplet_attention_pallas.4} parent=1 // pred_check
      _
    $region19: #{triplet_attention_pallas.4} parent=1 // pred_check_branch
      %34 = sbr.rel (0) target = $region21
    $region20: #{triplet_attention_pallas.4} parent=1 // pred_region
      _
    $region21: #{triplet_attention_pallas.4} parent=1 // pred_fallthru
      _
    // Predicated region
    $region22: #{triplet_attention_pallas.4} parent=1 // pred_check
      _
    $region23: #{triplet_attention_pallas.4} parent=1 // pred_check_branch
      %36 = sbr.rel (0) target = $region25
    $region24: #{triplet_attention_pallas.4} parent=1 // pred_region
      _
    $region25: #{triplet_attention_pallas.4} parent=1 // pred_fallthru
      _
    // Predicated region
    $region26: #{triplet_attention_pallas.4} parent=1 // pred_check
      _
    $region27: #{triplet_attention_pallas.4} parent=1 // pred_check_branch
      %38 = sbr.rel (0) target = $region29
    $region28: #{triplet_attention_pallas.4} parent=1 // pred_region
      _
    $region29: #{triplet_attention_pallas.4} parent=1 // pred_fallthru
      _
    // Predicated region
    $region30: #{triplet_attention_pallas.4} parent=1 // pred_check
      _
    $region31: #{triplet_attention_pallas.4} parent=1 // pred_check_branch
      %40 = sbr.rel (0) target = $region33
    $region32: #{triplet_attention_pallas.4} parent=1 // pred_region
      _
    $region33: #{triplet_attention_pallas.4} parent=1 // pred_fallthru
      _
    // Predicated region
    $region34: #{triplet_attention_pallas.4} parent=1 // pred_check
      _
    $region35: #{triplet_attention_pallas.4} parent=1 // pred_check_branch
      %42 = sbr.rel (0) target = $region37
    $region36: #{triplet_attention_pallas.4} parent=1 // pred_region
      _
    $region37: #{triplet_attention_pallas.4} parent=1 // pred_fallthru
      _
    // Predicated region
    $region38: #{triplet_attention_pallas.4} parent=1 // pred_check
      _
    $region39: #{triplet_attention_pallas.4} parent=1 // pred_check_branch
      %44 = sbr.rel (0) target = $region41
    $region40: #{triplet_attention_pallas.4} parent=1 // pred_region
      _
    $region41: #{triplet_attention_pallas.4} parent=1 // pred_fallthru
      _
    // Predicated region
    $region42: #{triplet_attention_pallas.4} parent=1 // pred_check
      _
    $region43: #{triplet_attention_pallas.4} parent=1 // pred_check_branch
      %46 = sbr.rel (0) target = $region45
    $region44: #{triplet_attention_pallas.4} parent=1 // pred_region
      %s48 = ssub.s32 8192, 8192
      %49 = vsyncadd [#allocation3], %s48
      %s50 = sshll.u32 [#allocation2], 4
      %s51 = int_to_ptr.vmem [resolvable:$true] %s50
      %56 = dma.hbm_to_vmem [thread:$0]  %s10, 8192, %s51, [#allocation3], 128, 128, 8
    $region45: #{triplet_attention_pallas.4} parent=1 // pred_fallthru
      _
    // Predicated region
    $region46: #{triplet_attention_pallas.4} parent=1 // pred_check
      _
    $region47: #{triplet_attention_pallas.4} parent=1 // pred_check_branch
      %58 = sbr.rel (0) target = $region49
    $region48: #{triplet_attention_pallas.4} parent=1 // pred_region
      %s60 = ssub.s32 8192, 8192
      %61 = vsyncadd [#allocation6], %s60
      %s62 = sshll.u32 [#allocation5], 4
      %s63 = int_to_ptr.vmem [resolvable:$true] %s62
      %68 = dma.hbm_to_vmem [thread:$0]  %s11, 8192, %s63, [#allocation6], 128, 128, 8
    $region49: #{triplet_attention_pallas.4} parent=1 // pred_fallthru
      _
    // Predicated region
    $region50: #{triplet_attention_pallas.4} parent=1 // pred_check
      _
    $region51: #{triplet_attention_pallas.4} parent=1 // pred_check_branch
      %70 = sbr.rel (0) target = $region53
    $region52: #{triplet_attention_pallas.4} parent=1 // pred_region
      %s72 = ssub.s32 64, 64
      %73 = vsyncadd [#allocation4], %s72
      %s75 = sshll.u32 %s12, 4
      %s76 = int_to_ptr.vmem [resolvable:$true] %s75
      %78 = dma.vmem_to_smem %s76, 64, [#allocation7], [#allocation4]
    $region53: #{triplet_attention_pallas.4} parent=1 // pred_fallthru
      _
    // Predicated region
    $region54: #{triplet_attention_pallas.4} parent=1 // pred_check
      _
    $region55: #{triplet_attention_pallas.4} parent=1 // pred_check_branch
      %80 = sbr.rel (0) target = $region57
    $region56: #{triplet_attention_pallas.4} parent=1 // pred_region
      %81 = dma.done [#allocation3], 8192
    $region57: #{triplet_attention_pallas.4} parent=1 // pred_fallthru
      _
    // Predicated region
    $region58: #{triplet_attention_pallas.4} parent=1 // pred_check
      _
    $region59: #{triplet_attention_pallas.4} parent=1 // pred_check_branch
      %83 = sbr.rel (0) target = $region61
    $region60: #{triplet_attention_pallas.4} parent=1 // pred_region
      %84 = dma.done [#allocation6], 8192
    $region61: #{triplet_attention_pallas.4} parent=1 // pred_fallthru
      _
    // Predicated region
    $region62: #{triplet_attention_pallas.4} parent=1 // pred_check
      _
    $region63: #{triplet_attention_pallas.4} parent=1 // pred_check_branch
      %86 = sbr.rel (0) target = $region65
    $region64: #{triplet_attention_pallas.4} parent=1 // pred_region
      %87 = dma.done [#allocation4], 64
    $region65: #{triplet_attention_pallas.4} parent=1 // pred_fallthru
      _
    %88 = sfence
    %v89 = vld [vmem:[%s0] sm:$0xff]
    %v90 = vld [vmem:[%s1] sm:$0xff]
    %v92 = vcombine.high %v89, %v89
    %v94 = vunpack.c.l.s4 1983009808
    %v95 = vunpack.c.0.s8 %v94
    %v96 = vlaneseq
    %v97 = vshrl.u32 %v96, 7
    %v98 = vsub.s32 %v95, %v97
    %v99 = vrot.slane %v89, %v98
    %v101 = vunpack.c.l.s4 1983009808
    %v102 = vunpack.c.0.s8 %v101
    %v103 = vlaneseq
    %v104 = vshrl.u32 %v103, 7
    %v105 = vsub.s32 %v102, %v104
    %v106 = vrot.slane %v92, %v105
    %v107 = vcombine.high %v99, %v99
    %v108 = vcombine.high %v106, %v106
    %v114 = vcombine.high %v90, %v90
    %v116 = vunpack.c.l.s4 1983009808
    %v117 = vunpack.c.0.s8 %v116
    %v118 = vlaneseq
    %v119 = vshrl.u32 %v118, 7
    %v120 = vsub.s32 %v117, %v119
    %v121 = vrot.slane %v90, %v120
    %v123 = vunpack.c.l.s4 1983009808
    %v124 = vunpack.c.0.s8 %v123
    %v125 = vlaneseq
    %v126 = vshrl.u32 %v125, 7
    %v127 = vsub.s32 %v124, %v126
    %v128 = vrot.slane %v114, %v127
    %v129 = vcombine.high %v121, %v121
    %v130 = vcombine.high %v128, %v128
    %v135 = vpack.c.bf16 %v99, %v99
    %v136 = vpack.c.bf16 %v107, %v107
    %v137 = vpack.c.bf16 %v106, %v106
    %v138 = vpack.c.bf16 %v108, %v108
    %v139 = vpack.c.bf16 %v121, %v121
    %v140 = vpack.c.bf16 %v129, %v129
    %v141 = vpack.c.bf16 %v128, %v128
    %v142 = vpack.c.bf16 %v130, %v130
    %v143 = vld [vmem:[%s8] sm:$0xff]
    %v144 = vld [vmem:[%s8 + $0x8] sm:$0xff]
    %v145 = vld [vmem:[%s8 + $0x10] sm:$0xff]
    %v146 = vld [vmem:[%s8 + $0x18] sm:$0xff]
    %v147 = vld [vmem:[%s8 + $0x20] sm:$0xff]
    %v148 = vld [vmem:[%s8 + $0x28] sm:$0xff]
    %v149 = vld [vmem:[%s8 + $0x30] sm:$0xff]
    %v150 = vld [vmem:[%s8 + $0x38] sm:$0xff]
    %v151 = vld [vmem:[%s8 + $0x40] sm:$0xff]
    %v152 = vld [vmem:[%s8 + $0x48] sm:$0xff]
    %v153 = vld [vmem:[%s8 + $0x50] sm:$0xff]
    %v154 = vld [vmem:[%s8 + $0x58] sm:$0xff]
    %v155 = vld [vmem:[%s8 + $0x60] sm:$0xff]
    %v156 = vld [vmem:[%s8 + $0x68] sm:$0xff]
    %v157 = vld [vmem:[%s8 + $0x70] sm:$0xff]
    %v158 = vld [vmem:[%s8 + $0x78] sm:$0xff]
    %v159 = vld [vmem:[%s8 + $0x80] sm:$0xff]
    %v160 = vld [vmem:[%s8 + $0x88] sm:$0xff]
    %v161 = vld [vmem:[%s8 + $0x90] sm:$0xff]
    %v162 = vld [vmem:[%s8 + $0x98] sm:$0xff]
    %v163 = vld [vmem:[%s8 + $0xa0] sm:$0xff]
    %v164 = vld [vmem:[%s8 + $0xa8] sm:$0xff]
    %v165 = vld [vmem:[%s8 + $0xb0] sm:$0xff]
    %v166 = vld [vmem:[%s8 + $0xb8] sm:$0xff]
    %v167 = vld [vmem:[%s8 + $0xc0] sm:$0xff]
    %v168 = vld [vmem:[%s8 + $0xc8] sm:$0xff]
    %v169 = vld [vmem:[%s8 + $0xd0] sm:$0xff]
    %v170 = vld [vmem:[%s8 + $0xd8] sm:$0xff]
    %v171 = vld [vmem:[%s8 + $0xe0] sm:$0xff]
    %v172 = vld [vmem:[%s8 + $0xe8] sm:$0xff]
    %v173 = vld [vmem:[%s8 + $0xf0] sm:$0xff]
    %v174 = vld [vmem:[%s8 + $0xf8] sm:$0xff]
    %v175 = vld [vmem:[%s8 + $0x100] sm:$0xff]
    %v176 = vld [vmem:[%s8 + $0x108] sm:$0xff]
    %v177 = vld [vmem:[%s8 + $0x110] sm:$0xff]
    %v178 = vld [vmem:[%s8 + $0x118] sm:$0xff]
    %v179 = vld [vmem:[%s8 + $0x120] sm:$0xff]
    %v180 = vld [vmem:[%s8 + $0x128] sm:$0xff]
    %v181 = vld [vmem:[%s8 + $0x130] sm:$0xff]
    %v182 = vld [vmem:[%s8 + $0x138] sm:$0xff]
    %v183 = vld [vmem:[%s8 + $0x140] sm:$0xff]
    %v184 = vld [vmem:[%s8 + $0x148] sm:$0xff]
    %v185 = vld [vmem:[%s8 + $0x150] sm:$0xff]
    %v186 = vld [vmem:[%s8 + $0x158] sm:$0xff]
    %v187 = vld [vmem:[%s8 + $0x160] sm:$0xff]
    %v188 = vld [vmem:[%s8 + $0x168] sm:$0xff]
    %v189 = vld [vmem:[%s8 + $0x170] sm:$0xff]
    %v190 = vld [vmem:[%s8 + $0x178] sm:$0xff]
    %v191 = vld [vmem:[%s8 + $0x180] sm:$0xff]
    %v192 = vld [vmem:[%s8 + $0x188] sm:$0xff]
    %v193 = vld [vmem:[%s8 + $0x190] sm:$0xff]
    %v194 = vld [vmem:[%s8 + $0x198] sm:$0xff]
    %v195 = vld [vmem:[%s8 + $0x1a0] sm:$0xff]
    %v196 = vld [vmem:[%s8 + $0x1a8] sm:$0xff]
    %v197 = vld [vmem:[%s8 + $0x1b0] sm:$0xff]
    %v198 = vld [vmem:[%s8 + $0x1b8] sm:$0xff]
    %v199 = vld [vmem:[%s8 + $0x1c0] sm:$0xff]
    %v200 = vld [vmem:[%s8 + $0x1c8] sm:$0xff]
    %v201 = vld [vmem:[%s8 + $0x1d0] sm:$0xff]
    %v202 = vld [vmem:[%s8 + $0x1d8] sm:$0xff]
    %v203 = vld [vmem:[%s8 + $0x1e0] sm:$0xff]
    %v204 = vld [vmem:[%s8 + $0x1e8] sm:$0xff]
    %v205 = vld [vmem:[%s8 + $0x1f0] sm:$0xff]
    %v206 = vld [vmem:[%s8 + $0x1f8] sm:$0xff]
    %v207 = vld [vmem:[%s8 + $0x200] sm:$0xff]
    %v208 = vld [vmem:[%s8 + $0x208] sm:$0xff]
    %v209 = vld [vmem:[%s8 + $0x210] sm:$0xff]
    %v210 = vld [vmem:[%s8 + $0x218] sm:$0xff]
    %v211 = vld [vmem:[%s8 + $0x220] sm:$0xff]
    %v212 = vld [vmem:[%s8 + $0x228] sm:$0xff]
    %v213 = vld [vmem:[%s8 + $0x230] sm:$0xff]
    %v214 = vld [vmem:[%s8 + $0x238] sm:$0xff]
    %v215 = vld [vmem:[%s8 + $0x240] sm:$0xff]
    %v216 = vld [vmem:[%s8 + $0x248] sm:$0xff]
    %v217 = vld [vmem:[%s8 + $0x250] sm:$0xff]
    %v218 = vld [vmem:[%s8 + $0x258] sm:$0xff]
    %v219 = vld [vmem:[%s8 + $0x260] sm:$0xff]
    %v220 = vld [vmem:[%s8 + $0x268] sm:$0xff]
    %v221 = vld [vmem:[%s8 + $0x270] sm:$0xff]
    %v222 = vld [vmem:[%s8 + $0x278] sm:$0xff]
    %v223 = vld [vmem:[%s8 + $0x280] sm:$0xff]
    %v224 = vld [vmem:[%s8 + $0x288] sm:$0xff]
    %v225 = vld [vmem:[%s8 + $0x290] sm:$0xff]
    %v226 = vld [vmem:[%s8 + $0x298] sm:$0xff]
    %v227 = vld [vmem:[%s8 + $0x2a0] sm:$0xff]
    %v228 = vld [vmem:[%s8 + $0x2a8] sm:$0xff]
    %v229 = vld [vmem:[%s8 + $0x2b0] sm:$0xff]
    %v230 = vld [vmem:[%s8 + $0x2b8] sm:$0xff]
    %v231 = vld [vmem:[%s8 + $0x2c0] sm:$0xff]
    %v232 = vld [vmem:[%s8 + $0x2c8] sm:$0xff]
    %v233 = vld [vmem:[%s8 + $0x2d0] sm:$0xff]
    %v234 = vld [vmem:[%s8 + $0x2d8] sm:$0xff]
    %v235 = vld [vmem:[%s8 + $0x2e0] sm:$0xff]
    %v236 = vld [vmem:[%s8 + $0x2e8] sm:$0xff]
    %v237 = vld [vmem:[%s8 + $0x2f0] sm:$0xff]
    %v238 = vld [vmem:[%s8 + $0x2f8] sm:$0xff]
    %v239 = vld [vmem:[%s8 + $0x300] sm:$0xff]
    %v240 = vld [vmem:[%s8 + $0x308] sm:$0xff]
    %v241 = vld [vmem:[%s8 + $0x310] sm:$0xff]
    %v242 = vld [vmem:[%s8 + $0x318] sm:$0xff]
    %v243 = vld [vmem:[%s8 + $0x320] sm:$0xff]
    %v244 = vld [vmem:[%s8 + $0x328] sm:$0xff]
    %v245 = vld [vmem:[%s8 + $0x330] sm:$0xff]
    %v246 = vld [vmem:[%s8 + $0x338] sm:$0xff]
    %v247 = vld [vmem:[%s8 + $0x340] sm:$0xff]
    %v248 = vld [vmem:[%s8 + $0x348] sm:$0xff]
    %v249 = vld [vmem:[%s8 + $0x350] sm:$0xff]
    %v250 = vld [vmem:[%s8 + $0x358] sm:$0xff]
    %v251 = vld [vmem:[%s8 + $0x360] sm:$0xff]
    %v252 = vld [vmem:[%s8 + $0x368] sm:$0xff]
    %v253 = vld [vmem:[%s8 + $0x370] sm:$0xff]
    %v254 = vld [vmem:[%s8 + $0x378] sm:$0xff]
    %v255 = vld [vmem:[%s8 + $0x380] sm:$0xff]
    %v256 = vld [vmem:[%s8 + $0x388] sm:$0xff]
    %v257 = vld [vmem:[%s8 + $0x390] sm:$0xff]
    %v258 = vld [vmem:[%s8 + $0x398] sm:$0xff]
    %v259 = vld [vmem:[%s8 + $0x3a0] sm:$0xff]
    %v260 = vld [vmem:[%s8 + $0x3a8] sm:$0xff]
    %v261 = vld [vmem:[%s8 + $0x3b0] sm:$0xff]
    %v262 = vld [vmem:[%s8 + $0x3b8] sm:$0xff]
    %v263 = vld [vmem:[%s8 + $0x3c0] sm:$0xff]
    %v264 = vld [vmem:[%s8 + $0x3c8] sm:$0xff]
    %v265 = vld [vmem:[%s8 + $0x3d0] sm:$0xff]
    %v266 = vld [vmem:[%s8 + $0x3d8] sm:$0xff]
    %v267 = vld [vmem:[%s8 + $0x3e0] sm:$0xff]
    %v268 = vld [vmem:[%s8 + $0x3e8] sm:$0xff]
    %v269 = vld [vmem:[%s8 + $0x3f0] sm:$0xff]
    %v270 = vld [vmem:[%s8 + $0x3f8] sm:$0xff]
    %v271 = vld [vmem:[%s8 + $0x400] sm:$0xff]
    %v272 = vld [vmem:[%s8 + $0x408] sm:$0xff]
    %v273 = vld [vmem:[%s8 + $0x410] sm:$0xff]
    %v274 = vld [vmem:[%s8 + $0x418] sm:$0xff]
    %v275 = vld [vmem:[%s8 + $0x420] sm:$0xff]
    %v276 = vld [vmem:[%s8 + $0x428] sm:$0xff]
    %v277 = vld [vmem:[%s8 + $0x430] sm:$0xff]
    %v278 = vld [vmem:[%s8 + $0x438] sm:$0xff]
    %v279 = vld [vmem:[%s8 + $0x440] sm:$0xff]
    %v280 = vld [vmem:[%s8 + $0x448] sm:$0xff]
    %v281 = vld [vmem:[%s8 + $0x450] sm:$0xff]
    %v282 = vld [vmem:[%s8 + $0x458] sm:$0xff]
    %v283 = vld [vmem:[%s8 + $0x460] sm:$0xff]
    %v284 = vld [vmem:[%s8 + $0x468] sm:$0xff]
    %v285 = vld [vmem:[%s8 + $0x470] sm:$0xff]
    %v286 = vld [vmem:[%s8 + $0x478] sm:$0xff]
    %v287 = vld [vmem:[%s8 + $0x480] sm:$0xff]
    %v288 = vld [vmem:[%s8 + $0x488] sm:$0xff]
    %v289 = vld [vmem:[%s8 + $0x490] sm:$0xff]
    %v290 = vld [vmem:[%s8 + $0x498] sm:$0xff]
    %v291 = vld [vmem:[%s8 + $0x4a0] sm:$0xff]
    %v292 = vld [vmem:[%s8 + $0x4a8] sm:$0xff]
    %v293 = vld [vmem:[%s8 + $0x4b0] sm:$0xff]
    %v294 = vld [vmem:[%s8 + $0x4b8] sm:$0xff]
    %v295 = vld [vmem:[%s8 + $0x4c0] sm:$0xff]
    %v296 = vld [vmem:[%s8 + $0x4c8] sm:$0xff]
    %v297 = vld [vmem:[%s8 + $0x4d0] sm:$0xff]
    %v298 = vld [vmem:[%s8 + $0x4d8] sm:$0xff]
    %v299 = vld [vmem:[%s8 + $0x4e0] sm:$0xff]
    %v300 = vld [vmem:[%s8 + $0x4e8] sm:$0xff]
    %v301 = vld [vmem:[%s8 + $0x4f0] sm:$0xff]
    %v302 = vld [vmem:[%s8 + $0x4f8] sm:$0xff]
    %v303 = vld [vmem:[%s8 + $0x500] sm:$0xff]
    %v304 = vld [vmem:[%s8 + $0x508] sm:$0xff]
    %v305 = vld [vmem:[%s8 + $0x510] sm:$0xff]
    %v306 = vld [vmem:[%s8 + $0x518] sm:$0xff]
    %v307 = vld [vmem:[%s8 + $0x520] sm:$0xff]
    %v308 = vld [vmem:[%s8 + $0x528] sm:$0xff]
    %v309 = vld [vmem:[%s8 + $0x530] sm:$0xff]
    %v310 = vld [vmem:[%s8 + $0x538] sm:$0xff]
    %v311 = vld [vmem:[%s8 + $0x540] sm:$0xff]
    %v312 = vld [vmem:[%s8 + $0x548] sm:$0xff]
    %v313 = vld [vmem:[%s8 + $0x550] sm:$0xff]
    %v314 = vld [vmem:[%s8 + $0x558] sm:$0xff]
    %v315 = vld [vmem:[%s8 + $0x560] sm:$0xff]
    %v316 = vld [vmem:[%s8 + $0x568] sm:$0xff]
    %v317 = vld [vmem:[%s8 + $0x570] sm:$0xff]
    %v318 = vld [vmem:[%s8 + $0x578] sm:$0xff]
    %v319 = vld [vmem:[%s8 + $0x580] sm:$0xff]
    %v320 = vld [vmem:[%s8 + $0x588] sm:$0xff]
    %v321 = vld [vmem:[%s8 + $0x590] sm:$0xff]
    %v322 = vld [vmem:[%s8 + $0x598] sm:$0xff]
    %v323 = vld [vmem:[%s8 + $0x5a0] sm:$0xff]
    %v324 = vld [vmem:[%s8 + $0x5a8] sm:$0xff]
    %v325 = vld [vmem:[%s8 + $0x5b0] sm:$0xff]
    %v326 = vld [vmem:[%s8 + $0x5b8] sm:$0xff]
    %v327 = vld [vmem:[%s8 + $0x5c0] sm:$0xff]
    %v328 = vld [vmem:[%s8 + $0x5c8] sm:$0xff]
    %v329 = vld [vmem:[%s8 + $0x5d0] sm:$0xff]
    %v330 = vld [vmem:[%s8 + $0x5d8] sm:$0xff]
    %v331 = vld [vmem:[%s8 + $0x5e0] sm:$0xff]
    %v332 = vld [vmem:[%s8 + $0x5e8] sm:$0xff]
    %v333 = vld [vmem:[%s8 + $0x5f0] sm:$0xff]
    %v334 = vld [vmem:[%s8 + $0x5f8] sm:$0xff]
    %v335 = vld [vmem:[%s8 + $0x600] sm:$0xff]
    %v336 = vld [vmem:[%s8 + $0x608] sm:$0xff]
    %v337 = vld [vmem:[%s8 + $0x610] sm:$0xff]
    %v338 = vld [vmem:[%s8 + $0x618] sm:$0xff]
    %v339 = vld [vmem:[%s8 + $0x620] sm:$0xff]
    %v340 = vld [vmem:[%s8 + $0x628] sm:$0xff]
    %v341 = vld [vmem:[%s8 + $0x630] sm:$0xff]
    %v342 = vld [vmem:[%s8 + $0x638] sm:$0xff]
    %v343 = vld [vmem:[%s8 + $0x640] sm:$0xff]
    %v344 = vld [vmem:[%s8 + $0x648] sm:$0xff]
    %v345 = vld [vmem:[%s8 + $0x650] sm:$0xff]
    %v346 = vld [vmem:[%s8 + $0x658] sm:$0xff]
    %v347 = vld [vmem:[%s8 + $0x660] sm:$0xff]
    %v348 = vld [vmem:[%s8 + $0x668] sm:$0xff]
    %v349 = vld [vmem:[%s8 + $0x670] sm:$0xff]
    %v350 = vld [vmem:[%s8 + $0x678] sm:$0xff]
    %v351 = vld [vmem:[%s8 + $0x680] sm:$0xff]
    %v352 = vld [vmem:[%s8 + $0x688] sm:$0xff]
    %v353 = vld [vmem:[%s8 + $0x690] sm:$0xff]
    %v354 = vld [vmem:[%s8 + $0x698] sm:$0xff]
    %v355 = vld [vmem:[%s8 + $0x6a0] sm:$0xff]
    %v356 = vld [vmem:[%s8 + $0x6a8] sm:$0xff]
    %v357 = vld [vmem:[%s8 + $0x6b0] sm:$0xff]
    %v358 = vld [vmem:[%s8 + $0x6b8] sm:$0xff]
    %v359 = vld [vmem:[%s8 + $0x6c0] sm:$0xff]
    %v360 = vld [vmem:[%s8 + $0x6c8] sm:$0xff]
    %v361 = vld [vmem:[%s8 + $0x6d0] sm:$0xff]
    %v362 = vld [vmem:[%s8 + $0x6d8] sm:$0xff]
    %v363 = vld [vmem:[%s8 + $0x6e0] sm:$0xff]
    %v364 = vld [vmem:[%s8 + $0x6e8] sm:$0xff]
    %v365 = vld [vmem:[%s8 + $0x6f0] sm:$0xff]
    %v366 = vld [vmem:[%s8 + $0x6f8] sm:$0xff]
    %v367 = vld [vmem:[%s8 + $0x700] sm:$0xff]
    %v368 = vld [vmem:[%s8 + $0x708] sm:$0xff]
    %v369 = vld [vmem:[%s8 + $0x710] sm:$0xff]
    %v370 = vld [vmem:[%s8 + $0x718] sm:$0xff]
    %v371 = vld [vmem:[%s8 + $0x720] sm:$0xff]
    %v372 = vld [vmem:[%s8 + $0x728] sm:$0xff]
    %v373 = vld [vmem:[%s8 + $0x730] sm:$0xff]
    %v374 = vld [vmem:[%s8 + $0x738] sm:$0xff]
    %v375 = vld [vmem:[%s8 + $0x740] sm:$0xff]
    %v376 = vld [vmem:[%s8 + $0x748] sm:$0xff]
    %v377 = vld [vmem:[%s8 + $0x750] sm:$0xff]
    %v378 = vld [vmem:[%s8 + $0x758] sm:$0xff]
    %v379 = vld [vmem:[%s8 + $0x760] sm:$0xff]
    %v380 = vld [vmem:[%s8 + $0x768] sm:$0xff]
    %v381 = vld [vmem:[%s8 + $0x770] sm:$0xff]
    %v382 = vld [vmem:[%s8 + $0x778] sm:$0xff]
    %v383 = vld [vmem:[%s8 + $0x780] sm:$0xff]
    %v384 = vld [vmem:[%s8 + $0x788] sm:$0xff]
    %v385 = vld [vmem:[%s8 + $0x790] sm:$0xff]
    %v386 = vld [vmem:[%s8 + $0x798] sm:$0xff]
    %v387 = vld [vmem:[%s8 + $0x7a0] sm:$0xff]
    %v388 = vld [vmem:[%s8 + $0x7a8] sm:$0xff]
    %v389 = vld [vmem:[%s8 + $0x7b0] sm:$0xff]
    %v390 = vld [vmem:[%s8 + $0x7b8] sm:$0xff]
    %v391 = vld [vmem:[%s8 + $0x7c0] sm:$0xff]
    %v392 = vld [vmem:[%s8 + $0x7c8] sm:$0xff]
    %v393 = vld [vmem:[%s8 + $0x7d0] sm:$0xff]
    %v394 = vld [vmem:[%s8 + $0x7d8] sm:$0xff]
    %v395 = vld [vmem:[%s8 + $0x7e0] sm:$0xff]
    %v396 = vld [vmem:[%s8 + $0x7e8] sm:$0xff]
    %v397 = vld [vmem:[%s8 + $0x7f0] sm:$0xff]
    %v398 = vld [vmem:[%s8 + $0x7f8] sm:$0xff]
    %v655 = vunpack.c.l.b16 %v143
    %v656 = vunpack.c.h.b16 %v143
    %v657 = vunpack.c.l.b16 %v144
    %v658 = vunpack.c.h.b16 %v144
    %v659 = vunpack.c.l.b16 %v145
    %v660 = vunpack.c.h.b16 %v145
    %v661 = vunpack.c.l.b16 %v146
    %v662 = vunpack.c.h.b16 %v146
    %v663 = vunpack.c.l.b16 %v147
    %v664 = vunpack.c.h.b16 %v147
    %v665 = vunpack.c.l.b16 %v148
    %v666 = vunpack.c.h.b16 %v148
    %v667 = vunpack.c.l.b16 %v149
    %v668 = vunpack.c.h.b16 %v149
    %v669 = vunpack.c.l.b16 %v150
    %v670 = vunpack.c.h.b16 %v150
    %v671 = vunpack.c.l.b16 %v151
    %v672 = vunpack.c.h.b16 %v151
    %v673 = vunpack.c.l.b16 %v152
    %v674 = vunpack.c.h.b16 %v152
    %v675 = vunpack.c.l.b16 %v153
    %v676 = vunpack.c.h.b16 %v153
    %v677 = vunpack.c.l.b16 %v154
    %v678 = vunpack.c.h.b16 %v154
    %v679 = vunpack.c.l.b16 %v155
    %v680 = vunpack.c.h.b16 %v155
    %v681 = vunpack.c.l.b16 %v156
    %v682 = vunpack.c.h.b16 %v156
    %v683 = vunpack.c.l.b16 %v157
    %v684 = vunpack.c.h.b16 %v157
    %v685 = vunpack.c.l.b16 %v158
    %v686 = vunpack.c.h.b16 %v158
    %v687 = vunpack.c.l.b16 %v159
    %v688 = vunpack.c.h.b16 %v159
    %v689 = vunpack.c.l.b16 %v160
    %v690 = vunpack.c.h.b16 %v160
    %v691 = vunpack.c.l.b16 %v161
    %v692 = vunpack.c.h.b16 %v161
    %v693 = vunpack.c.l.b16 %v162
    %v694 = vunpack.c.h.b16 %v162
    %v695 = vunpack.c.l.b16 %v163
    %v696 = vunpack.c.h.b16 %v163
    %v697 = vunpack.c.l.b16 %v164
    %v698 = vunpack.c.h.b16 %v164
    %v699 = vunpack.c.l.b16 %v165
    %v700 = vunpack.c.h.b16 %v165
    %v701 = vunpack.c.l.b16 %v166
    %v702 = vunpack.c.h.b16 %v166
    %v703 = vunpack.c.l.b16 %v167
    %v704 = vunpack.c.h.b16 %v167
    %v705 = vunpack.c.l.b16 %v168
    %v706 = vunpack.c.h.b16 %v168
    %v707 = vunpack.c.l.b16 %v169
    %v708 = vunpack.c.h.b16 %v169
    %v709 = vunpack.c.l.b16 %v170
    %v710 = vunpack.c.h.b16 %v170
    %v711 = vunpack.c.l.b16 %v171
    %v712 = vunpack.c.h.b16 %v171
    %v713 = vunpack.c.l.b16 %v172
    %v714 = vunpack.c.h.b16 %v172
    %v715 = vunpack.c.l.b16 %v173
    %v716 = vunpack.c.h.b16 %v173
    %v717 = vunpack.c.l.b16 %v174
    %v718 = vunpack.c.h.b16 %v174
    %v719 = vunpack.c.l.b16 %v175
    %v720 = vunpack.c.h.b16 %v175
    %v721 = vunpack.c.l.b16 %v176
    %v722 = vunpack.c.h.b16 %v176
    %v723 = vunpack.c.l.b16 %v177
    %v724 = vunpack.c.h.b16 %v177
    %v725 = vunpack.c.l.b16 %v178
    %v726 = vunpack.c.h.b16 %v178
    %v727 = vunpack.c.l.b16 %v179
    %v728 = vunpack.c.h.b16 %v179
    %v729 = vunpack.c.l.b16 %v180
    %v730 = vunpack.c.h.b16 %v180
    %v731 = vunpack.c.l.b16 %v181
    %v732 = vunpack.c.h.b16 %v181
    %v733 = vunpack.c.l.b16 %v182
    %v734 = vunpack.c.h.b16 %v182
    %v735 = vunpack.c.l.b16 %v183
    %v736 = vunpack.c.h.b16 %v183
    %v737 = vunpack.c.l.b16 %v184
    %v738 = vunpack.c.h.b16 %v184
    %v739 = vunpack.c.l.b16 %v185
    %v740 = vunpack.c.h.b16 %v185
    %v741 = vunpack.c.l.b16 %v186
    %v742 = vunpack.c.h.b16 %v186
    %v743 = vunpack.c.l.b16 %v187
    %v744 = vunpack.c.h.b16 %v187
    %v745 = vunpack.c.l.b16 %v188
    %v746 = vunpack.c.h.b16 %v188
    %v747 = vunpack.c.l.b16 %v189
    %v748 = vunpack.c.h.b16 %v189
    %v749 = vunpack.c.l.b16 %v190
    %v750 = vunpack.c.h.b16 %v190
    %v751 = vunpack.c.l.b16 %v191
    %v752 = vunpack.c.h.b16 %v191
    %v753 = vunpack.c.l.b16 %v192
    %v754 = vunpack.c.h.b16 %v192
    %v755 = vunpack.c.l.b16 %v193
    %v756 = vunpack.c.h.b16 %v193
    %v757 = vunpack.c.l.b16 %v194
    %v758 = vunpack.c.h.b16 %v194
    %v759 = vunpack.c.l.b16 %v195
    %v760 = vunpack.c.h.b16 %v195
    %v761 = vunpack.c.l.b16 %v196
    %v762 = vunpack.c.h.b16 %v196
    %v763 = vunpack.c.l.b16 %v197
    %v764 = vunpack.c.h.b16 %v197
    %v765 = vunpack.c.l.b16 %v198
    %v766 = vunpack.c.h.b16 %v198
    %v767 = vunpack.c.l.b16 %v199
    %v768 = vunpack.c.h.b16 %v199
    %v769 = vunpack.c.l.b16 %v200
    %v770 = vunpack.c.h.b16 %v200
    %v771 = vunpack.c.l.b16 %v201
    %v772 = vunpack.c.h.b16 %v201
    %v773 = vunpack.c.l.b16 %v202
    %v774 = vunpack.c.h.b16 %v202
    %v775 = vunpack.c.l.b16 %v203
    %v776 = vunpack.c.h.b16 %v203
    %v777 = vunpack.c.l.b16 %v204
    %v778 = vunpack.c.h.b16 %v204
    %v779 = vunpack.c.l.b16 %v205
    %v780 = vunpack.c.h.b16 %v205
    %v781 = vunpack.c.l.b16 %v206
    %v782 = vunpack.c.h.b16 %v206
    %v783 = vunpack.c.l.b16 %v207
    %v784 = vunpack.c.h.b16 %v207
    %v785 = vunpack.c.l.b16 %v208
    %v786 = vunpack.c.h.b16 %v208
    %v787 = vunpack.c.l.b16 %v209
    %v788 = vunpack.c.h.b16 %v209
    %v789 = vunpack.c.l.b16 %v210
    %v790 = vunpack.c.h.b16 %v210
    %v791 = vunpack.c.l.b16 %v211
    %v792 = vunpack.c.h.b16 %v211
    %v793 = vunpack.c.l.b16 %v212
    %v794 = vunpack.c.h.b16 %v212
    %v795 = vunpack.c.l.b16 %v213
    %v796 = vunpack.c.h.b16 %v213
    %v797 = vunpack.c.l.b16 %v214
    %v798 = vunpack.c.h.b16 %v214
    %v799 = vunpack.c.l.b16 %v215
    %v800 = vunpack.c.h.b16 %v215
    %v801 = vunpack.c.l.b16 %v216
    %v802 = vunpack.c.h.b16 %v216
    %v803 = vunpack.c.l.b16 %v217
    %v804 = vunpack.c.h.b16 %v217
    %v805 = vunpack.c.l.b16 %v218
    %v806 = vunpack.c.h.b16 %v218
    %v807 = vunpack.c.l.b16 %v219
    %v808 = vunpack.c.h.b16 %v219
    %v809 = vunpack.c.l.b16 %v220
    %v810 = vunpack.c.h.b16 %v220
    %v811 = vunpack.c.l.b16 %v221
    %v812 = vunpack.c.h.b16 %v221
    %v813 = vunpack.c.l.b16 %v222
    %v814 = vunpack.c.h.b16 %v222
    %v815 = vunpack.c.l.b16 %v223
    %v816 = vunpack.c.h.b16 %v223
    %v817 = vunpack.c.l.b16 %v224
    %v818 = vunpack.c.h.b16 %v224
    %v819 = vunpack.c.l.b16 %v225
    %v820 = vunpack.c.h.b16 %v225
    %v821 = vunpack.c.l.b16 %v226
    %v822 = vunpack.c.h.b16 %v226
    %v823 = vunpack.c.l.b16 %v227
    %v824 = vunpack.c.h.b16 %v227
    %v825 = vunpack.c.l.b16 %v228
    %v826 = vunpack.c.h.b16 %v228
    %v827 = vunpack.c.l.b16 %v229
    %v828 = vunpack.c.h.b16 %v229
    %v829 = vunpack.c.l.b16 %v230
    %v830 = vunpack.c.h.b16 %v230
    %v831 = vunpack.c.l.b16 %v231
    %v832 = vunpack.c.h.b16 %v231
    %v833 = vunpack.c.l.b16 %v232
    %v834 = vunpack.c.h.b16 %v232
    %v835 = vunpack.c.l.b16 %v233
    %v836 = vunpack.c.h.b16 %v233
    %v837 = vunpack.c.l.b16 %v234
    %v838 = vunpack.c.h.b16 %v234
    %v839 = vunpack.c.l.b16 %v235
    %v840 = vunpack.c.h.b16 %v235
    %v841 = vunpack.c.l.b16 %v236
    %v842 = vunpack.c.h.b16 %v236
    %v843 = vunpack.c.l.b16 %v237
    %v844 = vunpack.c.h.b16 %v237
    %v845 = vunpack.c.l.b16 %v238
    %v846 = vunpack.c.h.b16 %v238
    %v847 = vunpack.c.l.b16 %v239
    %v848 = vunpack.c.h.b16 %v239
    %v849 = vunpack.c.l.b16 %v240
    %v850 = vunpack.c.h.b16 %v240
    %v851 = vunpack.c.l.b16 %v241
    %v852 = vunpack.c.h.b16 %v241
    %v853 = vunpack.c.l.b16 %v242
    %v854 = vunpack.c.h.b16 %v242
    %v855 = vunpack.c.l.b16 %v243
    %v856 = vunpack.c.h.b16 %v243
    %v857 = vunpack.c.l.b16 %v244
    %v858 = vunpack.c.h.b16 %v244
    %v859 = vunpack.c.l.b16 %v245
    %v860 = vunpack.c.h.b16 %v245
    %v861 = vunpack.c.l.b16 %v246
    %v862 = vunpack.c.h.b16 %v246
    %v863 = vunpack.c.l.b16 %v247
    %v864 = vunpack.c.h.b16 %v247
    %v865 = vunpack.c.l.b16 %v248
    %v866 = vunpack.c.h.b16 %v248
    %v867 = vunpack.c.l.b16 %v249
    %v868 = vunpack.c.h.b16 %v249
    %v869 = vunpack.c.l.b16 %v250
    %v870 = vunpack.c.h.b16 %v250
    %v871 = vunpack.c.l.b16 %v251
    %v872 = vunpack.c.h.b16 %v251
    %v873 = vunpack.c.l.b16 %v252
    %v874 = vunpack.c.h.b16 %v252
    %v875 = vunpack.c.l.b16 %v253
    %v876 = vunpack.c.h.b16 %v253
    %v877 = vunpack.c.l.b16 %v254
    %v878 = vunpack.c.h.b16 %v254
    %v879 = vunpack.c.l.b16 %v255
    %v880 = vunpack.c.h.b16 %v255
    %v881 = vunpack.c.l.b16 %v256
    %v882 = vunpack.c.h.b16 %v256
    %v883 = vunpack.c.l.b16 %v257
    %v884 = vunpack.c.h.b16 %v257
    %v885 = vunpack.c.l.b16 %v258
    %v886 = vunpack.c.h.b16 %v258
    %v887 = vunpack.c.l.b16 %v259
    %v888 = vunpack.c.h.b16 %v259
    %v889 = vunpack.c.l.b16 %v260
    %v890 = vunpack.c.h.b16 %v260
    %v891 = vunpack.c.l.b16 %v261
    %v892 = vunpack.c.h.b16 %v261
    %v893 = vunpack.c.l.b16 %v262
    %v894 = vunpack.c.h.b16 %v262
    %v895 = vunpack.c.l.b16 %v263
    %v896 = vunpack.c.h.b16 %v263
    %v897 = vunpack.c.l.b16 %v264
    %v898 = vunpack.c.h.b16 %v264
    %v899 = vunpack.c.l.b16 %v265
    %v900 = vunpack.c.h.b16 %v265
    %v901 = vunpack.c.l.b16 %v266
    %v902 = vunpack.c.h.b16 %v266
    %v903 = vunpack.c.l.b16 %v267
    %v904 = vunpack.c.h.b16 %v267
    %v905 = vunpack.c.l.b16 %v268
    %v906 = vunpack.c.h.b16 %v268
    %v907 = vunpack.c.l.b16 %v269
    %v908 = vunpack.c.h.b16 %v269
    %v909 = vunpack.c.l.b16 %v270
    %v910 = vunpack.c.h.b16 %v270
    %v911 = vunpack.c.l.b16 %v271
    %v912 = vunpack.c.h.b16 %v271
    %v913 = vunpack.c.l.b16 %v272
    %v914 = vunpack.c.h.b16 %v272
    %v915 = vunpack.c.l.b16 %v273
    %v916 = vunpack.c.h.b16 %v273
    %v917 = vunpack.c.l.b16 %v274
    %v918 = vunpack.c.h.b16 %v274
    %v919 = vunpack.c.l.b16 %v275
    %v920 = vunpack.c.h.b16 %v275
    %v921 = vunpack.c.l.b16 %v276
    %v922 = vunpack.c.h.b16 %v276
    %v923 = vunpack.c.l.b16 %v277
    %v924 = vunpack.c.h.b16 %v277
    %v925 = vunpack.c.l.b16 %v278
    %v926 = vunpack.c.h.b16 %v278
    %v927 = vunpack.c.l.b16 %v279
    %v928 = vunpack.c.h.b16 %v279
    %v929 = vunpack.c.l.b16 %v280
    %v930 = vunpack.c.h.b16 %v280
    %v931 = vunpack.c.l.b16 %v281
    %v932 = vunpack.c.h.b16 %v281
    %v933 = vunpack.c.l.b16 %v282
    %v934 = vunpack.c.h.b16 %v282
    %v935 = vunpack.c.l.b16 %v283
    %v936 = vunpack.c.h.b16 %v283
    %v937 = vunpack.c.l.b16 %v284
    %v938 = vunpack.c.h.b16 %v284
    %v939 = vunpack.c.l.b16 %v285
    %v940 = vunpack.c.h.b16 %v285
    %v941 = vunpack.c.l.b16 %v286
    %v942 = vunpack.c.h.b16 %v286
    %v943 = vunpack.c.l.b16 %v287
    %v944 = vunpack.c.h.b16 %v287
    %v945 = vunpack.c.l.b16 %v288
    %v946 = vunpack.c.h.b16 %v288
    %v947 = vunpack.c.l.b16 %v289
    %v948 = vunpack.c.h.b16 %v289
    %v949 = vunpack.c.l.b16 %v290
    %v950 = vunpack.c.h.b16 %v290
    %v951 = vunpack.c.l.b16 %v291
    %v952 = vunpack.c.h.b16 %v291
    %v953 = vunpack.c.l.b16 %v292
    %v954 = vunpack.c.h.b16 %v292
    %v955 = vunpack.c.l.b16 %v293
    %v956 = vunpack.c.h.b16 %v293
    %v957 = vunpack.c.l.b16 %v294
    %v958 = vunpack.c.h.b16 %v294
    %v959 = vunpack.c.l.b16 %v295
    %v960 = vunpack.c.h.b16 %v295
    %v961 = vunpack.c.l.b16 %v296
    %v962 = vunpack.c.h.b16 %v296
    %v963 = vunpack.c.l.b16 %v297
    %v964 = vunpack.c.h.b16 %v297
    %v965 = vunpack.c.l.b16 %v298
    %v966 = vunpack.c.h.b16 %v298
    %v967 = vunpack.c.l.b16 %v299
    %v968 = vunpack.c.h.b16 %v299
    %v969 = vunpack.c.l.b16 %v300
    %v970 = vunpack.c.h.b16 %v300
    %v971 = vunpack.c.l.b16 %v301
    %v972 = vunpack.c.h.b16 %v301
    %v973 = vunpack.c.l.b16 %v302
    %v974 = vunpack.c.h.b16 %v302
    %v975 = vunpack.c.l.b16 %v303
    %v976 = vunpack.c.h.b16 %v303
    %v977 = vunpack.c.l.b16 %v304
    %v978 = vunpack.c.h.b16 %v304
    %v979 = vunpack.c.l.b16 %v305
    %v980 = vunpack.c.h.b16 %v305
    %v981 = vunpack.c.l.b16 %v306
    %v982 = vunpack.c.h.b16 %v306
    %v983 = vunpack.c.l.b16 %v307
    %v984 = vunpack.c.h.b16 %v307
    %v985 = vunpack.c.l.b16 %v308
    %v986 = vunpack.c.h.b16 %v308
    %v987 = vunpack.c.l.b16 %v309
    %v988 = vunpack.c.h.b16 %v309
    %v989 = vunpack.c.l.b16 %v310
    %v990 = vunpack.c.h.b16 %v310
    %v991 = vunpack.c.l.b16 %v311
    %v992 = vunpack.c.h.b16 %v311
    %v993 = vunpack.c.l.b16 %v312
    %v994 = vunpack.c.h.b16 %v312
    %v995 = vunpack.c.l.b16 %v313
    %v996 = vunpack.c.h.b16 %v313
    %v997 = vunpack.c.l.b16 %v314
    %v998 = vunpack.c.h.b16 %v314
    %v999 = vunpack.c.l.b16 %v315
    %v1000 = vunpack.c.h.b16 %v315
    %v1001 = vunpack.c.l.b16 %v316
    %v1002 = vunpack.c.h.b16 %v316
    %v1003 = vunpack.c.l.b16 %v317
    %v1004 = vunpack.c.h.b16 %v317
    %v1005 = vunpack.c.l.b16 %v318
    %v1006 = vunpack.c.h.b16 %v318
    %v1007 = vunpack.c.l.b16 %v319
    %v1008 = vunpack.c.h.b16 %v319
    %v1009 = vunpack.c.l.b16 %v320
    %v1010 = vunpack.c.h.b16 %v320
    %v1011 = vunpack.c.l.b16 %v321
    %v1012 = vunpack.c.h.b16 %v321
    %v1013 = vunpack.c.l.b16 %v322
    %v1014 = vunpack.c.h.b16 %v322
    %v1015 = vunpack.c.l.b16 %v323
    %v1016 = vunpack.c.h.b16 %v323
    %v1017 = vunpack.c.l.b16 %v324
    %v1018 = vunpack.c.h.b16 %v324
    %v1019 = vunpack.c.l.b16 %v325
    %v1020 = vunpack.c.h.b16 %v325
    %v1021 = vunpack.c.l.b16 %v326
    %v1022 = vunpack.c.h.b16 %v326
    %v1023 = vunpack.c.l.b16 %v327
    %v1024 = vunpack.c.h.b16 %v327
    %v1025 = vunpack.c.l.b16 %v328
    %v1026 = vunpack.c.h.b16 %v328
    %v1027 = vunpack.c.l.b16 %v329
    %v1028 = vunpack.c.h.b16 %v329
    %v1029 = vunpack.c.l.b16 %v330
    %v1030 = vunpack.c.h.b16 %v330
    %v1031 = vunpack.c.l.b16 %v331
    %v1032 = vunpack.c.h.b16 %v331
    %v1033 = vunpack.c.l.b16 %v332
    %v1034 = vunpack.c.h.b16 %v332
    %v1035 = vunpack.c.l.b16 %v333
    %v1036 = vunpack.c.h.b16 %v333
    %v1037 = vunpack.c.l.b16 %v334
    %v1038 = vunpack.c.h.b16 %v334
    %v1039 = vunpack.c.l.b16 %v335
    %v1040 = vunpack.c.h.b16 %v335
    %v1041 = vunpack.c.l.b16 %v336
    %v1042 = vunpack.c.h.b16 %v336
    %v1043 = vunpack.c.l.b16 %v337
    %v1044 = vunpack.c.h.b16 %v337
    %v1045 = vunpack.c.l.b16 %v338
    %v1046 = vunpack.c.h.b16 %v338
    %v1047 = vunpack.c.l.b16 %v339
    %v1048 = vunpack.c.h.b16 %v339
    %v1049 = vunpack.c.l.b16 %v340
    %v1050 = vunpack.c.h.b16 %v340
    %v1051 = vunpack.c.l.b16 %v341
    %v1052 = vunpack.c.h.b16 %v341
    %v1053 = vunpack.c.l.b16 %v342
    %v1054 = vunpack.c.h.b16 %v342
    %v1055 = vunpack.c.l.b16 %v343
    %v1056 = vunpack.c.h.b16 %v343
    %v1057 = vunpack.c.l.b16 %v344
    %v1058 = vunpack.c.h.b16 %v344
    %v1059 = vunpack.c.l.b16 %v345
    %v1060 = vunpack.c.h.b16 %v345
    %v1061 = vunpack.c.l.b16 %v346
    %v1062 = vunpack.c.h.b16 %v346
    %v1063 = vunpack.c.l.b16 %v347
    %v1064 = vunpack.c.h.b16 %v347
    %v1065 = vunpack.c.l.b16 %v348
    %v1066 = vunpack.c.h.b16 %v348
    %v1067 = vunpack.c.l.b16 %v349
    %v1068 = vunpack.c.h.b16 %v349
    %v1069 = vunpack.c.l.b16 %v350
    %v1070 = vunpack.c.h.b16 %v350
    %v1071 = vunpack.c.l.b16 %v351
    %v1072 = vunpack.c.h.b16 %v351
    %v1073 = vunpack.c.l.b16 %v352
    %v1074 = vunpack.c.h.b16 %v352
    %v1075 = vunpack.c.l.b16 %v353
    %v1076 = vunpack.c.h.b16 %v353
    %v1077 = vunpack.c.l.b16 %v354
    %v1078 = vunpack.c.h.b16 %v354
    %v1079 = vunpack.c.l.b16 %v355
    %v1080 = vunpack.c.h.b16 %v355
    %v1081 = vunpack.c.l.b16 %v356
    %v1082 = vunpack.c.h.b16 %v356
    %v1083 = vunpack.c.l.b16 %v357
    %v1084 = vunpack.c.h.b16 %v357
    %v1085 = vunpack.c.l.b16 %v358
    %v1086 = vunpack.c.h.b16 %v358
    %v1087 = vunpack.c.l.b16 %v359
    %v1088 = vunpack.c.h.b16 %v359
    %v1089 = vunpack.c.l.b16 %v360
    %v1090 = vunpack.c.h.b16 %v360
    %v1091 = vunpack.c.l.b16 %v361
    %v1092 = vunpack.c.h.b16 %v361
    %v1093 = vunpack.c.l.b16 %v362
    %v1094 = vunpack.c.h.b16 %v362
    %v1095 = vunpack.c.l.b16 %v363
    %v1096 = vunpack.c.h.b16 %v363
    %v1097 = vunpack.c.l.b16 %v364
    %v1098 = vunpack.c.h.b16 %v364
    %v1099 = vunpack.c.l.b16 %v365
    %v1100 = vunpack.c.h.b16 %v365
    %v1101 = vunpack.c.l.b16 %v366
    %v1102 = vunpack.c.h.b16 %v366
    %v1103 = vunpack.c.l.b16 %v367
    %v1104 = vunpack.c.h.b16 %v367
    %v1105 = vunpack.c.l.b16 %v368
    %v1106 = vunpack.c.h.b16 %v368
    %v1107 = vunpack.c.l.b16 %v369
    %v1108 = vunpack.c.h.b16 %v369
    %v1109 = vunpack.c.l.b16 %v370
    %v1110 = vunpack.c.h.b16 %v370
    %v1111 = vunpack.c.l.b16 %v371
    %v1112 = vunpack.c.h.b16 %v371
    %v1113 = vunpack.c.l.b16 %v372
    %v1114 = vunpack.c.h.b16 %v372
    %v1115 = vunpack.c.l.b16 %v373
    %v1116 = vunpack.c.h.b16 %v373
    %v1117 = vunpack.c.l.b16 %v374
    %v1118 = vunpack.c.h.b16 %v374
    %v1119 = vunpack.c.l.b16 %v375
    %v1120 = vunpack.c.h.b16 %v375
    %v1121 = vunpack.c.l.b16 %v376
    %v1122 = vunpack.c.h.b16 %v376
    %v1123 = vunpack.c.l.b16 %v377
    %v1124 = vunpack.c.h.b16 %v377
    %v1125 = vunpack.c.l.b16 %v378
    %v1126 = vunpack.c.h.b16 %v378
    %v1127 = vunpack.c.l.b16 %v379
    %v1128 = vunpack.c.h.b16 %v379
    %v1129 = vunpack.c.l.b16 %v380
    %v1130 = vunpack.c.h.b16 %v380
    %v1131 = vunpack.c.l.b16 %v381
    %v1132 = vunpack.c.h.b16 %v381
    %v1133 = vunpack.c.l.b16 %v382
    %v1134 = vunpack.c.h.b16 %v382
    %v1135 = vunpack.c.l.b16 %v383
    %v1136 = vunpack.c.h.b16 %v383
    %v1137 = vunpack.c.l.b16 %v384
    %v1138 = vunpack.c.h.b16 %v384
    %v1139 = vunpack.c.l.b16 %v385
    %v1140 = vunpack.c.h.b16 %v385
    %v1141 = vunpack.c.l.b16 %v386
    %v1142 = vunpack.c.h.b16 %v386
    %v1143 = vunpack.c.l.b16 %v387
    %v1144 = vunpack.c.h.b16 %v387
    %v1145 = vunpack.c.l.b16 %v388
    %v1146 = vunpack.c.h.b16 %v388
    %v1147 = vunpack.c.l.b16 %v389
    %v1148 = vunpack.c.h.b16 %v389
    %v1149 = vunpack.c.l.b16 %v390
    %v1150 = vunpack.c.h.b16 %v390
    %v1151 = vunpack.c.l.b16 %v391
    %v1152 = vunpack.c.h.b16 %v391
    %v1153 = vunpack.c.l.b16 %v392
    %v1154 = vunpack.c.h.b16 %v392
    %v1155 = vunpack.c.l.b16 %v393
    %v1156 = vunpack.c.h.b16 %v393
    %v1157 = vunpack.c.l.b16 %v394
    %v1158 = vunpack.c.h.b16 %v394
    %v1159 = vunpack.c.l.b16 %v395
    %v1160 = vunpack.c.h.b16 %v395
    %v1161 = vunpack.c.l.b16 %v396
    %v1162 = vunpack.c.h.b16 %v396
    %v1163 = vunpack.c.l.b16 %v397
    %v1164 = vunpack.c.h.b16 %v397
    %v1165 = vunpack.c.l.b16 %v398
    %v1166 = vunpack.c.h.b16 %v398
    %v1167 = vpack.c.b16 %v659, %v655
    %v1168 = vpack.c.b16 %v660, %v656
    %v1169 = vpack.c.b16 %v661, %v657
    %v1170 = vpack.c.b16 %v662, %v658
    %v1171 = vpack.c.b16 %v667, %v663
    %v1172 = vpack.c.b16 %v668, %v664
    %v1173 = vpack.c.b16 %v669, %v665
    %v1174 = vpack.c.b16 %v670, %v666
    %v1175 = vpack.c.b16 %v675, %v671
    %v1176 = vpack.c.b16 %v676, %v672
    %v1177 = vpack.c.b16 %v677, %v673
    %v1178 = vpack.c.b16 %v678, %v674
    %v1179 = vpack.c.b16 %v683, %v679
    %v1180 = vpack.c.b16 %v684, %v680
    %v1181 = vpack.c.b16 %v685, %v681
    %v1182 = vpack.c.b16 %v686, %v682
    %v1183 = vpack.c.b16 %v691, %v687
    %v1184 = vpack.c.b16 %v692, %v688
    %v1185 = vpack.c.b16 %v693, %v689
    %v1186 = vpack.c.b16 %v694, %v690
    %v1187 = vpack.c.b16 %v699, %v695
    %v1188 = vpack.c.b16 %v700, %v696
    %v1189 = vpack.c.b16 %v701, %v697
    %v1190 = vpack.c.b16 %v702, %v698
    %v1191 = vpack.c.b16 %v707, %v703
    %v1192 = vpack.c.b16 %v708, %v704
    %v1193 = vpack.c.b16 %v709, %v705
    %v1194 = vpack.c.b16 %v710, %v706
    %v1195 = vpack.c.b16 %v715, %v711
    %v1196 = vpack.c.b16 %v716, %v712
    %v1197 = vpack.c.b16 %v717, %v713
    %v1198 = vpack.c.b16 %v718, %v714
    %v1199 = vpack.c.b16 %v723, %v719
    %v1200 = vpack.c.b16 %v724, %v720
    %v1201 = vpack.c.b16 %v725, %v721
    %v1202 = vpack.c.b16 %v726, %v722
    %v1203 = vpack.c.b16 %v731, %v727
    %v1204 = vpack.c.b16 %v732, %v728
    %v1205 = vpack.c.b16 %v733, %v729
    %v1206 = vpack.c.b16 %v734, %v730
    %v1207 = vpack.c.b16 %v739, %v735
    %v1208 = vpack.c.b16 %v740, %v736
    %v1209 = vpack.c.b16 %v741, %v737
    %v1210 = vpack.c.b16 %v742, %v738
    %v1211 = vpack.c.b16 %v747, %v743
    %v1212 = vpack.c.b16 %v748, %v744
    %v1213 = vpack.c.b16 %v749, %v745
    %v1214 = vpack.c.b16 %v750, %v746
    %v1215 = vpack.c.b16 %v755, %v751
    %v1216 = vpack.c.b16 %v756, %v752
    %v1217 = vpack.c.b16 %v757, %v753
    %v1218 = vpack.c.b16 %v758, %v754
    %v1219 = vpack.c.b16 %v763, %v759
    %v1220 = vpack.c.b16 %v764, %v760
    %v1221 = vpack.c.b16 %v765, %v761
    %v1222 = vpack.c.b16 %v766, %v762
    %v1223 = vpack.c.b16 %v771, %v767
    %v1224 = vpack.c.b16 %v772, %v768
    %v1225 = vpack.c.b16 %v773, %v769
    %v1226 = vpack.c.b16 %v774, %v770
    %v1227 = vpack.c.b16 %v779, %v775
    %v1228 = vpack.c.b16 %v780, %v776
    %v1229 = vpack.c.b16 %v781, %v777
    %v1230 = vpack.c.b16 %v782, %v778
    %v1231 = vpack.c.b16 %v787, %v783
    %v1232 = vpack.c.b16 %v788, %v784
    %v1233 = vpack.c.b16 %v789, %v785
    %v1234 = vpack.c.b16 %v790, %v786
    %v1235 = vpack.c.b16 %v795, %v791
    %v1236 = vpack.c.b16 %v796, %v792
    %v1237 = vpack.c.b16 %v797, %v793
    %v1238 = vpack.c.b16 %v798, %v794
    %v1239 = vpack.c.b16 %v803, %v799
    %v1240 = vpack.c.b16 %v804, %v800
    %v1241 = vpack.c.b16 %v805, %v801
    %v1242 = vpack.c.b16 %v806, %v802
    %v1243 = vpack.c.b16 %v811, %v807
    %v1244 = vpack.c.b16 %v812, %v808
    %v1245 = vpack.c.b16 %v813, %v809
    %v1246 = vpack.c.b16 %v814, %v810
    %v1247 = vpack.c.b16 %v819, %v815
    %v1248 = vpack.c.b16 %v820, %v816
    %v1249 = vpack.c.b16 %v821, %v817
    %v1250 = vpack.c.b16 %v822, %v818
    %v1251 = vpack.c.b16 %v827, %v823
    %v1252 = vpack.c.b16 %v828, %v824
    %v1253 = vpack.c.b16 %v829, %v825
    %v1254 = vpack.c.b16 %v830, %v826
    %v1255 = vpack.c.b16 %v835, %v831
    %v1256 = vpack.c.b16 %v836, %v832
    %v1257 = vpack.c.b16 %v837, %v833
    %v1258 = vpack.c.b16 %v838, %v834
    %v1259 = vpack.c.b16 %v843, %v839
    %v1260 = vpack.c.b16 %v844, %v840
    %v1261 = vpack.c.b16 %v845, %v841
    %v1262 = vpack.c.b16 %v846, %v842
    %v1263 = vpack.c.b16 %v851, %v847
    %v1264 = vpack.c.b16 %v852, %v848
    %v1265 = vpack.c.b16 %v853, %v849
    %v1266 = vpack.c.b16 %v854, %v850
    %v1267 = vpack.c.b16 %v859, %v855
    %v1268 = vpack.c.b16 %v860, %v856
    %v1269 = vpack.c.b16 %v861, %v857
    %v1270 = vpack.c.b16 %v862, %v858
    %v1271 = vpack.c.b16 %v867, %v863
    %v1272 = vpack.c.b16 %v868, %v864
    %v1273 = vpack.c.b16 %v869, %v865
    %v1274 = vpack.c.b16 %v870, %v866
    %v1275 = vpack.c.b16 %v875, %v871
    %v1276 = vpack.c.b16 %v876, %v872
    %v1277 = vpack.c.b16 %v877, %v873
    %v1278 = vpack.c.b16 %v878, %v874
    %v1279 = vpack.c.b16 %v883, %v879
    %v1280 = vpack.c.b16 %v884, %v880
    %v1281 = vpack.c.b16 %v885, %v881
    %v1282 = vpack.c.b16 %v886, %v882
    %v1283 = vpack.c.b16 %v891, %v887
    %v1284 = vpack.c.b16 %v892, %v888
    %v1285 = vpack.c.b16 %v893, %v889
    %v1286 = vpack.c.b16 %v894, %v890
    %v1287 = vpack.c.b16 %v899, %v895
    %v1288 = vpack.c.b16 %v900, %v896
    %v1289 = vpack.c.b16 %v901, %v897
    %v1290 = vpack.c.b16 %v902, %v898
    %v1291 = vpack.c.b16 %v907, %v903
    %v1292 = vpack.c.b16 %v908, %v904
    %v1293 = vpack.c.b16 %v909, %v905
    %v1294 = vpack.c.b16 %v910, %v906
    %v1295 = vpack.c.b16 %v915, %v911
    %v1296 = vpack.c.b16 %v916, %v912
    %v1297 = vpack.c.b16 %v917, %v913
    %v1298 = vpack.c.b16 %v918, %v914
    %v1299 = vpack.c.b16 %v923, %v919
    %v1300 = vpack.c.b16 %v924, %v920
    %v1301 = vpack.c.b16 %v925, %v921
    %v1302 = vpack.c.b16 %v926, %v922
    %v1303 = vpack.c.b16 %v931, %v927
    %v1304 = vpack.c.b16 %v932, %v928
    %v1305 = vpack.c.b16 %v933, %v929
    %v1306 = vpack.c.b16 %v934, %v930
    %v1307 = vpack.c.b16 %v939, %v935
    %v1308 = vpack.c.b16 %v940, %v936
    %v1309 = vpack.c.b16 %v941, %v937
    %v1310 = vpack.c.b16 %v942, %v938
    %v1311 = vpack.c.b16 %v947, %v943
    %v1312 = vpack.c.b16 %v948, %v944
    %v1313 = vpack.c.b16 %v949, %v945
    %v1314 = vpack.c.b16 %v950, %v946
    %v1315 = vpack.c.b16 %v955, %v951
    %v1316 = vpack.c.b16 %v956, %v952
    %v1317 = vpack.c.b16 %v957, %v953
    %v1318 = vpack.c.b16 %v958, %v954
    %v1319 = vpack.c.b16 %v963, %v959
    %v1320 = vpack.c.b16 %v964, %v960
    %v1321 = vpack.c.b16 %v965, %v961
    %v1322 = vpack.c.b16 %v966, %v962
    %v1323 = vpack.c.b16 %v971, %v967
    %v1324 = vpack.c.b16 %v972, %v968
    %v1325 = vpack.c.b16 %v973, %v969
    %v1326 = vpack.c.b16 %v974, %v970
    %v1327 = vpack.c.b16 %v979, %v975
    %v1328 = vpack.c.b16 %v980, %v976
    %v1329 = vpack.c.b16 %v981, %v977
    %v1330 = vpack.c.b16 %v982, %v978
    %v1331 = vpack.c.b16 %v987, %v983
    %v1332 = vpack.c.b16 %v988, %v984
    %v1333 = vpack.c.b16 %v989, %v985
    %v1334 = vpack.c.b16 %v990, %v986
    %v1335 = vpack.c.b16 %v995, %v991
    %v1336 = vpack.c.b16 %v996, %v992
    %v1337 = vpack.c.b16 %v997, %v993
    %v1338 = vpack.c.b16 %v998, %v994
    %v1339 = vpack.c.b16 %v1003, %v999
    %v1340 = vpack.c.b16 %v1004, %v1000
    %v1341 = vpack.c.b16 %v1005, %v1001
    %v1342 = vpack.c.b16 %v1006, %v1002
    %v1343 = vpack.c.b16 %v1011, %v1007
    %v1344 = vpack.c.b16 %v1012, %v1008
    %v1345 = vpack.c.b16 %v1013, %v1009
    %v1346 = vpack.c.b16 %v1014, %v1010
    %v1347 = vpack.c.b16 %v1019, %v1015
    %v1348 = vpack.c.b16 %v1020, %v1016
    %v1349 = vpack.c.b16 %v1021, %v1017
    %v1350 = vpack.c.b16 %v1022, %v1018
    %v1351 = vpack.c.b16 %v1027, %v1023
    %v1352 = vpack.c.b16 %v1028, %v1024
    %v1353 = vpack.c.b16 %v1029, %v1025
    %v1354 = vpack.c.b16 %v1030, %v1026
    %v1355 = vpack.c.b16 %v1035, %v1031
    %v1356 = vpack.c.b16 %v1036, %v1032
    %v1357 = vpack.c.b16 %v1037, %v1033
    %v1358 = vpack.c.b16 %v1038, %v1034
    %v1359 = vpack.c.b16 %v1043, %v1039
    %v1360 = vpack.c.b16 %v1044, %v1040
    %v1361 = vpack.c.b16 %v1045, %v1041
    %v1362 = vpack.c.b16 %v1046, %v1042
    %v1363 = vpack.c.b16 %v1051, %v1047
    %v1364 = vpack.c.b16 %v1052, %v1048
    %v1365 = vpack.c.b16 %v1053, %v1049
    %v1366 = vpack.c.b16 %v1054, %v1050
    %v1367 = vpack.c.b16 %v1059, %v1055
    %v1368 = vpack.c.b16 %v1060, %v1056
    %v1369 = vpack.c.b16 %v1061, %v1057
    %v1370 = vpack.c.b16 %v1062, %v1058
    %v1371 = vpack.c.b16 %v1067, %v1063
    %v1372 = vpack.c.b16 %v1068, %v1064
    %v1373 = vpack.c.b16 %v1069, %v1065
    %v1374 = vpack.c.b16 %v1070, %v1066
    %v1375 = vpack.c.b16 %v1075, %v1071
    %v1376 = vpack.c.b16 %v1076, %v1072
    %v1377 = vpack.c.b16 %v1077, %v1073
    %v1378 = vpack.c.b16 %v1078, %v1074
    %v1379 = vpack.c.b16 %v1083, %v1079
    %v1380 = vpack.c.b16 %v1084, %v1080
    %v1381 = vpack.c.b16 %v1085, %v1081
    %v1382 = vpack.c.b16 %v1086, %v1082
    %v1383 = vpack.c.b16 %v1091, %v1087
    %v1384 = vpack.c.b16 %v1092, %v1088
    %v1385 = vpack.c.b16 %v1093, %v1089
    %v1386 = vpack.c.b16 %v1094, %v1090
    %v1387 = vpack.c.b16 %v1099, %v1095
    %v1388 = vpack.c.b16 %v1100, %v1096
    %v1389 = vpack.c.b16 %v1101, %v1097
    %v1390 = vpack.c.b16 %v1102, %v1098
    %v1391 = vpack.c.b16 %v1107, %v1103
    %v1392 = vpack.c.b16 %v1108, %v1104
    %v1393 = vpack.c.b16 %v1109, %v1105
    %v1394 = vpack.c.b16 %v1110, %v1106
    %v1395 = vpack.c.b16 %v1115, %v1111
    %v1396 = vpack.c.b16 %v1116, %v1112
    %v1397 = vpack.c.b16 %v1117, %v1113
    %v1398 = vpack.c.b16 %v1118, %v1114
    %v1399 = vpack.c.b16 %v1123, %v1119
    %v1400 = vpack.c.b16 %v1124, %v1120
    %v1401 = vpack.c.b16 %v1125, %v1121
    %v1402 = vpack.c.b16 %v1126, %v1122
    %v1403 = vpack.c.b16 %v1131, %v1127
    %v1404 = vpack.c.b16 %v1132, %v1128
    %v1405 = vpack.c.b16 %v1133, %v1129
    %v1406 = vpack.c.b16 %v1134, %v1130
    %v1407 = vpack.c.b16 %v1139, %v1135
    %v1408 = vpack.c.b16 %v1140, %v1136
    %v1409 = vpack.c.b16 %v1141, %v1137
    %v1410 = vpack.c.b16 %v1142, %v1138
    %v1411 = vpack.c.b16 %v1147, %v1143
    %v1412 = vpack.c.b16 %v1148, %v1144
    %v1413 = vpack.c.b16 %v1149, %v1145
    %v1414 = vpack.c.b16 %v1150, %v1146
    %v1415 = vpack.c.b16 %v1155, %v1151
    %v1416 = vpack.c.b16 %v1156, %v1152
    %v1417 = vpack.c.b16 %v1157, %v1153
    %v1418 = vpack.c.b16 %v1158, %v1154
    %v1419 = vpack.c.b16 %v1163, %v1159
    %v1420 = vpack.c.b16 %v1164, %v1160
    %v1421 = vpack.c.b16 %v1165, %v1161
    %v1422 = vpack.c.b16 %v1166, %v1162
    %1679 = vmatprep.subr.bf16.mxu0 %v1168
    %1680 = vmatpush1.bf16.msra.mxu0 %v1167
    %1681 = vmatprep.subr.bf16.mxu0 %v1172
    %1682 = vmatpush1.bf16.msra.mxu0 %v1171
    %1683 = vmatprep.subr.bf16.mxu0 %v1176
    %1684 = vmatpush1.bf16.msra.mxu0 %v1175
    %1685 = vmatprep.subr.bf16.mxu0 %v1180
    %1686 = vmatpush1.bf16.msra.mxu0 %v1179
    %1687 = vmatprep.subr.bf16.mxu0 %v1184
    %1688 = vmatpush1.bf16.msra.mxu0 %v1183
    %1689 = vmatprep.subr.bf16.mxu0 %v1188
    %1690 = vmatpush1.bf16.msra.mxu0 %v1187
    %1691 = vmatprep.subr.bf16.mxu0 %v1192
    %1692 = vmatpush1.bf16.msra.mxu0 %v1191
    %1693 = vmatprep.subr.bf16.mxu0 %v1196
    %1694 = vmatpush1.bf16.msra.mxu0 %v1195
    %1695 = vmatprep.subr.bf16.mxu0 %v1200
    %1696 = vmatpush1.bf16.msra.mxu0 %v1199
    %1697 = vmatprep.subr.bf16.mxu0 %v1204
    %1698 = vmatpush1.bf16.msra.mxu0 %v1203
    %1699 = vmatprep.subr.bf16.mxu0 %v1208
    %1700 = vmatpush1.bf16.msra.mxu0 %v1207
    %1701 = vmatprep.subr.bf16.mxu0 %v1212
    %1702 = vmatpush1.bf16.msra.mxu0 %v1211
    %1703 = vmatprep.subr.bf16.mxu0 %v1216
    %1704 = vmatpush1.bf16.msra.mxu0 %v1215
    %1705 = vmatprep.subr.bf16.mxu0 %v1220
    %1706 = vmatpush1.bf16.msra.mxu0 %v1219
    %1707 = vmatprep.subr.bf16.mxu0 %v1224
    %1708 = vmatpush1.bf16.msra.mxu0 %v1223
    %1709 = vmatprep.subr.bf16.mxu0 %v1228
    %1710 = vmatpush1.bf16.msra.mxu0 %v1227
    %1711 = vmatprep.mubr.bf16.mxu0 %v136
    %1712 = vmatmul.mubr.bf16.gmra.mrb[0].mxu0 %v135
    %v1713 = vpop.f32.mrb[0].mxu0
    %v1714 = vadd.f32 0.0, %v1713
    %v1715 = vpop.f32.mrb[0].mxu0
    %v1716 = vadd.f32 0.0, %v1715
    %v1717 = vpop.f32.mrb[0].mxu0
    %v1718 = vpop.f32.mrb[0].mxu0
    %1719 = vdwg.mxu0
    %1720 = vmatprep.subr.bf16.mxu0 %v1232
    %1721 = vmatpush1.bf16.msra.mxu0 %v1231
    %1722 = vmatprep.subr.bf16.mxu0 %v1236
    %1723 = vmatpush1.bf16.msra.mxu0 %v1235
    %1724 = vmatprep.subr.bf16.mxu0 %v1240
    %1725 = vmatpush1.bf16.msra.mxu0 %v1239
    %1726 = vmatprep.subr.bf16.mxu0 %v1244
    %1727 = vmatpush1.bf16.msra.mxu0 %v1243
    %1728 = vmatprep.subr.bf16.mxu0 %v1248
    %1729 = vmatpush1.bf16.msra.mxu0 %v1247
    %1730 = vmatprep.subr.bf16.mxu0 %v1252
    %1731 = vmatpush1.bf16.msra.mxu0 %v1251
    %1732 = vmatprep.subr.bf16.mxu0 %v1256
    %1733 = vmatpush1.bf16.msra.mxu0 %v1255
    %1734 = vmatprep.subr.bf16.mxu0 %v1260
    %1735 = vmatpush1.bf16.msra.mxu0 %v1259
    %1736 = vmatprep.subr.bf16.mxu0 %v1264
    %1737 = vmatpush1.bf16.msra.mxu0 %v1263
    %1738 = vmatprep.subr.bf16.mxu0 %v1268
    %1739 = vmatpush1.bf16.msra.mxu0 %v1267
    %1740 = vmatprep.subr.bf16.mxu0 %v1272
    %1741 = vmatpush1.bf16.msra.mxu0 %v1271
    %1742 = vmatprep.subr.bf16.mxu0 %v1276
    %1743 = vmatpush1.bf16.msra.mxu0 %v1275
    %1744 = vmatprep.subr.bf16.mxu0 %v1280
    %1745 = vmatpush1.bf16.msra.mxu0 %v1279
    %1746 = vmatprep.subr.bf16.mxu0 %v1284
    %1747 = vmatpush1.bf16.msra.mxu0 %v1283
    %1748 = vmatprep.subr.bf16.mxu0 %v1288
    %1749 = vmatpush1.bf16.msra.mxu0 %v1287
    %1750 = vmatprep.subr.bf16.mxu0 %v1292
    %1751 = vmatpush1.bf16.msra.mxu0 %v1291
    %1752 = vmatprep.mubr.bf16.mxu0 %v138
    %1753 = vmatmul.mubr.bf16.gmra.mrb[0].mxu0 %v137
    %v1754 = vpop.f32.mrb[0].mxu0
    %v1755 = vadd.f32 %v1714, %v1754
    %v1756 = vpop.f32.mrb[0].mxu0
    %v1757 = vadd.f32 %v1716, %v1756
    %v1758 = vpop.f32.mrb[0].mxu0
    %v1759 = vpop.f32.mrb[0].mxu0
    %1760 = vdwg.mxu0
    %1761 = vmatprep.subr.bf16.mxu0 %v1296
    %1762 = vmatpush1.bf16.msra.mxu0 %v1295
    %1763 = vmatprep.subr.bf16.mxu0 %v1300
    %1764 = vmatpush1.bf16.msra.mxu0 %v1299
    %1765 = vmatprep.subr.bf16.mxu0 %v1304
    %1766 = vmatpush1.bf16.msra.mxu0 %v1303
    %1767 = vmatprep.subr.bf16.mxu0 %v1308
    %1768 = vmatpush1.bf16.msra.mxu0 %v1307
    %1769 = vmatprep.subr.bf16.mxu0 %v1312
    %1770 = vmatpush1.bf16.msra.mxu0 %v1311
    %1771 = vmatprep.subr.bf16.mxu0 %v1316
    %1772 = vmatpush1.bf16.msra.mxu0 %v1315
    %1773 = vmatprep.subr.bf16.mxu0 %v1320
    %1774 = vmatpush1.bf16.msra.mxu0 %v1319
    %1775 = vmatprep.subr.bf16.mxu0 %v1324
    %1776 = vmatpush1.bf16.msra.mxu0 %v1323
    %1777 = vmatprep.subr.bf16.mxu0 %v1328
    %1778 = vmatpush1.bf16.msra.mxu0 %v1327
    %1779 = vmatprep.subr.bf16.mxu0 %v1332
    %1780 = vmatpush1.bf16.msra.mxu0 %v1331
    %1781 = vmatprep.subr.bf16.mxu0 %v1336
    %1782 = vmatpush1.bf16.msra.mxu0 %v1335
    %1783 = vmatprep.subr.bf16.mxu0 %v1340
    %1784 = vmatpush1.bf16.msra.mxu0 %v1339
    %1785 = vmatprep.subr.bf16.mxu0 %v1344
    %1786 = vmatpush1.bf16.msra.mxu0 %v1343
    %1787 = vmatprep.subr.bf16.mxu0 %v1348
    %1788 = vmatpush1.bf16.msra.mxu0 %v1347
    %1789 = vmatprep.subr.bf16.mxu0 %v1352
    %1790 = vmatpush1.bf16.msra.mxu0 %v1351
    %1791 = vmatprep.subr.bf16.mxu0 %v1356
    %1792 = vmatpush1.bf16.msra.mxu0 %v1355
    %1793 = vmatprep.mubr.bf16.mxu0 %v140
    %1794 = vmatmul.mubr.bf16.gmra.mrb[0].mxu0 %v139
    %v1795 = vpop.f32.mrb[0].mxu0
    %v1796 = vadd.f32 %v1755, %v1795
    %v1797 = vpop.f32.mrb[0].mxu0
    %v1798 = vadd.f32 %v1757, %v1797
    %v1799 = vpop.f32.mrb[0].mxu0
    %v1800 = vpop.f32.mrb[0].mxu0
    %1801 = vdwg.mxu0
    %1802 = vmatprep.subr.bf16.mxu0 %v1360
    %1803 = vmatpush1.bf16.msra.mxu0 %v1359
    %1804 = vmatprep.subr.bf16.mxu0 %v1364
    %1805 = vmatpush1.bf16.msra.mxu0 %v1363
    %1806 = vmatprep.subr.bf16.mxu0 %v1368
    %1807 = vmatpush1.bf16.msra.mxu0 %v1367
    %1808 = vmatprep.subr.bf16.mxu0 %v1372
    %1809 = vmatpush1.bf16.msra.mxu0 %v1371
    %1810 = vmatprep.subr.bf16.mxu0 %v1376
    %1811 = vmatpush1.bf16.msra.mxu0 %v1375
    %1812 = vmatprep.subr.bf16.mxu0 %v1380
    %1813 = vmatpush1.bf16.msra.mxu0 %v1379
    %1814 = vmatprep.subr.bf16.mxu0 %v1384
    %1815 = vmatpush1.bf16.msra.mxu0 %v1383
    %1816 = vmatprep.subr.bf16.mxu0 %v1388
    %1817 = vmatpush1.bf16.msra.mxu0 %v1387
    %1818 = vmatprep.subr.bf16.mxu0 %v1392
    %1819 = vmatpush1.bf16.msra.mxu0 %v1391
    %1820 = vmatprep.subr.bf16.mxu0 %v1396
    %1821 = vmatpush1.bf16.msra.mxu0 %v1395
    %1822 = vmatprep.subr.bf16.mxu0 %v1400
    %1823 = vmatpush1.bf16.msra.mxu0 %v1399
    %1824 = vmatprep.subr.bf16.mxu0 %v1404
    %1825 = vmatpush1.bf16.msra.mxu0 %v1403
    %1826 = vmatprep.subr.bf16.mxu0 %v1408
    %1827 = vmatpush1.bf16.msra.mxu0 %v1407
    %1828 = vmatprep.subr.bf16.mxu0 %v1412
    %1829 = vmatpush1.bf16.msra.mxu0 %v1411
    %1830 = vmatprep.subr.bf16.mxu0 %v1416
    %1831 = vmatpush1.bf16.msra.mxu0 %v1415
    %1832 = vmatprep.subr.bf16.mxu0 %v1420
    %1833 = vmatpush1.bf16.msra.mxu0 %v1419
    %1834 = vmatprep.mubr.bf16.mxu0 %v142
    %1835 = vmatmul.mubr.bf16.gmra.mrb[0].mxu0 %v141
    %v1836 = vpop.f32.mrb[0].mxu0
    %v1837 = vadd.f32 %v1796, %v1836
    %v1838 = vpop.f32.mrb[0].mxu0
    %v1839 = vadd.f32 %v1798, %v1838
    %v1840 = vpop.f32.mrb[0].mxu0
    %v1841 = vpop.f32.mrb[0].mxu0
    %1842 = vdwg.mxu0
    %1843 = vmatprep.subr.bf16.mxu0 %v1170
    %1844 = vmatpush1.bf16.msra.mxu0 %v1169
    %1845 = vmatprep.subr.bf16.mxu0 %v1174
    %1846 = vmatpush1.bf16.msra.mxu0 %v1173
    %1847 = vmatprep.subr.bf16.mxu0 %v1178
    %1848 = vmatpush1.bf16.msra.mxu0 %v1177
    %1849 = vmatprep.subr.bf16.mxu0 %v1182
    %1850 = vmatpush1.bf16.msra.mxu0 %v1181
    %1851 = vmatprep.subr.bf16.mxu0 %v1186
    %1852 = vmatpush1.bf16.msra.mxu0 %v1185
    %1853 = vmatprep.subr.bf16.mxu0 %v1190
    %1854 = vmatpush1.bf16.msra.mxu0 %v1189
    %1855 = vmatprep.subr.bf16.mxu0 %v1194
    %1856 = vmatpush1.bf16.msra.mxu0 %v1193
    %1857 = vmatprep.subr.bf16.mxu0 %v1198
    %1858 = vmatpush1.bf16.msra.mxu0 %v1197
    %1859 = vmatprep.subr.bf16.mxu0 %v1202
    %1860 = vmatpush1.bf16.msra.mxu0 %v1201
    %1861 = vmatprep.subr.bf16.mxu0 %v1206
    %1862 = vmatpush1.bf16.msra.mxu0 %v1205
    %1863 = vmatprep.subr.bf16.mxu0 %v1210
    %1864 = vmatpush1.bf16.msra.mxu0 %v1209
    %1865 = vmatprep.subr.bf16.mxu0 %v1214
    %1866 = vmatpush1.bf16.msra.mxu0 %v1213
    %1867 = vmatprep.subr.bf16.mxu0 %v1218
    %1868 = vmatpush1.bf16.msra.mxu0 %v1217
    %1869 = vmatprep.subr.bf16.mxu0 %v1222
    %1870 = vmatpush1.bf16.msra.mxu0 %v1221
    %1871 = vmatprep.subr.bf16.mxu0 %v1226
    %1872 = vmatpush1.bf16.msra.mxu0 %v1225
    %1873 = vmatprep.subr.bf16.mxu0 %v1230
    %1874 = vmatpush1.bf16.msra.mxu0 %v1229
    %1875 = vmatprep.mubr.bf16.mxu0 %v136
    %1876 = vmatmul.mubr.bf16.gmra.mrb[0].mxu0 %v135
    %v1877 = vpop.f32.mrb[0].mxu0
    %v1878 = vadd.f32 0.0, %v1877
    %v1879 = vpop.f32.mrb[0].mxu0
    %v1880 = vadd.f32 0.0, %v1879
    %v1881 = vpop.f32.mrb[0].mxu0
    %v1882 = vpop.f32.mrb[0].mxu0
    %1883 = vdwg.mxu0
    %1884 = vmatprep.subr.bf16.mxu0 %v1234
    %1885 = vmatpush1.bf16.msra.mxu0 %v1233
    %1886 = vmatprep.subr.bf16.mxu0 %v1238
    %1887 = vmatpush1.bf16.msra.mxu0 %v1237
    %1888 = vmatprep.subr.bf16.mxu0 %v1242
    %1889 = vmatpush1.bf16.msra.mxu0 %v1241
    %1890 = vmatprep.subr.bf16.mxu0 %v1246
    %1891 = vmatpush1.bf16.msra.mxu0 %v1245
    %1892 = vmatprep.subr.bf16.mxu0 %v1250
    %1893 = vmatpush1.bf16.msra.mxu0 %v1249
    %1894 = vmatprep.subr.bf16.mxu0 %v1254
    %1895 = vmatpush1.bf16.msra.mxu0 %v1253
    %1896 = vmatprep.subr.bf16.mxu0 %v1258
    %1897 = vmatpush1.bf16.msra.mxu0 %v1257
    %1898 = vmatprep.subr.bf16.mxu0 %v1262
    %1899 = vmatpush1.bf16.msra.mxu0 %v1261
    %1900 = vmatprep.subr.bf16.mxu0 %v1266
    %1901 = vmatpush1.bf16.msra.mxu0 %v1265
    %1902 = vmatprep.subr.bf16.mxu0 %v1270
    %1903 = vmatpush1.bf16.msra.mxu0 %v1269
    %1904 = vmatprep.subr.bf16.mxu0 %v1274
    %1905 = vmatpush1.bf16.msra.mxu0 %v1273
    %1906 = vmatprep.subr.bf16.mxu0 %v1278
    %1907 = vmatpush1.bf16.msra.mxu0 %v1277
    %1908 = vmatprep.subr.bf16.mxu0 %v1282
    %1909 = vmatpush1.bf16.msra.mxu0 %v1281
    %1910 = vmatprep.subr.bf16.mxu0 %v1286
    %1911 = vmatpush1.bf16.msra.mxu0 %v1285
    %1912 = vmatprep.subr.bf16.mxu0 %v1290
    %1913 = vmatpush1.bf16.msra.mxu0 %v1289
    %1914 = vmatprep.subr.bf16.mxu0 %v1294
    %1915 = vmatpush1.bf16.msra.mxu0 %v1293
    %1916 = vmatprep.mubr.bf16.mxu0 %v138
    %1917 = vmatmul.mubr.bf16.gmra.mrb[0].mxu0 %v137
    %v1918 = vpop.f32.mrb[0].mxu0
    %v1919 = vadd.f32 %v1878, %v1918
    %v1920 = vpop.f32.mrb[0].mxu0
    %v1921 = vadd.f32 %v1880, %v1920
    %v1922 = vpop.f32.mrb[0].mxu0
    %v1923 = vpop.f32.mrb[0].mxu0
    %1924 = vdwg.mxu0
    %1925 = vmatprep.subr.bf16.mxu0 %v1298
    %1926 = vmatpush1.bf16.msra.mxu0 %v1297
    %1927 = vmatprep.subr.bf16.mxu0 %v1302
    %1928 = vmatpush1.bf16.msra.mxu0 %v1301
    %1929 = vmatprep.subr.bf16.mxu0 %v1306
    %1930 = vmatpush1.bf16.msra.mxu0 %v1305
    %1931 = vmatprep.subr.bf16.mxu0 %v1310
    %1932 = vmatpush1.bf16.msra.mxu0 %v1309
    %1933 = vmatprep.subr.bf16.mxu0 %v1314
    %1934 = vmatpush1.bf16.msra.mxu0 %v1313
    %1935 = vmatprep.subr.bf16.mxu0 %v1318
    %1936 = vmatpush1.bf16.msra.mxu0 %v1317
    %1937 = vmatprep.subr.bf16.mxu0 %v1322
    %1938 = vmatpush1.bf16.msra.mxu0 %v1321
    %1939 = vmatprep.subr.bf16.mxu0 %v1326
    %1940 = vmatpush1.bf16.msra.mxu0 %v1325
    %1941 = vmatprep.subr.bf16.mxu0 %v1330
    %1942 = vmatpush1.bf16.msra.mxu0 %v1329
    %1943 = vmatprep.subr.bf16.mxu0 %v1334
    %1944 = vmatpush1.bf16.msra.mxu0 %v1333
    %1945 = vmatprep.subr.bf16.mxu0 %v1338
    %1946 = vmatpush1.bf16.msra.mxu0 %v1337
    %1947 = vmatprep.subr.bf16.mxu0 %v1342
    %1948 = vmatpush1.bf16.msra.mxu0 %v1341
    %1949 = vmatprep.subr.bf16.mxu0 %v1346
    %1950 = vmatpush1.bf16.msra.mxu0 %v1345
    %1951 = vmatprep.subr.bf16.mxu0 %v1350
    %1952 = vmatpush1.bf16.msra.mxu0 %v1349
    %1953 = vmatprep.subr.bf16.mxu0 %v1354
    %1954 = vmatpush1.bf16.msra.mxu0 %v1353
    %1955 = vmatprep.subr.bf16.mxu0 %v1358
    %1956 = vmatpush1.bf16.msra.mxu0 %v1357
    %1957 = vmatprep.mubr.bf16.mxu0 %v140
    %1958 = vmatmul.mubr.bf16.gmra.mrb[0].mxu0 %v139
    %v1959 = vpop.f32.mrb[0].mxu0
    %v1960 = vadd.f32 %v1919, %v1959
    %v1961 = vpop.f32.mrb[0].mxu0
    %v1962 = vadd.f32 %v1921, %v1961
    %v1963 = vpop.f32.mrb[0].mxu0
    %v1964 = vpop.f32.mrb[0].mxu0
    %1965 = vdwg.mxu0
    %1966 = vmatprep.subr.bf16.mxu0 %v1362
    %1967 = vmatpush1.bf16.msra.mxu0 %v1361
    %1968 = vmatprep.subr.bf16.mxu0 %v1366
    %1969 = vmatpush1.bf16.msra.mxu0 %v1365
    %1970 = vmatprep.subr.bf16.mxu0 %v1370
    %1971 = vmatpush1.bf16.msra.mxu0 %v1369
    %1972 = vmatprep.subr.bf16.mxu0 %v1374
    %1973 = vmatpush1.bf16.msra.mxu0 %v1373
    %1974 = vmatprep.subr.bf16.mxu0 %v1378
    %1975 = vmatpush1.bf16.msra.mxu0 %v1377
    %1976 = vmatprep.subr.bf16.mxu0 %v1382
    %1977 = vmatpush1.bf16.msra.mxu0 %v1381
    %1978 = vmatprep.subr.bf16.mxu0 %v1386
    %1979 = vmatpush1.bf16.msra.mxu0 %v1385
    %1980 = vmatprep.subr.bf16.mxu0 %v1390
    %1981 = vmatpush1.bf16.msra.mxu0 %v1389
    %1982 = vmatprep.subr.bf16.mxu0 %v1394
    %1983 = vmatpush1.bf16.msra.mxu0 %v1393
    %1984 = vmatprep.subr.bf16.mxu0 %v1398
    %1985 = vmatpush1.bf16.msra.mxu0 %v1397
    %1986 = vmatprep.subr.bf16.mxu0 %v1402
    %1987 = vmatpush1.bf16.msra.mxu0 %v1401
    %1988 = vmatprep.subr.bf16.mxu0 %v1406
    %1989 = vmatpush1.bf16.msra.mxu0 %v1405
    %1990 = vmatprep.subr.bf16.mxu0 %v1410
    %1991 = vmatpush1.bf16.msra.mxu0 %v1409
    %1992 = vmatprep.subr.bf16.mxu0 %v1414
    %1993 = vmatpush1.bf16.msra.mxu0 %v1413
    %1994 = vmatprep.subr.bf16.mxu0 %v1418
    %1995 = vmatpush1.bf16.msra.mxu0 %v1417
    %1996 = vmatprep.subr.bf16.mxu0 %v1422
    %1997 = vmatpush1.bf16.msra.mxu0 %v1421
    %1998 = vmatprep.mubr.bf16.mxu0 %v142
    %1999 = vmatmul.mubr.bf16.gmra.mrb[0].mxu0 %v141
    %v2000 = vpop.f32.mrb[0].mxu0
    %v2001 = vadd.f32 %v1960, %v2000
    %v2002 = vpop.f32.mrb[0].mxu0
    %v2003 = vadd.f32 %v1962, %v2002
    %v2004 = vpop.f32.mrb[0].mxu0
    %v2005 = vpop.f32.mrb[0].mxu0
    %2006 = vdwg.mxu0
    %vm2007 = vcmask 1041408
    %v2008 = vsel %vm2007, %v1837, 0.0
    %v2009 = vsel %vm2007, %v1839, 0.0
    %v2010 = vadd.f32 %v2008, %v2009
    %v2011 = vsel %vm2007, %v2001, 0.0
    %v2012 = vadd.f32 %v2010, %v2011
    %v2013 = vsel %vm2007, %v2003, 0.0
    %v2014 = vadd.f32 %v2012, %v2013
    %2015 = vadd.xlane.f32.xlu0 %v2014
    %v2016 = vpop.xlane.xlu0 %2015
    %v2017 = vrot.slane %v2016, 4
    %v2018 = vadd.f32 %v2016, %v2017
    %v2019 = vrot.slane %v2018, 2
    %v2020 = vadd.f32 %v2018, %v2019
    %v2021 = vrot.slane %v2020, 1
    %v2022 = vadd.f32 %v2020, %v2021
    %s2023 = vtos %v2022
    %v2024 = vrcp.pop 1024.0
    %s2025 = vtos %v2024
    %s2026 = smul.f32 %s2023, %s2025
    %v2027 = vstv %s2026
    %v2028 = vsub.f32 %v1837, %v2027
    %v2029 = vsub.f32 %v1839, %v2027
    %v2030 = vsub.f32 %v2001, %v2027
    %v2031 = vsub.f32 %v2003, %v2027
    %v2032 = vmul.f32 %v2028, %v2028
    %v2033 = vmul.f32 %v2029, %v2029
    %v2034 = vmul.f32 %v2030, %v2030
    %v2035 = vmul.f32 %v2031, %v2031
    %v2036 = vsel %vm2007, %v2032, 0.0
    %v2037 = vsel %vm2007, %v2033, 0.0
    %v2038 = vadd.f32 %v2036, %v2037
    %v2039 = vsel %vm2007, %v2034, 0.0
    %v2040 = vadd.f32 %v2038, %v2039
    %v2041 = vsel %vm2007, %v2035, 0.0
    %v2042 = vadd.f32 %v2040, %v2041
    %2043 = vadd.xlane.f32.xlu0 %v2042
    %v2044 = vpop.xlane.xlu0 %2043
    %v2045 = vrot.slane %v2044, 4
    %v2046 = vadd.f32 %v2044, %v2045
    %v2047 = vrot.slane %v2046, 2
    %v2048 = vadd.f32 %v2046, %v2047
    %v2049 = vrot.slane %v2048, 1
    %v2050 = vadd.f32 %v2048, %v2049
    %s2051 = vtos %v2050
    %v2052 = vrcp.pop 1024.0
    %s2053 = vtos %v2052
    %s2054 = smul.f32 %s2051, %s2053
    %s2055 = sadd.f32 %s2054, 1e-05
    %v2056 = vstv %s2055
    %v2057 = vrsqrt.pop %v2056
    %s2058 = vtos %v2057
    %v2059 = vstv %s2058
    %v2060 = vmul.f32 %v2028, %v2059
    %v2061 = vmul.f32 %v2029, %v2059
    %v2062 = vmul.f32 %v2030, %v2059
    %v2063 = vmul.f32 %v2031, %v2059
    %s2064 = sld [smem:[#allocation7]]
    %v2065 = vstv %s2064
    %v2066 = vmul.f32 %v2060, %v2065
    %v2067 = vmul.f32 %v2061, %v2065
    %v2068 = vmul.f32 %v2062, %v2065
    %v2069 = vmul.f32 %v2063, %v2065
    %s2070 = sld [smem:[#allocation7 + $0x1]]
    %v2071 = vstv %s2070
    %v2072 = vadd.f32 %v2066, %v2071
    %v2073 = vadd.f32 %v2067, %v2071
    %v2074 = vadd.f32 %v2068, %v2071
    %v2075 = vadd.f32 %v2069, %v2071
    %v2076 = vsub.f32 0.0, %v2072
    %v2077 = vsub.f32 0.0, %v2073
    %v2078 = vsub.f32 0.0, %v2074
    %v2079 = vsub.f32 0.0, %v2075
    %v2080 = vmul.f32 %v2076, 1.442695
    %v2081 = vpow.pop %v2080
    %v2082 = vmul.f32 %v2077, 1.442695
    %v2083 = vpow.pop %v2082
    %v2084 = vmul.f32 %v2078, 1.442695
    %v2085 = vpow.pop %v2084
    %v2086 = vmul.f32 %v2079, 1.442695
    %v2087 = vpow.pop %v2086
    %v2088 = vadd.f32 %v2081, 1.0
    %v2089 = vadd.f32 %v2083, 1.0
    %v2090 = vadd.f32 %v2085, 1.0
    %v2091 = vadd.f32 %v2087, 1.0
    %v2092 = vrcp.pop %v2088
    %v2093 = vmul.f32 1.0, %v2092
    %v2094 = vrcp.pop %v2089
    %v2095 = vmul.f32 1.0, %v2094
    %v2096 = vrcp.pop %v2090
    %v2097 = vmul.f32 1.0, %v2096
    %v2098 = vrcp.pop %v2091
    %v2099 = vmul.f32 1.0, %v2098
    %v2104 = vcombine.low %v2093, %v2095
    %v2105 = vcombine.low %v2097, %v2099
    %v2107 = vunpack.c.l.s4 1983009808
    %v2108 = vunpack.c.0.s8 %v2107
    %v2109 = vlaneseq
    %v2110 = vshrl.u32 %v2109, 7
    %v2111 = vsub.s32 %v2108, %v2110
    %v2112 = vrot.slane %v2104, %v2111
    %v2114 = vunpack.c.l.s4 1983009808
    %v2115 = vunpack.c.0.s8 %v2114
    %v2116 = vlaneseq
    %v2117 = vshrl.u32 %v2116, 7
    %v2118 = vsub.s32 %v2115, %v2117
    %v2119 = vrot.slane %v2105, %v2118
    %v2120 = vcombine.low %v2112, %v2119
    %2122 = vst [vmem:[%s13] sm:$0xff] %v2120
    %v2123 = vld [vmem:[%s2] sm:$0xf]
    %v2124 = vld [vmem:[%s3] sm:$0xf]
    %v2127 = vunpack.c.l.s4 1983009808
    %v2128 = vunpack.c.0.s8 %v2127
    %v2129 = vlaneseq
    %v2130 = vshrl.u32 %v2129, 7
    %v2131 = vsub.s32 %v2128, %v2130
    %v2132 = vrot.slane %v2123, %v2131
    %v2133 = vcombine.high %v2132, %v2132
    %v2138 = vunpack.c.l.s4 1983009808
    %v2139 = vunpack.c.0.s8 %v2138
    %v2140 = vlaneseq
    %v2141 = vshrl.u32 %v2140, 7
    %v2142 = vsub.s32 %v2139, %v2141
    %v2143 = vrot.slane %v2124, %v2142
    %v2144 = vcombine.high %v2143, %v2143
    %v2147 = vpack.c.bf16 %v2132, %v2132
    %v2148 = vpack.c.bf16 %v2133, %v2133
    %v2149 = vpack.c.bf16 %v2143, %v2143
    %v2150 = vpack.c.bf16 %v2144, %v2144
    %v2151 = vld [vmem:[%s9] sm:$0xff]
    %v2152 = vld [vmem:[%s9 + $0x8] sm:$0xff]
    %v2153 = vld [vmem:[%s9 + $0x10] sm:$0xff]
    %v2154 = vld [vmem:[%s9 + $0x18] sm:$0xff]
    %v2155 = vld [vmem:[%s9 + $0x20] sm:$0xff]
    %v2156 = vld [vmem:[%s9 + $0x28] sm:$0xff]
    %v2157 = vld [vmem:[%s9 + $0x30] sm:$0xff]
    %v2158 = vld [vmem:[%s9 + $0x38] sm:$0xff]
    %v2159 = vld [vmem:[%s9 + $0x40] sm:$0xff]
    %v2160 = vld [vmem:[%s9 + $0x48] sm:$0xff]
    %v2161 = vld [vmem:[%s9 + $0x50] sm:$0xff]
    %v2162 = vld [vmem:[%s9 + $0x58] sm:$0xff]
    %v2163 = vld [vmem:[%s9 + $0x60] sm:$0xff]
    %v2164 = vld [vmem:[%s9 + $0x68] sm:$0xff]
    %v2165 = vld [vmem:[%s9 + $0x70] sm:$0xff]
    %v2166 = vld [vmem:[%s9 + $0x78] sm:$0xff]
    %v2167 = vld [vmem:[%s9 + $0x80] sm:$0xff]
    %v2168 = vld [vmem:[%s9 + $0x88] sm:$0xff]
    %v2169 = vld [vmem:[%s9 + $0x90] sm:$0xff]
    %v2170 = vld [vmem:[%s9 + $0x98] sm:$0xff]
    %v2171 = vld [vmem:[%s9 + $0xa0] sm:$0xff]
    %v2172 = vld [vmem:[%s9 + $0xa8] sm:$0xff]
    %v2173 = vld [vmem:[%s9 + $0xb0] sm:$0xff]
    %v2174 = vld [vmem:[%s9 + $0xb8] sm:$0xff]
    %v2175 = vld [vmem:[%s9 + $0xc0] sm:$0xff]
    %v2176 = vld [vmem:[%s9 + $0xc8] sm:$0xff]
    %v2177 = vld [vmem:[%s9 + $0xd0] sm:$0xff]
    %v2178 = vld [vmem:[%s9 + $0xd8] sm:$0xff]
    %v2179 = vld [vmem:[%s9 + $0xe0] sm:$0xff]
    %v2180 = vld [vmem:[%s9 + $0xe8] sm:$0xff]
    %v2181 = vld [vmem:[%s9 + $0xf0] sm:$0xff]
    %v2182 = vld [vmem:[%s9 + $0xf8] sm:$0xff]
    %v2183 = vld [vmem:[%s9 + $0x100] sm:$0xff]
    %v2184 = vld [vmem:[%s9 + $0x108] sm:$0xff]
    %v2185 = vld [vmem:[%s9 + $0x110] sm:$0xff]
    %v2186 = vld [vmem:[%s9 + $0x118] sm:$0xff]
    %v2187 = vld [vmem:[%s9 + $0x120] sm:$0xff]
    %v2188 = vld [vmem:[%s9 + $0x128] sm:$0xff]
    %v2189 = vld [vmem:[%s9 + $0x130] sm:$0xff]
    %v2190 = vld [vmem:[%s9 + $0x138] sm:$0xff]
    %v2191 = vld [vmem:[%s9 + $0x140] sm:$0xff]
    %v2192 = vld [vmem:[%s9 + $0x148] sm:$0xff]
    %v2193 = vld [vmem:[%s9 + $0x150] sm:$0xff]
    %v2194 = vld [vmem:[%s9 + $0x158] sm:$0xff]
    %v2195 = vld [vmem:[%s9 + $0x160] sm:$0xff]
    %v2196 = vld [vmem:[%s9 + $0x168] sm:$0xff]
    %v2197 = vld [vmem:[%s9 + $0x170] sm:$0xff]
    %v2198 = vld [vmem:[%s9 + $0x178] sm:$0xff]
    %v2199 = vld [vmem:[%s9 + $0x180] sm:$0xff]
    %v2200 = vld [vmem:[%s9 + $0x188] sm:$0xff]
    %v2201 = vld [vmem:[%s9 + $0x190] sm:$0xff]
    %v2202 = vld [vmem:[%s9 + $0x198] sm:$0xff]
    %v2203 = vld [vmem:[%s9 + $0x1a0] sm:$0xff]
    %v2204 = vld [vmem:[%s9 + $0x1a8] sm:$0xff]
    %v2205 = vld [vmem:[%s9 + $0x1b0] sm:$0xff]
    %v2206 = vld [vmem:[%s9 + $0x1b8] sm:$0xff]
    %v2207 = vld [vmem:[%s9 + $0x1c0] sm:$0xff]
    %v2208 = vld [vmem:[%s9 + $0x1c8] sm:$0xff]
    %v2209 = vld [vmem:[%s9 + $0x1d0] sm:$0xff]
    %v2210 = vld [vmem:[%s9 + $0x1d8] sm:$0xff]
    %v2211 = vld [vmem:[%s9 + $0x1e0] sm:$0xff]
    %v2212 = vld [vmem:[%s9 + $0x1e8] sm:$0xff]
    %v2213 = vld [vmem:[%s9 + $0x1f0] sm:$0xff]
    %v2214 = vld [vmem:[%s9 + $0x1f8] sm:$0xff]
    %v2279 = vunpack.c.l.b16 %v2151
    %v2280 = vunpack.c.h.b16 %v2151
    %v2281 = vunpack.c.l.b16 %v2152
    %v2282 = vunpack.c.h.b16 %v2152
    %v2283 = vunpack.c.l.b16 %v2153
    %v2284 = vunpack.c.h.b16 %v2153
    %v2285 = vunpack.c.l.b16 %v2154
    %v2286 = vunpack.c.h.b16 %v2154
    %v2287 = vunpack.c.l.b16 %v2155
    %v2288 = vunpack.c.h.b16 %v2155
    %v2289 = vunpack.c.l.b16 %v2156
    %v2290 = vunpack.c.h.b16 %v2156
    %v2291 = vunpack.c.l.b16 %v2157
    %v2292 = vunpack.c.h.b16 %v2157
    %v2293 = vunpack.c.l.b16 %v2158
    %v2294 = vunpack.c.h.b16 %v2158
    %v2295 = vunpack.c.l.b16 %v2159
    %v2296 = vunpack.c.h.b16 %v2159
    %v2297 = vunpack.c.l.b16 %v2160
    %v2298 = vunpack.c.h.b16 %v2160
    %v2299 = vunpack.c.l.b16 %v2161
    %v2300 = vunpack.c.h.b16 %v2161
    %v2301 = vunpack.c.l.b16 %v2162
    %v2302 = vunpack.c.h.b16 %v2162
    %v2303 = vunpack.c.l.b16 %v2163
    %v2304 = vunpack.c.h.b16 %v2163
    %v2305 = vunpack.c.l.b16 %v2164
    %v2306 = vunpack.c.h.b16 %v2164
    %v2307 = vunpack.c.l.b16 %v2165
    %v2308 = vunpack.c.h.b16 %v2165
    %v2309 = vunpack.c.l.b16 %v2166
    %v2310 = vunpack.c.h.b16 %v2166
    %v2311 = vunpack.c.l.b16 %v2167
    %v2312 = vunpack.c.h.b16 %v2167
    %v2313 = vunpack.c.l.b16 %v2168
    %v2314 = vunpack.c.h.b16 %v2168
    %v2315 = vunpack.c.l.b16 %v2169
    %v2316 = vunpack.c.h.b16 %v2169
    %v2317 = vunpack.c.l.b16 %v2170
    %v2318 = vunpack.c.h.b16 %v2170
    %v2319 = vunpack.c.l.b16 %v2171
    %v2320 = vunpack.c.h.b16 %v2171
    %v2321 = vunpack.c.l.b16 %v2172
    %v2322 = vunpack.c.h.b16 %v2172
    %v2323 = vunpack.c.l.b16 %v2173
    %v2324 = vunpack.c.h.b16 %v2173
    %v2325 = vunpack.c.l.b16 %v2174
    %v2326 = vunpack.c.h.b16 %v2174
    %v2327 = vunpack.c.l.b16 %v2175
    %v2328 = vunpack.c.h.b16 %v2175
    %v2329 = vunpack.c.l.b16 %v2176
    %v2330 = vunpack.c.h.b16 %v2176
    %v2331 = vunpack.c.l.b16 %v2177
    %v2332 = vunpack.c.h.b16 %v2177
    %v2333 = vunpack.c.l.b16 %v2178
    %v2334 = vunpack.c.h.b16 %v2178
    %v2335 = vunpack.c.l.b16 %v2179
    %v2336 = vunpack.c.h.b16 %v2179
    %v2337 = vunpack.c.l.b16 %v2180
    %v2338 = vunpack.c.h.b16 %v2180
    %v2339 = vunpack.c.l.b16 %v2181
    %v2340 = vunpack.c.h.b16 %v2181
    %v2341 = vunpack.c.l.b16 %v2182
    %v2342 = vunpack.c.h.b16 %v2182
    %v2343 = vunpack.c.l.b16 %v2183
    %v2344 = vunpack.c.h.b16 %v2183
    %v2345 = vunpack.c.l.b16 %v2184
    %v2346 = vunpack.c.h.b16 %v2184
    %v2347 = vunpack.c.l.b16 %v2185
    %v2348 = vunpack.c.h.b16 %v2185
    %v2349 = vunpack.c.l.b16 %v2186
    %v2350 = vunpack.c.h.b16 %v2186
    %v2351 = vunpack.c.l.b16 %v2187
    %v2352 = vunpack.c.h.b16 %v2187
    %v2353 = vunpack.c.l.b16 %v2188
    %v2354 = vunpack.c.h.b16 %v2188
    %v2355 = vunpack.c.l.b16 %v2189
    %v2356 = vunpack.c.h.b16 %v2189
    %v2357 = vunpack.c.l.b16 %v2190
    %v2358 = vunpack.c.h.b16 %v2190
    %v2359 = vunpack.c.l.b16 %v2191
    %v2360 = vunpack.c.h.b16 %v2191
    %v2361 = vunpack.c.l.b16 %v2192
    %v2362 = vunpack.c.h.b16 %v2192
    %v2363 = vunpack.c.l.b16 %v2193
    %v2364 = vunpack.c.h.b16 %v2193
    %v2365 = vunpack.c.l.b16 %v2194
    %v2366 = vunpack.c.h.b16 %v2194
    %v2367 = vunpack.c.l.b16 %v2195
    %v2368 = vunpack.c.h.b16 %v2195
    %v2369 = vunpack.c.l.b16 %v2196
    %v2370 = vunpack.c.h.b16 %v2196
    %v2371 = vunpack.c.l.b16 %v2197
    %v2372 = vunpack.c.h.b16 %v2197
    %v2373 = vunpack.c.l.b16 %v2198
    %v2374 = vunpack.c.h.b16 %v2198
    %v2375 = vunpack.c.l.b16 %v2199
    %v2376 = vunpack.c.h.b16 %v2199
    %v2377 = vunpack.c.l.b16 %v2200
    %v2378 = vunpack.c.h.b16 %v2200
    %v2379 = vunpack.c.l.b16 %v2201
    %v2380 = vunpack.c.h.b16 %v2201
    %v2381 = vunpack.c.l.b16 %v2202
    %v2382 = vunpack.c.h.b16 %v2202
    %v2383 = vunpack.c.l.b16 %v2203
    %v2384 = vunpack.c.h.b16 %v2203
    %v2385 = vunpack.c.l.b16 %v2204
    %v2386 = vunpack.c.h.b16 %v2204
    %v2387 = vunpack.c.l.b16 %v2205
    %v2388 = vunpack.c.h.b16 %v2205
    %v2389 = vunpack.c.l.b16 %v2206
    %v2390 = vunpack.c.h.b16 %v2206
    %v2391 = vunpack.c.l.b16 %v2207
    %v2392 = vunpack.c.h.b16 %v2207
    %v2393 = vunpack.c.l.b16 %v2208
    %v2394 = vunpack.c.h.b16 %v2208
    %v2395 = vunpack.c.l.b16 %v2209
    %v2396 = vunpack.c.h.b16 %v2209
    %v2397 = vunpack.c.l.b16 %v2210
    %v2398 = vunpack.c.h.b16 %v2210
    %v2399 = vunpack.c.l.b16 %v2211
    %v2400 = vunpack.c.h.b16 %v2211
    %v2401 = vunpack.c.l.b16 %v2212
    %v2402 = vunpack.c.h.b16 %v2212
    %v2403 = vunpack.c.l.b16 %v2213
    %v2404 = vunpack.c.h.b16 %v2213
    %v2405 = vunpack.c.l.b16 %v2214
    %v2406 = vunpack.c.h.b16 %v2214
    %v2407 = vpack.c.b16 %v2281, %v2279
    %v2408 = vpack.c.b16 %v2282, %v2280
    %v2409 = vpack.c.b16 %v2285, %v2283
    %v2410 = vpack.c.b16 %v2286, %v2284
    %v2411 = vpack.c.b16 %v2289, %v2287
    %v2412 = vpack.c.b16 %v2290, %v2288
    %v2413 = vpack.c.b16 %v2293, %v2291
    %v2414 = vpack.c.b16 %v2294, %v2292
    %v2415 = vpack.c.b16 %v2297, %v2295
    %v2416 = vpack.c.b16 %v2298, %v2296
    %v2417 = vpack.c.b16 %v2301, %v2299
    %v2418 = vpack.c.b16 %v2302, %v2300
    %v2419 = vpack.c.b16 %v2305, %v2303
    %v2420 = vpack.c.b16 %v2306, %v2304
    %v2421 = vpack.c.b16 %v2309, %v2307
    %v2422 = vpack.c.b16 %v2310, %v2308
    %v2423 = vpack.c.b16 %v2313, %v2311
    %v2424 = vpack.c.b16 %v2314, %v2312
    %v2425 = vpack.c.b16 %v2317, %v2315
    %v2426 = vpack.c.b16 %v2318, %v2316
    %v2427 = vpack.c.b16 %v2321, %v2319
    %v2428 = vpack.c.b16 %v2322, %v2320
    %v2429 = vpack.c.b16 %v2325, %v2323
    %v2430 = vpack.c.b16 %v2326, %v2324
    %v2431 = vpack.c.b16 %v2329, %v2327
    %v2432 = vpack.c.b16 %v2330, %v2328
    %v2433 = vpack.c.b16 %v2333, %v2331
    %v2434 = vpack.c.b16 %v2334, %v2332
    %v2435 = vpack.c.b16 %v2337, %v2335
    %v2436 = vpack.c.b16 %v2338, %v2336
    %v2437 = vpack.c.b16 %v2341, %v2339
    %v2438 = vpack.c.b16 %v2342, %v2340
    %v2439 = vpack.c.b16 %v2345, %v2343
    %v2440 = vpack.c.b16 %v2346, %v2344
    %v2441 = vpack.c.b16 %v2349, %v2347
    %v2442 = vpack.c.b16 %v2350, %v2348
    %v2443 = vpack.c.b16 %v2353, %v2351
    %v2444 = vpack.c.b16 %v2354, %v2352
    %v2445 = vpack.c.b16 %v2357, %v2355
    %v2446 = vpack.c.b16 %v2358, %v2356
    %v2447 = vpack.c.b16 %v2361, %v2359
    %v2448 = vpack.c.b16 %v2362, %v2360
    %v2449 = vpack.c.b16 %v2365, %v2363
    %v2450 = vpack.c.b16 %v2366, %v2364
    %v2451 = vpack.c.b16 %v2369, %v2367
    %v2452 = vpack.c.b16 %v2370, %v2368
    %v2453 = vpack.c.b16 %v2373, %v2371
    %v2454 = vpack.c.b16 %v2374, %v2372
    %v2455 = vpack.c.b16 %v2377, %v2375
    %v2456 = vpack.c.b16 %v2378, %v2376
    %v2457 = vpack.c.b16 %v2381, %v2379
    %v2458 = vpack.c.b16 %v2382, %v2380
    %v2459 = vpack.c.b16 %v2385, %v2383
    %v2460 = vpack.c.b16 %v2386, %v2384
    %v2461 = vpack.c.b16 %v2389, %v2387
    %v2462 = vpack.c.b16 %v2390, %v2388
    %v2463 = vpack.c.b16 %v2393, %v2391
    %v2464 = vpack.c.b16 %v2394, %v2392
    %v2465 = vpack.c.b16 %v2397, %v2395
    %v2466 = vpack.c.b16 %v2398, %v2396
    %v2467 = vpack.c.b16 %v2401, %v2399
    %v2468 = vpack.c.b16 %v2402, %v2400
    %v2469 = vpack.c.b16 %v2405, %v2403
    %v2470 = vpack.c.b16 %v2406, %v2404
    %2535 = vmatprep.subr.bf16.mxu0 %v2408
    %2536 = vmatpush1.bf16.msra.mxu0 %v2407
    %2537 = vmatprep.subr.bf16.mxu0 %v2410
    %2538 = vmatpush1.bf16.msra.mxu0 %v2409
    %2539 = vmatprep.subr.bf16.mxu0 %v2412
    %2540 = vmatpush1.bf16.msra.mxu0 %v2411
    %2541 = vmatprep.subr.bf16.mxu0 %v2414
    %2542 = vmatpush1.bf16.msra.mxu0 %v2413
    %2543 = vmatprep.subr.bf16.mxu0 %v2416
    %2544 = vmatpush1.bf16.msra.mxu0 %v2415
    %2545 = vmatprep.subr.bf16.mxu0 %v2418
    %2546 = vmatpush1.bf16.msra.mxu0 %v2417
    %2547 = vmatprep.subr.bf16.mxu0 %v2420
    %2548 = vmatpush1.bf16.msra.mxu0 %v2419
    %2549 = vmatprep.subr.bf16.mxu0 %v2422
    %2550 = vmatpush1.bf16.msra.mxu0 %v2421
    %2551 = vmatprep.subr.bf16.mxu0 %v2424
    %2552 = vmatpush1.bf16.msra.mxu0 %v2423
    %2553 = vmatprep.subr.bf16.mxu0 %v2426
    %2554 = vmatpush1.bf16.msra.mxu0 %v2425
    %2555 = vmatprep.subr.bf16.mxu0 %v2428
    %2556 = vmatpush1.bf16.msra.mxu0 %v2427
    %2557 = vmatprep.subr.bf16.mxu0 %v2430
    %2558 = vmatpush1.bf16.msra.mxu0 %v2429
    %2559 = vmatprep.subr.bf16.mxu0 %v2432
    %2560 = vmatpush1.bf16.msra.mxu0 %v2431
    %2561 = vmatprep.subr.bf16.mxu0 %v2434
    %2562 = vmatpush1.bf16.msra.mxu0 %v2433
    %2563 = vmatprep.subr.bf16.mxu0 %v2436
    %2564 = vmatpush1.bf16.msra.mxu0 %v2435
    %2565 = vmatprep.subr.bf16.mxu0 %v2438
    %2566 = vmatpush1.bf16.msra.mxu0 %v2437
    %2567 = vmatprep.mubr.bf16.mxu0 %v2148
    %2568 = vmatmul.mubr.bf16.gmra.mrb[0].mxu0 %v2147
    %v2569 = vpop.f32.mrb[0].mxu0
    %v2570 = vadd.f32 0.0, %v2569
    %v2571 = vpop.f32.mrb[0].mxu0
    %v2572 = vadd.f32 0.0, %v2571
    %v2573 = vpop.f32.mrb[0].mxu0
    %v2574 = vpop.f32.mrb[0].mxu0
    %2575 = vdwg.mxu0
    %2576 = vmatprep.subr.bf16.mxu0 %v2440
    %2577 = vmatpush1.bf16.msra.mxu0 %v2439
    %2578 = vmatprep.subr.bf16.mxu0 %v2442
    %2579 = vmatpush1.bf16.msra.mxu0 %v2441
    %2580 = vmatprep.subr.bf16.mxu0 %v2444
    %2581 = vmatpush1.bf16.msra.mxu0 %v2443
    %2582 = vmatprep.subr.bf16.mxu0 %v2446
    %2583 = vmatpush1.bf16.msra.mxu0 %v2445
    %2584 = vmatprep.subr.bf16.mxu0 %v2448
    %2585 = vmatpush1.bf16.msra.mxu0 %v2447
    %2586 = vmatprep.subr.bf16.mxu0 %v2450
    %2587 = vmatpush1.bf16.msra.mxu0 %v2449
    %2588 = vmatprep.subr.bf16.mxu0 %v2452
    %2589 = vmatpush1.bf16.msra.mxu0 %v2451
    %2590 = vmatprep.subr.bf16.mxu0 %v2454
    %2591 = vmatpush1.bf16.msra.mxu0 %v2453
    %2592 = vmatprep.subr.bf16.mxu0 %v2456
    %2593 = vmatpush1.bf16.msra.mxu0 %v2455
    %2594 = vmatprep.subr.bf16.mxu0 %v2458
    %2595 = vmatpush1.bf16.msra.mxu0 %v2457
    %2596 = vmatprep.subr.bf16.mxu0 %v2460
    %2597 = vmatpush1.bf16.msra.mxu0 %v2459
    %2598 = vmatprep.subr.bf16.mxu0 %v2462
    %2599 = vmatpush1.bf16.msra.mxu0 %v2461
    %2600 = vmatprep.subr.bf16.mxu0 %v2464
    %2601 = vmatpush1.bf16.msra.mxu0 %v2463
    %2602 = vmatprep.subr.bf16.mxu0 %v2466
    %2603 = vmatpush1.bf16.msra.mxu0 %v2465
    %2604 = vmatprep.subr.bf16.mxu0 %v2468
    %2605 = vmatpush1.bf16.msra.mxu0 %v2467
    %2606 = vmatprep.subr.bf16.mxu0 %v2470
    %2607 = vmatpush1.bf16.msra.mxu0 %v2469
    %2608 = vmatprep.mubr.bf16.mxu0 %v2150
    %2609 = vmatmul.mubr.bf16.gmra.mrb[0].mxu0 %v2149
    %v2610 = vpop.f32.mrb[0].mxu0
    %v2611 = vadd.f32 %v2570, %v2610
    %v2612 = vpop.f32.mrb[0].mxu0
    %v2613 = vadd.f32 %v2572, %v2612
    %v2614 = vpop.f32.mrb[0].mxu0
    %v2615 = vpop.f32.mrb[0].mxu0
    %2616 = vdwg.mxu0
    %v2617 = vsel %vm2007, %v2611, 0.0
    %v2618 = vsel %vm2007, %v2613, 0.0
    %v2619 = vadd.f32 %v2617, %v2618
    %2620 = vadd.xlane.f32.xlu0 %v2619
    %v2621 = vpop.xlane.xlu0 %2620
    %v2622 = vrot.slane %v2621, 4
    %v2623 = vadd.f32 %v2621, %v2622
    %v2624 = vrot.slane %v2623, 2
    %v2625 = vadd.f32 %v2623, %v2624
    %v2626 = vrot.slane %v2625, 1
    %v2627 = vadd.f32 %v2625, %v2626
    %s2628 = vtos %v2627
    %v2629 = vrcp.pop 512.0
    %s2630 = vtos %v2629
    %s2631 = smul.f32 %s2628, %s2630
    %v2632 = vstv %s2631
    %v2633 = vsub.f32 %v2611, %v2632
    %v2634 = vsub.f32 %v2613, %v2632
    %v2635 = vmul.f32 %v2633, %v2633
    %v2636 = vmul.f32 %v2634, %v2634
    %v2637 = vsel %vm2007, %v2635, 0.0
    %v2638 = vsel %vm2007, %v2636, 0.0
    %v2639 = vadd.f32 %v2637, %v2638
    %2640 = vadd.xlane.f32.xlu0 %v2639
    %v2641 = vpop.xlane.xlu0 %2640
    %v2642 = vrot.slane %v2641, 4
    %v2643 = vadd.f32 %v2641, %v2642
    %v2644 = vrot.slane %v2643, 2
    %v2645 = vadd.f32 %v2643, %v2644
    %v2646 = vrot.slane %v2645, 1
    %v2647 = vadd.f32 %v2645, %v2646
    %s2648 = vtos %v2647
    %v2649 = vrcp.pop 512.0
    %s2650 = vtos %v2649
    %s2651 = smul.f32 %s2648, %s2650
    %s2652 = sadd.f32 %s2651, 1e-05
    %v2653 = vstv %s2652
    %v2654 = vrsqrt.pop %v2653
    %s2655 = vtos %v2654
    %v2656 = vstv %s2655
    %v2657 = vmul.f32 %v2633, %v2656
    %v2658 = vmul.f32 %v2634, %v2656
    %s2659 = sld [smem:[#allocation7 + $0x80]]
    %v2660 = vstv %s2659
    %v2661 = vmul.f32 %v2657, %v2660
    %v2662 = vmul.f32 %v2658, %v2660
    %s2663 = sld [smem:[#allocation7 + $0x81]]
    %v2664 = vstv %s2663
    %v2665 = vadd.f32 %v2661, %v2664
    %v2666 = vadd.f32 %v2662, %v2664
    %v2667 = vsub.f32 0.0, %v2665
    %v2668 = vsub.f32 0.0, %v2666
    %v2669 = vmul.f32 %v2667, 1.442695
    %v2670 = vpow.pop %v2669
    %v2671 = vmul.f32 %v2668, 1.442695
    %v2672 = vpow.pop %v2671
    %v2673 = vadd.f32 %v2670, 1.0
    %v2674 = vadd.f32 %v2672, 1.0
    %v2675 = vrcp.pop %v2673
    %v2676 = vmul.f32 1.0, %v2675
    %v2677 = vrcp.pop %v2674
    %v2678 = vmul.f32 1.0, %v2677
    %v2681 = vcombine.low %v2676, %v2678
    %v2683 = vunpack.c.l.s4 1983009808
    %v2684 = vunpack.c.0.s8 %v2683
    %v2685 = vlaneseq
    %v2686 = vshrl.u32 %v2685, 7
    %v2687 = vsub.s32 %v2684, %v2686
    %v2688 = vrot.slane %v2681, %v2687
    %2690 = vst [vmem:[%s14] sm:$0xf] %v2688
    %v2691 = vld [vmem:[%s4] sm:$0xf]
    %v2692 = vld [vmem:[%s5] sm:$0xf]
    %v2695 = vunpack.c.l.s4 1983009808
    %v2696 = vunpack.c.0.s8 %v2695
    %v2697 = vlaneseq
    %v2698 = vshrl.u32 %v2697, 7
    %v2699 = vsub.s32 %v2696, %v2698
    %v2700 = vrot.slane %v2691, %v2699
    %v2701 = vcombine.high %v2700, %v2700
    %v2706 = vunpack.c.l.s4 1983009808
    %v2707 = vunpack.c.0.s8 %v2706
    %v2708 = vlaneseq
    %v2709 = vshrl.u32 %v2708, 7
    %v2710 = vsub.s32 %v2707, %v2709
    %v2711 = vrot.slane %v2692, %v2710
    %v2712 = vcombine.high %v2711, %v2711
    %v2715 = vpack.c.bf16 %v2700, %v2700
    %v2716 = vpack.c.bf16 %v2701, %v2701
    %v2717 = vpack.c.bf16 %v2711, %v2711
    %v2718 = vpack.c.bf16 %v2712, %v2712
    %v2719 = vld [vmem:[#allocation2] sm:$0xff]
    %v2720 = vld [vmem:[#allocation2 + $0x8] sm:$0xff]
    %v2721 = vld [vmem:[#allocation2 + $0x10] sm:$0xff]
    %v2722 = vld [vmem:[#allocation2 + $0x18] sm:$0xff]
    %v2723 = vld [vmem:[#allocation2 + $0x20] sm:$0xff]
    %v2724 = vld [vmem:[#allocation2 + $0x28] sm:$0xff]
    %v2725 = vld [vmem:[#allocation2 + $0x30] sm:$0xff]
    %v2726 = vld [vmem:[#allocation2 + $0x38] sm:$0xff]
    %v2727 = vld [vmem:[#allocation2 + $0x40] sm:$0xff]
    %v2728 = vld [vmem:[#allocation2 + $0x48] sm:$0xff]
    %v2729 = vld [vmem:[#allocation2 + $0x50] sm:$0xff]
    %v2730 = vld [vmem:[#allocation2 + $0x58] sm:$0xff]
    %v2731 = vld [vmem:[#allocation2 + $0x60] sm:$0xff]
    %v2732 = vld [vmem:[#allocation2 + $0x68] sm:$0xff]
    %v2733 = vld [vmem:[#allocation2 + $0x70] sm:$0xff]
    %v2734 = vld [vmem:[#allocation2 + $0x78] sm:$0xff]
    %v2735 = vld [vmem:[#allocation2 + $0x80] sm:$0xff]
    %v2736 = vld [vmem:[#allocation2 + $0x88] sm:$0xff]
    %v2737 = vld [vmem:[#allocation2 + $0x90] sm:$0xff]
    %v2738 = vld [vmem:[#allocation2 + $0x98] sm:$0xff]
    %v2739 = vld [vmem:[#allocation2 + $0xa0] sm:$0xff]
    %v2740 = vld [vmem:[#allocation2 + $0xa8] sm:$0xff]
    %v2741 = vld [vmem:[#allocation2 + $0xb0] sm:$0xff]
    %v2742 = vld [vmem:[#allocation2 + $0xb8] sm:$0xff]
    %v2743 = vld [vmem:[#allocation2 + $0xc0] sm:$0xff]
    %v2744 = vld [vmem:[#allocation2 + $0xc8] sm:$0xff]
    %v2745 = vld [vmem:[#allocation2 + $0xd0] sm:$0xff]
    %v2746 = vld [vmem:[#allocation2 + $0xd8] sm:$0xff]
    %v2747 = vld [vmem:[#allocation2 + $0xe0] sm:$0xff]
    %v2748 = vld [vmem:[#allocation2 + $0xe8] sm:$0xff]
    %v2749 = vld [vmem:[#allocation2 + $0xf0] sm:$0xff]
    %v2750 = vld [vmem:[#allocation2 + $0xf8] sm:$0xff]
    %v2751 = vld [vmem:[#allocation2 + $0x100] sm:$0xff]
    %v2752 = vld [vmem:[#allocation2 + $0x108] sm:$0xff]
    %v2753 = vld [vmem:[#allocation2 + $0x110] sm:$0xff]
    %v2754 = vld [vmem:[#allocation2 + $0x118] sm:$0xff]
    %v2755 = vld [vmem:[#allocation2 + $0x120] sm:$0xff]
    %v2756 = vld [vmem:[#allocation2 + $0x128] sm:$0xff]
    %v2757 = vld [vmem:[#allocation2 + $0x130] sm:$0xff]
    %v2758 = vld [vmem:[#allocation2 + $0x138] sm:$0xff]
    %v2759 = vld [vmem:[#allocation2 + $0x140] sm:$0xff]
    %v2760 = vld [vmem:[#allocation2 + $0x148] sm:$0xff]
    %v2761 = vld [vmem:[#allocation2 + $0x150] sm:$0xff]
    %v2762 = vld [vmem:[#allocation2 + $0x158] sm:$0xff]
    %v2763 = vld [vmem:[#allocation2 + $0x160] sm:$0xff]
    %v2764 = vld [vmem:[#allocation2 + $0x168] sm:$0xff]
    %v2765 = vld [vmem:[#allocation2 + $0x170] sm:$0xff]
    %v2766 = vld [vmem:[#allocation2 + $0x178] sm:$0xff]
    %v2767 = vld [vmem:[#allocation2 + $0x180] sm:$0xff]
    %v2768 = vld [vmem:[#allocation2 + $0x188] sm:$0xff]
    %v2769 = vld [vmem:[#allocation2 + $0x190] sm:$0xff]
    %v2770 = vld [vmem:[#allocation2 + $0x198] sm:$0xff]
    %v2771 = vld [vmem:[#allocation2 + $0x1a0] sm:$0xff]
    %v2772 = vld [vmem:[#allocation2 + $0x1a8] sm:$0xff]
    %v2773 = vld [vmem:[#allocation2 + $0x1b0] sm:$0xff]
    %v2774 = vld [vmem:[#allocation2 + $0x1b8] sm:$0xff]
    %v2775 = vld [vmem:[#allocation2 + $0x1c0] sm:$0xff]
    %v2776 = vld [vmem:[#allocation2 + $0x1c8] sm:$0xff]
    %v2777 = vld [vmem:[#allocation2 + $0x1d0] sm:$0xff]
    %v2778 = vld [vmem:[#allocation2 + $0x1d8] sm:$0xff]
    %v2779 = vld [vmem:[#allocation2 + $0x1e0] sm:$0xff]
    %v2780 = vld [vmem:[#allocation2 + $0x1e8] sm:$0xff]
    %v2781 = vld [vmem:[#allocation2 + $0x1f0] sm:$0xff]
    %v2782 = vld [vmem:[#allocation2 + $0x1f8] sm:$0xff]
    %v2847 = vunpack.c.l.b16 %v2719
    %v2848 = vunpack.c.h.b16 %v2719
    %v2849 = vunpack.c.l.b16 %v2720
    %v2850 = vunpack.c.h.b16 %v2720
    %v2851 = vunpack.c.l.b16 %v2721
    %v2852 = vunpack.c.h.b16 %v2721
    %v2853 = vunpack.c.l.b16 %v2722
    %v2854 = vunpack.c.h.b16 %v2722
    %v2855 = vunpack.c.l.b16 %v2723
    %v2856 = vunpack.c.h.b16 %v2723
    %v2857 = vunpack.c.l.b16 %v2724
    %v2858 = vunpack.c.h.b16 %v2724
    %v2859 = vunpack.c.l.b16 %v2725
    %v2860 = vunpack.c.h.b16 %v2725
    %v2861 = vunpack.c.l.b16 %v2726
    %v2862 = vunpack.c.h.b16 %v2726
    %v2863 = vunpack.c.l.b16 %v2727
    %v2864 = vunpack.c.h.b16 %v2727
    %v2865 = vunpack.c.l.b16 %v2728
    %v2866 = vunpack.c.h.b16 %v2728
    %v2867 = vunpack.c.l.b16 %v2729
    %v2868 = vunpack.c.h.b16 %v2729
    %v2869 = vunpack.c.l.b16 %v2730
    %v2870 = vunpack.c.h.b16 %v2730
    %v2871 = vunpack.c.l.b16 %v2731
    %v2872 = vunpack.c.h.b16 %v2731
    %v2873 = vunpack.c.l.b16 %v2732
    %v2874 = vunpack.c.h.b16 %v2732
    %v2875 = vunpack.c.l.b16 %v2733
    %v2876 = vunpack.c.h.b16 %v2733
    %v2877 = vunpack.c.l.b16 %v2734
    %v2878 = vunpack.c.h.b16 %v2734
    %v2879 = vunpack.c.l.b16 %v2735
    %v2880 = vunpack.c.h.b16 %v2735
    %v2881 = vunpack.c.l.b16 %v2736
    %v2882 = vunpack.c.h.b16 %v2736
    %v2883 = vunpack.c.l.b16 %v2737
    %v2884 = vunpack.c.h.b16 %v2737
    %v2885 = vunpack.c.l.b16 %v2738
    %v2886 = vunpack.c.h.b16 %v2738
    %v2887 = vunpack.c.l.b16 %v2739
    %v2888 = vunpack.c.h.b16 %v2739
    %v2889 = vunpack.c.l.b16 %v2740
    %v2890 = vunpack.c.h.b16 %v2740
    %v2891 = vunpack.c.l.b16 %v2741
    %v2892 = vunpack.c.h.b16 %v2741
    %v2893 = vunpack.c.l.b16 %v2742
    %v2894 = vunpack.c.h.b16 %v2742
    %v2895 = vunpack.c.l.b16 %v2743
    %v2896 = vunpack.c.h.b16 %v2743
    %v2897 = vunpack.c.l.b16 %v2744
    %v2898 = vunpack.c.h.b16 %v2744
    %v2899 = vunpack.c.l.b16 %v2745
    %v2900 = vunpack.c.h.b16 %v2745
    %v2901 = vunpack.c.l.b16 %v2746
    %v2902 = vunpack.c.h.b16 %v2746
    %v2903 = vunpack.c.l.b16 %v2747
    %v2904 = vunpack.c.h.b16 %v2747
    %v2905 = vunpack.c.l.b16 %v2748
    %v2906 = vunpack.c.h.b16 %v2748
    %v2907 = vunpack.c.l.b16 %v2749
    %v2908 = vunpack.c.h.b16 %v2749
    %v2909 = vunpack.c.l.b16 %v2750
    %v2910 = vunpack.c.h.b16 %v2750
    %v2911 = vunpack.c.l.b16 %v2751
    %v2912 = vunpack.c.h.b16 %v2751
    %v2913 = vunpack.c.l.b16 %v2752
    %v2914 = vunpack.c.h.b16 %v2752
    %v2915 = vunpack.c.l.b16 %v2753
    %v2916 = vunpack.c.h.b16 %v2753
    %v2917 = vunpack.c.l.b16 %v2754
    %v2918 = vunpack.c.h.b16 %v2754
    %v2919 = vunpack.c.l.b16 %v2755
    %v2920 = vunpack.c.h.b16 %v2755
    %v2921 = vunpack.c.l.b16 %v2756
    %v2922 = vunpack.c.h.b16 %v2756
    %v2923 = vunpack.c.l.b16 %v2757
    %v2924 = vunpack.c.h.b16 %v2757
    %v2925 = vunpack.c.l.b16 %v2758
    %v2926 = vunpack.c.h.b16 %v2758
    %v2927 = vunpack.c.l.b16 %v2759
    %v2928 = vunpack.c.h.b16 %v2759
    %v2929 = vunpack.c.l.b16 %v2760
    %v2930 = vunpack.c.h.b16 %v2760
    %v2931 = vunpack.c.l.b16 %v2761
    %v2932 = vunpack.c.h.b16 %v2761
    %v2933 = vunpack.c.l.b16 %v2762
    %v2934 = vunpack.c.h.b16 %v2762
    %v2935 = vunpack.c.l.b16 %v2763
    %v2936 = vunpack.c.h.b16 %v2763
    %v2937 = vunpack.c.l.b16 %v2764
    %v2938 = vunpack.c.h.b16 %v2764
    %v2939 = vunpack.c.l.b16 %v2765
    %v2940 = vunpack.c.h.b16 %v2765
    %v2941 = vunpack.c.l.b16 %v2766
    %v2942 = vunpack.c.h.b16 %v2766
    %v2943 = vunpack.c.l.b16 %v2767
    %v2944 = vunpack.c.h.b16 %v2767
    %v2945 = vunpack.c.l.b16 %v2768
    %v2946 = vunpack.c.h.b16 %v2768
    %v2947 = vunpack.c.l.b16 %v2769
    %v2948 = vunpack.c.h.b16 %v2769
    %v2949 = vunpack.c.l.b16 %v2770
    %v2950 = vunpack.c.h.b16 %v2770
    %v2951 = vunpack.c.l.b16 %v2771
    %v2952 = vunpack.c.h.b16 %v2771
    %v2953 = vunpack.c.l.b16 %v2772
    %v2954 = vunpack.c.h.b16 %v2772
    %v2955 = vunpack.c.l.b16 %v2773
    %v2956 = vunpack.c.h.b16 %v2773
    %v2957 = vunpack.c.l.b16 %v2774
    %v2958 = vunpack.c.h.b16 %v2774
    %v2959 = vunpack.c.l.b16 %v2775
    %v2960 = vunpack.c.h.b16 %v2775
    %v2961 = vunpack.c.l.b16 %v2776
    %v2962 = vunpack.c.h.b16 %v2776
    %v2963 = vunpack.c.l.b16 %v2777
    %v2964 = vunpack.c.h.b16 %v2777
    %v2965 = vunpack.c.l.b16 %v2778
    %v2966 = vunpack.c.h.b16 %v2778
    %v2967 = vunpack.c.l.b16 %v2779
    %v2968 = vunpack.c.h.b16 %v2779
    %v2969 = vunpack.c.l.b16 %v2780
    %v2970 = vunpack.c.h.b16 %v2780
    %v2971 = vunpack.c.l.b16 %v2781
    %v2972 = vunpack.c.h.b16 %v2781
    %v2973 = vunpack.c.l.b16 %v2782
    %v2974 = vunpack.c.h.b16 %v2782
    %v2975 = vpack.c.b16 %v2849, %v2847
    %v2976 = vpack.c.b16 %v2850, %v2848
    %v2977 = vpack.c.b16 %v2853, %v2851
    %v2978 = vpack.c.b16 %v2854, %v2852
    %v2979 = vpack.c.b16 %v2857, %v2855
    %v2980 = vpack.c.b16 %v2858, %v2856
    %v2981 = vpack.c.b16 %v2861, %v2859
    %v2982 = vpack.c.b16 %v2862, %v2860
    %v2983 = vpack.c.b16 %v2865, %v2863
    %v2984 = vpack.c.b16 %v2866, %v2864
    %v2985 = vpack.c.b16 %v2869, %v2867
    %v2986 = vpack.c.b16 %v2870, %v2868
    %v2987 = vpack.c.b16 %v2873, %v2871
    %v2988 = vpack.c.b16 %v2874, %v2872
    %v2989 = vpack.c.b16 %v2877, %v2875
    %v2990 = vpack.c.b16 %v2878, %v2876
    %v2991 = vpack.c.b16 %v2881, %v2879
    %v2992 = vpack.c.b16 %v2882, %v2880
    %v2993 = vpack.c.b16 %v2885, %v2883
    %v2994 = vpack.c.b16 %v2886, %v2884
    %v2995 = vpack.c.b16 %v2889, %v2887
    %v2996 = vpack.c.b16 %v2890, %v2888
    %v2997 = vpack.c.b16 %v2893, %v2891
    %v2998 = vpack.c.b16 %v2894, %v2892
    %v2999 = vpack.c.b16 %v2897, %v2895
    %v3000 = vpack.c.b16 %v2898, %v2896
    %v3001 = vpack.c.b16 %v2901, %v2899
    %v3002 = vpack.c.b16 %v2902, %v2900
    %v3003 = vpack.c.b16 %v2905, %v2903
    %v3004 = vpack.c.b16 %v2906, %v2904
    %v3005 = vpack.c.b16 %v2909, %v2907
    %v3006 = vpack.c.b16 %v2910, %v2908
    %v3007 = vpack.c.b16 %v2913, %v2911
    %v3008 = vpack.c.b16 %v2914, %v2912
    %v3009 = vpack.c.b16 %v2917, %v2915
    %v3010 = vpack.c.b16 %v2918, %v2916
    %v3011 = vpack.c.b16 %v2921, %v2919
    %v3012 = vpack.c.b16 %v2922, %v2920
    %v3013 = vpack.c.b16 %v2925, %v2923
    %v3014 = vpack.c.b16 %v2926, %v2924
    %v3015 = vpack.c.b16 %v2929, %v2927
    %v3016 = vpack.c.b16 %v2930, %v2928
    %v3017 = vpack.c.b16 %v2933, %v2931
    %v3018 = vpack.c.b16 %v2934, %v2932
    %v3019 = vpack.c.b16 %v2937, %v2935
    %v3020 = vpack.c.b16 %v2938, %v2936
    %v3021 = vpack.c.b16 %v2941, %v2939
    %v3022 = vpack.c.b16 %v2942, %v2940
    %v3023 = vpack.c.b16 %v2945, %v2943
    %v3024 = vpack.c.b16 %v2946, %v2944
    %v3025 = vpack.c.b16 %v2949, %v2947
    %v3026 = vpack.c.b16 %v2950, %v2948
    %v3027 = vpack.c.b16 %v2953, %v2951
    %v3028 = vpack.c.b16 %v2954, %v2952
    %v3029 = vpack.c.b16 %v2957, %v2955
    %v3030 = vpack.c.b16 %v2958, %v2956
    %v3031 = vpack.c.b16 %v2961, %v2959
    %v3032 = vpack.c.b16 %v2962, %v2960
    %v3033 = vpack.c.b16 %v2965, %v2963
    %v3034 = vpack.c.b16 %v2966, %v2964
    %v3035 = vpack.c.b16 %v2969, %v2967
    %v3036 = vpack.c.b16 %v2970, %v2968
    %v3037 = vpack.c.b16 %v2973, %v2971
    %v3038 = vpack.c.b16 %v2974, %v2972
    %3103 = vmatprep.subr.bf16.mxu0 %v2976
    %3104 = vmatpush1.bf16.msra.mxu0 %v2975
    %3105 = vmatprep.subr.bf16.mxu0 %v2978
    %3106 = vmatpush1.bf16.msra.mxu0 %v2977
    %3107 = vmatprep.subr.bf16.mxu0 %v2980
    %3108 = vmatpush1.bf16.msra.mxu0 %v2979
    %3109 = vmatprep.subr.bf16.mxu0 %v2982
    %3110 = vmatpush1.bf16.msra.mxu0 %v2981
    %3111 = vmatprep.subr.bf16.mxu0 %v2984
    %3112 = vmatpush1.bf16.msra.mxu0 %v2983
    %3113 = vmatprep.subr.bf16.mxu0 %v2986
    %3114 = vmatpush1.bf16.msra.mxu0 %v2985
    %3115 = vmatprep.subr.bf16.mxu0 %v2988
    %3116 = vmatpush1.bf16.msra.mxu0 %v2987
    %3117 = vmatprep.subr.bf16.mxu0 %v2990
    %3118 = vmatpush1.bf16.msra.mxu0 %v2989
    %3119 = vmatprep.subr.bf16.mxu0 %v2992
    %3120 = vmatpush1.bf16.msra.mxu0 %v2991
    %3121 = vmatprep.subr.bf16.mxu0 %v2994
    %3122 = vmatpush1.bf16.msra.mxu0 %v2993
    %3123 = vmatprep.subr.bf16.mxu0 %v2996
    %3124 = vmatpush1.bf16.msra.mxu0 %v2995
    %3125 = vmatprep.subr.bf16.mxu0 %v2998
    %3126 = vmatpush1.bf16.msra.mxu0 %v2997
    %3127 = vmatprep.subr.bf16.mxu0 %v3000
    %3128 = vmatpush1.bf16.msra.mxu0 %v2999
    %3129 = vmatprep.subr.bf16.mxu0 %v3002
    %3130 = vmatpush1.bf16.msra.mxu0 %v3001
    %3131 = vmatprep.subr.bf16.mxu0 %v3004
    %3132 = vmatpush1.bf16.msra.mxu0 %v3003
    %3133 = vmatprep.subr.bf16.mxu0 %v3006
    %3134 = vmatpush1.bf16.msra.mxu0 %v3005
    %3135 = vmatprep.mubr.bf16.mxu0 %v2716
    %3136 = vmatmul.mubr.bf16.gmra.mrb[0].mxu0 %v2715
    %v3137 = vpop.f32.mrb[0].mxu0
    %v3138 = vadd.f32 0.0, %v3137
    %v3139 = vpop.f32.mrb[0].mxu0
    %v3140 = vadd.f32 0.0, %v3139
    %v3141 = vpop.f32.mrb[0].mxu0
    %v3142 = vpop.f32.mrb[0].mxu0
    %3143 = vdwg.mxu0
    %3144 = vmatprep.subr.bf16.mxu0 %v3008
    %3145 = vmatpush1.bf16.msra.mxu0 %v3007
    %3146 = vmatprep.subr.bf16.mxu0 %v3010
    %3147 = vmatpush1.bf16.msra.mxu0 %v3009
    %3148 = vmatprep.subr.bf16.mxu0 %v3012
    %3149 = vmatpush1.bf16.msra.mxu0 %v3011
    %3150 = vmatprep.subr.bf16.mxu0 %v3014
    %3151 = vmatpush1.bf16.msra.mxu0 %v3013
    %3152 = vmatprep.subr.bf16.mxu0 %v3016
    %3153 = vmatpush1.bf16.msra.mxu0 %v3015
    %3154 = vmatprep.subr.bf16.mxu0 %v3018
    %3155 = vmatpush1.bf16.msra.mxu0 %v3017
    %3156 = vmatprep.subr.bf16.mxu0 %v3020
    %3157 = vmatpush1.bf16.msra.mxu0 %v3019
    %3158 = vmatprep.subr.bf16.mxu0 %v3022
    %3159 = vmatpush1.bf16.msra.mxu0 %v3021
    %3160 = vmatprep.subr.bf16.mxu0 %v3024
    %3161 = vmatpush1.bf16.msra.mxu0 %v3023
    %3162 = vmatprep.subr.bf16.mxu0 %v3026
    %3163 = vmatpush1.bf16.msra.mxu0 %v3025
    %3164 = vmatprep.subr.bf16.mxu0 %v3028
    %3165 = vmatpush1.bf16.msra.mxu0 %v3027
    %3166 = vmatprep.subr.bf16.mxu0 %v3030
    %3167 = vmatpush1.bf16.msra.mxu0 %v3029
    %3168 = vmatprep.subr.bf16.mxu0 %v3032
    %3169 = vmatpush1.bf16.msra.mxu0 %v3031
    %3170 = vmatprep.subr.bf16.mxu0 %v3034
    %3171 = vmatpush1.bf16.msra.mxu0 %v3033
    %3172 = vmatprep.subr.bf16.mxu0 %v3036
    %3173 = vmatpush1.bf16.msra.mxu0 %v3035
    %3174 = vmatprep.subr.bf16.mxu0 %v3038
    %3175 = vmatpush1.bf16.msra.mxu0 %v3037
    %3176 = vmatprep.mubr.bf16.mxu0 %v2718
    %3177 = vmatmul.mubr.bf16.gmra.mrb[0].mxu0 %v2717
    %v3178 = vpop.f32.mrb[0].mxu0
    %v3179 = vadd.f32 %v3138, %v3178
    %v3180 = vpop.f32.mrb[0].mxu0
    %v3181 = vadd.f32 %v3140, %v3180
    %v3182 = vpop.f32.mrb[0].mxu0
    %v3183 = vpop.f32.mrb[0].mxu0
    %3184 = vdwg.mxu0
    %v3185 = vsel %vm2007, %v3179, 0.0
    %v3186 = vsel %vm2007, %v3181, 0.0
    %v3187 = vadd.f32 %v3185, %v3186
    %3188 = vadd.xlane.f32.xlu0 %v3187
    %v3189 = vpop.xlane.xlu0 %3188
    %v3190 = vrot.slane %v3189, 4
    %v3191 = vadd.f32 %v3189, %v3190
    %v3192 = vrot.slane %v3191, 2
    %v3193 = vadd.f32 %v3191, %v3192
    %v3194 = vrot.slane %v3193, 1
    %v3195 = vadd.f32 %v3193, %v3194
    %s3196 = vtos %v3195
    %v3197 = vrcp.pop 512.0
    %s3198 = vtos %v3197
    %s3199 = smul.f32 %s3196, %s3198
    %v3200 = vstv %s3199
    %v3201 = vsub.f32 %v3179, %v3200
    %v3202 = vsub.f32 %v3181, %v3200
    %v3203 = vmul.f32 %v3201, %v3201
    %v3204 = vmul.f32 %v3202, %v3202
    %v3205 = vsel %vm2007, %v3203, 0.0
    %v3206 = vsel %vm2007, %v3204, 0.0
    %v3207 = vadd.f32 %v3205, %v3206
    %3208 = vadd.xlane.f32.xlu0 %v3207
    %v3209 = vpop.xlane.xlu0 %3208
    %v3210 = vrot.slane %v3209, 4
    %v3211 = vadd.f32 %v3209, %v3210
    %v3212 = vrot.slane %v3211, 2
    %v3213 = vadd.f32 %v3211, %v3212
    %v3214 = vrot.slane %v3213, 1
    %v3215 = vadd.f32 %v3213, %v3214
    %s3216 = vtos %v3215
    %v3217 = vrcp.pop 512.0
    %s3218 = vtos %v3217
    %s3219 = smul.f32 %s3216, %s3218
    %s3220 = sadd.f32 %s3219, 1e-05
    %v3221 = vstv %s3220
    %v3222 = vrsqrt.pop %v3221
    %s3223 = vtos %v3222
    %v3224 = vstv %s3223
    %v3225 = vmul.f32 %v3201, %v3224
    %v3226 = vmul.f32 %v3202, %v3224
    %s3227 = sld [smem:[#allocation7 + $0x100]]
    %v3228 = vstv %s3227
    %v3229 = vmul.f32 %v3225, %v3228
    %v3230 = vmul.f32 %v3226, %v3228
    %s3231 = sld [smem:[#allocation7 + $0x101]]
    %v3232 = vstv %s3231
    %v3233 = vadd.f32 %v3229, %v3232
    %v3234 = vadd.f32 %v3230, %v3232
    %v3235 = vsub.f32 0.0, %v3233
    %v3236 = vsub.f32 0.0, %v3234
    %v3237 = vmul.f32 %v3235, 1.442695
    %v3238 = vpow.pop %v3237
    %v3239 = vmul.f32 %v3236, 1.442695
    %v3240 = vpow.pop %v3239
    %v3241 = vadd.f32 %v3238, 1.0
    %v3242 = vadd.f32 %v3240, 1.0
    %v3243 = vrcp.pop %v3241
    %v3244 = vmul.f32 1.0, %v3243
    %v3245 = vrcp.pop %v3242
    %v3246 = vmul.f32 1.0, %v3245
    %v3249 = vcombine.low %v3244, %v3246
    %v3251 = vunpack.c.l.s4 1983009808
    %v3252 = vunpack.c.0.s8 %v3251
    %v3253 = vlaneseq
    %v3254 = vshrl.u32 %v3253, 7
    %v3255 = vsub.s32 %v3252, %v3254
    %v3256 = vrot.slane %v3249, %v3255
    %3258 = vst [vmem:[%s15] sm:$0xf] %v3256
    %v3259 = vld [vmem:[%s6] sm:$0xf]
    %v3260 = vld [vmem:[%s7] sm:$0xf]
    %v3263 = vunpack.c.l.s4 1983009808
    %v3264 = vunpack.c.0.s8 %v3263
    %v3265 = vlaneseq
    %v3266 = vshrl.u32 %v3265, 7
    %v3267 = vsub.s32 %v3264, %v3266
    %v3268 = vrot.slane %v3259, %v3267
    %v3269 = vcombine.high %v3268, %v3268
    %v3274 = vunpack.c.l.s4 1983009808
    %v3275 = vunpack.c.0.s8 %v3274
    %v3276 = vlaneseq
    %v3277 = vshrl.u32 %v3276, 7
    %v3278 = vsub.s32 %v3275, %v3277
    %v3279 = vrot.slane %v3260, %v3278
    %v3280 = vcombine.high %v3279, %v3279
    %v3283 = vpack.c.bf16 %v3268, %v3268
    %v3284 = vpack.c.bf16 %v3269, %v3269
    %v3285 = vpack.c.bf16 %v3279, %v3279
    %v3286 = vpack.c.bf16 %v3280, %v3280
    %v3287 = vld [vmem:[#allocation5] sm:$0xff]
    %v3288 = vld [vmem:[#allocation5 + $0x8] sm:$0xff]
    %v3289 = vld [vmem:[#allocation5 + $0x10] sm:$0xff]
    %v3290 = vld [vmem:[#allocation5 + $0x18] sm:$0xff]
    %v3291 = vld [vmem:[#allocation5 + $0x20] sm:$0xff]
    %v3292 = vld [vmem:[#allocation5 + $0x28] sm:$0xff]
    %v3293 = vld [vmem:[#allocation5 + $0x30] sm:$0xff]
    %v3294 = vld [vmem:[#allocation5 + $0x38] sm:$0xff]
    %v3295 = vld [vmem:[#allocation5 + $0x40] sm:$0xff]
    %v3296 = vld [vmem:[#allocation5 + $0x48] sm:$0xff]
    %v3297 = vld [vmem:[#allocation5 + $0x50] sm:$0xff]
    %v3298 = vld [vmem:[#allocation5 + $0x58] sm:$0xff]
    %v3299 = vld [vmem:[#allocation5 + $0x60] sm:$0xff]
    %v3300 = vld [vmem:[#allocation5 + $0x68] sm:$0xff]
    %v3301 = vld [vmem:[#allocation5 + $0x70] sm:$0xff]
    %v3302 = vld [vmem:[#allocation5 + $0x78] sm:$0xff]
    %v3303 = vld [vmem:[#allocation5 + $0x80] sm:$0xff]
    %v3304 = vld [vmem:[#allocation5 + $0x88] sm:$0xff]
    %v3305 = vld [vmem:[#allocation5 + $0x90] sm:$0xff]
    %v3306 = vld [vmem:[#allocation5 + $0x98] sm:$0xff]
    %v3307 = vld [vmem:[#allocation5 + $0xa0] sm:$0xff]
    %v3308 = vld [vmem:[#allocation5 + $0xa8] sm:$0xff]
    %v3309 = vld [vmem:[#allocation5 + $0xb0] sm:$0xff]
    %v3310 = vld [vmem:[#allocation5 + $0xb8] sm:$0xff]
    %v3311 = vld [vmem:[#allocation5 + $0xc0] sm:$0xff]
    %v3312 = vld [vmem:[#allocation5 + $0xc8] sm:$0xff]
    %v3313 = vld [vmem:[#allocation5 + $0xd0] sm:$0xff]
    %v3314 = vld [vmem:[#allocation5 + $0xd8] sm:$0xff]
    %v3315 = vld [vmem:[#allocation5 + $0xe0] sm:$0xff]
    %v3316 = vld [vmem:[#allocation5 + $0xe8] sm:$0xff]
    %v3317 = vld [vmem:[#allocation5 + $0xf0] sm:$0xff]
    %v3318 = vld [vmem:[#allocation5 + $0xf8] sm:$0xff]
    %v3319 = vld [vmem:[#allocation5 + $0x100] sm:$0xff]
    %v3320 = vld [vmem:[#allocation5 + $0x108] sm:$0xff]
    %v3321 = vld [vmem:[#allocation5 + $0x110] sm:$0xff]
    %v3322 = vld [vmem:[#allocation5 + $0x118] sm:$0xff]
    %v3323 = vld [vmem:[#allocation5 + $0x120] sm:$0xff]
    %v3324 = vld [vmem:[#allocation5 + $0x128] sm:$0xff]
    %v3325 = vld [vmem:[#allocation5 + $0x130] sm:$0xff]
    %v3326 = vld [vmem:[#allocation5 + $0x138] sm:$0xff]
    %v3327 = vld [vmem:[#allocation5 + $0x140] sm:$0xff]
    %v3328 = vld [vmem:[#allocation5 + $0x148] sm:$0xff]
    %v3329 = vld [vmem:[#allocation5 + $0x150] sm:$0xff]
    %v3330 = vld [vmem:[#allocation5 + $0x158] sm:$0xff]
    %v3331 = vld [vmem:[#allocation5 + $0x160] sm:$0xff]
    %v3332 = vld [vmem:[#allocation5 + $0x168] sm:$0xff]
    %v3333 = vld [vmem:[#allocation5 + $0x170] sm:$0xff]
    %v3334 = vld [vmem:[#allocation5 + $0x178] sm:$0xff]
    %v3335 = vld [vmem:[#allocation5 + $0x180] sm:$0xff]
    %v3336 = vld [vmem:[#allocation5 + $0x188] sm:$0xff]
    %v3337 = vld [vmem:[#allocation5 + $0x190] sm:$0xff]
    %v3338 = vld [vmem:[#allocation5 + $0x198] sm:$0xff]
    %v3339 = vld [vmem:[#allocation5 + $0x1a0] sm:$0xff]
    %v3340 = vld [vmem:[#allocation5 + $0x1a8] sm:$0xff]
    %v3341 = vld [vmem:[#allocation5 + $0x1b0] sm:$0xff]
    %v3342 = vld [vmem:[#allocation5 + $0x1b8] sm:$0xff]
    %v3343 = vld [vmem:[#allocation5 + $0x1c0] sm:$0xff]
    %v3344 = vld [vmem:[#allocation5 + $0x1c8] sm:$0xff]
    %v3345 = vld [vmem:[#allocation5 + $0x1d0] sm:$0xff]
    %v3346 = vld [vmem:[#allocation5 + $0x1d8] sm:$0xff]
    %v3347 = vld [vmem:[#allocation5 + $0x1e0] sm:$0xff]
    %v3348 = vld [vmem:[#allocation5 + $0x1e8] sm:$0xff]
    %v3349 = vld [vmem:[#allocation5 + $0x1f0] sm:$0xff]
    %v3350 = vld [vmem:[#allocation5 + $0x1f8] sm:$0xff]
    %v3415 = vunpack.c.l.b16 %v3287
    %v3416 = vunpack.c.h.b16 %v3287
    %v3417 = vunpack.c.l.b16 %v3288
    %v3418 = vunpack.c.h.b16 %v3288
    %v3419 = vunpack.c.l.b16 %v3289
    %v3420 = vunpack.c.h.b16 %v3289
    %v3421 = vunpack.c.l.b16 %v3290
    %v3422 = vunpack.c.h.b16 %v3290
    %v3423 = vunpack.c.l.b16 %v3291
    %v3424 = vunpack.c.h.b16 %v3291
    %v3425 = vunpack.c.l.b16 %v3292
    %v3426 = vunpack.c.h.b16 %v3292
    %v3427 = vunpack.c.l.b16 %v3293
    %v3428 = vunpack.c.h.b16 %v3293
    %v3429 = vunpack.c.l.b16 %v3294
    %v3430 = vunpack.c.h.b16 %v3294
    %v3431 = vunpack.c.l.b16 %v3295
    %v3432 = vunpack.c.h.b16 %v3295
    %v3433 = vunpack.c.l.b16 %v3296
    %v3434 = vunpack.c.h.b16 %v3296
    %v3435 = vunpack.c.l.b16 %v3297
    %v3436 = vunpack.c.h.b16 %v3297
    %v3437 = vunpack.c.l.b16 %v3298
    %v3438 = vunpack.c.h.b16 %v3298
    %v3439 = vunpack.c.l.b16 %v3299
    %v3440 = vunpack.c.h.b16 %v3299
    %v3441 = vunpack.c.l.b16 %v3300
    %v3442 = vunpack.c.h.b16 %v3300
    %v3443 = vunpack.c.l.b16 %v3301
    %v3444 = vunpack.c.h.b16 %v3301
    %v3445 = vunpack.c.l.b16 %v3302
    %v3446 = vunpack.c.h.b16 %v3302
    %v3447 = vunpack.c.l.b16 %v3303
    %v3448 = vunpack.c.h.b16 %v3303
    %v3449 = vunpack.c.l.b16 %v3304
    %v3450 = vunpack.c.h.b16 %v3304
    %v3451 = vunpack.c.l.b16 %v3305
    %v3452 = vunpack.c.h.b16 %v3305
    %v3453 = vunpack.c.l.b16 %v3306
    %v3454 = vunpack.c.h.b16 %v3306
    %v3455 = vunpack.c.l.b16 %v3307
    %v3456 = vunpack.c.h.b16 %v3307
    %v3457 = vunpack.c.l.b16 %v3308
    %v3458 = vunpack.c.h.b16 %v3308
    %v3459 = vunpack.c.l.b16 %v3309
    %v3460 = vunpack.c.h.b16 %v3309
    %v3461 = vunpack.c.l.b16 %v3310
    %v3462 = vunpack.c.h.b16 %v3310
    %v3463 = vunpack.c.l.b16 %v3311
    %v3464 = vunpack.c.h.b16 %v3311
    %v3465 = vunpack.c.l.b16 %v3312
    %v3466 = vunpack.c.h.b16 %v3312
    %v3467 = vunpack.c.l.b16 %v3313
    %v3468 = vunpack.c.h.b16 %v3313
    %v3469 = vunpack.c.l.b16 %v3314
    %v3470 = vunpack.c.h.b16 %v3314
    %v3471 = vunpack.c.l.b16 %v3315
    %v3472 = vunpack.c.h.b16 %v3315
    %v3473 = vunpack.c.l.b16 %v3316
    %v3474 = vunpack.c.h.b16 %v3316
    %v3475 = vunpack.c.l.b16 %v3317
    %v3476 = vunpack.c.h.b16 %v3317
    %v3477 = vunpack.c.l.b16 %v3318
    %v3478 = vunpack.c.h.b16 %v3318
    %v3479 = vunpack.c.l.b16 %v3319
    %v3480 = vunpack.c.h.b16 %v3319
    %v3481 = vunpack.c.l.b16 %v3320
    %v3482 = vunpack.c.h.b16 %v3320
    %v3483 = vunpack.c.l.b16 %v3321
    %v3484 = vunpack.c.h.b16 %v3321
    %v3485 = vunpack.c.l.b16 %v3322
    %v3486 = vunpack.c.h.b16 %v3322
    %v3487 = vunpack.c.l.b16 %v3323
    %v3488 = vunpack.c.h.b16 %v3323
    %v3489 = vunpack.c.l.b16 %v3324
    %v3490 = vunpack.c.h.b16 %v3324
    %v3491 = vunpack.c.l.b16 %v3325
    %v3492 = vunpack.c.h.b16 %v3325
    %v3493 = vunpack.c.l.b16 %v3326
    %v3494 = vunpack.c.h.b16 %v3326
    %v3495 = vunpack.c.l.b16 %v3327
    %v3496 = vunpack.c.h.b16 %v3327
    %v3497 = vunpack.c.l.b16 %v3328
    %v3498 = vunpack.c.h.b16 %v3328
    %v3499 = vunpack.c.l.b16 %v3329
    %v3500 = vunpack.c.h.b16 %v3329
    %v3501 = vunpack.c.l.b16 %v3330
    %v3502 = vunpack.c.h.b16 %v3330
    %v3503 = vunpack.c.l.b16 %v3331
    %v3504 = vunpack.c.h.b16 %v3331
    %v3505 = vunpack.c.l.b16 %v3332
    %v3506 = vunpack.c.h.b16 %v3332
    %v3507 = vunpack.c.l.b16 %v3333
    %v3508 = vunpack.c.h.b16 %v3333
    %v3509 = vunpack.c.l.b16 %v3334
    %v3510 = vunpack.c.h.b16 %v3334
    %v3511 = vunpack.c.l.b16 %v3335
    %v3512 = vunpack.c.h.b16 %v3335
    %v3513 = vunpack.c.l.b16 %v3336
    %v3514 = vunpack.c.h.b16 %v3336
    %v3515 = vunpack.c.l.b16 %v3337
    %v3516 = vunpack.c.h.b16 %v3337
    %v3517 = vunpack.c.l.b16 %v3338
    %v3518 = vunpack.c.h.b16 %v3338
    %v3519 = vunpack.c.l.b16 %v3339
    %v3520 = vunpack.c.h.b16 %v3339
    %v3521 = vunpack.c.l.b16 %v3340
    %v3522 = vunpack.c.h.b16 %v3340
    %v3523 = vunpack.c.l.b16 %v3341
    %v3524 = vunpack.c.h.b16 %v3341
    %v3525 = vunpack.c.l.b16 %v3342
    %v3526 = vunpack.c.h.b16 %v3342
    %v3527 = vunpack.c.l.b16 %v3343
    %v3528 = vunpack.c.h.b16 %v3343
    %v3529 = vunpack.c.l.b16 %v3344
    %v3530 = vunpack.c.h.b16 %v3344
    %v3531 = vunpack.c.l.b16 %v3345
    %v3532 = vunpack.c.h.b16 %v3345
    %v3533 = vunpack.c.l.b16 %v3346
    %v3534 = vunpack.c.h.b16 %v3346
    %v3535 = vunpack.c.l.b16 %v3347
    %v3536 = vunpack.c.h.b16 %v3347
    %v3537 = vunpack.c.l.b16 %v3348
    %v3538 = vunpack.c.h.b16 %v3348
    %v3539 = vunpack.c.l.b16 %v3349
    %v3540 = vunpack.c.h.b16 %v3349
    %v3541 = vunpack.c.l.b16 %v3350
    %v3542 = vunpack.c.h.b16 %v3350
    %v3543 = vpack.c.b16 %v3417, %v3415
    %v3544 = vpack.c.b16 %v3418, %v3416
    %v3545 = vpack.c.b16 %v3421, %v3419
    %v3546 = vpack.c.b16 %v3422, %v3420
    %v3547 = vpack.c.b16 %v3425, %v3423
    %v3548 = vpack.c.b16 %v3426, %v3424
    %v3549 = vpack.c.b16 %v3429, %v3427
    %v3550 = vpack.c.b16 %v3430, %v3428
    %v3551 = vpack.c.b16 %v3433, %v3431
    %v3552 = vpack.c.b16 %v3434, %v3432
    %v3553 = vpack.c.b16 %v3437, %v3435
    %v3554 = vpack.c.b16 %v3438, %v3436
    %v3555 = vpack.c.b16 %v3441, %v3439
    %v3556 = vpack.c.b16 %v3442, %v3440
    %v3557 = vpack.c.b16 %v3445, %v3443
    %v3558 = vpack.c.b16 %v3446, %v3444
    %v3559 = vpack.c.b16 %v3449, %v3447
    %v3560 = vpack.c.b16 %v3450, %v3448
    %v3561 = vpack.c.b16 %v3453, %v3451
    %v3562 = vpack.c.b16 %v3454, %v3452
    %v3563 = vpack.c.b16 %v3457, %v3455
    %v3564 = vpack.c.b16 %v3458, %v3456
    %v3565 = vpack.c.b16 %v3461, %v3459
    %v3566 = vpack.c.b16 %v3462, %v3460
    %v3567 = vpack.c.b16 %v3465, %v3463
    %v3568 = vpack.c.b16 %v3466, %v3464
    %v3569 = vpack.c.b16 %v3469, %v3467
    %v3570 = vpack.c.b16 %v3470, %v3468
    %v3571 = vpack.c.b16 %v3473, %v3471
    %v3572 = vpack.c.b16 %v3474, %v3472
    %v3573 = vpack.c.b16 %v3477, %v3475
    %v3574 = vpack.c.b16 %v3478, %v3476
    %v3575 = vpack.c.b16 %v3481, %v3479
    %v3576 = vpack.c.b16 %v3482, %v3480
    %v3577 = vpack.c.b16 %v3485, %v3483
    %v3578 = vpack.c.b16 %v3486, %v3484
    %v3579 = vpack.c.b16 %v3489, %v3487
    %v3580 = vpack.c.b16 %v3490, %v3488
    %v3581 = vpack.c.b16 %v3493, %v3491
    %v3582 = vpack.c.b16 %v3494, %v3492
    %v3583 = vpack.c.b16 %v3497, %v3495
    %v3584 = vpack.c.b16 %v3498, %v3496
    %v3585 = vpack.c.b16 %v3501, %v3499
    %v3586 = vpack.c.b16 %v3502, %v3500
    %v3587 = vpack.c.b16 %v3505, %v3503
    %v3588 = vpack.c.b16 %v3506, %v3504
    %v3589 = vpack.c.b16 %v3509, %v3507
    %v3590 = vpack.c.b16 %v3510, %v3508
    %v3591 = vpack.c.b16 %v3513, %v3511
    %v3592 = vpack.c.b16 %v3514, %v3512
    %v3593 = vpack.c.b16 %v3517, %v3515
    %v3594 = vpack.c.b16 %v3518, %v3516
    %v3595 = vpack.c.b16 %v3521, %v3519
    %v3596 = vpack.c.b16 %v3522, %v3520
    %v3597 = vpack.c.b16 %v3525, %v3523
    %v3598 = vpack.c.b16 %v3526, %v3524
    %v3599 = vpack.c.b16 %v3529, %v3527
    %v3600 = vpack.c.b16 %v3530, %v3528
    %v3601 = vpack.c.b16 %v3533, %v3531
    %v3602 = vpack.c.b16 %v3534, %v3532
    %v3603 = vpack.c.b16 %v3537, %v3535
    %v3604 = vpack.c.b16 %v3538, %v3536
    %v3605 = vpack.c.b16 %v3541, %v3539
    %v3606 = vpack.c.b16 %v3542, %v3540
    %3671 = vmatprep.subr.bf16.mxu0 %v3544
    %3672 = vmatpush1.bf16.msra.mxu0 %v3543
    %3673 = vmatprep.subr.bf16.mxu0 %v3546
    %3674 = vmatpush1.bf16.msra.mxu0 %v3545
    %3675 = vmatprep.subr.bf16.mxu0 %v3548
    %3676 = vmatpush1.bf16.msra.mxu0 %v3547
    %3677 = vmatprep.subr.bf16.mxu0 %v3550
    %3678 = vmatpush1.bf16.msra.mxu0 %v3549
    %3679 = vmatprep.subr.bf16.mxu0 %v3552
    %3680 = vmatpush1.bf16.msra.mxu0 %v3551
    %3681 = vmatprep.subr.bf16.mxu0 %v3554
    %3682 = vmatpush1.bf16.msra.mxu0 %v3553
    %3683 = vmatprep.subr.bf16.mxu0 %v3556
    %3684 = vmatpush1.bf16.msra.mxu0 %v3555
    %3685 = vmatprep.subr.bf16.mxu0 %v3558
    %3686 = vmatpush1.bf16.msra.mxu0 %v3557
    %3687 = vmatprep.subr.bf16.mxu0 %v3560
    %3688 = vmatpush1.bf16.msra.mxu0 %v3559
    %3689 = vmatprep.subr.bf16.mxu0 %v3562
    %3690 = vmatpush1.bf16.msra.mxu0 %v3561
    %3691 = vmatprep.subr.bf16.mxu0 %v3564
    %3692 = vmatpush1.bf16.msra.mxu0 %v3563
    %3693 = vmatprep.subr.bf16.mxu0 %v3566
    %3694 = vmatpush1.bf16.msra.mxu0 %v3565
    %3695 = vmatprep.subr.bf16.mxu0 %v3568
    %3696 = vmatpush1.bf16.msra.mxu0 %v3567
    %3697 = vmatprep.subr.bf16.mxu0 %v3570
    %3698 = vmatpush1.bf16.msra.mxu0 %v3569
    %3699 = vmatprep.subr.bf16.mxu0 %v3572
    %3700 = vmatpush1.bf16.msra.mxu0 %v3571
    %3701 = vmatprep.subr.bf16.mxu0 %v3574
    %3702 = vmatpush1.bf16.msra.mxu0 %v3573
    %3703 = vmatprep.mubr.bf16.mxu0 %v3284
    %3704 = vmatmul.mubr.bf16.gmra.mrb[0].mxu0 %v3283
    %v3705 = vpop.f32.mrb[0].mxu0
    %v3706 = vadd.f32 0.0, %v3705
    %v3707 = vpop.f32.mrb[0].mxu0
    %v3708 = vadd.f32 0.0, %v3707
    %v3709 = vpop.f32.mrb[0].mxu0
    %v3710 = vpop.f32.mrb[0].mxu0
    %3711 = vdwg.mxu0
    %3712 = vmatprep.subr.bf16.mxu0 %v3576
    %3713 = vmatpush1.bf16.msra.mxu0 %v3575
    %3714 = vmatprep.subr.bf16.mxu0 %v3578
    %3715 = vmatpush1.bf16.msra.mxu0 %v3577
    %3716 = vmatprep.subr.bf16.mxu0 %v3580
    %3717 = vmatpush1.bf16.msra.mxu0 %v3579
    %3718 = vmatprep.subr.bf16.mxu0 %v3582
    %3719 = vmatpush1.bf16.msra.mxu0 %v3581
    %3720 = vmatprep.subr.bf16.mxu0 %v3584
    %3721 = vmatpush1.bf16.msra.mxu0 %v3583
    %3722 = vmatprep.subr.bf16.mxu0 %v3586
    %3723 = vmatpush1.bf16.msra.mxu0 %v3585
    %3724 = vmatprep.subr.bf16.mxu0 %v3588
    %3725 = vmatpush1.bf16.msra.mxu0 %v3587
    %3726 = vmatprep.subr.bf16.mxu0 %v3590
    %3727 = vmatpush1.bf16.msra.mxu0 %v3589
    %3728 = vmatprep.subr.bf16.mxu0 %v3592
    %3729 = vmatpush1.bf16.msra.mxu0 %v3591
    %3730 = vmatprep.subr.bf16.mxu0 %v3594
    %3731 = vmatpush1.bf16.msra.mxu0 %v3593
    %3732 = vmatprep.subr.bf16.mxu0 %v3596
    %3733 = vmatpush1.bf16.msra.mxu0 %v3595
    %3734 = vmatprep.subr.bf16.mxu0 %v3598
    %3735 = vmatpush1.bf16.msra.mxu0 %v3597
    %3736 = vmatprep.subr.bf16.mxu0 %v3600
    %3737 = vmatpush1.bf16.msra.mxu0 %v3599
    %3738 = vmatprep.subr.bf16.mxu0 %v3602
    %3739 = vmatpush1.bf16.msra.mxu0 %v3601
    %3740 = vmatprep.subr.bf16.mxu0 %v3604
    %3741 = vmatpush1.bf16.msra.mxu0 %v3603
    %3742 = vmatprep.subr.bf16.mxu0 %v3606
    %3743 = vmatpush1.bf16.msra.mxu0 %v3605
    %3744 = vmatprep.mubr.bf16.mxu0 %v3286
    %3745 = vmatmul.mubr.bf16.gmra.mrb[0].mxu0 %v3285
    %v3746 = vpop.f32.mrb[0].mxu0
    %v3747 = vadd.f32 %v3706, %v3746
    %v3748 = vpop.f32.mrb[0].mxu0
    %v3749 = vadd.f32 %v3708, %v3748
    %v3750 = vpop.f32.mrb[0].mxu0
    %v3751 = vpop.f32.mrb[0].mxu0
    %3752 = vdwg.mxu0
    %v3753 = vsel %vm2007, %v3747, 0.0
    %v3754 = vsel %vm2007, %v3749, 0.0
    %v3755 = vadd.f32 %v3753, %v3754
    %3756 = vadd.xlane.f32.xlu0 %v3755
    %v3757 = vpop.xlane.xlu0 %3756
    %v3758 = vrot.slane %v3757, 4
    %v3759 = vadd.f32 %v3757, %v3758
    %v3760 = vrot.slane %v3759, 2
    %v3761 = vadd.f32 %v3759, %v3760
    %v3762 = vrot.slane %v3761, 1
    %v3763 = vadd.f32 %v3761, %v3762
    %s3764 = vtos %v3763
    %v3765 = vrcp.pop 512.0
    %s3766 = vtos %v3765
    %s3767 = smul.f32 %s3764, %s3766
    %v3768 = vstv %s3767
    %v3769 = vsub.f32 %v3747, %v3768
    %v3770 = vsub.f32 %v3749, %v3768
    %v3771 = vmul.f32 %v3769, %v3769
    %v3772 = vmul.f32 %v3770, %v3770
    %v3773 = vsel %vm2007, %v3771, 0.0
    %v3774 = vsel %vm2007, %v3772, 0.0
    %v3775 = vadd.f32 %v3773, %v3774
    %3776 = vadd.xlane.f32.xlu0 %v3775
    %v3777 = vpop.xlane.xlu0 %3776
    %v3778 = vrot.slane %v3777, 4
    %v3779 = vadd.f32 %v3777, %v3778
    %v3780 = vrot.slane %v3779, 2
    %v3781 = vadd.f32 %v3779, %v3780
    %v3782 = vrot.slane %v3781, 1
    %v3783 = vadd.f32 %v3781, %v3782
    %s3784 = vtos %v3783
    %v3785 = vrcp.pop 512.0
    %s3786 = vtos %v3785
    %s3787 = smul.f32 %s3784, %s3786
    %s3788 = sadd.f32 %s3787, 1e-05
    %v3789 = vstv %s3788
    %v3790 = vrsqrt.pop %v3789
    %s3791 = vtos %v3790
    %v3792 = vstv %s3791
    %v3793 = vmul.f32 %v3769, %v3792
    %v3794 = vmul.f32 %v3770, %v3792
    %s3795 = sld [smem:[#allocation7 + $0x180]]
    %v3796 = vstv %s3795
    %v3797 = vmul.f32 %v3793, %v3796
    %v3798 = vmul.f32 %v3794, %v3796
    %s3799 = sld [smem:[#allocation7 + $0x181]]
    %v3800 = vstv %s3799
    %v3801 = vadd.f32 %v3797, %v3800
    %v3802 = vadd.f32 %v3798, %v3800
    %v3803 = vsub.f32 0.0, %v3801
    %v3804 = vsub.f32 0.0, %v3802
    %v3805 = vmul.f32 %v3803, 1.442695
    %v3806 = vpow.pop %v3805
    %v3807 = vmul.f32 %v3804, 1.442695
    %v3808 = vpow.pop %v3807
    %v3809 = vadd.f32 %v3806, 1.0
    %v3810 = vadd.f32 %v3808, 1.0
    %v3811 = vrcp.pop %v3809
    %v3812 = vmul.f32 1.0, %v3811
    %v3813 = vrcp.pop %v3810
    %v3814 = vmul.f32 1.0, %v3813
    %v3817 = vcombine.low %v3812, %v3814
    %v3819 = vunpack.c.l.s4 1983009808
    %v3820 = vunpack.c.0.s8 %v3819
    %v3821 = vlaneseq
    %v3822 = vshrl.u32 %v3821, 7
    %v3823 = vsub.s32 %v3820, %v3822
    %v3824 = vrot.slane %v3817, %v3823
    %3826 = vst [vmem:[%s16] sm:$0xf] %v3824
    // Predicated region
    $region66: #{triplet_attention_pallas.4} parent=1 // pred_check
      _
    $region67: #{triplet_attention_pallas.4} parent=1 // pred_check_branch
      %3828 = sbr.rel (0) target = $region69
    $region68: #{triplet_attention_pallas.4} parent=1 // pred_region
      _
    $region69: #{triplet_attention_pallas.4} parent=1 // pred_fallthru
      _
    // Predicated region
    $region70: #{triplet_attention_pallas.4} parent=1 // pred_check
      _
    $region71: #{triplet_attention_pallas.4} parent=1 // pred_check_branch
      %3830 = sbr.rel (0) target = $region73
    $region72: #{triplet_attention_pallas.4} parent=1 // pred_region
      _
    $region73: #{triplet_attention_pallas.4} parent=1 // pred_fallthru
      _
    // Predicated region
    $region74: #{triplet_attention_pallas.4} parent=1 // pred_check
      _
    $region75: #{triplet_attention_pallas.4} parent=1 // pred_check_branch
      %3832 = sbr.rel (0) target = $region77
    $region76: #{triplet_attention_pallas.4} parent=1 // pred_region
      _
    $region77: #{triplet_attention_pallas.4} parent=1 // pred_fallthru
      _
    // Predicated region
    $region78: #{triplet_attention_pallas.4} parent=1 // pred_check
      _
    $region79: #{triplet_attention_pallas.4} parent=1 // pred_check_branch
      %3834 = sbr.rel (0) target = $region81
    $region80: #{triplet_attention_pallas.4} parent=1 // pred_region
      _
    $region81: #{triplet_attention_pallas.4} parent=1 // pred_fallthru
      _
    // Predicated region
    $region82: #{triplet_attention_pallas.4} parent=1 // pred_check
      _
    $region83: #{triplet_attention_pallas.4} parent=1 // pred_check_branch
      %3836 = sbr.rel (0) target = $region85
    $region84: #{triplet_attention_pallas.4} parent=1 // pred_region
      _
    $region85: #{triplet_attention_pallas.4} parent=1 // pred_fallthru
      _
    // Predicated region
    $region86: #{triplet_attention_pallas.4} parent=1 // pred_check
      _
    $region87: #{triplet_attention_pallas.4} parent=1 // pred_check_branch
      %3838 = sbr.rel (0) target = $region89
    $region88: #{triplet_attention_pallas.4} parent=1 // pred_region
      _
    $region89: #{triplet_attention_pallas.4} parent=1 // pred_fallthru
      _
    // Predicated region
    $region90: #{triplet_attention_pallas.4} parent=1 // pred_check
      _
    $region91: #{triplet_attention_pallas.4} parent=1 // pred_check_branch
      %3840 = sbr.rel (0) target = $region93
    $region92: #{triplet_attention_pallas.4} parent=1 // pred_region
      _
    $region93: #{triplet_attention_pallas.4} parent=1 // pred_fallthru
      _
    // Predicated region
    $region94: #{triplet_attention_pallas.4} parent=1 // pred_check
      _
    $region95: #{triplet_attention_pallas.4} parent=1 // pred_check_branch
      %3842 = sbr.rel (0) target = $region97
    $region96: #{triplet_attention_pallas.4} parent=1 // pred_region
      _
    $region97: #{triplet_attention_pallas.4} parent=1 // pred_fallthru
      _
    %3843 = vsyncpa [#allocation3], 1
    %3844 = vsyncpa [#allocation6], 1
    %3845 = vsyncpa [#allocation4], 1

</llo_original>
